<compile_context>
chip_gen: v7x
topology: tpu7x:2x2x1
jax: 0.10.0
libtpu: 0.0.40
codegen_flags: <defaults>
</compile_context>

<pallas_src>
import jax
import jax.numpy as jnp
import numpy as np
from jax.experimental import pallas as pl
from jax.experimental.pallas import tpu as pltpu


def _vmem_capacity_bytes():
    try:
        return int(pltpu.get_tpu_info().vmem_capacity_bytes)
    except Exception:
        return 64 * 1024 * 1024  # conservative (v7x-sized) fallback


def _pick_batch_tile(N, H, W, cin, cmid, cout, budget_bytes, vmem_cap):
    """Largest batch tile dividing N whose estimated VMEM footprint fits the
    budget.  On 64 MiB-class parts (v7x) also leave >=2 grid steps so both
    TensorCores get work; on 128 MiB parts (v5e/v6e, 1 TC) take the biggest
    tile that fits."""
    wbytes = 2 * 9 * (cin * cmid + cmid * cout) * 2        # bf16 weights, dbl-buffered
    per_b = (H + 2) * (W + 2) * 2 * (cin + cmid)           # bf16 padded scratches
    per_b += H * W * cin * 4 * 2                           # x input block (f32, dbl-buffered)
    per_b += H * W * cout * 2 * 2                          # t output block (bf16, dbl-buffered)
    per_b += H * W * (cmid + cout) * 4                     # live f32 accumulators
    per_b += H * W * max(cin, cmid) * 2 * 2                # transient tap slabs (headroom)
    assert wbytes + per_b <= budget_bytes, (
        "per-sample VMEM footprint exceeds the budget; this H/W/channel config "
        "needs halo'd H-tiling (TODO(synk)) instead of batch-only tiling")
    cap = N
    if vmem_cap <= 64 * 1024 * 1024 and N > 1:
        cap = max(1, N // 2)   # keep >=2 grid steps for v7x's two TensorCores
    nb = 1
    for cand in range(1, N + 1):
        if N % cand == 0 and cand <= cap and wbytes + cand * per_b <= budget_bytes:
            nb = cand
    return nb


def _fwd_kernel(x_ref, wdn_ref, wup_ref, t_ref, stats_ref, xpad_ref, mid_ref):
    # x_ref    : (nb, H, W, Cin)        unpadded input tile (f32)
    # wdn_ref  : (9, Cin, Cmid)         down-conv weight, per-tap (bf16)
    # wup_ref  : (9, Cmid, Cout)        up-conv (flipped) weight, per-tap (bf16)
    # t_ref    : (nb, H, W, Cout)       pre-BatchNorm output tile (bf16)
    # stats_ref: (1, 2, Cout)           per-tile [sum, centered sum-of-squares] (f32)
    # xpad_ref : (nb, H+2, W+2, Cin)    VMEM scratch, padded activation (bf16)
    # mid_ref  : (nb, H+2, W+2, Cmid)   VMEM scratch, padded intermediate (bf16)
    nb, H, W, cin = x_ref.shape
    cmid = mid_ref.shape[-1]
    cout = t_ref.shape[-1]
    npix = nb * H * W

    # ---- LeakyReLU(0.2) -> bf16 once, staged into the padded scratch --------
    # LeakyReLU(0) == 0, so activate-then-pad == pad-then-activate.  Only the
    # four 1-pixel border strips are zeroed; the interior is fully rewritten.
    # (Per-iteration on purpose: scratch is uninitialized per-core and under
    # megacore sharding a program_id==0 guard would never run on core 1.)
    x = x_ref[...]
    act = jnp.where(x > 0, x, 0.2 * x).astype(xpad_ref.dtype)
    xpad_ref[:, 0:1, :, :] = jnp.zeros((nb, 1, W + 2, cin), xpad_ref.dtype)
    xpad_ref[:, H + 1:H + 2, :, :] = jnp.zeros((nb, 1, W + 2, cin), xpad_ref.dtype)
    xpad_ref[:, 1:H + 1, 0:1, :] = jnp.zeros((nb, H, 1, cin), xpad_ref.dtype)
    xpad_ref[:, 1:H + 1, W + 1:W + 2, :] = jnp.zeros((nb, H, 1, cin), xpad_ref.dtype)
    xpad_ref[:, 1:H + 1, 1:W + 1, :] = act

    # ---- down Conv2d(k=3,s=1,p=1,bias=False): 9 accumulating MXU matmuls ----
    acc = None
    for tap in range(9):
        dy, dx = tap // 3, tap % 3
        slab = xpad_ref[:, dy:dy + H, dx:dx + W, :].reshape(npix, cin)
        p = jnp.dot(slab, wdn_ref[tap], preferred_element_type=jnp.float32)
        acc = p if acc is None else acc + p

    d = jnp.maximum(acc, 0.0).astype(mid_ref.dtype)        # ReLU, single bf16 cast

    # ---- stage intermediate in the padded bf16 scratch for the up conv ------
    mid_ref[:, 0:1, :, :] = jnp.zeros((nb, 1, W + 2, cmid), mid_ref.dtype)
    mid_ref[:, H + 1:H + 2, :, :] = jnp.zeros((nb, 1, W + 2, cmid), mid_ref.dtype)
    mid_ref[:, 1:H + 1, 0:1, :] = jnp.zeros((nb, H, 1, cmid), mid_ref.dtype)
    mid_ref[:, 1:H + 1, W + 1:W + 2, :] = jnp.zeros((nb, H, 1, cmid), mid_ref.dtype)
    mid_ref[:, 1:H + 1, 1:W + 1, :] = d.reshape(nb, H, W, cmid)

    # ---- up ConvTranspose2d(k=3,s=1,p=1) as flipped conv: 9 matmuls ---------
    acc2 = None
    for tap in range(9):
        dy, dx = tap // 3, tap % 3
        slab = mid_ref[:, dy:dy + H, dx:dx + W, :].reshape(npix, cmid)
        p = jnp.dot(slab, wup_ref[tap], preferred_element_type=jnp.float32)
        acc2 = p if acc2 is None else acc2 + p

    # ---- pre-BN tile (bf16) + per-tile *centered* BN partials (f32) ---------
    t_ref[...] = acc2.reshape(nb, H, W, cout).astype(t_ref.dtype)
    s = jnp.sum(acc2, axis=0, keepdims=True)                       # (1, cout)
    mu = s * (1.0 / npix)
    m2 = jnp.sum((acc2 - mu) ** 2, axis=0, keepdims=True)          # (1, cout)
    stats_ref[...] = jnp.concatenate([s, m2], axis=0)[None]        # one store


def _bn_concat_kernel(x_ref, t_ref, scale_ref, shift_ref, y_ref):
    # Fused BatchNorm-apply + skip concat:
    #   y[..., :cin]        = x
    #   y[..., cin:cin+cout] = t * scale + shift
    cin = x_ref.shape[-1]
    cout = t_ref.shape[-1]
    y_ref[:, :, :, 0:cin] = x_ref[...].astype(y_ref.dtype)
    bn = t_ref[...].astype(jnp.float32) * scale_ref[...] + shift_ref[...]
    y_ref[:, :, :, cin:cin + cout] = bn.astype(y_ref.dtype)


def skip_connection_block_innermost(x_nchw, w_down, w_up, eps=1e-5):
    """Forward of the innermost SkipConnectionBlock (norm_layer=BatchNorm2d,
    training-mode batch stats, gamma=1, beta=0, use_bias=False).

    x_nchw : (N, input_nc, H, W)
    w_down : (inner_nc, input_nc, 3, 3)   nn.Conv2d weight
    w_up   : (inner_nc, outer_nc, 3, 3)   nn.ConvTranspose2d weight
    returns: (N, input_nc + outer_nc, H, W)
    """
    N, cin, H, W = x_nchw.shape
    cmid = w_down.shape[0]
    cout = w_up.shape[1]

    # NCHW -> NHWC once at the block boundary (channels on the lane axis).
    x_nhwc = jnp.transpose(x_nchw, (0, 2, 3, 1)).astype(jnp.float32)

    # Conv2d (O,I,kh,kw) -> per-tap (9, I, O).  ConvTranspose2d(k=3,s=1,p=1) ==
    # Conv2d with the spatially flipped, in/out-swapped kernel and padding 1.
    wdn = jnp.transpose(w_down, (2, 3, 1, 0)).reshape(9, cin, cmid).astype(jnp.bfloat16)
    wup = (jnp.transpose(w_up[:, :, ::-1, ::-1], (2, 3, 0, 1))
           .reshape(9, cmid, cout).astype(jnp.bfloat16))

    vmem_cap = _vmem_capacity_bytes()
    vmem_limit = min(100 * 1024 * 1024, (vmem_cap * 3) // 4)
    budget = vmem_limit // 2
    nb = _pick_batch_tile(N, H, W, cin, cmid, cout, budget, vmem_cap)
    nbt = N // nb

    # ---- pass 1: activations + both convs + per-tile centered BN partials ---
    t, stats = pl.pallas_call(
        _fwd_kernel,
        grid=(nbt,),
        in_specs=[
            pl.BlockSpec((nb, H, W, cin), lambda i: (i, 0, 0, 0)),
            pl.BlockSpec((9, cin, cmid), lambda i: (0, 0, 0)),
            pl.BlockSpec((9, cmid, cout), lambda i: (0, 0, 0)),
        ],
        out_specs=(
            pl.BlockSpec((nb, H, W, cout), lambda i: (i, 0, 0, 0)),
            pl.BlockSpec((1, 2, cout), lambda i: (i, 0, 0)),
        ),
        out_shape=(
            jax.ShapeDtypeStruct((N, H, W, cout), jnp.bfloat16),
            jax.ShapeDtypeStruct((nbt, 2, cout), jnp.float32),
        ),
        scratch_shapes=[
            pltpu.VMEM((nb, H + 2, W + 2, cin), jnp.bfloat16),
            pltpu.VMEM((nb, H + 2, W + 2, cmid), jnp.bfloat16),
        ],
        compiler_params=pltpu.CompilerParams(
            dimension_semantics=("parallel",),
            vmem_limit_bytes=vmem_limit),
    )(x_nhwc, wdn, wup)

    # ---- tiny cross-tile BN combine (parallel-variance formula, f32) --------
    cnt_tile = jnp.float32(nb * H * W)
    total = jnp.float32(N * H * W)
    s = stats[:, 0, :]                       # (nbt, cout) per-tile sums
    m2 = stats[:, 1, :]                      # (nbt, cout) per-tile centered SSQ
    mu_tile = s / cnt_tile
    mean = jnp.sum(s, axis=0) / total
    m2_tot = jnp.sum(m2, axis=0) + cnt_tile * jnp.sum(
        (mu_tile - mean[None, :]) ** 2, axis=0)
    var = jnp.maximum(m2_tot / total, 0.0)   # biased var (PyTorch training BN)
    scale = jax.lax.rsqrt(var + jnp.float32(eps))
    shift = -mean * scale
    scale4 = scale.reshape(1, 1, 1, cout)
    shift4 = shift.reshape(1, 1, 1, cout)

    # ---- pass 2: BatchNorm apply fused with the skip concat -----------------
    y = pl.pallas_call(
        _bn_concat_kernel,
        grid=(nbt,),
        in_specs=[
            pl.BlockSpec((nb, H, W, cin), lambda i: (i, 0, 0, 0)),
            pl.BlockSpec((nb, H, W, cout), lambda i: (i, 0, 0, 0)),
            pl.BlockSpec((1, 1, 1, cout), lambda i: (0, 0, 0, 0)),
            pl.BlockSpec((1, 1, 1, cout), lambda i: (0, 0, 0, 0)),
        ],
        out_specs=pl.BlockSpec((nb, H, W, cin + cout), lambda i: (i, 0, 0, 0)),
        out_shape=jax.ShapeDtypeStruct((N, H, W, cin + cout), jnp.float32),
        compiler_params=pltpu.CompilerParams(
            dimension_semantics=("parallel",),
            vmem_limit_bytes=vmem_limit),
    )(x_nhwc, t, scale4, shift4)

    return jnp.transpose(y, (0, 3, 1, 2))


def _reference(x_nchw, w_down, w_up, eps=1e-5):
    """Pure-JAX reference (bf16 conv operands, f32 accumulation, f32 BN)."""
    x = jnp.transpose(x_nchw, (0, 2, 3, 1)).astype(jnp.float32)
    h = jnp.where(x > 0, x, 0.2 * x).astype(jnp.bfloat16)
    wdn = jnp.transpose(w_down, (2, 3, 1, 0)).astype(jnp.bfloat16)
    d = jax.lax.conv_general_dilated(
        h, wdn, (1, 1), 'SAME', dimension_numbers=('NHWC', 'HWIO', 'NHWC'),
        preferred_element_type=jnp.float32)
    u = jnp.maximum(d, 0.0).astype(jnp.bfloat16)
    wup = jnp.transpose(w_up[:, :, ::-1, ::-1], (2, 3, 0, 1)).astype(jnp.bfloat16)
    t = jax.lax.conv_general_dilated(
        u, wup, (1, 1), 'SAME', dimension_numbers=('NHWC', 'HWIO', 'NHWC'),
        preferred_element_type=jnp.float32)
    mean = jnp.mean(t, axis=(0, 1, 2), keepdims=True)
    var = jnp.mean((t - mean) ** 2, axis=(0, 1, 2), keepdims=True)
    bn = (t - mean) * jax.lax.rsqrt(var + eps)
    out = jnp.concatenate([x, bn], axis=-1)
    return jnp.transpose(out, (0, 3, 1, 2))


if __name__ == "__main__":
    # TODO(synk): outermost / middle (recursive submodule) variants are Python-
    # level composition of blocks; only the self-contained innermost block is
    # implemented as fused kernels here.
    key = jax.random.PRNGKey(0)
    k1, k2, k3 = jax.random.split(key, 3)

    N, H, W = 2, 16, 16
    outer_nc, inner_nc = 4, 8
    input_nc = outer_nc  # input_nc=None in the module -> input_nc = outer_nc

    x = jax.random.normal(k1, (N, input_nc, H, W), jnp.float32)
    w_down = 0.1 * jax.random.normal(k2, (inner_nc, input_nc, 3, 3), jnp.float32)
    w_up = 0.1 * jax.random.normal(k3, (inner_nc, outer_nc, 3, 3), jnp.float32)

    fwd = jax.jit(skip_connection_block_innermost)
    out = jax.block_until_ready(fwd(x, w_down, w_up))

    ref = _reference(x, w_down, w_up)
    assert out.shape == (N, input_nc + outer_nc, H, W)
    # Tolerance accounts for the bf16-stored pre-BN intermediate (stats are f32).
    np.testing.assert_allclose(np.asarray(out), np.asarray(ref), rtol=2e-2, atol=2e-2)
    print("KERNEL_OK")
</pallas_src>

<mosaic_0001>
module attributes {stable_mosaic.version = 11 : i64} {
  func.func @_fwd_kernel(%arg0: i32, %arg1: memref<1x16x16x4xf32, #tpu.memory_space<vmem>>, %arg2: memref<9x4x8xbf16, #tpu.memory_space<vmem>>, %arg3: memref<9x8x4xbf16, #tpu.memory_space<vmem>>, %arg4: memref<1x16x16x4xbf16, #tpu.memory_space<vmem>>, %arg5: memref<1x2x4xf32, #tpu.memory_space<vmem>>, %arg6: memref<1x18x18x4xbf16, #tpu.memory_space<vmem>>, %arg7: memref<1x18x18x8xbf16, #tpu.memory_space<vmem>>) attributes {dimension_semantics = [#tpu.dimension_semantics<parallel>], iteration_bounds = array<i64: 2>, scalar_prefetch = 0 : i64, scratch_operands = 2 : i64, tpu.core_type = #tpu.core_type<tc>, window_params = [{transform_indices = @transform_0, window_bounds = array<i64: 1, 16, 16, 4>}, {pipeline_mode = #tpu.pipeline_mode<synchronous>, transform_indices = @transform_1, window_bounds = array<i64: 9, 4, 8>}, {pipeline_mode = #tpu.pipeline_mode<synchronous>, transform_indices = @transform_2, window_bounds = array<i64: 9, 8, 4>}, {transform_indices = @transform_3, window_bounds = array<i64: 1, 16, 16, 4>}, {transform_indices = @transform_4, window_bounds = array<i64: 1, 2, 4>}]} {
    %c0 = arith.constant 0 : index
    %c0_0 = arith.constant 0 : index
    %c0_1 = arith.constant 0 : index
    %c0_2 = arith.constant 0 : index
    %0 = vector.load %arg1[%c0, %c0_0, %c0_1, %c0_2] : memref<1x16x16x4xf32, #tpu.memory_space<vmem>>, vector<1x16x16x4xf32>
    %cst = arith.constant 0.000000e+00 : f32
    %1 = vector.broadcast %cst : f32 to vector<1x16x16x4xf32>
    %2 = arith.cmpf ogt, %0, %1 : vector<1x16x16x4xf32>
    %cst_3 = arith.constant 2.000000e-01 : f32
    %3 = vector.broadcast %cst_3 : f32 to vector<1x16x16x4xf32>
    %4 = arith.mulf %3, %0 : vector<1x16x16x4xf32>
    %5 = arith.select %2, %0, %4 : vector<1x16x16x4xi1>, vector<1x16x16x4xf32>
    %6 = arith.truncf %5 : vector<1x16x16x4xf32> to vector<1x16x16x4xbf16>
    %cst_4 = arith.constant 0.000000e+00 : bf16
    %7 = vector.broadcast %cst_4 : bf16 to vector<1x1x18x4xbf16>
    %c0_5 = arith.constant 0 : index
    %c0_6 = arith.constant 0 : index
    %c0_7 = arith.constant 0 : index
    %c0_8 = arith.constant 0 : index
    %8 = vector.load %arg6[%c0_5, %c0_6, %c0_7, %c0_8] : memref<1x18x18x4xbf16, #tpu.memory_space<vmem>>, vector<1x1x18x4xbf16>
    tpu.vector_store %arg6[%c0_5, %c0_6, %c0_7, %c0_8], %7 {strides = array<i32>} : memref<1x18x18x4xbf16, #tpu.memory_space<vmem>>, vector<1x1x18x4xbf16>,
    %cst_9 = arith.constant 0.000000e+00 : bf16
    %9 = vector.broadcast %cst_9 : bf16 to vector<1x1x18x4xbf16>
    %c0_10 = arith.constant 0 : index
    %c17 = arith.constant 17 : index
    %c0_11 = arith.constant 0 : index
    %c0_12 = arith.constant 0 : index
    %10 = vector.load %arg6[%c0_10, %c17, %c0_11, %c0_12] : memref<1x18x18x4xbf16, #tpu.memory_space<vmem>>, vector<1x1x18x4xbf16>
    tpu.vector_store %arg6[%c0_10, %c17, %c0_11, %c0_12], %9 {strides = array<i32>} : memref<1x18x18x4xbf16, #tpu.memory_space<vmem>>, vector<1x1x18x4xbf16>,
    %cst_13 = arith.constant 0.000000e+00 : bf16
    %11 = vector.broadcast %cst_13 : bf16 to vector<1x16x1x4xbf16>
    %c0_14 = arith.constant 0 : index
    %c1 = arith.constant 1 : index
    %c0_15 = arith.constant 0 : index
    %c0_16 = arith.constant 0 : index
    %12 = vector.load %arg6[%c0_14, %c1, %c0_15, %c0_16] : memref<1x18x18x4xbf16, #tpu.memory_space<vmem>>, vector<1x16x1x4xbf16>
    tpu.vector_store %arg6[%c0_14, %c1, %c0_15, %c0_16], %11 {strides = array<i32>} : memref<1x18x18x4xbf16, #tpu.memory_space<vmem>>, vector<1x16x1x4xbf16>,
    %cst_17 = arith.constant 0.000000e+00 : bf16
    %13 = vector.broadcast %cst_17 : bf16 to vector<1x16x1x4xbf16>
    %c0_18 = arith.constant 0 : index
    %c1_19 = arith.constant 1 : index
    %c17_20 = arith.constant 17 : index
    %c0_21 = arith.constant 0 : index
    %14 = vector.load %arg6[%c0_18, %c1_19, %c17_20, %c0_21] : memref<1x18x18x4xbf16, #tpu.memory_space<vmem>>, vector<1x16x1x4xbf16>
    tpu.vector_store %arg6[%c0_18, %c1_19, %c17_20, %c0_21], %13 {strides = array<i32>} : memref<1x18x18x4xbf16, #tpu.memory_space<vmem>>, vector<1x16x1x4xbf16>,
    %c0_22 = arith.constant 0 : index
    %c1_23 = arith.constant 1 : index
    %c1_24 = arith.constant 1 : index
    %c0_25 = arith.constant 0 : index
    %15 = vector.load %arg6[%c0_22, %c1_23, %c1_24, %c0_25] : memref<1x18x18x4xbf16, #tpu.memory_space<vmem>>, vector<1x16x16x4xbf16>
    tpu.vector_store %arg6[%c0_22, %c1_23, %c1_24, %c0_25], %6 {strides = array<i32>} : memref<1x18x18x4xbf16, #tpu.memory_space<vmem>>, vector<1x16x16x4xbf16>,
    %c0_26 = arith.constant 0 : index
    %c0_27 = arith.constant 0 : index
    %c0_28 = arith.constant 0 : index
    %c0_29 = arith.constant 0 : index
    %16 = vector.load %arg6[%c0_26, %c0_27, %c0_28, %c0_29] : memref<1x18x18x4xbf16, #tpu.memory_space<vmem>>, vector<1x16x16x4xbf16>
    %17 = vector.shape_cast %16 : vector<1x16x16x4xbf16> to vector<256x4xbf16>
    %c0_30 = arith.constant 0 : index
    %c0_31 = arith.constant 0 : index
    %c0_32 = arith.constant 0 : index
    %18 = vector.load %arg2[%c0_30, %c0_31, %c0_32] : memref<9x4x8xbf16, #tpu.memory_space<vmem>>, vector<1x4x8xbf16>
    %19 = vector.shape_cast %18 : vector<1x4x8xbf16> to vector<4x8xbf16>
    %cst_33 = arith.constant dense<0.000000e+00> : vector<256x8xf32>
    %20 = tpu.matmul %17, %19, %cst_33 {dimension_numbers = #tpu.dot_dimension_numbers<[1], [0], [0], [1], [0, 0, 1, 1], [], []>} : vector<256x4xbf16>, vector<4x8xbf16>, vector<256x8xf32> -> vector<256x8xf32>
    %c0_34 = arith.constant 0 : index
    %c0_35 = arith.constant 0 : index
    %c1_36 = arith.constant 1 : index
    %c0_37 = arith.constant 0 : index
    %21 = vector.load %arg6[%c0_34, %c0_35, %c1_36, %c0_37] : memref<1x18x18x4xbf16, #tpu.memory_space<vmem>>, vector<1x16x16x4xbf16>
    %22 = vector.shape_cast %21 : vector<1x16x16x4xbf16> to vector<256x4xbf16>
    %c1_38 = arith.constant 1 : index
    %c0_39 = arith.constant 0 : index
    %c0_40 = arith.constant 0 : index
    %23 = vector.load %arg2[%c1_38, %c0_39, %c0_40] : memref<9x4x8xbf16, #tpu.memory_space<vmem>>, vector<1x4x8xbf16>
    %24 = vector.shape_cast %23 : vector<1x4x8xbf16> to vector<4x8xbf16>
    %cst_41 = arith.constant dense<0.000000e+00> : vector<256x8xf32>
    %25 = tpu.matmul %22, %24, %cst_41 {dimension_numbers = #tpu.dot_dimension_numbers<[1], [0], [0], [1], [0, 0, 1, 1], [], []>} : vector<256x4xbf16>, vector<4x8xbf16>, vector<256x8xf32> -> vector<256x8xf32>
    %26 = arith.addf %20, %25 : vector<256x8xf32>
    %c0_42 = arith.constant 0 : index
    %c0_43 = arith.constant 0 : index
    %c2 = arith.constant 2 : index
    %c0_44 = arith.constant 0 : index
    %27 = vector.load %arg6[%c0_42, %c0_43, %c2, %c0_44] : memref<1x18x18x4xbf16, #tpu.memory_space<vmem>>, vector<1x16x16x4xbf16>
    %28 = vector.shape_cast %27 : vector<1x16x16x4xbf16> to vector<256x4xbf16>
    %c2_45 = arith.constant 2 : index
    %c0_46 = arith.constant 0 : index
    %c0_47 = arith.constant 0 : index
    %29 = vector.load %arg2[%c2_45, %c0_46, %c0_47] : memref<9x4x8xbf16, #tpu.memory_space<vmem>>, vector<1x4x8xbf16>
    %30 = vector.shape_cast %29 : vector<1x4x8xbf16> to vector<4x8xbf16>
    %cst_48 = arith.constant dense<0.000000e+00> : vector<256x8xf32>
    %31 = tpu.matmul %28, %30, %cst_48 {dimension_numbers = #tpu.dot_dimension_numbers<[1], [0], [0], [1], [0, 0, 1, 1], [], []>} : vector<256x4xbf16>, vector<4x8xbf16>, vector<256x8xf32> -> vector<256x8xf32>
    %32 = arith.addf %26, %31 : vector<256x8xf32>
    %c0_49 = arith.constant 0 : index
    %c1_50 = arith.constant 1 : index
    %c0_51 = arith.constant 0 : index
    %c0_52 = arith.constant 0 : index
    %33 = vector.load %arg6[%c0_49, %c1_50, %c0_51, %c0_52] : memref<1x18x18x4xbf16, #tpu.memory_space<vmem>>, vector<1x16x16x4xbf16>
    %34 = vector.shape_cast %33 : vector<1x16x16x4xbf16> to vector<256x4xbf16>
    %c3 = arith.constant 3 : index
    %c0_53 = arith.constant 0 : index
    %c0_54 = arith.constant 0 : index
    %35 = vector.load %arg2[%c3, %c0_53, %c0_54] : memref<9x4x8xbf16, #tpu.memory_space<vmem>>, vector<1x4x8xbf16>
    %36 = vector.shape_cast %35 : vector<1x4x8xbf16> to vector<4x8xbf16>
    %cst_55 = arith.constant dense<0.000000e+00> : vector<256x8xf32>
    %37 = tpu.matmul %34, %36, %cst_55 {dimension_numbers = #tpu.dot_dimension_numbers<[1], [0], [0], [1], [0, 0, 1, 1], [], []>} : vector<256x4xbf16>, vector<4x8xbf16>, vector<256x8xf32> -> vector<256x8xf32>
    %38 = arith.addf %32, %37 : vector<256x8xf32>
    %c0_56 = arith.constant 0 : index
    %c1_57 = arith.constant 1 : index
    %c1_58 = arith.constant 1 : index
    %c0_59 = arith.constant 0 : index
    %39 = vector.load %arg6[%c0_56, %c1_57, %c1_58, %c0_59] : memref<1x18x18x4xbf16, #tpu.memory_space<vmem>>, vector<1x16x16x4xbf16>
    %40 = vector.shape_cast %39 : vector<1x16x16x4xbf16> to vector<256x4xbf16>
    %c4 = arith.constant 4 : index
    %c0_60 = arith.constant 0 : index
    %c0_61 = arith.constant 0 : index
    %41 = vector.load %arg2[%c4, %c0_60, %c0_61] : memref<9x4x8xbf16, #tpu.memory_space<vmem>>, vector<1x4x8xbf16>
    %42 = vector.shape_cast %41 : vector<1x4x8xbf16> to vector<4x8xbf16>
    %cst_62 = arith.constant dense<0.000000e+00> : vector<256x8xf32>
    %43 = tpu.matmul %40, %42, %cst_62 {dimension_numbers = #tpu.dot_dimension_numbers<[1], [0], [0], [1], [0, 0, 1, 1], [], []>} : vector<256x4xbf16>, vector<4x8xbf16>, vector<256x8xf32> -> vector<256x8xf32>
    %44 = arith.addf %38, %43 : vector<256x8xf32>
    %c0_63 = arith.constant 0 : index
    %c1_64 = arith.constant 1 : index
    %c2_65 = arith.constant 2 : index
    %c0_66 = arith.constant 0 : index
    %45 = vector.load %arg6[%c0_63, %c1_64, %c2_65, %c0_66] : memref<1x18x18x4xbf16, #tpu.memory_space<vmem>>, vector<1x16x16x4xbf16>
    %46 = vector.shape_cast %45 : vector<1x16x16x4xbf16> to vector<256x4xbf16>
    %c5 = arith.constant 5 : index
    %c0_67 = arith.constant 0 : index
    %c0_68 = arith.constant 0 : index
    %47 = vector.load %arg2[%c5, %c0_67, %c0_68] : memref<9x4x8xbf16, #tpu.memory_space<vmem>>, vector<1x4x8xbf16>
    %48 = vector.shape_cast %47 : vector<1x4x8xbf16> to vector<4x8xbf16>
    %cst_69 = arith.constant dense<0.000000e+00> : vector<256x8xf32>
    %49 = tpu.matmul %46, %48, %cst_69 {dimension_numbers = #tpu.dot_dimension_numbers<[1], [0], [0], [1], [0, 0, 1, 1], [], []>} : vector<256x4xbf16>, vector<4x8xbf16>, vector<256x8xf32> -> vector<256x8xf32>
    %50 = arith.addf %44, %49 : vector<256x8xf32>
    %c0_70 = arith.constant 0 : index
    %c2_71 = arith.constant 2 : index
    %c0_72 = arith.constant 0 : index
    %c0_73 = arith.constant 0 : index
    %51 = vector.load %arg6[%c0_70, %c2_71, %c0_72, %c0_73] : memref<1x18x18x4xbf16, #tpu.memory_space<vmem>>, vector<1x16x16x4xbf16>
    %52 = vector.shape_cast %51 : vector<1x16x16x4xbf16> to vector<256x4xbf16>
    %c6 = arith.constant 6 : index
    %c0_74 = arith.constant 0 : index
    %c0_75 = arith.constant 0 : index
    %53 = vector.load %arg2[%c6, %c0_74, %c0_75] : memref<9x4x8xbf16, #tpu.memory_space<vmem>>, vector<1x4x8xbf16>
    %54 = vector.shape_cast %53 : vector<1x4x8xbf16> to vector<4x8xbf16>
    %cst_76 = arith.constant dense<0.000000e+00> : vector<256x8xf32>
    %55 = tpu.matmul %52, %54, %cst_76 {dimension_numbers = #tpu.dot_dimension_numbers<[1], [0], [0], [1], [0, 0, 1, 1], [], []>} : vector<256x4xbf16>, vector<4x8xbf16>, vector<256x8xf32> -> vector<256x8xf32>
    %56 = arith.addf %50, %55 : vector<256x8xf32>
    %c0_77 = arith.constant 0 : index
    %c2_78 = arith.constant 2 : index
    %c1_79 = arith.constant 1 : index
    %c0_80 = arith.constant 0 : index
    %57 = vector.load %arg6[%c0_77, %c2_78, %c1_79, %c0_80] : memref<1x18x18x4xbf16, #tpu.memory_space<vmem>>, vector<1x16x16x4xbf16>
    %58 = vector.shape_cast %57 : vector<1x16x16x4xbf16> to vector<256x4xbf16>
    %c7 = arith.constant 7 : index
    %c0_81 = arith.constant 0 : index
    %c0_82 = arith.constant 0 : index
    %59 = vector.load %arg2[%c7, %c0_81, %c0_82] : memref<9x4x8xbf16, #tpu.memory_space<vmem>>, vector<1x4x8xbf16>
    %60 = vector.shape_cast %59 : vector<1x4x8xbf16> to vector<4x8xbf16>
    %cst_83 = arith.constant dense<0.000000e+00> : vector<256x8xf32>
    %61 = tpu.matmul %58, %60, %cst_83 {dimension_numbers = #tpu.dot_dimension_numbers<[1], [0], [0], [1], [0, 0, 1, 1], [], []>} : vector<256x4xbf16>, vector<4x8xbf16>, vector<256x8xf32> -> vector<256x8xf32>
    %62 = arith.addf %56, %61 : vector<256x8xf32>
    %c0_84 = arith.constant 0 : index
    %c2_85 = arith.constant 2 : index
    %c2_86 = arith.constant 2 : index
    %c0_87 = arith.constant 0 : index
    %63 = vector.load %arg6[%c0_84, %c2_85, %c2_86, %c0_87] : memref<1x18x18x4xbf16, #tpu.memory_space<vmem>>, vector<1x16x16x4xbf16>
    %64 = vector.shape_cast %63 : vector<1x16x16x4xbf16> to vector<256x4xbf16>
    %c8 = arith.constant 8 : index
    %c0_88 = arith.constant 0 : index
    %c0_89 = arith.constant 0 : index
    %65 = vector.load %arg2[%c8, %c0_88, %c0_89] : memref<9x4x8xbf16, #tpu.memory_space<vmem>>, vector<1x4x8xbf16>
    %66 = vector.shape_cast %65 : vector<1x4x8xbf16> to vector<4x8xbf16>
    %cst_90 = arith.constant dense<0.000000e+00> : vector<256x8xf32>
    %67 = tpu.matmul %64, %66, %cst_90 {dimension_numbers = #tpu.dot_dimension_numbers<[1], [0], [0], [1], [0, 0, 1, 1], [], []>} : vector<256x4xbf16>, vector<4x8xbf16>, vector<256x8xf32> -> vector<256x8xf32>
    %68 = arith.addf %62, %67 : vector<256x8xf32>
    %cst_91 = arith.constant 0.000000e+00 : f32
    %69 = vector.broadcast %cst_91 : f32 to vector<256x8xf32>
    %70 = arith.maximumf %68, %69 : vector<256x8xf32>
    %71 = arith.truncf %70 : vector<256x8xf32> to vector<256x8xbf16>
    %cst_92 = arith.constant 0.000000e+00 : bf16
    %72 = vector.broadcast %cst_92 : bf16 to vector<1x1x18x8xbf16>
    %c0_93 = arith.constant 0 : index
    %c0_94 = arith.constant 0 : index
    %c0_95 = arith.constant 0 : index
    %c0_96 = arith.constant 0 : index
    %73 = vector.load %arg7[%c0_93, %c0_94, %c0_95, %c0_96] : memref<1x18x18x8xbf16, #tpu.memory_space<vmem>>, vector<1x1x18x8xbf16>
    tpu.vector_store %arg7[%c0_93, %c0_94, %c0_95, %c0_96], %72 {strides = array<i32>} : memref<1x18x18x8xbf16, #tpu.memory_space<vmem>>, vector<1x1x18x8xbf16>,
    %cst_97 = arith.constant 0.000000e+00 : bf16
    %74 = vector.broadcast %cst_97 : bf16 to vector<1x1x18x8xbf16>
    %c0_98 = arith.constant 0 : index
    %c17_99 = arith.constant 17 : index
    %c0_100 = arith.constant 0 : index
    %c0_101 = arith.constant 0 : index
    %75 = vector.load %arg7[%c0_98, %c17_99, %c0_100, %c0_101] : memref<1x18x18x8xbf16, #tpu.memory_space<vmem>>, vector<1x1x18x8xbf16>
    tpu.vector_store %arg7[%c0_98, %c17_99, %c0_100, %c0_101], %74 {strides = array<i32>} : memref<1x18x18x8xbf16, #tpu.memory_space<vmem>>, vector<1x1x18x8xbf16>,
    %cst_102 = arith.constant 0.000000e+00 : bf16
    %76 = vector.broadcast %cst_102 : bf16 to vector<1x16x1x8xbf16>
    %c0_103 = arith.constant 0 : index
    %c1_104 = arith.constant 1 : index
    %c0_105 = arith.constant 0 : index
    %c0_106 = arith.constant 0 : index
    %77 = vector.load %arg7[%c0_103, %c1_104, %c0_105, %c0_106] : memref<1x18x18x8xbf16, #tpu.memory_space<vmem>>, vector<1x16x1x8xbf16>
    tpu.vector_store %arg7[%c0_103, %c1_104, %c0_105, %c0_106], %76 {strides = array<i32>} : memref<1x18x18x8xbf16, #tpu.memory_space<vmem>>, vector<1x16x1x8xbf16>,
    %cst_107 = arith.constant 0.000000e+00 : bf16
    %78 = vector.broadcast %cst_107 : bf16 to vector<1x16x1x8xbf16>
    %c0_108 = arith.constant 0 : index
    %c1_109 = arith.constant 1 : index
    %c17_110 = arith.constant 17 : index
    %c0_111 = arith.constant 0 : index
    %79 = vector.load %arg7[%c0_108, %c1_109, %c17_110, %c0_111] : memref<1x18x18x8xbf16, #tpu.memory_space<vmem>>, vector<1x16x1x8xbf16>
    tpu.vector_store %arg7[%c0_108, %c1_109, %c17_110, %c0_111], %78 {strides = array<i32>} : memref<1x18x18x8xbf16, #tpu.memory_space<vmem>>, vector<1x16x1x8xbf16>,
    %80 = vector.shape_cast %71 : vector<256x8xbf16> to vector<1x16x16x8xbf16>
    %c0_112 = arith.constant 0 : index
    %c1_113 = arith.constant 1 : index
    %c1_114 = arith.constant 1 : index
    %c0_115 = arith.constant 0 : index
    %81 = vector.load %arg7[%c0_112, %c1_113, %c1_114, %c0_115] : memref<1x18x18x8xbf16, #tpu.memory_space<vmem>>, vector<1x16x16x8xbf16>
    tpu.vector_store %arg7[%c0_112, %c1_113, %c1_114, %c0_115], %80 {strides = array<i32>} : memref<1x18x18x8xbf16, #tpu.memory_space<vmem>>, vector<1x16x16x8xbf16>,
    %c0_116 = arith.constant 0 : index
    %c0_117 = arith.constant 0 : index
    %c0_118 = arith.constant 0 : index
    %c0_119 = arith.constant 0 : index
    %82 = vector.load %arg7[%c0_116, %c0_117, %c0_118, %c0_119] : memref<1x18x18x8xbf16, #tpu.memory_space<vmem>>, vector<1x16x16x8xbf16>
    %83 = vector.shape_cast %82 : vector<1x16x16x8xbf16> to vector<256x8xbf16>
    %c0_120 = arith.constant 0 : index
    %c0_121 = arith.constant 0 : index
    %c0_122 = arith.constant 0 : index
    %84 = vector.load %arg3[%c0_120, %c0_121, %c0_122] : memref<9x8x4xbf16, #tpu.memory_space<vmem>>, vector<1x8x4xbf16>
    %85 = vector.shape_cast %84 : vector<1x8x4xbf16> to vector<8x4xbf16>
    %cst_123 = arith.constant dense<0.000000e+00> : vector<256x4xf32>
    %86 = tpu.matmul %83, %85, %cst_123 {dimension_numbers = #tpu.dot_dimension_numbers<[1], [0], [0], [1], [0, 0, 1, 1], [], []>} : vector<256x8xbf16>, vector<8x4xbf16>, vector<256x4xf32> -> vector<256x4xf32>
    %c0_124 = arith.constant 0 : index
    %c0_125 = arith.constant 0 : index
    %c1_126 = arith.constant 1 : index
    %c0_127 = arith.constant 0 : index
    %87 = vector.load %arg7[%c0_124, %c0_125, %c1_126, %c0_127] : memref<1x18x18x8xbf16, #tpu.memory_space<vmem>>, vector<1x16x16x8xbf16>
    %88 = vector.shape_cast %87 : vector<1x16x16x8xbf16> to vector<256x8xbf16>
    %c1_128 = arith.constant 1 : index
    %c0_129 = arith.constant 0 : index
    %c0_130 = arith.constant 0 : index
    %89 = vector.load %arg3[%c1_128, %c0_129, %c0_130] : memref<9x8x4xbf16, #tpu.memory_space<vmem>>, vector<1x8x4xbf16>
    %90 = vector.shape_cast %89 : vector<1x8x4xbf16> to vector<8x4xbf16>
    %cst_131 = arith.constant dense<0.000000e+00> : vector<256x4xf32>
    %91 = tpu.matmul %88, %90, %cst_131 {dimension_numbers = #tpu.dot_dimension_numbers<[1], [0], [0], [1], [0, 0, 1, 1], [], []>} : vector<256x8xbf16>, vector<8x4xbf16>, vector<256x4xf32> -> vector<256x4xf32>
    %92 = arith.addf %86, %91 : vector<256x4xf32>
    %c0_132 = arith.constant 0 : index
    %c0_133 = arith.constant 0 : index
    %c2_134 = arith.constant 2 : index
    %c0_135 = arith.constant 0 : index
    %93 = vector.load %arg7[%c0_132, %c0_133, %c2_134, %c0_135] : memref<1x18x18x8xbf16, #tpu.memory_space<vmem>>, vector<1x16x16x8xbf16>
    %94 = vector.shape_cast %93 : vector<1x16x16x8xbf16> to vector<256x8xbf16>
    %c2_136 = arith.constant 2 : index
    %c0_137 = arith.constant 0 : index
    %c0_138 = arith.constant 0 : index
    %95 = vector.load %arg3[%c2_136, %c0_137, %c0_138] : memref<9x8x4xbf16, #tpu.memory_space<vmem>>, vector<1x8x4xbf16>
    %96 = vector.shape_cast %95 : vector<1x8x4xbf16> to vector<8x4xbf16>
    %cst_139 = arith.constant dense<0.000000e+00> : vector<256x4xf32>
    %97 = tpu.matmul %94, %96, %cst_139 {dimension_numbers = #tpu.dot_dimension_numbers<[1], [0], [0], [1], [0, 0, 1, 1], [], []>} : vector<256x8xbf16>, vector<8x4xbf16>, vector<256x4xf32> -> vector<256x4xf32>
    %98 = arith.addf %92, %97 : vector<256x4xf32>
    %c0_140 = arith.constant 0 : index
    %c1_141 = arith.constant 1 : index
    %c0_142 = arith.constant 0 : index
    %c0_143 = arith.constant 0 : index
    %99 = vector.load %arg7[%c0_140, %c1_141, %c0_142, %c0_143] : memref<1x18x18x8xbf16, #tpu.memory_space<vmem>>, vector<1x16x16x8xbf16>
    %100 = vector.shape_cast %99 : vector<1x16x16x8xbf16> to vector<256x8xbf16>
    %c3_144 = arith.constant 3 : index
    %c0_145 = arith.constant 0 : index
    %c0_146 = arith.constant 0 : index
    %101 = vector.load %arg3[%c3_144, %c0_145, %c0_146] : memref<9x8x4xbf16, #tpu.memory_space<vmem>>, vector<1x8x4xbf16>
    %102 = vector.shape_cast %101 : vector<1x8x4xbf16> to vector<8x4xbf16>
    %cst_147 = arith.constant dense<0.000000e+00> : vector<256x4xf32>
    %103 = tpu.matmul %100, %102, %cst_147 {dimension_numbers = #tpu.dot_dimension_numbers<[1], [0], [0], [1], [0, 0, 1, 1], [], []>} : vector<256x8xbf16>, vector<8x4xbf16>, vector<256x4xf32> -> vector<256x4xf32>
    %104 = arith.addf %98, %103 : vector<256x4xf32>
    %c0_148 = arith.constant 0 : index
    %c1_149 = arith.constant 1 : index
    %c1_150 = arith.constant 1 : index
    %c0_151 = arith.constant 0 : index
    %105 = vector.load %arg7[%c0_148, %c1_149, %c1_150, %c0_151] : memref<1x18x18x8xbf16, #tpu.memory_space<vmem>>, vector<1x16x16x8xbf16>
    %106 = vector.shape_cast %105 : vector<1x16x16x8xbf16> to vector<256x8xbf16>
    %c4_152 = arith.constant 4 : index
    %c0_153 = arith.constant 0 : index
    %c0_154 = arith.constant 0 : index
    %107 = vector.load %arg3[%c4_152, %c0_153, %c0_154] : memref<9x8x4xbf16, #tpu.memory_space<vmem>>, vector<1x8x4xbf16>
    %108 = vector.shape_cast %107 : vector<1x8x4xbf16> to vector<8x4xbf16>
    %cst_155 = arith.constant dense<0.000000e+00> : vector<256x4xf32>
    %109 = tpu.matmul %106, %108, %cst_155 {dimension_numbers = #tpu.dot_dimension_numbers<[1], [0], [0], [1], [0, 0, 1, 1], [], []>} : vector<256x8xbf16>, vector<8x4xbf16>, vector<256x4xf32> -> vector<256x4xf32>
    %110 = arith.addf %104, %109 : vector<256x4xf32>
    %c0_156 = arith.constant 0 : index
    %c1_157 = arith.constant 1 : index
    %c2_158 = arith.constant 2 : index
    %c0_159 = arith.constant 0 : index
    %111 = vector.load %arg7[%c0_156, %c1_157, %c2_158, %c0_159] : memref<1x18x18x8xbf16, #tpu.memory_space<vmem>>, vector<1x16x16x8xbf16>
    %112 = vector.shape_cast %111 : vector<1x16x16x8xbf16> to vector<256x8xbf16>
    %c5_160 = arith.constant 5 : index
    %c0_161 = arith.constant 0 : index
    %c0_162 = arith.constant 0 : index
    %113 = vector.load %arg3[%c5_160, %c0_161, %c0_162] : memref<9x8x4xbf16, #tpu.memory_space<vmem>>, vector<1x8x4xbf16>
    %114 = vector.shape_cast %113 : vector<1x8x4xbf16> to vector<8x4xbf16>
    %cst_163 = arith.constant dense<0.000000e+00> : vector<256x4xf32>
    %115 = tpu.matmul %112, %114, %cst_163 {dimension_numbers = #tpu.dot_dimension_numbers<[1], [0], [0], [1], [0, 0, 1, 1], [], []>} : vector<256x8xbf16>, vector<8x4xbf16>, vector<256x4xf32> -> vector<256x4xf32>
    %116 = arith.addf %110, %115 : vector<256x4xf32>
    %c0_164 = arith.constant 0 : index
    %c2_165 = arith.constant 2 : index
    %c0_166 = arith.constant 0 : index
    %c0_167 = arith.constant 0 : index
    %117 = vector.load %arg7[%c0_164, %c2_165, %c0_166, %c0_167] : memref<1x18x18x8xbf16, #tpu.memory_space<vmem>>, vector<1x16x16x8xbf16>
    %118 = vector.shape_cast %117 : vector<1x16x16x8xbf16> to vector<256x8xbf16>
    %c6_168 = arith.constant 6 : index
    %c0_169 = arith.constant 0 : index
    %c0_170 = arith.constant 0 : index
    %119 = vector.load %arg3[%c6_168, %c0_169, %c0_170] : memref<9x8x4xbf16, #tpu.memory_space<vmem>>, vector<1x8x4xbf16>
    %120 = vector.shape_cast %119 : vector<1x8x4xbf16> to vector<8x4xbf16>
    %cst_171 = arith.constant dense<0.000000e+00> : vector<256x4xf32>
    %121 = tpu.matmul %118, %120, %cst_171 {dimension_numbers = #tpu.dot_dimension_numbers<[1], [0], [0], [1], [0, 0, 1, 1], [], []>} : vector<256x8xbf16>, vector<8x4xbf16>, vector<256x4xf32> -> vector<256x4xf32>
    %122 = arith.addf %116, %121 : vector<256x4xf32>
    %c0_172 = arith.constant 0 : index
    %c2_173 = arith.constant 2 : index
    %c1_174 = arith.constant 1 : index
    %c0_175 = arith.constant 0 : index
    %123 = vector.load %arg7[%c0_172, %c2_173, %c1_174, %c0_175] : memref<1x18x18x8xbf16, #tpu.memory_space<vmem>>, vector<1x16x16x8xbf16>
    %124 = vector.shape_cast %123 : vector<1x16x16x8xbf16> to vector<256x8xbf16>
    %c7_176 = arith.constant 7 : index
    %c0_177 = arith.constant 0 : index
    %c0_178 = arith.constant 0 : index
    %125 = vector.load %arg3[%c7_176, %c0_177, %c0_178] : memref<9x8x4xbf16, #tpu.memory_space<vmem>>, vector<1x8x4xbf16>
    %126 = vector.shape_cast %125 : vector<1x8x4xbf16> to vector<8x4xbf16>
    %cst_179 = arith.constant dense<0.000000e+00> : vector<256x4xf32>
    %127 = tpu.matmul %124, %126, %cst_179 {dimension_numbers = #tpu.dot_dimension_numbers<[1], [0], [0], [1], [0, 0, 1, 1], [], []>} : vector<256x8xbf16>, vector<8x4xbf16>, vector<256x4xf32> -> vector<256x4xf32>
    %128 = arith.addf %122, %127 : vector<256x4xf32>
    %c0_180 = arith.constant 0 : index
    %c2_181 = arith.constant 2 : index
    %c2_182 = arith.constant 2 : index
    %c0_183 = arith.constant 0 : index
    %129 = vector.load %arg7[%c0_180, %c2_181, %c2_182, %c0_183] : memref<1x18x18x8xbf16, #tpu.memory_space<vmem>>, vector<1x16x16x8xbf16>
    %130 = vector.shape_cast %129 : vector<1x16x16x8xbf16> to vector<256x8xbf16>
    %c8_184 = arith.constant 8 : index
    %c0_185 = arith.constant 0 : index
    %c0_186 = arith.constant 0 : index
    %131 = vector.load %arg3[%c8_184, %c0_185, %c0_186] : memref<9x8x4xbf16, #tpu.memory_space<vmem>>, vector<1x8x4xbf16>
    %132 = vector.shape_cast %131 : vector<1x8x4xbf16> to vector<8x4xbf16>
    %cst_187 = arith.constant dense<0.000000e+00> : vector<256x4xf32>
    %133 = tpu.matmul %130, %132, %cst_187 {dimension_numbers = #tpu.dot_dimension_numbers<[1], [0], [0], [1], [0, 0, 1, 1], [], []>} : vector<256x8xbf16>, vector<8x4xbf16>, vector<256x4xf32> -> vector<256x4xf32>
    %134 = arith.addf %128, %133 : vector<256x4xf32>
    %135 = vector.shape_cast %134 : vector<256x4xf32> to vector<1x16x16x4xf32>
    %136 = arith.truncf %135 : vector<1x16x16x4xf32> to vector<1x16x16x4xbf16>
    %c0_188 = arith.constant 0 : index
    %c0_189 = arith.constant 0 : index
    %c0_190 = arith.constant 0 : index
    %c0_191 = arith.constant 0 : index
    %137 = vector.load %arg4[%c0_188, %c0_189, %c0_190, %c0_191] : memref<1x16x16x4xbf16, #tpu.memory_space<vmem>>, vector<1x16x16x4xbf16>
    tpu.vector_store %arg4[%c0_188, %c0_189, %c0_190, %c0_191], %136 {strides = array<i32>} : memref<1x16x16x4xbf16, #tpu.memory_space<vmem>>, vector<1x16x16x4xbf16>,
    %cst_192 = arith.constant dense<0.000000e+00> : vector<4xf32>
    %138 = vector.multi_reduction <add>, %134, %cst_192 [0] : vector<256x4xf32> to vector<4xf32>
    %139 = vector.shape_cast %138 : vector<4xf32> to vector<1x4xf32>
    %cst_193 = arith.constant 3.906250e-03 : f32
    %140 = vector.broadcast %cst_193 : f32 to vector<1x4xf32>
    %141 = arith.mulf %139, %140 : vector<1x4xf32>
    %142 = vector.broadcast %141 : vector<1x4xf32> to vector<256x4xf32>
    %143 = arith.subf %134, %142 : vector<256x4xf32>
    %144 = arith.mulf %143, %143 : vector<256x4xf32>
    %cst_194 = arith.constant dense<0.000000e+00> : vector<4xf32>
    %145 = vector.multi_reduction <add>, %144, %cst_194 [0] : vector<256x4xf32> to vector<4xf32>
    %146 = vector.shape_cast %145 : vector<4xf32> to vector<1x4xf32>
    %147 = tpu.concatenate %139, %146 in 0 : vector<1x4xf32>, vector<1x4xf32> -> vector<2x4xf32>
    %148 = vector.shape_cast %147 : vector<2x4xf32> to vector<1x2x4xf32>
    %c0_195 = arith.constant 0 : index
    %c0_196 = arith.constant 0 : index
    %c0_197 = arith.constant 0 : index
    %149 = vector.load %arg5[%c0_195, %c0_196, %c0_197] : memref<1x2x4xf32, #tpu.memory_space<vmem>>, vector<1x2x4xf32>
    tpu.vector_store %arg5[%c0_195, %c0_196, %c0_197], %148 {strides = array<i32>} : memref<1x2x4xf32, #tpu.memory_space<vmem>>, vector<1x2x4xf32>,
    return
  }
  func.func @transform_0(%arg0: i32) -> (i32, i32, i32, i32) {
    %c0_i32 = arith.constant 0 : i32
    %c0_i32_0 = arith.constant 0 : i32
    %c0_i32_1 = arith.constant 0 : i32
    %c0_i32_2 = arith.constant 0 : i32
    return %arg0, %c0_i32, %c0_i32_0, %c0_i32_1 : i32, i32, i32, i32
  }
  func.func @transform_1(%arg0: i32) -> (i32, i32, i32) {
    %c0_i32 = arith.constant 0 : i32
    %c0_i32_0 = arith.constant 0 : i32
    %c0_i32_1 = arith.constant 0 : i32
    %c0_i32_2 = arith.constant 0 : i32
    return %c0_i32, %c0_i32_0, %c0_i32_1 : i32, i32, i32
  }
  func.func @transform_2(%arg0: i32) -> (i32, i32, i32) {
    %c0_i32 = arith.constant 0 : i32
    %c0_i32_0 = arith.constant 0 : i32
    %c0_i32_1 = arith.constant 0 : i32
    %c0_i32_2 = arith.constant 0 : i32
    return %c0_i32, %c0_i32_0, %c0_i32_1 : i32, i32, i32
  }
  func.func @transform_3(%arg0: i32) -> (i32, i32, i32, i32) {
    %c0_i32 = arith.constant 0 : i32
    %c0_i32_0 = arith.constant 0 : i32
    %c0_i32_1 = arith.constant 0 : i32
    %c0_i32_2 = arith.constant 0 : i32
    return %arg0, %c0_i32, %c0_i32_0, %c0_i32_1 : i32, i32, i32, i32
  }
  func.func @transform_4(%arg0: i32) -> (i32, i32, i32) {
    %c0_i32 = arith.constant 0 : i32
    %c0_i32_0 = arith.constant 0 : i32
    %c0_i32_1 = arith.constant 0 : i32
    return %arg0, %c0_i32, %c0_i32_0 : i32, i32, i32
  }
}

module attributes {stable_mosaic.version = 11 : i64} {
  func.func @_bn_concat_kernel(%arg0: i32, %arg1: memref<1x16x16x4xf32, #tpu.memory_space<vmem>>, %arg2: memref<1x16x16x4xbf16, #tpu.memory_space<vmem>>, %arg3: memref<1x1x1x4xf32, #tpu.memory_space<vmem>>, %arg4: memref<1x1x1x4xf32, #tpu.memory_space<vmem>>, %arg5: memref<1x16x16x8xf32, #tpu.memory_space<vmem>>) attributes {dimension_semantics = [#tpu.dimension_semantics<parallel>], iteration_bounds = array<i64: 2>, scalar_prefetch = 0 : i64, scratch_operands = 0 : i64, tpu.core_type = #tpu.core_type<tc>, window_params = [{transform_indices = @transform_0, window_bounds = array<i64: 1, 16, 16, 4>}, {transform_indices = @transform_1, window_bounds = array<i64: 1, 16, 16, 4>}, {pipeline_mode = #tpu.pipeline_mode<synchronous>, transform_indices = @transform_2, window_bounds = array<i64: 1, 1, 1, 4>}, {pipeline_mode = #tpu.pipeline_mode<synchronous>, transform_indices = @transform_3, window_bounds = array<i64: 1, 1, 1, 4>}, {transform_indices = @transform_4, window_bounds = array<i64: 1, 16, 16, 8>}]} {
    %c0 = arith.constant 0 : index
    %c0_0 = arith.constant 0 : index
    %c0_1 = arith.constant 0 : index
    %c0_2 = arith.constant 0 : index
    %0 = vector.load %arg1[%c0, %c0_0, %c0_1, %c0_2] : memref<1x16x16x4xf32, #tpu.memory_space<vmem>>, vector<1x16x16x4xf32>
    %c0_3 = arith.constant 0 : index
    %c0_4 = arith.constant 0 : index
    %c0_5 = arith.constant 0 : index
    %c0_6 = arith.constant 0 : index
    %1 = vector.load %arg5[%c0_3, %c0_4, %c0_5, %c0_6] : memref<1x16x16x8xf32, #tpu.memory_space<vmem>>, vector<1x16x16x4xf32>
    tpu.vector_store %arg5[%c0_3, %c0_4, %c0_5, %c0_6], %0 {strides = array<i32>} : memref<1x16x16x8xf32, #tpu.memory_space<vmem>>, vector<1x16x16x4xf32>,
    %c0_7 = arith.constant 0 : index
    %c0_8 = arith.constant 0 : index
    %c0_9 = arith.constant 0 : index
    %c0_10 = arith.constant 0 : index
    %2 = vector.load %arg2[%c0_7, %c0_8, %c0_9, %c0_10] : memref<1x16x16x4xbf16, #tpu.memory_space<vmem>>, vector<1x16x16x4xbf16>
    %3 = arith.extf %2 : vector<1x16x16x4xbf16> to vector<1x16x16x4xf32>
    %c0_11 = arith.constant 0 : index
    %c0_12 = arith.constant 0 : index
    %c0_13 = arith.constant 0 : index
    %c0_14 = arith.constant 0 : index
    %4 = vector.load %arg3[%c0_11, %c0_12, %c0_13, %c0_14] : memref<1x1x1x4xf32, #tpu.memory_space<vmem>>, vector<1x1x1x4xf32>
    %5 = vector.broadcast %4 : vector<1x1x1x4xf32> to vector<1x16x16x4xf32>
    %6 = arith.mulf %3, %5 : vector<1x16x16x4xf32>
    %c0_15 = arith.constant 0 : index
    %c0_16 = arith.constant 0 : index
    %c0_17 = arith.constant 0 : index
    %c0_18 = arith.constant 0 : index
    %7 = vector.load %arg4[%c0_15, %c0_16, %c0_17, %c0_18] : memref<1x1x1x4xf32, #tpu.memory_space<vmem>>, vector<1x1x1x4xf32>
    %8 = vector.broadcast %7 : vector<1x1x1x4xf32> to vector<1x16x16x4xf32>
    %9 = arith.addf %6, %8 : vector<1x16x16x4xf32>
    %c0_19 = arith.constant 0 : index
    %c0_20 = arith.constant 0 : index
    %c0_21 = arith.constant 0 : index
    %c4 = arith.constant 4 : index
    %10 = vector.load %arg5[%c0_19, %c0_20, %c0_21, %c4] : memref<1x16x16x8xf32, #tpu.memory_space<vmem>>, vector<1x16x16x4xf32>
    tpu.vector_store %arg5[%c0_19, %c0_20, %c0_21, %c4], %9 {strides = array<i32>} : memref<1x16x16x8xf32, #tpu.memory_space<vmem>>, vector<1x16x16x4xf32>,
    return
  }
  func.func @transform_0(%arg0: i32) -> (i32, i32, i32, i32) {
    %c0_i32 = arith.constant 0 : i32
    %c0_i32_0 = arith.constant 0 : i32
    %c0_i32_1 = arith.constant 0 : i32
    %c0_i32_2 = arith.constant 0 : i32
    return %arg0, %c0_i32, %c0_i32_0, %c0_i32_1 : i32, i32, i32, i32
  }
  func.func @transform_1(%arg0: i32) -> (i32, i32, i32, i32) {
    %c0_i32 = arith.constant 0 : i32
    %c0_i32_0 = arith.constant 0 : i32
    %c0_i32_1 = arith.constant 0 : i32
    %c0_i32_2 = arith.constant 0 : i32
    return %arg0, %c0_i32, %c0_i32_0, %c0_i32_1 : i32, i32, i32, i32
  }
  func.func @transform_2(%arg0: i32) -> (i32, i32, i32, i32) {
    %c0_i32 = arith.constant 0 : i32
    %c0_i32_0 = arith.constant 0 : i32
    %c0_i32_1 = arith.constant 0 : i32
    %c0_i32_2 = arith.constant 0 : i32
    %c0_i32_3 = arith.constant 0 : i32
    return %c0_i32, %c0_i32_0, %c0_i32_1, %c0_i32_2 : i32, i32, i32, i32
  }
  func.func @transform_3(%arg0: i32) -> (i32, i32, i32, i32) {
    %c0_i32 = arith.constant 0 : i32
    %c0_i32_0 = arith.constant 0 : i32
    %c0_i32_1 = arith.constant 0 : i32
    %c0_i32_2 = arith.constant 0 : i32
    %c0_i32_3 = arith.constant 0 : i32
    return %c0_i32, %c0_i32_0, %c0_i32_1, %c0_i32_2 : i32, i32, i32, i32
  }
  func.func @transform_4(%arg0: i32) -> (i32, i32, i32, i32) {
    %c0_i32 = arith.constant 0 : i32
    %c0_i32_0 = arith.constant 0 : i32
    %c0_i32_1 = arith.constant 0 : i32
    %c0_i32_2 = arith.constant 0 : i32
    return %arg0, %c0_i32, %c0_i32_0, %c0_i32_1 : i32, i32, i32, i32
  }
}

</mosaic_0001>

<llo_original>
// kernel: skip_connection_block_innermost.3
$region0: #{skip_connection_block_innermost.3}
  #allocation0 [shape = 'u32[]', space=smem, size = 0x4, offset = 0x4, fixed_abs, tag = 'smem constant byte address 0x4 - core index']
  #allocation1 [shape = 'u32[144,128]{1,0:T(1,128)}', space=vmem, size = 0x12000, scoped, tag = 'internal scratch']
  %s0 = inlined_call_operand.vmem [shape: f32[2,16,16,4], index: 0, kind: input, shape index: {}]
  %s1 = inlined_call_operand.vmem [shape: bf16[2,16,16,4], index: 1, kind: input, shape index: {}]
  %s2 = inlined_call_operand.vmem [shape: f32[1,1,1,4], index: 2, kind: input, shape index: {}]
  %s3 = inlined_call_operand.vmem [shape: f32[1,1,1,4], index: 3, kind: input, shape index: {}]
  %s4 = inlined_call_operand.vmem [shape: f32[2,16,16,8], index: 4, kind: output, shape index: {}]
  %s5 = sld [smem:[#allocation0]]
  $region49: #{skip_connection_block_innermost.3} parent=0
    _
  %s7 = ssub.s32 1, %s5
  %s8 = scalar_select 0, %s7, %s5
  loop: start=0, step=1, limit=4
  $region2: #{skip_connection_block_innermost.3} parent=0 // loop_pre_header
    _
  $region3: #{skip_connection_block_innermost.3} parent=0 // loop_header
    %s10 = sphi 0, %s14
    %p11 = scmp.ge.s32.totalorder %s10, 4
    %s20 = sphi 0, %s22
    %s23 = sphi 0, %s20
    %s24 = sphi 0, %s23
    %s40 = sphi 0, %s24
    %s46 = sphi 0, %s48
    %s49 = sphi 0, %s46
    %s50 = sphi 0, %s49
    %s66 = sphi 0, %s50
    %s70 = sphi 0, %s70
    %s72 = sphi 0, %s70
    %s73 = sphi 0, %s72
    %s87 = sphi 0, %s73
    %s91 = sphi 0, %s91
    %s93 = sphi 0, %s91
    %s94 = sphi 0, %s93
    %s108 = sphi 0, %s94
    %s114 = sphi 0, %s116
    %s117 = sphi 0, %s114
    %s118 = sphi 0, %s117
    %s134 = sphi 0, %s118
  $region4: #{skip_connection_block_innermost.3} parent=0 // loop_header_branch
    %13 = sbr.rel (%p11) target = $region8
  $region5: #{skip_connection_block_innermost.3} parent=0 // loop_body
    %s15 = ssub.s32 %s10, 1
    %s16 = ssub.s32 %s10, 2
    %s17 = sadd.s32 %s10, 1
    %s18 = ssub.s32 %s10, %s17
    %p19 = scmp.eq.s32.totalorder %s18, 0
    %s21 = sadd.s32 %s20, 1
    %s22 = scalar_select %p19, %s20, %s21
    %p25 = pneg %p19
    %p26 = scmp.eq.s32.totalorder %s10, 1
    %p27 = por %p25, %p26
    %p28 = scmp.ne.s32.totalorder %s20, %s23
    %p29 = scmp.eq.s32.totalorder %s10, 0
    %p30 = por %p28, %p29
    %p31 = scmp.ne.s32.totalorder %s20, %s23
    %p32 = scmp.eq.s32.totalorder %s15, 1
    %p33 = por %p31, %p32
    %p34 = scmp.ne.s32.totalorder %s23, %s24
    %p35 = scmp.eq.s32.totalorder %s15, 0
    %p36 = por %p34, %p35
    %p37 = scmp.ne.s32.totalorder %s23, %s24
    %p38 = scmp.eq.s32.totalorder %s16, 1
    %p39 = por %p37, %p38
    %p41 = scmp.ne.s32.totalorder %s24, %s40
    %p42 = scmp.eq.s32.totalorder %s16, 0
    %p43 = por %p41, %p42
    %s44 = ssub.s32 %s10, %s17
    %p45 = scmp.eq.s32.totalorder %s44, 0
    %s47 = sadd.s32 %s46, 1
    %s48 = scalar_select %p45, %s46, %s47
    %p51 = pneg %p45
    %p52 = scmp.eq.s32.totalorder %s10, 1
    %p53 = por %p51, %p52
    %p54 = scmp.ne.s32.totalorder %s46, %s49
    %p55 = scmp.eq.s32.totalorder %s10, 0
    %p56 = por %p54, %p55
    %p57 = scmp.ne.s32.totalorder %s46, %s49
    %p58 = scmp.eq.s32.totalorder %s15, 1
    %p59 = por %p57, %p58
    %p60 = scmp.ne.s32.totalorder %s49, %s50
    %p61 = scmp.eq.s32.totalorder %s15, 0
    %p62 = por %p60, %p61
    %p63 = scmp.ne.s32.totalorder %s49, %s50
    %p64 = scmp.eq.s32.totalorder %s16, 1
    %p65 = por %p63, %p64
    %p67 = scmp.ne.s32.totalorder %s50, %s66
    %p68 = scmp.eq.s32.totalorder %s16, 0
    %p69 = por %p67, %p68
    %s71 = sadd.s32 %s70, 1
    %p74 = scmp.eq.s32.totalorder %s10, 1
    %p75 = scmp.ne.s32.totalorder %s70, %s72
    %p76 = scmp.eq.s32.totalorder %s10, 0
    %p77 = por %p75, %p76
    %p78 = scmp.ne.s32.totalorder %s70, %s72
    %p79 = scmp.eq.s32.totalorder %s15, 1
    %p80 = por %p78, %p79
    %p81 = scmp.ne.s32.totalorder %s72, %s73
    %p82 = scmp.eq.s32.totalorder %s15, 0
    %p83 = por %p81, %p82
    %p84 = scmp.ne.s32.totalorder %s72, %s73
    %p85 = scmp.eq.s32.totalorder %s16, 1
    %p86 = por %p84, %p85
    %p88 = scmp.ne.s32.totalorder %s73, %s87
    %p89 = scmp.eq.s32.totalorder %s16, 0
    %p90 = por %p88, %p89
    %s92 = sadd.s32 %s91, 1
    %p95 = scmp.eq.s32.totalorder %s10, 1
    %p96 = scmp.ne.s32.totalorder %s91, %s93
    %p97 = scmp.eq.s32.totalorder %s10, 0
    %p98 = por %p96, %p97
    %p99 = scmp.ne.s32.totalorder %s91, %s93
    %p100 = scmp.eq.s32.totalorder %s15, 1
    %p101 = por %p99, %p100
    %p102 = scmp.ne.s32.totalorder %s93, %s94
    %p103 = scmp.eq.s32.totalorder %s15, 0
    %p104 = por %p102, %p103
    %p105 = scmp.ne.s32.totalorder %s93, %s94
    %p106 = scmp.eq.s32.totalorder %s16, 1
    %p107 = por %p105, %p106
    %p109 = scmp.ne.s32.totalorder %s94, %s108
    %p110 = scmp.eq.s32.totalorder %s16, 0
    %p111 = por %p109, %p110
    %s112 = ssub.s32 %s10, %s17
    %p113 = scmp.eq.s32.totalorder %s112, 0
    %s115 = sadd.s32 %s114, 1
    %s116 = scalar_select %p113, %s114, %s115
    %p119 = pneg %p113
    %p120 = scmp.eq.s32.totalorder %s10, 1
    %p121 = por %p119, %p120
    %p122 = scmp.ne.s32.totalorder %s114, %s117
    %p123 = scmp.eq.s32.totalorder %s10, 0
    %p124 = por %p122, %p123
    %p125 = scmp.ne.s32.totalorder %s114, %s117
    %p126 = scmp.eq.s32.totalorder %s15, 1
    %p127 = por %p125, %p126
    %p128 = scmp.ne.s32.totalorder %s117, %s118
    %p129 = scmp.eq.s32.totalorder %s15, 0
    %p130 = por %p128, %p129
    %p131 = scmp.ne.s32.totalorder %s117, %s118
    %p132 = scmp.eq.s32.totalorder %s16, 1
    %p133 = por %p131, %p132
    %p135 = scmp.ne.s32.totalorder %s118, %s134
    %p136 = scmp.eq.s32.totalorder %s16, 0
    %p137 = por %p135, %p136
    %p138 = scmp.le.s32.totalorder 1, %s10
    %p139 = scmp.lt.s32.totalorder %s10, 3
    %p140 = pnand %p138, %p139
    %p141 = pneg %p140
    // Predicated region
    $region9: #{skip_connection_block_innermost.3} parent=5 // pred_check
      _
    $region10: #{skip_connection_block_innermost.3} parent=5 // pred_check_branch
      %143 = sbr.rel (%p140) target = $region12
    $region11: #{skip_connection_block_innermost.3} parent=5 // pred_region
      %s144 = ssub.s32 %s10, 1
      // Predicated region
      $region13: #{skip_connection_block_innermost.3} parent=11 // pred_check
        %p145 = pneg %p83
      $region14: #{skip_connection_block_innermost.3} parent=11 // pred_check_branch
        %147 = sbr.rel (%p145) target = $region16
      $region15: #{skip_connection_block_innermost.3} parent=11 // pred_region
        _
      $region16: #{skip_connection_block_innermost.3} parent=11 // pred_fallthru
        _
      // Predicated region
      $region17: #{skip_connection_block_innermost.3} parent=11 // pred_check
        %p148 = pneg %p104
      $region18: #{skip_connection_block_innermost.3} parent=11 // pred_check_branch
        %150 = sbr.rel (%p148) target = $region20
      $region19: #{skip_connection_block_innermost.3} parent=11 // pred_region
        _
      $region20: #{skip_connection_block_innermost.3} parent=11 // pred_fallthru
        _
    $region12: #{skip_connection_block_innermost.3} parent=5 // pred_fallthru
      _
    %p151 = scmp.lt.s32.totalorder %s10, 2
    // Predicated region
    $region21: #{skip_connection_block_innermost.3} parent=5 // pred_check
      %p152 = pneg %p151
    $region22: #{skip_connection_block_innermost.3} parent=5 // pred_check_branch
      %154 = sbr.rel (%p152) target = $region24
    $region23: #{skip_connection_block_innermost.3} parent=5 // pred_region
      // Predicated region
      $region25: #{skip_connection_block_innermost.3} parent=23 // pred_check
        %p155 = pneg %p30
      $region26: #{skip_connection_block_innermost.3} parent=23 // pred_check_branch
        %157 = sbr.rel (%p155) target = $region28
      $region27: #{skip_connection_block_innermost.3} parent=23 // pred_region
        %p158 = scmp.lt.s32.totalorder %s10, 1
        %s159 = scalar_select %p158, %s10, 1
        %s160 = smul.addr %s159, 32
        %s161 = smul.addr %s160, 8
        %s162 = scalar_lea.vmem %s0, %s161
      $region28: #{skip_connection_block_innermost.3} parent=23 // pred_fallthru
        _
      // Predicated region
      $region29: #{skip_connection_block_innermost.3} parent=23 // pred_check
        %p163 = pneg %p56
      $region30: #{skip_connection_block_innermost.3} parent=23 // pred_check_branch
        %165 = sbr.rel (%p163) target = $region32
      $region31: #{skip_connection_block_innermost.3} parent=23 // pred_region
        %p166 = scmp.lt.s32.totalorder %s10, 1
        %s167 = scalar_select %p166, %s10, 1
        %s168 = smul.addr %s167, 32
        %s169 = smul.addr %s168, 4
        %s170 = scalar_lea.vmem %s1, %s169
      $region32: #{skip_connection_block_innermost.3} parent=23 // pred_fallthru
        _
    $region24: #{skip_connection_block_innermost.3} parent=5 // pred_fallthru
      _
    %p171 = scmp.le.s32.totalorder 1, %s10
    %p172 = scmp.lt.s32.totalorder %s10, 3
    %p173 = pnand %p171, %p172
    %p174 = pneg %p173
    // Predicated region
    $region33: #{skip_connection_block_innermost.3} parent=5 // pred_check
      _
    $region34: #{skip_connection_block_innermost.3} parent=5 // pred_check_branch
      %176 = sbr.rel (%p173) target = $region36
    $region35: #{skip_connection_block_innermost.3} parent=5 // pred_region
      %s177 = ssub.s32 %s10, 1
      %p178 = scmp.lt.s32.totalorder %s15, 1
      %s179 = scalar_select %p178, %s15, 1
      %s180 = smul.addr %s179, 32
      %s181 = smul.addr %s180, 8
      %s182 = scalar_lea.vmem %s0, %s181
      %p183 = pneg %p36
      %p184 = pneg %p33
      %p185 = scmp.lt.s32.totalorder %s15, 1
      %s186 = scalar_select %p185, %s15, 1
      %s187 = smul.addr %s186, 32
      %s188 = smul.addr %s187, 4
      %s189 = scalar_lea.vmem %s1, %s188
      %p190 = pneg %p62
      %p191 = pneg %p59
      %p192 = pneg %p83
      %p193 = pneg %p80
      %p194 = pneg %p104
      %p195 = pneg %p101
      %p196 = pneg %p130
      %p197 = pneg %p127
      %p198 = scmp.lt.s32.totalorder %s15, 1
      %s199 = scalar_select %p198, %s15, 1
      %s200 = smul.addr %s199, 32
      %s201 = smul.addr %s200, 8
      %s202 = scalar_lea.vmem %s4, %s201
      %p203 = scmp.lt.s32.totalorder %s15, 1
      %s204 = scalar_select %p203, %s15, 1
      %s205 = smul.addr %s204, 32
      %s206 = smul.addr %s205, 8
      %s207 = scalar_lea.vmem %s0, %s206
      %p208 = scmp.lt.s32.totalorder %s15, 1
      %s209 = scalar_select %p208, %s15, 1
      %s210 = smul.addr %s209, 32
      %s211 = smul.addr %s210, 4
      %s212 = scalar_lea.vmem %s1, %s211
      %p213 = scmp.lt.s32.totalorder %s15, 1
      %s214 = scalar_select %p213, %s15, 1
      %s215 = smul.addr %s214, 32
      %s216 = smul.addr %s215, 8
      %s217 = scalar_lea.vmem %s4, %s216
      %v218 = vld [vmem:[%s207] sm:$0xff]
      %v219 = vld [vmem:[%s207 + $0x8] sm:$0xff]
      %v220 = vld [vmem:[%s207 + $0x10] sm:$0xff]
      %v221 = vld [vmem:[%s207 + $0x18] sm:$0xff]
      %v222 = vld [vmem:[%s207 + $0x20] sm:$0xff]
      %v223 = vld [vmem:[%s207 + $0x28] sm:$0xff]
      %v224 = vld [vmem:[%s207 + $0x30] sm:$0xff]
      %v225 = vld [vmem:[%s207 + $0x38] sm:$0xff]
      %v226 = vld [vmem:[%s207 + $0x40] sm:$0xff]
      %v227 = vld [vmem:[%s207 + $0x48] sm:$0xff]
      %v228 = vld [vmem:[%s207 + $0x50] sm:$0xff]
      %v229 = vld [vmem:[%s207 + $0x58] sm:$0xff]
      %v230 = vld [vmem:[%s207 + $0x60] sm:$0xff]
      %v231 = vld [vmem:[%s207 + $0x68] sm:$0xff]
      %v232 = vld [vmem:[%s207 + $0x70] sm:$0xff]
      %v233 = vld [vmem:[%s207 + $0x78] sm:$0xff]
      %v234 = vld [vmem:[%s207 + $0x80] sm:$0xff]
      %v235 = vld [vmem:[%s207 + $0x88] sm:$0xff]
      %v236 = vld [vmem:[%s207 + $0x90] sm:$0xff]
      %v237 = vld [vmem:[%s207 + $0x98] sm:$0xff]
      %v238 = vld [vmem:[%s207 + $0xa0] sm:$0xff]
      %v239 = vld [vmem:[%s207 + $0xa8] sm:$0xff]
      %v240 = vld [vmem:[%s207 + $0xb0] sm:$0xff]
      %v241 = vld [vmem:[%s207 + $0xb8] sm:$0xff]
      %v242 = vld [vmem:[%s207 + $0xc0] sm:$0xff]
      %v243 = vld [vmem:[%s207 + $0xc8] sm:$0xff]
      %v244 = vld [vmem:[%s207 + $0xd0] sm:$0xff]
      %v245 = vld [vmem:[%s207 + $0xd8] sm:$0xff]
      %v246 = vld [vmem:[%s207 + $0xe0] sm:$0xff]
      %v247 = vld [vmem:[%s207 + $0xe8] sm:$0xff]
      %v248 = vld [vmem:[%s207 + $0xf0] sm:$0xff]
      %v249 = vld [vmem:[%s207 + $0xf8] sm:$0xff]
      %vm250 = vcmask 31744
      %251 = vst.msk [vmem:[%s217] sm:$0xff] %vm250, %v218
      %252 = vst.msk [vmem:[%s217 + $0x8] sm:$0xff] %vm250, %v219
      %253 = vst.msk [vmem:[%s217 + $0x10] sm:$0xff] %vm250, %v220
      %254 = vst.msk [vmem:[%s217 + $0x18] sm:$0xff] %vm250, %v221
      %255 = vst.msk [vmem:[%s217 + $0x20] sm:$0xff] %vm250, %v222
      %256 = vst.msk [vmem:[%s217 + $0x28] sm:$0xff] %vm250, %v223
      %257 = vst.msk [vmem:[%s217 + $0x30] sm:$0xff] %vm250, %v224
      %258 = vst.msk [vmem:[%s217 + $0x38] sm:$0xff] %vm250, %v225
      %259 = vst.msk [vmem:[%s217 + $0x40] sm:$0xff] %vm250, %v226
      %260 = vst.msk [vmem:[%s217 + $0x48] sm:$0xff] %vm250, %v227
      %261 = vst.msk [vmem:[%s217 + $0x50] sm:$0xff] %vm250, %v228
      %262 = vst.msk [vmem:[%s217 + $0x58] sm:$0xff] %vm250, %v229
      %263 = vst.msk [vmem:[%s217 + $0x60] sm:$0xff] %vm250, %v230
      %264 = vst.msk [vmem:[%s217 + $0x68] sm:$0xff] %vm250, %v231
      %265 = vst.msk [vmem:[%s217 + $0x70] sm:$0xff] %vm250, %v232
      %266 = vst.msk [vmem:[%s217 + $0x78] sm:$0xff] %vm250, %v233
      %267 = vst.msk [vmem:[%s217 + $0x80] sm:$0xff] %vm250, %v234
      %268 = vst.msk [vmem:[%s217 + $0x88] sm:$0xff] %vm250, %v235
      %269 = vst.msk [vmem:[%s217 + $0x90] sm:$0xff] %vm250, %v236
      %270 = vst.msk [vmem:[%s217 + $0x98] sm:$0xff] %vm250, %v237
      %271 = vst.msk [vmem:[%s217 + $0xa0] sm:$0xff] %vm250, %v238
      %272 = vst.msk [vmem:[%s217 + $0xa8] sm:$0xff] %vm250, %v239
      %273 = vst.msk [vmem:[%s217 + $0xb0] sm:$0xff] %vm250, %v240
      %274 = vst.msk [vmem:[%s217 + $0xb8] sm:$0xff] %vm250, %v241
      %275 = vst.msk [vmem:[%s217 + $0xc0] sm:$0xff] %vm250, %v242
      %276 = vst.msk [vmem:[%s217 + $0xc8] sm:$0xff] %vm250, %v243
      %277 = vst.msk [vmem:[%s217 + $0xd0] sm:$0xff] %vm250, %v244
      %278 = vst.msk [vmem:[%s217 + $0xd8] sm:$0xff] %vm250, %v245
      %279 = vst.msk [vmem:[%s217 + $0xe0] sm:$0xff] %vm250, %v246
      %280 = vst.msk [vmem:[%s217 + $0xe8] sm:$0xff] %vm250, %v247
      %281 = vst.msk [vmem:[%s217 + $0xf0] sm:$0xff] %vm250, %v248
      %282 = vst.msk [vmem:[%s217 + $0xf8] sm:$0xff] %vm250, %v249
      %v283 = vld [vmem:[%s212] sm:$0xf]
      %v284 = vld [vmem:[%s212 + $0x4] sm:$0xf]
      %v285 = vld [vmem:[%s212 + $0x8] sm:$0xf]
      %v286 = vld [vmem:[%s212 + $0xc] sm:$0xf]
      %v287 = vld [vmem:[%s212 + $0x10] sm:$0xf]
      %v288 = vld [vmem:[%s212 + $0x14] sm:$0xf]
      %v289 = vld [vmem:[%s212 + $0x18] sm:$0xf]
      %v290 = vld [vmem:[%s212 + $0x1c] sm:$0xf]
      %v291 = vld [vmem:[%s212 + $0x20] sm:$0xf]
      %v292 = vld [vmem:[%s212 + $0x24] sm:$0xf]
      %v293 = vld [vmem:[%s212 + $0x28] sm:$0xf]
      %v294 = vld [vmem:[%s212 + $0x2c] sm:$0xf]
      %v295 = vld [vmem:[%s212 + $0x30] sm:$0xf]
      %v296 = vld [vmem:[%s212 + $0x34] sm:$0xf]
      %v297 = vld [vmem:[%s212 + $0x38] sm:$0xf]
      %v298 = vld [vmem:[%s212 + $0x3c] sm:$0xf]
      %v299 = vld [vmem:[%s212 + $0x40] sm:$0xf]
      %v300 = vld [vmem:[%s212 + $0x44] sm:$0xf]
      %v301 = vld [vmem:[%s212 + $0x48] sm:$0xf]
      %v302 = vld [vmem:[%s212 + $0x4c] sm:$0xf]
      %v303 = vld [vmem:[%s212 + $0x50] sm:$0xf]
      %v304 = vld [vmem:[%s212 + $0x54] sm:$0xf]
      %v305 = vld [vmem:[%s212 + $0x58] sm:$0xf]
      %v306 = vld [vmem:[%s212 + $0x5c] sm:$0xf]
      %v307 = vld [vmem:[%s212 + $0x60] sm:$0xf]
      %v308 = vld [vmem:[%s212 + $0x64] sm:$0xf]
      %v309 = vld [vmem:[%s212 + $0x68] sm:$0xf]
      %v310 = vld [vmem:[%s212 + $0x6c] sm:$0xf]
      %v311 = vld [vmem:[%s212 + $0x70] sm:$0xf]
      %v312 = vld [vmem:[%s212 + $0x74] sm:$0xf]
      %v313 = vld [vmem:[%s212 + $0x78] sm:$0xf]
      %v314 = vld [vmem:[%s212 + $0x7c] sm:$0xf]
      %v315 = vunpack.c.l.bf16 %v283
      %v316 = vunpack.c.l.bf16 %v284
      %v317 = vunpack.c.l.bf16 %v285
      %v318 = vunpack.c.l.bf16 %v286
      %v319 = vunpack.c.l.bf16 %v287
      %v320 = vunpack.c.l.bf16 %v288
      %v321 = vunpack.c.l.bf16 %v289
      %v322 = vunpack.c.l.bf16 %v290
      %v323 = vunpack.c.l.bf16 %v291
      %v324 = vunpack.c.l.bf16 %v292
      %v325 = vunpack.c.l.bf16 %v293
      %v326 = vunpack.c.l.bf16 %v294
      %v327 = vunpack.c.l.bf16 %v295
      %v328 = vunpack.c.l.bf16 %v296
      %v329 = vunpack.c.l.bf16 %v297
      %v330 = vunpack.c.l.bf16 %v298
      %v331 = vunpack.c.l.bf16 %v299
      %v332 = vunpack.c.l.bf16 %v300
      %v333 = vunpack.c.l.bf16 %v301
      %v334 = vunpack.c.l.bf16 %v302
      %v335 = vunpack.c.l.bf16 %v303
      %v336 = vunpack.c.l.bf16 %v304
      %v337 = vunpack.c.l.bf16 %v305
      %v338 = vunpack.c.l.bf16 %v306
      %v339 = vunpack.c.l.bf16 %v307
      %v340 = vunpack.c.l.bf16 %v308
      %v341 = vunpack.c.l.bf16 %v309
      %v342 = vunpack.c.l.bf16 %v310
      %v343 = vunpack.c.l.bf16 %v311
      %v344 = vunpack.c.l.bf16 %v312
      %v345 = vunpack.c.l.bf16 %v313
      %v346 = vunpack.c.l.bf16 %v314
      %v347 = vld [vmem:[%s2] sm:$0x1]
      %v349 = vlaneseq
      %v350 = vshrl.u32 %v349, 7
      %v351 = vsub.s32 0, %v350
      %v352 = vrot.slane %v347, %v351
      %v354 = vmul.f32 %v315, %v352
      %v355 = vmul.f32 %v316, %v352
      %v356 = vmul.f32 %v317, %v352
      %v357 = vmul.f32 %v318, %v352
      %v358 = vmul.f32 %v319, %v352
      %v359 = vmul.f32 %v320, %v352
      %v360 = vmul.f32 %v321, %v352
      %v361 = vmul.f32 %v322, %v352
      %v362 = vmul.f32 %v323, %v352
      %v363 = vmul.f32 %v324, %v352
      %v364 = vmul.f32 %v325, %v352
      %v365 = vmul.f32 %v326, %v352
      %v366 = vmul.f32 %v327, %v352
      %v367 = vmul.f32 %v328, %v352
      %v368 = vmul.f32 %v329, %v352
      %v369 = vmul.f32 %v330, %v352
      %v370 = vmul.f32 %v331, %v352
      %v371 = vmul.f32 %v332, %v352
      %v372 = vmul.f32 %v333, %v352
      %v373 = vmul.f32 %v334, %v352
      %v374 = vmul.f32 %v335, %v352
      %v375 = vmul.f32 %v336, %v352
      %v376 = vmul.f32 %v337, %v352
      %v377 = vmul.f32 %v338, %v352
      %v378 = vmul.f32 %v339, %v352
      %v379 = vmul.f32 %v340, %v352
      %v380 = vmul.f32 %v341, %v352
      %v381 = vmul.f32 %v342, %v352
      %v382 = vmul.f32 %v343, %v352
      %v383 = vmul.f32 %v344, %v352
      %v384 = vmul.f32 %v345, %v352
      %v385 = vmul.f32 %v346, %v352
      %v386 = vld [vmem:[%s3] sm:$0x1]
      %v388 = vlaneseq
      %v389 = vshrl.u32 %v388, 7
      %v390 = vsub.s32 0, %v389
      %v391 = vrot.slane %v386, %v390
      %v393 = vadd.f32 %v354, %v391
      %v394 = vadd.f32 %v355, %v391
      %v395 = vadd.f32 %v356, %v391
      %v396 = vadd.f32 %v357, %v391
      %v397 = vadd.f32 %v358, %v391
      %v398 = vadd.f32 %v359, %v391
      %v399 = vadd.f32 %v360, %v391
      %v400 = vadd.f32 %v361, %v391
      %v401 = vadd.f32 %v362, %v391
      %v402 = vadd.f32 %v363, %v391
      %v403 = vadd.f32 %v364, %v391
      %v404 = vadd.f32 %v365, %v391
      %v405 = vadd.f32 %v366, %v391
      %v406 = vadd.f32 %v367, %v391
      %v407 = vadd.f32 %v368, %v391
      %v408 = vadd.f32 %v369, %v391
      %v409 = vadd.f32 %v370, %v391
      %v410 = vadd.f32 %v371, %v391
      %v411 = vadd.f32 %v372, %v391
      %v412 = vadd.f32 %v373, %v391
      %v413 = vadd.f32 %v374, %v391
      %v414 = vadd.f32 %v375, %v391
      %v415 = vadd.f32 %v376, %v391
      %v416 = vadd.f32 %v377, %v391
      %v417 = vadd.f32 %v378, %v391
      %v418 = vadd.f32 %v379, %v391
      %v419 = vadd.f32 %v380, %v391
      %v420 = vadd.f32 %v381, %v391
      %v421 = vadd.f32 %v382, %v391
      %v422 = vadd.f32 %v383, %v391
      %v423 = vadd.f32 %v384, %v391
      %v424 = vadd.f32 %v385, %v391
      %457 = vrot.lane.b32.xlu0 %v393, 4
      %v458 = vpop.permute.xlu0 %457
      %459 = vrot.lane.b32.xlu0 %v394, 4
      %v460 = vpop.permute.xlu0 %459
      %461 = vrot.lane.b32.xlu0 %v395, 4
      %v462 = vpop.permute.xlu0 %461
      %463 = vrot.lane.b32.xlu0 %v396, 4
      %v464 = vpop.permute.xlu0 %463
      %465 = vrot.lane.b32.xlu0 %v397, 4
      %v466 = vpop.permute.xlu0 %465
      %467 = vrot.lane.b32.xlu0 %v398, 4
      %v468 = vpop.permute.xlu0 %467
      %469 = vrot.lane.b32.xlu0 %v399, 4
      %v470 = vpop.permute.xlu0 %469
      %471 = vrot.lane.b32.xlu0 %v400, 4
      %v472 = vpop.permute.xlu0 %471
      %473 = vrot.lane.b32.xlu0 %v401, 4
      %v474 = vpop.permute.xlu0 %473
      %475 = vrot.lane.b32.xlu0 %v402, 4
      %v476 = vpop.permute.xlu0 %475
      %477 = vrot.lane.b32.xlu0 %v403, 4
      %v478 = vpop.permute.xlu0 %477
      %479 = vrot.lane.b32.xlu0 %v404, 4
      %v480 = vpop.permute.xlu0 %479
      %481 = vrot.lane.b32.xlu0 %v405, 4
      %v482 = vpop.permute.xlu0 %481
      %483 = vrot.lane.b32.xlu0 %v406, 4
      %v484 = vpop.permute.xlu0 %483
      %485 = vrot.lane.b32.xlu0 %v407, 4
      %v486 = vpop.permute.xlu0 %485
      %487 = vrot.lane.b32.xlu0 %v408, 4
      %v488 = vpop.permute.xlu0 %487
      %489 = vrot.lane.b32.xlu0 %v409, 4
      %v490 = vpop.permute.xlu0 %489
      %491 = vrot.lane.b32.xlu0 %v410, 4
      %v492 = vpop.permute.xlu0 %491
      %493 = vrot.lane.b32.xlu0 %v411, 4
      %v494 = vpop.permute.xlu0 %493
      %495 = vrot.lane.b32.xlu0 %v412, 4
      %v496 = vpop.permute.xlu0 %495
      %497 = vrot.lane.b32.xlu0 %v413, 4
      %v498 = vpop.permute.xlu0 %497
      %499 = vrot.lane.b32.xlu0 %v414, 4
      %v500 = vpop.permute.xlu0 %499
      %501 = vrot.lane.b32.xlu0 %v415, 4
      %v502 = vpop.permute.xlu0 %501
      %503 = vrot.lane.b32.xlu0 %v416, 4
      %v504 = vpop.permute.xlu0 %503
      %505 = vrot.lane.b32.xlu0 %v417, 4
      %v506 = vpop.permute.xlu0 %505
      %507 = vrot.lane.b32.xlu0 %v418, 4
      %v508 = vpop.permute.xlu0 %507
      %509 = vrot.lane.b32.xlu0 %v419, 4
      %v510 = vpop.permute.xlu0 %509
      %511 = vrot.lane.b32.xlu0 %v420, 4
      %v512 = vpop.permute.xlu0 %511
      %513 = vrot.lane.b32.xlu0 %v421, 4
      %v514 = vpop.permute.xlu0 %513
      %515 = vrot.lane.b32.xlu0 %v422, 4
      %v516 = vpop.permute.xlu0 %515
      %517 = vrot.lane.b32.xlu0 %v423, 4
      %v518 = vpop.permute.xlu0 %517
      %519 = vrot.lane.b32.xlu0 %v424, 4
      %v520 = vpop.permute.xlu0 %519
      %vm553 = vcmask 64544
      %554 = vst.msk [vmem:[%s217] sm:$0xff] %vm553, %v458
      %555 = vst.msk [vmem:[%s217 + $0x8] sm:$0xff] %vm553, %v460
      %556 = vst.msk [vmem:[%s217 + $0x10] sm:$0xff] %vm553, %v462
      %557 = vst.msk [vmem:[%s217 + $0x18] sm:$0xff] %vm553, %v464
      %558 = vst.msk [vmem:[%s217 + $0x20] sm:$0xff] %vm553, %v466
      %559 = vst.msk [vmem:[%s217 + $0x28] sm:$0xff] %vm553, %v468
      %560 = vst.msk [vmem:[%s217 + $0x30] sm:$0xff] %vm553, %v470
      %561 = vst.msk [vmem:[%s217 + $0x38] sm:$0xff] %vm553, %v472
      %562 = vst.msk [vmem:[%s217 + $0x40] sm:$0xff] %vm553, %v474
      %563 = vst.msk [vmem:[%s217 + $0x48] sm:$0xff] %vm553, %v476
      %564 = vst.msk [vmem:[%s217 + $0x50] sm:$0xff] %vm553, %v478
      %565 = vst.msk [vmem:[%s217 + $0x58] sm:$0xff] %vm553, %v480
      %566 = vst.msk [vmem:[%s217 + $0x60] sm:$0xff] %vm553, %v482
      %567 = vst.msk [vmem:[%s217 + $0x68] sm:$0xff] %vm553, %v484
      %568 = vst.msk [vmem:[%s217 + $0x70] sm:$0xff] %vm553, %v486
      %569 = vst.msk [vmem:[%s217 + $0x78] sm:$0xff] %vm553, %v488
      %570 = vst.msk [vmem:[%s217 + $0x80] sm:$0xff] %vm553, %v490
      %571 = vst.msk [vmem:[%s217 + $0x88] sm:$0xff] %vm553, %v492
      %572 = vst.msk [vmem:[%s217 + $0x90] sm:$0xff] %vm553, %v494
      %573 = vst.msk [vmem:[%s217 + $0x98] sm:$0xff] %vm553, %v496
      %574 = vst.msk [vmem:[%s217 + $0xa0] sm:$0xff] %vm553, %v498
      %575 = vst.msk [vmem:[%s217 + $0xa8] sm:$0xff] %vm553, %v500
      %576 = vst.msk [vmem:[%s217 + $0xb0] sm:$0xff] %vm553, %v502
      %577 = vst.msk [vmem:[%s217 + $0xb8] sm:$0xff] %vm553, %v504
      %578 = vst.msk [vmem:[%s217 + $0xc0] sm:$0xff] %vm553, %v506
      %579 = vst.msk [vmem:[%s217 + $0xc8] sm:$0xff] %vm553, %v508
      %580 = vst.msk [vmem:[%s217 + $0xd0] sm:$0xff] %vm553, %v510
      %581 = vst.msk [vmem:[%s217 + $0xd8] sm:$0xff] %vm553, %v512
      %582 = vst.msk [vmem:[%s217 + $0xe0] sm:$0xff] %vm553, %v514
      %583 = vst.msk [vmem:[%s217 + $0xe8] sm:$0xff] %vm553, %v516
      %584 = vst.msk [vmem:[%s217 + $0xf0] sm:$0xff] %vm553, %v518
      %585 = vst.msk [vmem:[%s217 + $0xf8] sm:$0xff] %vm553, %v520
      %p586 = scmp.lt.s32.totalorder %s15, 1
      %s587 = scalar_select %p586, %s15, 1
      %s588 = smul.addr %s587, 32
      %s589 = smul.addr %s588, 8
      %s590 = scalar_lea.vmem %s4, %s589
      // Predicated region
      $region37: #{skip_connection_block_innermost.3} parent=35 // pred_check
        %p591 = pneg %p127
      $region38: #{skip_connection_block_innermost.3} parent=35 // pred_check_branch
        %593 = sbr.rel (%p591) target = $region40
      $region39: #{skip_connection_block_innermost.3} parent=35 // pred_region
        _
      $region40: #{skip_connection_block_innermost.3} parent=35 // pred_fallthru
        _
    $region36: #{skip_connection_block_innermost.3} parent=5 // pred_fallthru
      _
    %p594 = scmp.le.s32.totalorder 2, %s10
    // Predicated region
    $region41: #{skip_connection_block_innermost.3} parent=5 // pred_check
      %p595 = pneg %p594
    $region42: #{skip_connection_block_innermost.3} parent=5 // pred_check_branch
      %597 = sbr.rel (%p595) target = $region44
    $region43: #{skip_connection_block_innermost.3} parent=5 // pred_region
      %s598 = ssub.s32 %s10, 2
      // Predicated region
      $region45: #{skip_connection_block_innermost.3} parent=43 // pred_check
        %p599 = pneg %p133
      $region46: #{skip_connection_block_innermost.3} parent=43 // pred_check_branch
        %601 = sbr.rel (%p599) target = $region48
      $region47: #{skip_connection_block_innermost.3} parent=43 // pred_region
        %p602 = scmp.lt.s32.totalorder %s16, 1
        %s603 = scalar_select %p602, %s16, 1
        %s604 = smul.addr %s603, 32
        %s605 = smul.addr %s604, 8
        %s606 = scalar_lea.vmem %s4, %s605
      $region48: #{skip_connection_block_innermost.3} parent=43 // pred_fallthru
        _
    $region44: #{skip_connection_block_innermost.3} parent=5 // pred_fallthru
      _
  $region6: #{skip_connection_block_innermost.3} parent=0 // loop_footer
    %s14 = sadd.s32 1, %s10
  $region7: #{skip_connection_block_innermost.3} parent=0 // loop_footer_branch
    %9 = sbr.rel target = $region3
  $region8: #{skip_connection_block_innermost.3} parent=0 // loop_exit
    _

// kernel: skip_connection_block_innermost.2
$region0: #{skip_connection_block_innermost.2}
  #allocation0 [shape = 'u32[]', space=smem, size = 0x4, offset = 0x4, fixed_abs, tag = 'smem constant byte address 0x4 - core index']
  #allocation1 [shape = 'u32[144,128]{1,0:T(1,128)}', space=vmem, size = 0x12000, scoped, tag = 'internal scratch']
  #allocation2 [shape = 'bf16[1,18,18,4]{3,2,1,0:T(8,128)(2,1)}', space=vmem, size = 0x1b000, scoped, tag = 'scratch operand']
  #allocation3 [shape = 'bf16[1,18,18,8]{3,2,1,0:T(8,128)(2,1)}', space=vmem, size = 0x1b000, scoped, tag = 'scratch operand']
  %s0 = inlined_call_operand.vmem [shape: f32[2,16,16,4], index: 0, kind: input, shape index: {}]
  %s1 = inlined_call_operand.vmem [shape: bf16[9,4,8], index: 1, kind: input, shape index: {}]
  %s2 = inlined_call_operand.vmem [shape: bf16[9,8,4], index: 2, kind: input, shape index: {}]
  %s3 = inlined_call_operand.vmem [shape: bf16[2,16,16,4], index: 3, kind: output, shape index: {0}]
  %s4 = inlined_call_operand.vmem [shape: f32[2,2,4], index: 4, kind: output, shape index: {1}]
  %5 = xla_tuple %s3, %s4
  %s6 = sld [smem:[#allocation0]]
  $region53: #{skip_connection_block_innermost.2} parent=0
    _
  %s8 = ssub.s32 1, %s6
  %s9 = scalar_select 0, %s8, %s6
  loop: start=0, step=1, limit=4
  $region2: #{skip_connection_block_innermost.2} parent=0 // loop_pre_header
    _
  $region3: #{skip_connection_block_innermost.2} parent=0 // loop_header
    %s11 = sphi 0, %s15
    %p12 = scmp.ge.s32.totalorder %s11, 4
    %s21 = sphi 0, %s23
    %s24 = sphi 0, %s21
    %s25 = sphi 0, %s24
    %s41 = sphi 0, %s25
    %s45 = sphi 0, %s45
    %s47 = sphi 0, %s45
    %s48 = sphi 0, %s47
    %s62 = sphi 0, %s48
    %s66 = sphi 0, %s66
    %s68 = sphi 0, %s66
    %s69 = sphi 0, %s68
    %s83 = sphi 0, %s69
    %s89 = sphi 0, %s91
    %s92 = sphi 0, %s89
    %s93 = sphi 0, %s92
    %s109 = sphi 0, %s93
    %s115 = sphi 0, %s117
    %s118 = sphi 0, %s115
    %s119 = sphi 0, %s118
    %s135 = sphi 0, %s119
  $region4: #{skip_connection_block_innermost.2} parent=0 // loop_header_branch
    %14 = sbr.rel (%p12) target = $region8
  $region5: #{skip_connection_block_innermost.2} parent=0 // loop_body
    %s16 = ssub.s32 %s11, 1
    %s17 = ssub.s32 %s11, 2
    %s18 = sadd.s32 %s11, 1
    %s19 = ssub.s32 %s11, %s18
    %p20 = scmp.eq.s32.totalorder %s19, 0
    %s22 = sadd.s32 %s21, 1
    %s23 = scalar_select %p20, %s21, %s22
    %p26 = pneg %p20
    %p27 = scmp.eq.s32.totalorder %s11, 1
    %p28 = por %p26, %p27
    %p29 = scmp.ne.s32.totalorder %s21, %s24
    %p30 = scmp.eq.s32.totalorder %s11, 0
    %p31 = por %p29, %p30
    %p32 = scmp.ne.s32.totalorder %s21, %s24
    %p33 = scmp.eq.s32.totalorder %s16, 1
    %p34 = por %p32, %p33
    %p35 = scmp.ne.s32.totalorder %s24, %s25
    %p36 = scmp.eq.s32.totalorder %s16, 0
    %p37 = por %p35, %p36
    %p38 = scmp.ne.s32.totalorder %s24, %s25
    %p39 = scmp.eq.s32.totalorder %s17, 1
    %p40 = por %p38, %p39
    %p42 = scmp.ne.s32.totalorder %s25, %s41
    %p43 = scmp.eq.s32.totalorder %s17, 0
    %p44 = por %p42, %p43
    %s46 = sadd.s32 %s45, 1
    %p49 = scmp.eq.s32.totalorder %s11, 1
    %p50 = scmp.ne.s32.totalorder %s45, %s47
    %p51 = scmp.eq.s32.totalorder %s11, 0
    %p52 = por %p50, %p51
    %p53 = scmp.ne.s32.totalorder %s45, %s47
    %p54 = scmp.eq.s32.totalorder %s16, 1
    %p55 = por %p53, %p54
    %p56 = scmp.ne.s32.totalorder %s47, %s48
    %p57 = scmp.eq.s32.totalorder %s16, 0
    %p58 = por %p56, %p57
    %p59 = scmp.ne.s32.totalorder %s47, %s48
    %p60 = scmp.eq.s32.totalorder %s17, 1
    %p61 = por %p59, %p60
    %p63 = scmp.ne.s32.totalorder %s48, %s62
    %p64 = scmp.eq.s32.totalorder %s17, 0
    %p65 = por %p63, %p64
    %s67 = sadd.s32 %s66, 1
    %p70 = scmp.eq.s32.totalorder %s11, 1
    %p71 = scmp.ne.s32.totalorder %s66, %s68
    %p72 = scmp.eq.s32.totalorder %s11, 0
    %p73 = por %p71, %p72
    %p74 = scmp.ne.s32.totalorder %s66, %s68
    %p75 = scmp.eq.s32.totalorder %s16, 1
    %p76 = por %p74, %p75
    %p77 = scmp.ne.s32.totalorder %s68, %s69
    %p78 = scmp.eq.s32.totalorder %s16, 0
    %p79 = por %p77, %p78
    %p80 = scmp.ne.s32.totalorder %s68, %s69
    %p81 = scmp.eq.s32.totalorder %s17, 1
    %p82 = por %p80, %p81
    %p84 = scmp.ne.s32.totalorder %s69, %s83
    %p85 = scmp.eq.s32.totalorder %s17, 0
    %p86 = por %p84, %p85
    %s87 = ssub.s32 %s11, %s18
    %p88 = scmp.eq.s32.totalorder %s87, 0
    %s90 = sadd.s32 %s89, 1
    %s91 = scalar_select %p88, %s89, %s90
    %p94 = pneg %p88
    %p95 = scmp.eq.s32.totalorder %s11, 1
    %p96 = por %p94, %p95
    %p97 = scmp.ne.s32.totalorder %s89, %s92
    %p98 = scmp.eq.s32.totalorder %s11, 0
    %p99 = por %p97, %p98
    %p100 = scmp.ne.s32.totalorder %s89, %s92
    %p101 = scmp.eq.s32.totalorder %s16, 1
    %p102 = por %p100, %p101
    %p103 = scmp.ne.s32.totalorder %s92, %s93
    %p104 = scmp.eq.s32.totalorder %s16, 0
    %p105 = por %p103, %p104
    %p106 = scmp.ne.s32.totalorder %s92, %s93
    %p107 = scmp.eq.s32.totalorder %s17, 1
    %p108 = por %p106, %p107
    %p110 = scmp.ne.s32.totalorder %s93, %s109
    %p111 = scmp.eq.s32.totalorder %s17, 0
    %p112 = por %p110, %p111
    %s113 = ssub.s32 %s11, %s18
    %p114 = scmp.eq.s32.totalorder %s113, 0
    %s116 = sadd.s32 %s115, 1
    %s117 = scalar_select %p114, %s115, %s116
    %p120 = pneg %p114
    %p121 = scmp.eq.s32.totalorder %s11, 1
    %p122 = por %p120, %p121
    %p123 = scmp.ne.s32.totalorder %s115, %s118
    %p124 = scmp.eq.s32.totalorder %s11, 0
    %p125 = por %p123, %p124
    %p126 = scmp.ne.s32.totalorder %s115, %s118
    %p127 = scmp.eq.s32.totalorder %s16, 1
    %p128 = por %p126, %p127
    %p129 = scmp.ne.s32.totalorder %s118, %s119
    %p130 = scmp.eq.s32.totalorder %s16, 0
    %p131 = por %p129, %p130
    %p132 = scmp.ne.s32.totalorder %s118, %s119
    %p133 = scmp.eq.s32.totalorder %s17, 1
    %p134 = por %p132, %p133
    %p136 = scmp.ne.s32.totalorder %s119, %s135
    %p137 = scmp.eq.s32.totalorder %s17, 0
    %p138 = por %p136, %p137
    %p139 = scmp.le.s32.totalorder 1, %s11
    %p140 = scmp.lt.s32.totalorder %s11, 3
    %p141 = pnand %p139, %p140
    %p142 = pneg %p141
    // Predicated region
    $region9: #{skip_connection_block_innermost.2} parent=5 // pred_check
      _
    $region10: #{skip_connection_block_innermost.2} parent=5 // pred_check_branch
      %144 = sbr.rel (%p141) target = $region12
    $region11: #{skip_connection_block_innermost.2} parent=5 // pred_region
      %s145 = ssub.s32 %s11, 1
      // Predicated region
      $region13: #{skip_connection_block_innermost.2} parent=11 // pred_check
        %p146 = pneg %p58
      $region14: #{skip_connection_block_innermost.2} parent=11 // pred_check_branch
        %148 = sbr.rel (%p146) target = $region16
      $region15: #{skip_connection_block_innermost.2} parent=11 // pred_region
        _
      $region16: #{skip_connection_block_innermost.2} parent=11 // pred_fallthru
        _
      // Predicated region
      $region17: #{skip_connection_block_innermost.2} parent=11 // pred_check
        %p149 = pneg %p79
      $region18: #{skip_connection_block_innermost.2} parent=11 // pred_check_branch
        %151 = sbr.rel (%p149) target = $region20
      $region19: #{skip_connection_block_innermost.2} parent=11 // pred_region
        _
      $region20: #{skip_connection_block_innermost.2} parent=11 // pred_fallthru
        _
    $region12: #{skip_connection_block_innermost.2} parent=5 // pred_fallthru
      _
    %p152 = scmp.lt.s32.totalorder %s11, 2
    // Predicated region
    $region21: #{skip_connection_block_innermost.2} parent=5 // pred_check
      %p153 = pneg %p152
    $region22: #{skip_connection_block_innermost.2} parent=5 // pred_check_branch
      %155 = sbr.rel (%p153) target = $region24
    $region23: #{skip_connection_block_innermost.2} parent=5 // pred_region
      // Predicated region
      $region25: #{skip_connection_block_innermost.2} parent=23 // pred_check
        %p156 = pneg %p31
      $region26: #{skip_connection_block_innermost.2} parent=23 // pred_check_branch
        %158 = sbr.rel (%p156) target = $region28
      $region27: #{skip_connection_block_innermost.2} parent=23 // pred_region
        %p159 = scmp.lt.s32.totalorder %s11, 1
        %s160 = scalar_select %p159, %s11, 1
        %s161 = smul.addr %s160, 32
        %s162 = smul.addr %s161, 8
        %s163 = scalar_lea.vmem %s0, %s162
      $region28: #{skip_connection_block_innermost.2} parent=23 // pred_fallthru
        _
    $region24: #{skip_connection_block_innermost.2} parent=5 // pred_fallthru
      _
    %p164 = scmp.le.s32.totalorder 1, %s11
    %p165 = scmp.lt.s32.totalorder %s11, 3
    %p166 = pnand %p164, %p165
    %p167 = pneg %p166
    // Predicated region
    $region29: #{skip_connection_block_innermost.2} parent=5 // pred_check
      _
    $region30: #{skip_connection_block_innermost.2} parent=5 // pred_check_branch
      %169 = sbr.rel (%p166) target = $region32
    $region31: #{skip_connection_block_innermost.2} parent=5 // pred_region
      %s170 = ssub.s32 %s11, 1
      %p171 = scmp.lt.s32.totalorder %s16, 1
      %s172 = scalar_select %p171, %s16, 1
      %s173 = smul.addr %s172, 32
      %s174 = smul.addr %s173, 8
      %s175 = scalar_lea.vmem %s0, %s174
      %p176 = pneg %p37
      %p177 = pneg %p34
      %p178 = pneg %p58
      %p179 = pneg %p55
      %p180 = pneg %p79
      %p181 = pneg %p76
      %p182 = pneg %p105
      %p183 = pneg %p102
      %p184 = scmp.lt.s32.totalorder %s16, 1
      %s185 = scalar_select %p184, %s16, 1
      %s186 = smul.addr %s185, 32
      %s187 = smul.addr %s186, 4
      %s188 = scalar_lea.vmem %s3, %s187
      %p189 = pneg %p131
      %p190 = pneg %p128
      %p191 = scmp.lt.s32.totalorder %s16, 1
      %s192 = scalar_select %p191, %s16, 1
      %s193 = smul.addr %s192, 2
      %s194 = scalar_lea.vmem %s4, %s193
      %p195 = scmp.lt.s32.totalorder %s16, 1
      %s196 = scalar_select %p195, %s16, 1
      %s197 = smul.addr %s196, 32
      %s198 = smul.addr %s197, 8
      %s199 = scalar_lea.vmem %s0, %s198
      %p200 = scmp.lt.s32.totalorder %s16, 1
      %s201 = scalar_select %p200, %s16, 1
      %s202 = smul.addr %s201, 32
      %s203 = smul.addr %s202, 4
      %s204 = scalar_lea.vmem %s3, %s203
      %p205 = scmp.lt.s32.totalorder %s16, 1
      %s206 = scalar_select %p205, %s16, 1
      %s207 = smul.addr %s206, 2
      %s208 = scalar_lea.vmem %s4, %s207
      %v210 = vld [vmem:[%s199] sm:$0xff]
      %v211 = vld [vmem:[%s199 + $0x8] sm:$0xff]
      %v212 = vld [vmem:[%s199 + $0x10] sm:$0xff]
      %v213 = vld [vmem:[%s199 + $0x18] sm:$0xff]
      %v214 = vld [vmem:[%s199 + $0x20] sm:$0xff]
      %v215 = vld [vmem:[%s199 + $0x28] sm:$0xff]
      %v216 = vld [vmem:[%s199 + $0x30] sm:$0xff]
      %v217 = vld [vmem:[%s199 + $0x38] sm:$0xff]
      %v218 = vld [vmem:[%s199 + $0x40] sm:$0xff]
      %v219 = vld [vmem:[%s199 + $0x48] sm:$0xff]
      %v220 = vld [vmem:[%s199 + $0x50] sm:$0xff]
      %v221 = vld [vmem:[%s199 + $0x58] sm:$0xff]
      %v222 = vld [vmem:[%s199 + $0x60] sm:$0xff]
      %v223 = vld [vmem:[%s199 + $0x68] sm:$0xff]
      %v224 = vld [vmem:[%s199 + $0x70] sm:$0xff]
      %v225 = vld [vmem:[%s199 + $0x78] sm:$0xff]
      %v226 = vld [vmem:[%s199 + $0x80] sm:$0xff]
      %v227 = vld [vmem:[%s199 + $0x88] sm:$0xff]
      %v228 = vld [vmem:[%s199 + $0x90] sm:$0xff]
      %v229 = vld [vmem:[%s199 + $0x98] sm:$0xff]
      %v230 = vld [vmem:[%s199 + $0xa0] sm:$0xff]
      %v231 = vld [vmem:[%s199 + $0xa8] sm:$0xff]
      %v232 = vld [vmem:[%s199 + $0xb0] sm:$0xff]
      %v233 = vld [vmem:[%s199 + $0xb8] sm:$0xff]
      %v234 = vld [vmem:[%s199 + $0xc0] sm:$0xff]
      %v235 = vld [vmem:[%s199 + $0xc8] sm:$0xff]
      %v236 = vld [vmem:[%s199 + $0xd0] sm:$0xff]
      %v237 = vld [vmem:[%s199 + $0xd8] sm:$0xff]
      %v238 = vld [vmem:[%s199 + $0xe0] sm:$0xff]
      %v239 = vld [vmem:[%s199 + $0xe8] sm:$0xff]
      %v240 = vld [vmem:[%s199 + $0xf0] sm:$0xff]
      %v241 = vld [vmem:[%s199 + $0xf8] sm:$0xff]
      %vm242 = vcmp.gt.f32.partialorder %v210, 0.0
      %vm243 = vcmp.gt.f32.partialorder %v211, 0.0
      %vm244 = vcmp.gt.f32.partialorder %v212, 0.0
      %vm245 = vcmp.gt.f32.partialorder %v213, 0.0
      %vm246 = vcmp.gt.f32.partialorder %v214, 0.0
      %vm247 = vcmp.gt.f32.partialorder %v215, 0.0
      %vm248 = vcmp.gt.f32.partialorder %v216, 0.0
      %vm249 = vcmp.gt.f32.partialorder %v217, 0.0
      %vm250 = vcmp.gt.f32.partialorder %v218, 0.0
      %vm251 = vcmp.gt.f32.partialorder %v219, 0.0
      %vm252 = vcmp.gt.f32.partialorder %v220, 0.0
      %vm253 = vcmp.gt.f32.partialorder %v221, 0.0
      %vm254 = vcmp.gt.f32.partialorder %v222, 0.0
      %vm255 = vcmp.gt.f32.partialorder %v223, 0.0
      %vm256 = vcmp.gt.f32.partialorder %v224, 0.0
      %vm257 = vcmp.gt.f32.partialorder %v225, 0.0
      %vm258 = vcmp.gt.f32.partialorder %v226, 0.0
      %vm259 = vcmp.gt.f32.partialorder %v227, 0.0
      %vm260 = vcmp.gt.f32.partialorder %v228, 0.0
      %vm261 = vcmp.gt.f32.partialorder %v229, 0.0
      %vm262 = vcmp.gt.f32.partialorder %v230, 0.0
      %vm263 = vcmp.gt.f32.partialorder %v231, 0.0
      %vm264 = vcmp.gt.f32.partialorder %v232, 0.0
      %vm265 = vcmp.gt.f32.partialorder %v233, 0.0
      %vm266 = vcmp.gt.f32.partialorder %v234, 0.0
      %vm267 = vcmp.gt.f32.partialorder %v235, 0.0
      %vm268 = vcmp.gt.f32.partialorder %v236, 0.0
      %vm269 = vcmp.gt.f32.partialorder %v237, 0.0
      %vm270 = vcmp.gt.f32.partialorder %v238, 0.0
      %vm271 = vcmp.gt.f32.partialorder %v239, 0.0
      %vm272 = vcmp.gt.f32.partialorder %v240, 0.0
      %vm273 = vcmp.gt.f32.partialorder %v241, 0.0
      %v274 = vmul.f32 %v210, 0.2
      %v275 = vmul.f32 %v211, 0.2
      %v276 = vmul.f32 %v212, 0.2
      %v277 = vmul.f32 %v213, 0.2
      %v278 = vmul.f32 %v214, 0.2
      %v279 = vmul.f32 %v215, 0.2
      %v280 = vmul.f32 %v216, 0.2
      %v281 = vmul.f32 %v217, 0.2
      %v282 = vmul.f32 %v218, 0.2
      %v283 = vmul.f32 %v219, 0.2
      %v284 = vmul.f32 %v220, 0.2
      %v285 = vmul.f32 %v221, 0.2
      %v286 = vmul.f32 %v222, 0.2
      %v287 = vmul.f32 %v223, 0.2
      %v288 = vmul.f32 %v224, 0.2
      %v289 = vmul.f32 %v225, 0.2
      %v290 = vmul.f32 %v226, 0.2
      %v291 = vmul.f32 %v227, 0.2
      %v292 = vmul.f32 %v228, 0.2
      %v293 = vmul.f32 %v229, 0.2
      %v294 = vmul.f32 %v230, 0.2
      %v295 = vmul.f32 %v231, 0.2
      %v296 = vmul.f32 %v232, 0.2
      %v297 = vmul.f32 %v233, 0.2
      %v298 = vmul.f32 %v234, 0.2
      %v299 = vmul.f32 %v235, 0.2
      %v300 = vmul.f32 %v236, 0.2
      %v301 = vmul.f32 %v237, 0.2
      %v302 = vmul.f32 %v238, 0.2
      %v303 = vmul.f32 %v239, 0.2
      %v304 = vmul.f32 %v240, 0.2
      %v305 = vmul.f32 %v241, 0.2
      %v306 = vsel %vm242, %v210, %v274
      %v307 = vsel %vm243, %v211, %v275
      %v308 = vsel %vm244, %v212, %v276
      %v309 = vsel %vm245, %v213, %v277
      %v310 = vsel %vm246, %v214, %v278
      %v311 = vsel %vm247, %v215, %v279
      %v312 = vsel %vm248, %v216, %v280
      %v313 = vsel %vm249, %v217, %v281
      %v314 = vsel %vm250, %v218, %v282
      %v315 = vsel %vm251, %v219, %v283
      %v316 = vsel %vm252, %v220, %v284
      %v317 = vsel %vm253, %v221, %v285
      %v318 = vsel %vm254, %v222, %v286
      %v319 = vsel %vm255, %v223, %v287
      %v320 = vsel %vm256, %v224, %v288
      %v321 = vsel %vm257, %v225, %v289
      %v322 = vsel %vm258, %v226, %v290
      %v323 = vsel %vm259, %v227, %v291
      %v324 = vsel %vm260, %v228, %v292
      %v325 = vsel %vm261, %v229, %v293
      %v326 = vsel %vm262, %v230, %v294
      %v327 = vsel %vm263, %v231, %v295
      %v328 = vsel %vm264, %v232, %v296
      %v329 = vsel %vm265, %v233, %v297
      %v330 = vsel %vm266, %v234, %v298
      %v331 = vsel %vm267, %v235, %v299
      %v332 = vsel %vm268, %v236, %v300
      %v333 = vsel %vm269, %v237, %v301
      %v334 = vsel %vm270, %v238, %v302
      %v335 = vsel %vm271, %v239, %v303
      %v336 = vsel %vm272, %v240, %v304
      %v337 = vsel %vm273, %v241, %v305
      %v338 = vpack.c.bf16 %v307, %v306
      %v339 = vpack.c.bf16 %v309, %v308
      %v340 = vpack.c.bf16 %v311, %v310
      %v341 = vpack.c.bf16 %v313, %v312
      %v342 = vpack.c.bf16 %v315, %v314
      %v343 = vpack.c.bf16 %v317, %v316
      %v344 = vpack.c.bf16 %v319, %v318
      %v345 = vpack.c.bf16 %v321, %v320
      %v346 = vpack.c.bf16 %v323, %v322
      %v347 = vpack.c.bf16 %v325, %v324
      %v348 = vpack.c.bf16 %v327, %v326
      %v349 = vpack.c.bf16 %v329, %v328
      %v350 = vpack.c.bf16 %v331, %v330
      %v351 = vpack.c.bf16 %v333, %v332
      %v352 = vpack.c.bf16 %v335, %v334
      %v353 = vpack.c.bf16 %v337, %v336
      %vm354 = vcmask 27648
      %355 = vst.msk [vmem:[#allocation2] sm:$0xf] %vm354, 0
      %356 = vst.msk [vmem:[#allocation2 + $0x4] sm:$0xf] %vm354, 0
      %vm357 = vcmask 24576
      %358 = vst.msk [vmem:[#allocation2 + $0x8] sm:$0x1] %vm357, 0
      %s359 = scalar_lea.vmem [#allocation2], 204
      %360 = vst.msk [vmem:[%s359] sm:$0xf] %vm354, 0
      %361 = vst.msk [vmem:[%s359 + $0x4] sm:$0xf] %vm354, 0
      %362 = vst.msk [vmem:[%s359 + $0x8] sm:$0x1] %vm357, 0
      %s363 = scalar_lea.vmem [#allocation2], 12
      %vm364 = vcmask 24576
      %vm365 = vsmask.f32 256
      %vm366 = vmand %vm364, %vm365
      %v367 = vld [vmem:[%s363] sm:$0x1]
      %v368 = vsel %vm366, 0, %v367
      %369 = vst [vmem:[%s363] sm:$0x1] %v368
      %v370 = vld [vmem:[%s363 + $0xc] sm:$0x1]
      %v371 = vsel %vm366, 0, %v370
      %372 = vst [vmem:[%s363 + $0xc] sm:$0x1] %v371
      %v373 = vld [vmem:[%s363 + $0x18] sm:$0x1]
      %v374 = vsel %vm366, 0, %v373
      %375 = vst [vmem:[%s363 + $0x18] sm:$0x1] %v374
      %v376 = vld [vmem:[%s363 + $0x24] sm:$0x1]
      %v377 = vsel %vm366, 0, %v376
      %378 = vst [vmem:[%s363 + $0x24] sm:$0x1] %v377
      %v379 = vld [vmem:[%s363 + $0x30] sm:$0x1]
      %v380 = vsel %vm366, 0, %v379
      %381 = vst [vmem:[%s363 + $0x30] sm:$0x1] %v380
      %v382 = vld [vmem:[%s363 + $0x3c] sm:$0x1]
      %v383 = vsel %vm366, 0, %v382
      %384 = vst [vmem:[%s363 + $0x3c] sm:$0x1] %v383
      %v385 = vld [vmem:[%s363 + $0x48] sm:$0x1]
      %v386 = vsel %vm366, 0, %v385
      %387 = vst [vmem:[%s363 + $0x48] sm:$0x1] %v386
      %v388 = vld [vmem:[%s363 + $0x54] sm:$0x1]
      %v389 = vsel %vm366, 0, %v388
      %390 = vst [vmem:[%s363 + $0x54] sm:$0x1] %v389
      %v391 = vld [vmem:[%s363 + $0x60] sm:$0x1]
      %v392 = vsel %vm366, 0, %v391
      %393 = vst [vmem:[%s363 + $0x60] sm:$0x1] %v392
      %v394 = vld [vmem:[%s363 + $0x6c] sm:$0x1]
      %v395 = vsel %vm366, 0, %v394
      %396 = vst [vmem:[%s363 + $0x6c] sm:$0x1] %v395
      %v397 = vld [vmem:[%s363 + $0x78] sm:$0x1]
      %v398 = vsel %vm366, 0, %v397
      %399 = vst [vmem:[%s363 + $0x78] sm:$0x1] %v398
      %v400 = vld [vmem:[%s363 + $0x84] sm:$0x1]
      %v401 = vsel %vm366, 0, %v400
      %402 = vst [vmem:[%s363 + $0x84] sm:$0x1] %v401
      %v403 = vld [vmem:[%s363 + $0x90] sm:$0x1]
      %v404 = vsel %vm366, 0, %v403
      %405 = vst [vmem:[%s363 + $0x90] sm:$0x1] %v404
      %v406 = vld [vmem:[%s363 + $0x9c] sm:$0x1]
      %v407 = vsel %vm366, 0, %v406
      %408 = vst [vmem:[%s363 + $0x9c] sm:$0x1] %v407
      %v409 = vld [vmem:[%s363 + $0xa8] sm:$0x1]
      %v410 = vsel %vm366, 0, %v409
      %411 = vst [vmem:[%s363 + $0xa8] sm:$0x1] %v410
      %v412 = vld [vmem:[%s363 + $0xb4] sm:$0x1]
      %v413 = vsel %vm366, 0, %v412
      %414 = vst [vmem:[%s363 + $0xb4] sm:$0x1] %v413
      %vm415 = vsmask.f32 7938
      %vm416 = vmand %vm364, %vm415
      %v417 = vld [vmem:[%s363 + $0x8] sm:$0x1]
      %v418 = vsel %vm416, 0, %v417
      %419 = vst [vmem:[%s363 + $0x8] sm:$0x1] %v418
      %v420 = vld [vmem:[%s363 + $0x14] sm:$0x1]
      %v421 = vsel %vm416, 0, %v420
      %422 = vst [vmem:[%s363 + $0x14] sm:$0x1] %v421
      %v423 = vld [vmem:[%s363 + $0x20] sm:$0x1]
      %v424 = vsel %vm416, 0, %v423
      %425 = vst [vmem:[%s363 + $0x20] sm:$0x1] %v424
      %v426 = vld [vmem:[%s363 + $0x2c] sm:$0x1]
      %v427 = vsel %vm416, 0, %v426
      %428 = vst [vmem:[%s363 + $0x2c] sm:$0x1] %v427
      %v429 = vld [vmem:[%s363 + $0x38] sm:$0x1]
      %v430 = vsel %vm416, 0, %v429
      %431 = vst [vmem:[%s363 + $0x38] sm:$0x1] %v430
      %v432 = vld [vmem:[%s363 + $0x44] sm:$0x1]
      %v433 = vsel %vm416, 0, %v432
      %434 = vst [vmem:[%s363 + $0x44] sm:$0x1] %v433
      %v435 = vld [vmem:[%s363 + $0x50] sm:$0x1]
      %v436 = vsel %vm416, 0, %v435
      %437 = vst [vmem:[%s363 + $0x50] sm:$0x1] %v436
      %v438 = vld [vmem:[%s363 + $0x5c] sm:$0x1]
      %v439 = vsel %vm416, 0, %v438
      %440 = vst [vmem:[%s363 + $0x5c] sm:$0x1] %v439
      %v441 = vld [vmem:[%s363 + $0x68] sm:$0x1]
      %v442 = vsel %vm416, 0, %v441
      %443 = vst [vmem:[%s363 + $0x68] sm:$0x1] %v442
      %v444 = vld [vmem:[%s363 + $0x74] sm:$0x1]
      %v445 = vsel %vm416, 0, %v444
      %446 = vst [vmem:[%s363 + $0x74] sm:$0x1] %v445
      %v447 = vld [vmem:[%s363 + $0x80] sm:$0x1]
      %v448 = vsel %vm416, 0, %v447
      %449 = vst [vmem:[%s363 + $0x80] sm:$0x1] %v448
      %v450 = vld [vmem:[%s363 + $0x8c] sm:$0x1]
      %v451 = vsel %vm416, 0, %v450
      %452 = vst [vmem:[%s363 + $0x8c] sm:$0x1] %v451
      %v453 = vld [vmem:[%s363 + $0x98] sm:$0x1]
      %v454 = vsel %vm416, 0, %v453
      %455 = vst [vmem:[%s363 + $0x98] sm:$0x1] %v454
      %v456 = vld [vmem:[%s363 + $0xa4] sm:$0x1]
      %v457 = vsel %vm416, 0, %v456
      %458 = vst [vmem:[%s363 + $0xa4] sm:$0x1] %v457
      %v459 = vld [vmem:[%s363 + $0xb0] sm:$0x1]
      %v460 = vsel %vm416, 0, %v459
      %461 = vst [vmem:[%s363 + $0xb0] sm:$0x1] %v460
      %v462 = vld [vmem:[%s363 + $0xbc] sm:$0x1]
      %v463 = vsel %vm416, 0, %v462
      %464 = vst [vmem:[%s363 + $0xbc] sm:$0x1] %v463
      %v481 = vunpack.c.l.b16 %v338
      %v482 = vunpack.c.h.b16 %v338
      %v483 = vunpack.c.l.b16 %v339
      %v484 = vunpack.c.h.b16 %v339
      %v485 = vunpack.c.l.b16 %v340
      %v486 = vunpack.c.h.b16 %v340
      %v487 = vunpack.c.l.b16 %v341
      %v488 = vunpack.c.h.b16 %v341
      %v489 = vunpack.c.l.b16 %v342
      %v490 = vunpack.c.h.b16 %v342
      %v491 = vunpack.c.l.b16 %v343
      %v492 = vunpack.c.h.b16 %v343
      %v493 = vunpack.c.l.b16 %v344
      %v494 = vunpack.c.h.b16 %v344
      %v495 = vunpack.c.l.b16 %v345
      %v496 = vunpack.c.h.b16 %v345
      %v497 = vunpack.c.l.b16 %v346
      %v498 = vunpack.c.h.b16 %v346
      %v499 = vunpack.c.l.b16 %v347
      %v500 = vunpack.c.h.b16 %v347
      %v501 = vunpack.c.l.b16 %v348
      %v502 = vunpack.c.h.b16 %v348
      %v503 = vunpack.c.l.b16 %v349
      %v504 = vunpack.c.h.b16 %v349
      %v505 = vunpack.c.l.b16 %v350
      %v506 = vunpack.c.h.b16 %v350
      %v507 = vunpack.c.l.b16 %v351
      %v508 = vunpack.c.h.b16 %v351
      %v509 = vunpack.c.l.b16 %v352
      %v510 = vunpack.c.h.b16 %v352
      %v511 = vunpack.c.l.b16 %v353
      %v512 = vunpack.c.h.b16 %v353
      %v513 = vpack.c.b16 %v481, %v481
      %v514 = vpack.c.b16 %v482, %v482
      %v515 = vpack.c.b16 %v483, %v483
      %v516 = vpack.c.b16 %v484, %v484
      %v517 = vpack.c.b16 %v485, %v485
      %v518 = vpack.c.b16 %v486, %v486
      %v519 = vpack.c.b16 %v487, %v487
      %v520 = vpack.c.b16 %v488, %v488
      %v521 = vpack.c.b16 %v489, %v489
      %v522 = vpack.c.b16 %v490, %v490
      %v523 = vpack.c.b16 %v491, %v491
      %v524 = vpack.c.b16 %v492, %v492
      %v525 = vpack.c.b16 %v493, %v493
      %v526 = vpack.c.b16 %v494, %v494
      %v527 = vpack.c.b16 %v495, %v495
      %v528 = vpack.c.b16 %v496, %v496
      %v529 = vpack.c.b16 %v497, %v497
      %v530 = vpack.c.b16 %v498, %v498
      %v531 = vpack.c.b16 %v499, %v499
      %v532 = vpack.c.b16 %v500, %v500
      %v533 = vpack.c.b16 %v501, %v501
      %v534 = vpack.c.b16 %v502, %v502
      %v535 = vpack.c.b16 %v503, %v503
      %v536 = vpack.c.b16 %v504, %v504
      %v537 = vpack.c.b16 %v505, %v505
      %v538 = vpack.c.b16 %v506, %v506
      %v539 = vpack.c.b16 %v507, %v507
      %v540 = vpack.c.b16 %v508, %v508
      %v541 = vpack.c.b16 %v509, %v509
      %v542 = vpack.c.b16 %v510, %v510
      %v543 = vpack.c.b16 %v511, %v511
      %v544 = vpack.c.b16 %v512, %v512
      %vm545 = vsmask.f32 4368
      %vm546 = vmor %vm365, %vm545
      %v548 = vshrl.u32 %v513, 16
      %v550 = vrot.slane %v548, 7
      %v551 = vshll.u32 %v513, 16
      %v553 = vor.u32 %v550, %v551
      %v554 = vrot.slane %v550, 4
      %v556 = vshrl.u32 %v514, 16
      %v558 = vrot.slane %v556, 7
      %v559 = vshll.u32 %v514, 16
      %v561 = vor.u32 %v558, %v559
      %v562 = vsel %vm546, %v554, %v561
      %v563 = vrot.slane %v558, 4
      %v565 = vshrl.u32 %v515, 16
      %v567 = vrot.slane %v565, 7
      %v568 = vshll.u32 %v515, 16
      %v570 = vor.u32 %v567, %v568
      %v571 = vrot.slane %v567, 4
      %v573 = vshrl.u32 %v516, 16
      %v575 = vrot.slane %v573, 7
      %v576 = vshll.u32 %v516, 16
      %v578 = vor.u32 %v575, %v576
      %v579 = vsel %vm546, %v571, %v578
      %v580 = vrot.slane %v575, 4
      %v582 = vshrl.u32 %v517, 16
      %v584 = vrot.slane %v582, 7
      %v585 = vshll.u32 %v517, 16
      %v587 = vor.u32 %v584, %v585
      %v588 = vrot.slane %v584, 4
      %v590 = vshrl.u32 %v518, 16
      %v592 = vrot.slane %v590, 7
      %v593 = vshll.u32 %v518, 16
      %v595 = vor.u32 %v592, %v593
      %v596 = vsel %vm546, %v588, %v595
      %v597 = vrot.slane %v592, 4
      %v599 = vshrl.u32 %v519, 16
      %v601 = vrot.slane %v599, 7
      %v602 = vshll.u32 %v519, 16
      %v604 = vor.u32 %v601, %v602
      %v605 = vrot.slane %v601, 4
      %v607 = vshrl.u32 %v520, 16
      %v609 = vrot.slane %v607, 7
      %v610 = vshll.u32 %v520, 16
      %v612 = vor.u32 %v609, %v610
      %v613 = vsel %vm546, %v605, %v612
      %v614 = vrot.slane %v609, 4
      %v616 = vshrl.u32 %v521, 16
      %v618 = vrot.slane %v616, 7
      %v619 = vshll.u32 %v521, 16
      %v621 = vor.u32 %v618, %v619
      %v622 = vrot.slane %v618, 4
      %v624 = vshrl.u32 %v522, 16
      %v626 = vrot.slane %v624, 7
      %v627 = vshll.u32 %v522, 16
      %v629 = vor.u32 %v626, %v627
      %v630 = vsel %vm546, %v622, %v629
      %v631 = vrot.slane %v626, 4
      %v633 = vshrl.u32 %v523, 16
      %v635 = vrot.slane %v633, 7
      %v636 = vshll.u32 %v523, 16
      %v638 = vor.u32 %v635, %v636
      %v639 = vrot.slane %v635, 4
      %v641 = vshrl.u32 %v524, 16
      %v643 = vrot.slane %v641, 7
      %v644 = vshll.u32 %v524, 16
      %v646 = vor.u32 %v643, %v644
      %v647 = vsel %vm546, %v639, %v646
      %v648 = vrot.slane %v643, 4
      %v650 = vshrl.u32 %v525, 16
      %v652 = vrot.slane %v650, 7
      %v653 = vshll.u32 %v525, 16
      %v655 = vor.u32 %v652, %v653
      %v656 = vrot.slane %v652, 4
      %v658 = vshrl.u32 %v526, 16
      %v660 = vrot.slane %v658, 7
      %v661 = vshll.u32 %v526, 16
      %v663 = vor.u32 %v660, %v661
      %v664 = vsel %vm546, %v656, %v663
      %v665 = vrot.slane %v660, 4
      %v667 = vshrl.u32 %v527, 16
      %v669 = vrot.slane %v667, 7
      %v670 = vshll.u32 %v527, 16
      %v672 = vor.u32 %v669, %v670
      %v673 = vrot.slane %v669, 4
      %v675 = vshrl.u32 %v528, 16
      %v677 = vrot.slane %v675, 7
      %v678 = vshll.u32 %v528, 16
      %v680 = vor.u32 %v677, %v678
      %v681 = vsel %vm546, %v673, %v680
      %v682 = vrot.slane %v677, 4
      %v684 = vshrl.u32 %v529, 16
      %v686 = vrot.slane %v684, 7
      %v687 = vshll.u32 %v529, 16
      %v689 = vor.u32 %v686, %v687
      %v690 = vrot.slane %v686, 4
      %v692 = vshrl.u32 %v530, 16
      %v694 = vrot.slane %v692, 7
      %v695 = vshll.u32 %v530, 16
      %v697 = vor.u32 %v694, %v695
      %v698 = vsel %vm546, %v690, %v697
      %v699 = vrot.slane %v694, 4
      %v701 = vshrl.u32 %v531, 16
      %v703 = vrot.slane %v701, 7
      %v704 = vshll.u32 %v531, 16
      %v706 = vor.u32 %v703, %v704
      %v707 = vrot.slane %v703, 4
      %v709 = vshrl.u32 %v532, 16
      %v711 = vrot.slane %v709, 7
      %v712 = vshll.u32 %v532, 16
      %v714 = vor.u32 %v711, %v712
      %v715 = vsel %vm546, %v707, %v714
      %v716 = vrot.slane %v711, 4
      %v718 = vshrl.u32 %v533, 16
      %v720 = vrot.slane %v718, 7
      %v721 = vshll.u32 %v533, 16
      %v723 = vor.u32 %v720, %v721
      %v724 = vrot.slane %v720, 4
      %v726 = vshrl.u32 %v534, 16
      %v728 = vrot.slane %v726, 7
      %v729 = vshll.u32 %v534, 16
      %v731 = vor.u32 %v728, %v729
      %v732 = vsel %vm546, %v724, %v731
      %v733 = vrot.slane %v728, 4
      %v735 = vshrl.u32 %v535, 16
      %v737 = vrot.slane %v735, 7
      %v738 = vshll.u32 %v535, 16
      %v740 = vor.u32 %v737, %v738
      %v741 = vrot.slane %v737, 4
      %v743 = vshrl.u32 %v536, 16
      %v745 = vrot.slane %v743, 7
      %v746 = vshll.u32 %v536, 16
      %v748 = vor.u32 %v745, %v746
      %v749 = vsel %vm546, %v741, %v748
      %v750 = vrot.slane %v745, 4
      %v752 = vshrl.u32 %v537, 16
      %v754 = vrot.slane %v752, 7
      %v755 = vshll.u32 %v537, 16
      %v757 = vor.u32 %v754, %v755
      %v758 = vrot.slane %v754, 4
      %v760 = vshrl.u32 %v538, 16
      %v762 = vrot.slane %v760, 7
      %v763 = vshll.u32 %v538, 16
      %v765 = vor.u32 %v762, %v763
      %v766 = vsel %vm546, %v758, %v765
      %v767 = vrot.slane %v762, 4
      %v769 = vshrl.u32 %v539, 16
      %v771 = vrot.slane %v769, 7
      %v772 = vshll.u32 %v539, 16
      %v774 = vor.u32 %v771, %v772
      %v775 = vrot.slane %v771, 4
      %v777 = vshrl.u32 %v540, 16
      %v779 = vrot.slane %v777, 7
      %v780 = vshll.u32 %v540, 16
      %v782 = vor.u32 %v779, %v780
      %v783 = vsel %vm546, %v775, %v782
      %v784 = vrot.slane %v779, 4
      %v786 = vshrl.u32 %v541, 16
      %v788 = vrot.slane %v786, 7
      %v789 = vshll.u32 %v541, 16
      %v791 = vor.u32 %v788, %v789
      %v792 = vrot.slane %v788, 4
      %v794 = vshrl.u32 %v542, 16
      %v796 = vrot.slane %v794, 7
      %v797 = vshll.u32 %v542, 16
      %v799 = vor.u32 %v796, %v797
      %v800 = vsel %vm546, %v792, %v799
      %v801 = vrot.slane %v796, 4
      %v803 = vshrl.u32 %v543, 16
      %v805 = vrot.slane %v803, 7
      %v806 = vshll.u32 %v543, 16
      %v808 = vor.u32 %v805, %v806
      %v809 = vrot.slane %v805, 4
      %v811 = vshrl.u32 %v544, 16
      %v813 = vrot.slane %v811, 7
      %v814 = vshll.u32 %v544, 16
      %v816 = vor.u32 %v813, %v814
      %v817 = vsel %vm546, %v809, %v816
      %v818 = vrot.slane %v813, 4
      %vm867 = vcmask 27648
      %vm868 = vmand %vm867, %vm415
      %v869 = vld [vmem:[%s363] sm:$0xf]
      %v870 = vsel %vm868, %v553, %v869
      %871 = vst [vmem:[%s363] sm:$0xf] %v870
      %872 = vst.msk [vmem:[%s363 + $0x4] sm:$0xf] %vm354, %v562
      %v873 = vld [vmem:[%s363 + $0x8] sm:$0x1]
      %v874 = vsel %vm366, %v563, %v873
      %875 = vst [vmem:[%s363 + $0x8] sm:$0x1] %v874
      %v876 = vld [vmem:[%s363 + $0xc] sm:$0xf]
      %v877 = vsel %vm868, %v570, %v876
      %878 = vst [vmem:[%s363 + $0xc] sm:$0xf] %v877
      %879 = vst.msk [vmem:[%s363 + $0x10] sm:$0xf] %vm354, %v579
      %v880 = vld [vmem:[%s363 + $0x14] sm:$0x1]
      %v881 = vsel %vm366, %v580, %v880
      %882 = vst [vmem:[%s363 + $0x14] sm:$0x1] %v881
      %v883 = vld [vmem:[%s363 + $0x18] sm:$0xf]
      %v884 = vsel %vm868, %v587, %v883
      %885 = vst [vmem:[%s363 + $0x18] sm:$0xf] %v884
      %886 = vst.msk [vmem:[%s363 + $0x1c] sm:$0xf] %vm354, %v596
      %v887 = vld [vmem:[%s363 + $0x20] sm:$0x1]
      %v888 = vsel %vm366, %v597, %v887
      %889 = vst [vmem:[%s363 + $0x20] sm:$0x1] %v888
      %v890 = vld [vmem:[%s363 + $0x24] sm:$0xf]
      %v891 = vsel %vm868, %v604, %v890
      %892 = vst [vmem:[%s363 + $0x24] sm:$0xf] %v891
      %893 = vst.msk [vmem:[%s363 + $0x28] sm:$0xf] %vm354, %v613
      %v894 = vld [vmem:[%s363 + $0x2c] sm:$0x1]
      %v895 = vsel %vm366, %v614, %v894
      %896 = vst [vmem:[%s363 + $0x2c] sm:$0x1] %v895
      %v897 = vld [vmem:[%s363 + $0x30] sm:$0xf]
      %v898 = vsel %vm868, %v621, %v897
      %899 = vst [vmem:[%s363 + $0x30] sm:$0xf] %v898
      %900 = vst.msk [vmem:[%s363 + $0x34] sm:$0xf] %vm354, %v630
      %v901 = vld [vmem:[%s363 + $0x38] sm:$0x1]
      %v902 = vsel %vm366, %v631, %v901
      %903 = vst [vmem:[%s363 + $0x38] sm:$0x1] %v902
      %v904 = vld [vmem:[%s363 + $0x3c] sm:$0xf]
      %v905 = vsel %vm868, %v638, %v904
      %906 = vst [vmem:[%s363 + $0x3c] sm:$0xf] %v905
      %907 = vst.msk [vmem:[%s363 + $0x40] sm:$0xf] %vm354, %v647
      %v908 = vld [vmem:[%s363 + $0x44] sm:$0x1]
      %v909 = vsel %vm366, %v648, %v908
      %910 = vst [vmem:[%s363 + $0x44] sm:$0x1] %v909
      %v911 = vld [vmem:[%s363 + $0x48] sm:$0xf]
      %v912 = vsel %vm868, %v655, %v911
      %913 = vst [vmem:[%s363 + $0x48] sm:$0xf] %v912
      %914 = vst.msk [vmem:[%s363 + $0x4c] sm:$0xf] %vm354, %v664
      %v915 = vld [vmem:[%s363 + $0x50] sm:$0x1]
      %v916 = vsel %vm366, %v665, %v915
      %917 = vst [vmem:[%s363 + $0x50] sm:$0x1] %v916
      %v918 = vld [vmem:[%s363 + $0x54] sm:$0xf]
      %v919 = vsel %vm868, %v672, %v918
      %920 = vst [vmem:[%s363 + $0x54] sm:$0xf] %v919
      %921 = vst.msk [vmem:[%s363 + $0x58] sm:$0xf] %vm354, %v681
      %v922 = vld [vmem:[%s363 + $0x5c] sm:$0x1]
      %v923 = vsel %vm366, %v682, %v922
      %924 = vst [vmem:[%s363 + $0x5c] sm:$0x1] %v923
      %v925 = vld [vmem:[%s363 + $0x60] sm:$0xf]
      %v926 = vsel %vm868, %v689, %v925
      %927 = vst [vmem:[%s363 + $0x60] sm:$0xf] %v926
      %928 = vst.msk [vmem:[%s363 + $0x64] sm:$0xf] %vm354, %v698
      %v929 = vld [vmem:[%s363 + $0x68] sm:$0x1]
      %v930 = vsel %vm366, %v699, %v929
      %931 = vst [vmem:[%s363 + $0x68] sm:$0x1] %v930
      %v932 = vld [vmem:[%s363 + $0x6c] sm:$0xf]
      %v933 = vsel %vm868, %v706, %v932
      %934 = vst [vmem:[%s363 + $0x6c] sm:$0xf] %v933
      %935 = vst.msk [vmem:[%s363 + $0x70] sm:$0xf] %vm354, %v715
      %v936 = vld [vmem:[%s363 + $0x74] sm:$0x1]
      %v937 = vsel %vm366, %v716, %v936
      %938 = vst [vmem:[%s363 + $0x74] sm:$0x1] %v937
      %v939 = vld [vmem:[%s363 + $0x78] sm:$0xf]
      %v940 = vsel %vm868, %v723, %v939
      %941 = vst [vmem:[%s363 + $0x78] sm:$0xf] %v940
      %942 = vst.msk [vmem:[%s363 + $0x7c] sm:$0xf] %vm354, %v732
      %v943 = vld [vmem:[%s363 + $0x80] sm:$0x1]
      %v944 = vsel %vm366, %v733, %v943
      %945 = vst [vmem:[%s363 + $0x80] sm:$0x1] %v944
      %v946 = vld [vmem:[%s363 + $0x84] sm:$0xf]
      %v947 = vsel %vm868, %v740, %v946
      %948 = vst [vmem:[%s363 + $0x84] sm:$0xf] %v947
      %949 = vst.msk [vmem:[%s363 + $0x88] sm:$0xf] %vm354, %v749
      %v950 = vld [vmem:[%s363 + $0x8c] sm:$0x1]
      %v951 = vsel %vm366, %v750, %v950
      %952 = vst [vmem:[%s363 + $0x8c] sm:$0x1] %v951
      %v953 = vld [vmem:[%s363 + $0x90] sm:$0xf]
      %v954 = vsel %vm868, %v757, %v953
      %955 = vst [vmem:[%s363 + $0x90] sm:$0xf] %v954
      %956 = vst.msk [vmem:[%s363 + $0x94] sm:$0xf] %vm354, %v766
      %v957 = vld [vmem:[%s363 + $0x98] sm:$0x1]
      %v958 = vsel %vm366, %v767, %v957
      %959 = vst [vmem:[%s363 + $0x98] sm:$0x1] %v958
      %v960 = vld [vmem:[%s363 + $0x9c] sm:$0xf]
      %v961 = vsel %vm868, %v774, %v960
      %962 = vst [vmem:[%s363 + $0x9c] sm:$0xf] %v961
      %963 = vst.msk [vmem:[%s363 + $0xa0] sm:$0xf] %vm354, %v783
      %v964 = vld [vmem:[%s363 + $0xa4] sm:$0x1]
      %v965 = vsel %vm366, %v784, %v964
      %966 = vst [vmem:[%s363 + $0xa4] sm:$0x1] %v965
      %v967 = vld [vmem:[%s363 + $0xa8] sm:$0xf]
      %v968 = vsel %vm868, %v791, %v967
      %969 = vst [vmem:[%s363 + $0xa8] sm:$0xf] %v968
      %970 = vst.msk [vmem:[%s363 + $0xac] sm:$0xf] %vm354, %v800
      %v971 = vld [vmem:[%s363 + $0xb0] sm:$0x1]
      %v972 = vsel %vm366, %v801, %v971
      %973 = vst [vmem:[%s363 + $0xb0] sm:$0x1] %v972
      %v974 = vld [vmem:[%s363 + $0xb4] sm:$0xf]
      %v975 = vsel %vm868, %v808, %v974
      %976 = vst [vmem:[%s363 + $0xb4] sm:$0xf] %v975
      %977 = vst.msk [vmem:[%s363 + $0xb8] sm:$0xf] %vm354, %v817
      %v978 = vld [vmem:[%s363 + $0xbc] sm:$0x1]
      %v979 = vsel %vm366, %v818, %v978
      %980 = vst [vmem:[%s363 + $0xbc] sm:$0x1] %v979
      %v981 = vld [vmem:[#allocation2] sm:$0xf]
      %v982 = vld [vmem:[#allocation2 + $0x4] sm:$0xf]
      %v983 = vld [vmem:[#allocation2 + $0xc] sm:$0xf]
      %v984 = vld [vmem:[#allocation2 + $0x10] sm:$0xf]
      %v985 = vld [vmem:[#allocation2 + $0x18] sm:$0xf]
      %v986 = vld [vmem:[#allocation2 + $0x1c] sm:$0xf]
      %v987 = vld [vmem:[#allocation2 + $0x24] sm:$0xf]
      %v988 = vld [vmem:[#allocation2 + $0x28] sm:$0xf]
      %v989 = vld [vmem:[#allocation2 + $0x30] sm:$0xf]
      %v990 = vld [vmem:[#allocation2 + $0x34] sm:$0xf]
      %v991 = vld [vmem:[#allocation2 + $0x3c] sm:$0xf]
      %v992 = vld [vmem:[#allocation2 + $0x40] sm:$0xf]
      %v993 = vld [vmem:[#allocation2 + $0x48] sm:$0xf]
      %v994 = vld [vmem:[#allocation2 + $0x4c] sm:$0xf]
      %v995 = vld [vmem:[#allocation2 + $0x54] sm:$0xf]
      %v996 = vld [vmem:[#allocation2 + $0x58] sm:$0xf]
      %v997 = vld [vmem:[#allocation2 + $0x60] sm:$0xf]
      %v998 = vld [vmem:[#allocation2 + $0x64] sm:$0xf]
      %v999 = vld [vmem:[#allocation2 + $0x6c] sm:$0xf]
      %v1000 = vld [vmem:[#allocation2 + $0x70] sm:$0xf]
      %v1001 = vld [vmem:[#allocation2 + $0x78] sm:$0xf]
      %v1002 = vld [vmem:[#allocation2 + $0x7c] sm:$0xf]
      %v1003 = vld [vmem:[#allocation2 + $0x84] sm:$0xf]
      %v1004 = vld [vmem:[#allocation2 + $0x88] sm:$0xf]
      %v1005 = vld [vmem:[#allocation2 + $0x90] sm:$0xf]
      %v1006 = vld [vmem:[#allocation2 + $0x94] sm:$0xf]
      %v1007 = vld [vmem:[#allocation2 + $0x9c] sm:$0xf]
      %v1008 = vld [vmem:[#allocation2 + $0xa0] sm:$0xf]
      %v1009 = vld [vmem:[#allocation2 + $0xa8] sm:$0xf]
      %v1010 = vld [vmem:[#allocation2 + $0xac] sm:$0xf]
      %v1011 = vld [vmem:[#allocation2 + $0xb4] sm:$0xf]
      %v1012 = vld [vmem:[#allocation2 + $0xb8] sm:$0xf]
      %v1013 = vld [vmem:[%s1] sm:$0x3]
      %v1014 = vld [vmem:[#allocation2 + $0x8] sm:$0x1]
      %v1015 = vld [vmem:[#allocation2 + $0x14] sm:$0x1]
      %v1016 = vld [vmem:[#allocation2 + $0x20] sm:$0x1]
      %v1017 = vld [vmem:[#allocation2 + $0x2c] sm:$0x1]
      %v1018 = vld [vmem:[#allocation2 + $0x38] sm:$0x1]
      %v1019 = vld [vmem:[#allocation2 + $0x44] sm:$0x1]
      %v1020 = vld [vmem:[#allocation2 + $0x50] sm:$0x1]
      %v1021 = vld [vmem:[#allocation2 + $0x5c] sm:$0x1]
      %v1022 = vld [vmem:[#allocation2 + $0x68] sm:$0x1]
      %v1023 = vld [vmem:[#allocation2 + $0x74] sm:$0x1]
      %v1024 = vld [vmem:[#allocation2 + $0x80] sm:$0x1]
      %v1025 = vld [vmem:[#allocation2 + $0x8c] sm:$0x1]
      %v1026 = vld [vmem:[#allocation2 + $0x98] sm:$0x1]
      %v1027 = vld [vmem:[#allocation2 + $0xa4] sm:$0x1]
      %v1028 = vld [vmem:[#allocation2 + $0xb0] sm:$0x1]
      %v1029 = vld [vmem:[#allocation2 + $0xbc] sm:$0x1]
      %vm1030 = vsmask.f32 3328
      %vm1031 = vsmask.f32 7440
      %vm1032 = vmor %vm1030, %vm1031
      %v1034 = vshrl.u32 %v981, 16
      %v1036 = vrot.slane %v1034, 4
      %v1037 = vshll.u32 %v981, 16
      %v1039 = vrot.slane %v1037, 5
      %v1040 = vor.u32 %v1036, %v1039
      %v1041 = vrot.slane %v1040, 4
      %v1043 = vshll.u32 %v982, 16
      %v1045 = vrot.slane %v1043, 5
      %v1046 = vsel %vm1032, %v1041, %v1045
      %v1047 = vshrl.u32 %v982, 16
      %v1049 = vrot.slane %v1047, 4
      %v1050 = vor.u32 %v1049, %v1045
      %v1051 = vrot.slane %v1050, 4
      %v1053 = vshll.u32 %v1014, 16
      %v1055 = vrot.slane %v1053, 5
      %v1056 = vsel %vm1032, %v1051, %v1055
      %v1058 = vshrl.u32 %v983, 16
      %v1060 = vrot.slane %v1058, 4
      %v1061 = vshll.u32 %v983, 16
      %v1063 = vrot.slane %v1061, 5
      %v1064 = vor.u32 %v1060, %v1063
      %v1065 = vrot.slane %v1064, 4
      %v1067 = vshll.u32 %v984, 16
      %v1069 = vrot.slane %v1067, 5
      %v1070 = vsel %vm1032, %v1065, %v1069
      %v1071 = vshrl.u32 %v984, 16
      %v1073 = vrot.slane %v1071, 4
      %v1074 = vor.u32 %v1073, %v1069
      %v1075 = vrot.slane %v1074, 4
      %v1077 = vshll.u32 %v1015, 16
      %v1079 = vrot.slane %v1077, 5
      %v1080 = vsel %vm1032, %v1075, %v1079
      %v1082 = vshrl.u32 %v985, 16
      %v1084 = vrot.slane %v1082, 4
      %v1085 = vshll.u32 %v985, 16
      %v1087 = vrot.slane %v1085, 5
      %v1088 = vor.u32 %v1084, %v1087
      %v1089 = vrot.slane %v1088, 4
      %v1091 = vshll.u32 %v986, 16
      %v1093 = vrot.slane %v1091, 5
      %v1094 = vsel %vm1032, %v1089, %v1093
      %v1095 = vshrl.u32 %v986, 16
      %v1097 = vrot.slane %v1095, 4
      %v1098 = vor.u32 %v1097, %v1093
      %v1099 = vrot.slane %v1098, 4
      %v1101 = vshll.u32 %v1016, 16
      %v1103 = vrot.slane %v1101, 5
      %v1104 = vsel %vm1032, %v1099, %v1103
      %v1106 = vshrl.u32 %v987, 16
      %v1108 = vrot.slane %v1106, 4
      %v1109 = vshll.u32 %v987, 16
      %v1111 = vrot.slane %v1109, 5
      %v1112 = vor.u32 %v1108, %v1111
      %v1113 = vrot.slane %v1112, 4
      %v1115 = vshll.u32 %v988, 16
      %v1117 = vrot.slane %v1115, 5
      %v1118 = vsel %vm1032, %v1113, %v1117
      %v1119 = vshrl.u32 %v988, 16
      %v1121 = vrot.slane %v1119, 4
      %v1122 = vor.u32 %v1121, %v1117
      %v1123 = vrot.slane %v1122, 4
      %v1125 = vshll.u32 %v1017, 16
      %v1127 = vrot.slane %v1125, 5
      %v1128 = vsel %vm1032, %v1123, %v1127
      %v1130 = vshrl.u32 %v989, 16
      %v1132 = vrot.slane %v1130, 4
      %v1133 = vshll.u32 %v989, 16
      %v1135 = vrot.slane %v1133, 5
      %v1136 = vor.u32 %v1132, %v1135
      %v1137 = vrot.slane %v1136, 4
      %v1139 = vshll.u32 %v990, 16
      %v1141 = vrot.slane %v1139, 5
      %v1142 = vsel %vm1032, %v1137, %v1141
      %v1143 = vshrl.u32 %v990, 16
      %v1145 = vrot.slane %v1143, 4
      %v1146 = vor.u32 %v1145, %v1141
      %v1147 = vrot.slane %v1146, 4
      %v1149 = vshll.u32 %v1018, 16
      %v1151 = vrot.slane %v1149, 5
      %v1152 = vsel %vm1032, %v1147, %v1151
      %v1154 = vshrl.u32 %v991, 16
      %v1156 = vrot.slane %v1154, 4
      %v1157 = vshll.u32 %v991, 16
      %v1159 = vrot.slane %v1157, 5
      %v1160 = vor.u32 %v1156, %v1159
      %v1161 = vrot.slane %v1160, 4
      %v1163 = vshll.u32 %v992, 16
      %v1165 = vrot.slane %v1163, 5
      %v1166 = vsel %vm1032, %v1161, %v1165
      %v1167 = vshrl.u32 %v992, 16
      %v1169 = vrot.slane %v1167, 4
      %v1170 = vor.u32 %v1169, %v1165
      %v1171 = vrot.slane %v1170, 4
      %v1173 = vshll.u32 %v1019, 16
      %v1175 = vrot.slane %v1173, 5
      %v1176 = vsel %vm1032, %v1171, %v1175
      %v1178 = vshrl.u32 %v993, 16
      %v1180 = vrot.slane %v1178, 4
      %v1181 = vshll.u32 %v993, 16
      %v1183 = vrot.slane %v1181, 5
      %v1184 = vor.u32 %v1180, %v1183
      %v1185 = vrot.slane %v1184, 4
      %v1187 = vshll.u32 %v994, 16
      %v1189 = vrot.slane %v1187, 5
      %v1190 = vsel %vm1032, %v1185, %v1189
      %v1191 = vshrl.u32 %v994, 16
      %v1193 = vrot.slane %v1191, 4
      %v1194 = vor.u32 %v1193, %v1189
      %v1195 = vrot.slane %v1194, 4
      %v1197 = vshll.u32 %v1020, 16
      %v1199 = vrot.slane %v1197, 5
      %v1200 = vsel %vm1032, %v1195, %v1199
      %v1202 = vshrl.u32 %v995, 16
      %v1204 = vrot.slane %v1202, 4
      %v1205 = vshll.u32 %v995, 16
      %v1207 = vrot.slane %v1205, 5
      %v1208 = vor.u32 %v1204, %v1207
      %v1209 = vrot.slane %v1208, 4
      %v1211 = vshll.u32 %v996, 16
      %v1213 = vrot.slane %v1211, 5
      %v1214 = vsel %vm1032, %v1209, %v1213
      %v1215 = vshrl.u32 %v996, 16
      %v1217 = vrot.slane %v1215, 4
      %v1218 = vor.u32 %v1217, %v1213
      %v1219 = vrot.slane %v1218, 4
      %v1221 = vshll.u32 %v1021, 16
      %v1223 = vrot.slane %v1221, 5
      %v1224 = vsel %vm1032, %v1219, %v1223
      %v1226 = vshrl.u32 %v997, 16
      %v1228 = vrot.slane %v1226, 4
      %v1229 = vshll.u32 %v997, 16
      %v1231 = vrot.slane %v1229, 5
      %v1232 = vor.u32 %v1228, %v1231
      %v1233 = vrot.slane %v1232, 4
      %v1235 = vshll.u32 %v998, 16
      %v1237 = vrot.slane %v1235, 5
      %v1238 = vsel %vm1032, %v1233, %v1237
      %v1239 = vshrl.u32 %v998, 16
      %v1241 = vrot.slane %v1239, 4
      %v1242 = vor.u32 %v1241, %v1237
      %v1243 = vrot.slane %v1242, 4
      %v1245 = vshll.u32 %v1022, 16
      %v1247 = vrot.slane %v1245, 5
      %v1248 = vsel %vm1032, %v1243, %v1247
      %v1250 = vshrl.u32 %v999, 16
      %v1252 = vrot.slane %v1250, 4
      %v1253 = vshll.u32 %v999, 16
      %v1255 = vrot.slane %v1253, 5
      %v1256 = vor.u32 %v1252, %v1255
      %v1257 = vrot.slane %v1256, 4
      %v1259 = vshll.u32 %v1000, 16
      %v1261 = vrot.slane %v1259, 5
      %v1262 = vsel %vm1032, %v1257, %v1261
      %v1263 = vshrl.u32 %v1000, 16
      %v1265 = vrot.slane %v1263, 4
      %v1266 = vor.u32 %v1265, %v1261
      %v1267 = vrot.slane %v1266, 4
      %v1269 = vshll.u32 %v1023, 16
      %v1271 = vrot.slane %v1269, 5
      %v1272 = vsel %vm1032, %v1267, %v1271
      %v1274 = vshrl.u32 %v1001, 16
      %v1276 = vrot.slane %v1274, 4
      %v1277 = vshll.u32 %v1001, 16
      %v1279 = vrot.slane %v1277, 5
      %v1280 = vor.u32 %v1276, %v1279
      %v1281 = vrot.slane %v1280, 4
      %v1283 = vshll.u32 %v1002, 16
      %v1285 = vrot.slane %v1283, 5
      %v1286 = vsel %vm1032, %v1281, %v1285
      %v1287 = vshrl.u32 %v1002, 16
      %v1289 = vrot.slane %v1287, 4
      %v1290 = vor.u32 %v1289, %v1285
      %v1291 = vrot.slane %v1290, 4
      %v1293 = vshll.u32 %v1024, 16
      %v1295 = vrot.slane %v1293, 5
      %v1296 = vsel %vm1032, %v1291, %v1295
      %v1298 = vshrl.u32 %v1003, 16
      %v1300 = vrot.slane %v1298, 4
      %v1301 = vshll.u32 %v1003, 16
      %v1303 = vrot.slane %v1301, 5
      %v1304 = vor.u32 %v1300, %v1303
      %v1305 = vrot.slane %v1304, 4
      %v1307 = vshll.u32 %v1004, 16
      %v1309 = vrot.slane %v1307, 5
      %v1310 = vsel %vm1032, %v1305, %v1309
      %v1311 = vshrl.u32 %v1004, 16
      %v1313 = vrot.slane %v1311, 4
      %v1314 = vor.u32 %v1313, %v1309
      %v1315 = vrot.slane %v1314, 4
      %v1317 = vshll.u32 %v1025, 16
      %v1319 = vrot.slane %v1317, 5
      %v1320 = vsel %vm1032, %v1315, %v1319
      %v1322 = vshrl.u32 %v1005, 16
      %v1324 = vrot.slane %v1322, 4
      %v1325 = vshll.u32 %v1005, 16
      %v1327 = vrot.slane %v1325, 5
      %v1328 = vor.u32 %v1324, %v1327
      %v1329 = vrot.slane %v1328, 4
      %v1331 = vshll.u32 %v1006, 16
      %v1333 = vrot.slane %v1331, 5
      %v1334 = vsel %vm1032, %v1329, %v1333
      %v1335 = vshrl.u32 %v1006, 16
      %v1337 = vrot.slane %v1335, 4
      %v1338 = vor.u32 %v1337, %v1333
      %v1339 = vrot.slane %v1338, 4
      %v1341 = vshll.u32 %v1026, 16
      %v1343 = vrot.slane %v1341, 5
      %v1344 = vsel %vm1032, %v1339, %v1343
      %v1346 = vshrl.u32 %v1007, 16
      %v1348 = vrot.slane %v1346, 4
      %v1349 = vshll.u32 %v1007, 16
      %v1351 = vrot.slane %v1349, 5
      %v1352 = vor.u32 %v1348, %v1351
      %v1353 = vrot.slane %v1352, 4
      %v1355 = vshll.u32 %v1008, 16
      %v1357 = vrot.slane %v1355, 5
      %v1358 = vsel %vm1032, %v1353, %v1357
      %v1359 = vshrl.u32 %v1008, 16
      %v1361 = vrot.slane %v1359, 4
      %v1362 = vor.u32 %v1361, %v1357
      %v1363 = vrot.slane %v1362, 4
      %v1365 = vshll.u32 %v1027, 16
      %v1367 = vrot.slane %v1365, 5
      %v1368 = vsel %vm1032, %v1363, %v1367
      %v1370 = vshrl.u32 %v1009, 16
      %v1372 = vrot.slane %v1370, 4
      %v1373 = vshll.u32 %v1009, 16
      %v1375 = vrot.slane %v1373, 5
      %v1376 = vor.u32 %v1372, %v1375
      %v1377 = vrot.slane %v1376, 4
      %v1379 = vshll.u32 %v1010, 16
      %v1381 = vrot.slane %v1379, 5
      %v1382 = vsel %vm1032, %v1377, %v1381
      %v1383 = vshrl.u32 %v1010, 16
      %v1385 = vrot.slane %v1383, 4
      %v1386 = vor.u32 %v1385, %v1381
      %v1387 = vrot.slane %v1386, 4
      %v1389 = vshll.u32 %v1028, 16
      %v1391 = vrot.slane %v1389, 5
      %v1392 = vsel %vm1032, %v1387, %v1391
      %v1394 = vshrl.u32 %v1011, 16
      %v1396 = vrot.slane %v1394, 4
      %v1397 = vshll.u32 %v1011, 16
      %v1399 = vrot.slane %v1397, 5
      %v1400 = vor.u32 %v1396, %v1399
      %v1401 = vrot.slane %v1400, 4
      %v1403 = vshll.u32 %v1012, 16
      %v1405 = vrot.slane %v1403, 5
      %v1406 = vsel %vm1032, %v1401, %v1405
      %v1407 = vshrl.u32 %v1012, 16
      %v1409 = vrot.slane %v1407, 4
      %v1410 = vor.u32 %v1409, %v1405
      %v1411 = vrot.slane %v1410, 4
      %v1413 = vshll.u32 %v1029, 16
      %v1415 = vrot.slane %v1413, 5
      %v1416 = vsel %vm1032, %v1411, %v1415
      %s1417 = scalar_lea.vmem %s1, 2
      %v1418 = vld [vmem:[%s1417] sm:$0x3]
      %v1419 = vunpack.c.l.b16 %v1046
      %v1420 = vunpack.c.l.b16 %v1056
      %v1421 = vunpack.c.l.b16 %v1070
      %v1422 = vunpack.c.l.b16 %v1080
      %v1423 = vunpack.c.l.b16 %v1094
      %v1424 = vunpack.c.l.b16 %v1104
      %v1425 = vunpack.c.l.b16 %v1118
      %v1426 = vunpack.c.l.b16 %v1128
      %v1427 = vunpack.c.l.b16 %v1142
      %v1428 = vunpack.c.l.b16 %v1152
      %v1429 = vunpack.c.l.b16 %v1166
      %v1430 = vunpack.c.l.b16 %v1176
      %v1431 = vunpack.c.l.b16 %v1190
      %v1432 = vunpack.c.l.b16 %v1200
      %v1433 = vunpack.c.l.b16 %v1214
      %v1434 = vunpack.c.l.b16 %v1224
      %v1435 = vunpack.c.l.b16 %v1238
      %v1436 = vunpack.c.l.b16 %v1248
      %v1437 = vunpack.c.l.b16 %v1262
      %v1438 = vunpack.c.l.b16 %v1272
      %v1439 = vunpack.c.l.b16 %v1286
      %v1440 = vunpack.c.l.b16 %v1296
      %v1441 = vunpack.c.l.b16 %v1310
      %v1442 = vunpack.c.l.b16 %v1320
      %v1443 = vunpack.c.l.b16 %v1334
      %v1444 = vunpack.c.l.b16 %v1344
      %v1445 = vunpack.c.l.b16 %v1358
      %v1446 = vunpack.c.l.b16 %v1368
      %v1447 = vunpack.c.l.b16 %v1382
      %v1448 = vunpack.c.l.b16 %v1392
      %v1449 = vunpack.c.l.b16 %v1406
      %v1450 = vunpack.c.l.b16 %v1416
      %v1451 = vpack.c.b16 %v1420, %v1419
      %v1452 = vpack.c.b16 %v1422, %v1421
      %v1453 = vpack.c.b16 %v1424, %v1423
      %v1454 = vpack.c.b16 %v1426, %v1425
      %v1455 = vpack.c.b16 %v1428, %v1427
      %v1456 = vpack.c.b16 %v1430, %v1429
      %v1457 = vpack.c.b16 %v1432, %v1431
      %v1458 = vpack.c.b16 %v1434, %v1433
      %v1459 = vpack.c.b16 %v1436, %v1435
      %v1460 = vpack.c.b16 %v1438, %v1437
      %v1461 = vpack.c.b16 %v1440, %v1439
      %v1462 = vpack.c.b16 %v1442, %v1441
      %v1463 = vpack.c.b16 %v1444, %v1443
      %v1464 = vpack.c.b16 %v1446, %v1445
      %v1465 = vpack.c.b16 %v1448, %v1447
      %v1466 = vpack.c.b16 %v1450, %v1449
      %vm1467 = vcmask 31744
      %v1469 = vsel %vm1467, %v1451, 0
      %v1472 = vsel %vm1467, %v1452, 0
      %v1475 = vsel %vm1467, %v1453, 0
      %v1478 = vsel %vm1467, %v1454, 0
      %v1481 = vsel %vm1467, %v1455, 0
      %v1484 = vsel %vm1467, %v1456, 0
      %v1487 = vsel %vm1467, %v1457, 0
      %v1490 = vsel %vm1467, %v1458, 0
      %v1493 = vsel %vm1467, %v1459, 0
      %v1496 = vsel %vm1467, %v1460, 0
      %v1499 = vsel %vm1467, %v1461, 0
      %v1502 = vsel %vm1467, %v1462, 0
      %v1505 = vsel %vm1467, %v1463, 0
      %v1508 = vsel %vm1467, %v1464, 0
      %v1511 = vsel %vm1467, %v1465, 0
      %v1514 = vsel %vm1467, %v1466, 0
      %vm1516 = vcmask 1041408
      %v1518 = vsel %vm1516, %v1418, 0
      %1520 = vmatprep.subr.bf16.mxu0 0
      %1521 = vmatpush1.bf16.msra.mxu0 %v1518
      %1522 = vmatprep.subr.bf16.mxu0 0
      %1523 = vmatpush1.bf16.msra.mxu0 0
      %1524 = vmatprep.subr.bf16.mxu0 0
      %1525 = vmatpush1.bf16.msra.mxu0 0
      %1526 = vmatprep.subr.bf16.mxu0 0
      %1527 = vmatpush1.bf16.msra.mxu0 0
      %1528 = vmatprep.subr.bf16.mxu0 0
      %1529 = vmatpush1.bf16.msra.mxu0 0
      %1530 = vmatprep.subr.bf16.mxu0 0
      %1531 = vmatpush1.bf16.msra.mxu0 0
      %1532 = vmatprep.subr.bf16.mxu0 0
      %1533 = vmatpush1.bf16.msra.mxu0 0
      %1534 = vmatprep.subr.bf16.mxu0 0
      %1535 = vmatpush1.bf16.msra.mxu0 0
      %1536 = vmatprep.subr.bf16.mxu0 0
      %1537 = vmatpush1.bf16.msra.mxu0 0
      %1538 = vmatprep.subr.bf16.mxu0 0
      %1539 = vmatpush1.bf16.msra.mxu0 0
      %1540 = vmatprep.subr.bf16.mxu0 0
      %1541 = vmatpush1.bf16.msra.mxu0 0
      %1542 = vmatprep.subr.bf16.mxu0 0
      %1543 = vmatpush1.bf16.msra.mxu0 0
      %1544 = vmatprep.subr.bf16.mxu0 0
      %1545 = vmatpush1.bf16.msra.mxu0 0
      %1546 = vmatprep.subr.bf16.mxu0 0
      %1547 = vmatpush1.bf16.msra.mxu0 0
      %1548 = vmatprep.subr.bf16.mxu0 0
      %1549 = vmatpush1.bf16.msra.mxu0 0
      %1550 = vmatprep.subr.bf16.mxu0 0
      %1551 = vmatpush1.bf16.msra.mxu0 0
      %1552 = vmatprep.mubr.bf16.mxu0 0
      %1553 = vmatmul.mubr.bf16.gmra.mrb[0].mxu0 %v1469
      %v1554 = vpop.f32.mrb[0].mxu0
      %v1555 = vadd.f32 0.0, %v1554
      %v1556 = vpop.f32.mrb[0].mxu0
      %v1557 = vpop.f32.mrb[0].mxu0
      %v1558 = vadd.f32 0.0, %v1557
      %v1559 = vpop.f32.mrb[0].mxu0
      %1560 = vmatprep.mubr.bf16.mxu0 0
      %1561 = vmatmul.mubr.bf16.gmra.mrb[0].mxu0 %v1472
      %v1562 = vpop.f32.mrb[0].mxu0
      %v1563 = vadd.f32 0.0, %v1562
      %v1564 = vpop.f32.mrb[0].mxu0
      %v1565 = vpop.f32.mrb[0].mxu0
      %v1566 = vadd.f32 0.0, %v1565
      %v1567 = vpop.f32.mrb[0].mxu0
      %1568 = vmatprep.mubr.bf16.mxu0 0
      %1569 = vmatmul.mubr.bf16.gmra.mrb[0].mxu0 %v1475
      %v1570 = vpop.f32.mrb[0].mxu0
      %v1571 = vadd.f32 0.0, %v1570
      %v1572 = vpop.f32.mrb[0].mxu0
      %v1573 = vpop.f32.mrb[0].mxu0
      %v1574 = vadd.f32 0.0, %v1573
      %v1575 = vpop.f32.mrb[0].mxu0
      %1576 = vmatprep.mubr.bf16.mxu0 0
      %1577 = vmatmul.mubr.bf16.gmra.mrb[0].mxu0 %v1478
      %v1578 = vpop.f32.mrb[0].mxu0
      %v1579 = vadd.f32 0.0, %v1578
      %v1580 = vpop.f32.mrb[0].mxu0
      %v1581 = vpop.f32.mrb[0].mxu0
      %v1582 = vadd.f32 0.0, %v1581
      %v1583 = vpop.f32.mrb[0].mxu0
      %1584 = vmatprep.mubr.bf16.mxu0 0
      %1585 = vmatmul.mubr.bf16.gmra.mrb[0].mxu0 %v1481
      %v1586 = vpop.f32.mrb[0].mxu0
      %v1587 = vadd.f32 0.0, %v1586
      %v1588 = vpop.f32.mrb[0].mxu0
      %v1589 = vpop.f32.mrb[0].mxu0
      %v1590 = vadd.f32 0.0, %v1589
      %v1591 = vpop.f32.mrb[0].mxu0
      %1592 = vmatprep.mubr.bf16.mxu0 0
      %1593 = vmatmul.mubr.bf16.gmra.mrb[0].mxu0 %v1484
      %v1594 = vpop.f32.mrb[0].mxu0
      %v1595 = vadd.f32 0.0, %v1594
      %v1596 = vpop.f32.mrb[0].mxu0
      %v1597 = vpop.f32.mrb[0].mxu0
      %v1598 = vadd.f32 0.0, %v1597
      %v1599 = vpop.f32.mrb[0].mxu0
      %1600 = vmatprep.mubr.bf16.mxu0 0
      %1601 = vmatmul.mubr.bf16.gmra.mrb[0].mxu0 %v1487
      %v1602 = vpop.f32.mrb[0].mxu0
      %v1603 = vadd.f32 0.0, %v1602
      %v1604 = vpop.f32.mrb[0].mxu0
      %v1605 = vpop.f32.mrb[0].mxu0
      %v1606 = vadd.f32 0.0, %v1605
      %v1607 = vpop.f32.mrb[0].mxu0
      %1608 = vmatprep.mubr.bf16.mxu0 0
      %1609 = vmatmul.mubr.bf16.gmra.mrb[0].mxu0 %v1490
      %v1610 = vpop.f32.mrb[0].mxu0
      %v1611 = vadd.f32 0.0, %v1610
      %v1612 = vpop.f32.mrb[0].mxu0
      %v1613 = vpop.f32.mrb[0].mxu0
      %v1614 = vadd.f32 0.0, %v1613
      %v1615 = vpop.f32.mrb[0].mxu0
      %1616 = vmatprep.mubr.bf16.mxu0 0
      %1617 = vmatmul.mubr.bf16.gmra.mrb[0].mxu0 %v1493
      %v1618 = vpop.f32.mrb[0].mxu0
      %v1619 = vadd.f32 0.0, %v1618
      %v1620 = vpop.f32.mrb[0].mxu0
      %v1621 = vpop.f32.mrb[0].mxu0
      %v1622 = vadd.f32 0.0, %v1621
      %v1623 = vpop.f32.mrb[0].mxu0
      %1624 = vmatprep.mubr.bf16.mxu0 0
      %1625 = vmatmul.mubr.bf16.gmra.mrb[0].mxu0 %v1496
      %v1626 = vpop.f32.mrb[0].mxu0
      %v1627 = vadd.f32 0.0, %v1626
      %v1628 = vpop.f32.mrb[0].mxu0
      %v1629 = vpop.f32.mrb[0].mxu0
      %v1630 = vadd.f32 0.0, %v1629
      %v1631 = vpop.f32.mrb[0].mxu0
      %1632 = vmatprep.mubr.bf16.mxu0 0
      %1633 = vmatmul.mubr.bf16.gmra.mrb[0].mxu0 %v1499
      %v1634 = vpop.f32.mrb[0].mxu0
      %v1635 = vadd.f32 0.0, %v1634
      %v1636 = vpop.f32.mrb[0].mxu0
      %v1637 = vpop.f32.mrb[0].mxu0
      %v1638 = vadd.f32 0.0, %v1637
      %v1639 = vpop.f32.mrb[0].mxu0
      %1640 = vmatprep.mubr.bf16.mxu0 0
      %1641 = vmatmul.mubr.bf16.gmra.mrb[0].mxu0 %v1502
      %v1642 = vpop.f32.mrb[0].mxu0
      %v1643 = vadd.f32 0.0, %v1642
      %v1644 = vpop.f32.mrb[0].mxu0
      %v1645 = vpop.f32.mrb[0].mxu0
      %v1646 = vadd.f32 0.0, %v1645
      %v1647 = vpop.f32.mrb[0].mxu0
      %1648 = vmatprep.mubr.bf16.mxu0 0
      %1649 = vmatmul.mubr.bf16.gmra.mrb[0].mxu0 %v1505
      %v1650 = vpop.f32.mrb[0].mxu0
      %v1651 = vadd.f32 0.0, %v1650
      %v1652 = vpop.f32.mrb[0].mxu0
      %v1653 = vpop.f32.mrb[0].mxu0
      %v1654 = vadd.f32 0.0, %v1653
      %v1655 = vpop.f32.mrb[0].mxu0
      %1656 = vmatprep.mubr.bf16.mxu0 0
      %1657 = vmatmul.mubr.bf16.gmra.mrb[0].mxu0 %v1508
      %v1658 = vpop.f32.mrb[0].mxu0
      %v1659 = vadd.f32 0.0, %v1658
      %v1660 = vpop.f32.mrb[0].mxu0
      %v1661 = vpop.f32.mrb[0].mxu0
      %v1662 = vadd.f32 0.0, %v1661
      %v1663 = vpop.f32.mrb[0].mxu0
      %1664 = vmatprep.mubr.bf16.mxu0 0
      %1665 = vmatmul.mubr.bf16.gmra.mrb[0].mxu0 %v1511
      %v1666 = vpop.f32.mrb[0].mxu0
      %v1667 = vadd.f32 0.0, %v1666
      %v1668 = vpop.f32.mrb[0].mxu0
      %v1669 = vpop.f32.mrb[0].mxu0
      %v1670 = vadd.f32 0.0, %v1669
      %v1671 = vpop.f32.mrb[0].mxu0
      %1672 = vmatprep.mubr.bf16.mxu0 0
      %1673 = vmatmul.mubr.bf16.gmra.mrb[0].mxu0 %v1514
      %v1674 = vpop.f32.mrb[0].mxu0
      %v1675 = vadd.f32 0.0, %v1674
      %v1676 = vpop.f32.mrb[0].mxu0
      %v1677 = vpop.f32.mrb[0].mxu0
      %v1678 = vadd.f32 0.0, %v1677
      %v1679 = vpop.f32.mrb[0].mxu0
      %1680 = vdwg.mxu0
      %v1713 = vunpack.c.l.b16 %v981
      %v1714 = vunpack.c.l.b16 %v982
      %v1715 = vunpack.c.l.b16 %v983
      %v1716 = vunpack.c.l.b16 %v984
      %v1717 = vunpack.c.l.b16 %v985
      %v1718 = vunpack.c.l.b16 %v986
      %v1719 = vunpack.c.l.b16 %v987
      %v1720 = vunpack.c.l.b16 %v988
      %v1721 = vunpack.c.l.b16 %v989
      %v1722 = vunpack.c.l.b16 %v990
      %v1723 = vunpack.c.l.b16 %v991
      %v1724 = vunpack.c.l.b16 %v992
      %v1725 = vunpack.c.l.b16 %v993
      %v1726 = vunpack.c.l.b16 %v994
      %v1727 = vunpack.c.l.b16 %v995
      %v1728 = vunpack.c.l.b16 %v996
      %v1729 = vunpack.c.l.b16 %v997
      %v1730 = vunpack.c.l.b16 %v998
      %v1731 = vunpack.c.l.b16 %v999
      %v1732 = vunpack.c.l.b16 %v1000
      %v1733 = vunpack.c.l.b16 %v1001
      %v1734 = vunpack.c.l.b16 %v1002
      %v1735 = vunpack.c.l.b16 %v1003
      %v1736 = vunpack.c.l.b16 %v1004
      %v1737 = vunpack.c.l.b16 %v1005
      %v1738 = vunpack.c.l.b16 %v1006
      %v1739 = vunpack.c.l.b16 %v1007
      %v1740 = vunpack.c.l.b16 %v1008
      %v1741 = vunpack.c.l.b16 %v1009
      %v1742 = vunpack.c.l.b16 %v1010
      %v1743 = vunpack.c.l.b16 %v1011
      %v1744 = vunpack.c.l.b16 %v1012
      %v1745 = vpack.c.b16 %v1714, %v1713
      %v1746 = vpack.c.b16 %v1716, %v1715
      %v1747 = vpack.c.b16 %v1718, %v1717
      %v1748 = vpack.c.b16 %v1720, %v1719
      %v1749 = vpack.c.b16 %v1722, %v1721
      %v1750 = vpack.c.b16 %v1724, %v1723
      %v1751 = vpack.c.b16 %v1726, %v1725
      %v1752 = vpack.c.b16 %v1728, %v1727
      %v1753 = vpack.c.b16 %v1730, %v1729
      %v1754 = vpack.c.b16 %v1732, %v1731
      %v1755 = vpack.c.b16 %v1734, %v1733
      %v1756 = vpack.c.b16 %v1736, %v1735
      %v1757 = vpack.c.b16 %v1738, %v1737
      %v1758 = vpack.c.b16 %v1740, %v1739
      %v1759 = vpack.c.b16 %v1742, %v1741
      %v1760 = vpack.c.b16 %v1744, %v1743
      %v1762 = vsel %vm1467, %v1745, 0
      %v1765 = vsel %vm1467, %v1746, 0
      %v1768 = vsel %vm1467, %v1747, 0
      %v1771 = vsel %vm1467, %v1748, 0
      %v1774 = vsel %vm1467, %v1749, 0
      %v1777 = vsel %vm1467, %v1750, 0
      %v1780 = vsel %vm1467, %v1751, 0
      %v1783 = vsel %vm1467, %v1752, 0
      %v1786 = vsel %vm1467, %v1753, 0
      %v1789 = vsel %vm1467, %v1754, 0
      %v1792 = vsel %vm1467, %v1755, 0
      %v1795 = vsel %vm1467, %v1756, 0
      %v1798 = vsel %vm1467, %v1757, 0
      %v1801 = vsel %vm1467, %v1758, 0
      %v1804 = vsel %vm1467, %v1759, 0
      %v1807 = vsel %vm1467, %v1760, 0
      %v1810 = vsel %vm1516, %v1013, 0
      %1812 = vmatprep.subr.bf16.mxu0 0
      %1813 = vmatpush1.bf16.msra.mxu0 %v1810
      %1814 = vmatprep.subr.bf16.mxu0 0
      %1815 = vmatpush1.bf16.msra.mxu0 0
      %1816 = vmatprep.subr.bf16.mxu0 0
      %1817 = vmatpush1.bf16.msra.mxu0 0
      %1818 = vmatprep.subr.bf16.mxu0 0
      %1819 = vmatpush1.bf16.msra.mxu0 0
      %1820 = vmatprep.subr.bf16.mxu0 0
      %1821 = vmatpush1.bf16.msra.mxu0 0
      %1822 = vmatprep.subr.bf16.mxu0 0
      %1823 = vmatpush1.bf16.msra.mxu0 0
      %1824 = vmatprep.subr.bf16.mxu0 0
      %1825 = vmatpush1.bf16.msra.mxu0 0
      %1826 = vmatprep.subr.bf16.mxu0 0
      %1827 = vmatpush1.bf16.msra.mxu0 0
      %1828 = vmatprep.subr.bf16.mxu0 0
      %1829 = vmatpush1.bf16.msra.mxu0 0
      %1830 = vmatprep.subr.bf16.mxu0 0
      %1831 = vmatpush1.bf16.msra.mxu0 0
      %1832 = vmatprep.subr.bf16.mxu0 0
      %1833 = vmatpush1.bf16.msra.mxu0 0
      %1834 = vmatprep.subr.bf16.mxu0 0
      %1835 = vmatpush1.bf16.msra.mxu0 0
      %1836 = vmatprep.subr.bf16.mxu0 0
      %1837 = vmatpush1.bf16.msra.mxu0 0
      %1838 = vmatprep.subr.bf16.mxu0 0
      %1839 = vmatpush1.bf16.msra.mxu0 0
      %1840 = vmatprep.subr.bf16.mxu0 0
      %1841 = vmatpush1.bf16.msra.mxu0 0
      %1842 = vmatprep.subr.bf16.mxu0 0
      %1843 = vmatpush1.bf16.msra.mxu0 0
      %1844 = vmatprep.mubr.bf16.mxu0 0
      %1845 = vmatmul.mubr.bf16.gmra.mrb[0].mxu0 %v1762
      %v1846 = vpop.f32.mrb[0].mxu0
      %v1847 = vadd.f32 %v1555, %v1846
      %v1848 = vpop.f32.mrb[0].mxu0
      %v1849 = vpop.f32.mrb[0].mxu0
      %v1850 = vadd.f32 %v1558, %v1849
      %v1851 = vpop.f32.mrb[0].mxu0
      %1852 = vmatprep.mubr.bf16.mxu0 0
      %1853 = vmatmul.mubr.bf16.gmra.mrb[0].mxu0 %v1765
      %v1854 = vpop.f32.mrb[0].mxu0
      %v1855 = vadd.f32 %v1563, %v1854
      %v1856 = vpop.f32.mrb[0].mxu0
      %v1857 = vpop.f32.mrb[0].mxu0
      %v1858 = vadd.f32 %v1566, %v1857
      %v1859 = vpop.f32.mrb[0].mxu0
      %1860 = vmatprep.mubr.bf16.mxu0 0
      %1861 = vmatmul.mubr.bf16.gmra.mrb[0].mxu0 %v1768
      %v1862 = vpop.f32.mrb[0].mxu0
      %v1863 = vadd.f32 %v1571, %v1862
      %v1864 = vpop.f32.mrb[0].mxu0
      %v1865 = vpop.f32.mrb[0].mxu0
      %v1866 = vadd.f32 %v1574, %v1865
      %v1867 = vpop.f32.mrb[0].mxu0
      %1868 = vmatprep.mubr.bf16.mxu0 0
      %1869 = vmatmul.mubr.bf16.gmra.mrb[0].mxu0 %v1771
      %v1870 = vpop.f32.mrb[0].mxu0
      %v1871 = vadd.f32 %v1579, %v1870
      %v1872 = vpop.f32.mrb[0].mxu0
      %v1873 = vpop.f32.mrb[0].mxu0
      %v1874 = vadd.f32 %v1582, %v1873
      %v1875 = vpop.f32.mrb[0].mxu0
      %1876 = vmatprep.mubr.bf16.mxu0 0
      %1877 = vmatmul.mubr.bf16.gmra.mrb[0].mxu0 %v1774
      %v1878 = vpop.f32.mrb[0].mxu0
      %v1879 = vadd.f32 %v1587, %v1878
      %v1880 = vpop.f32.mrb[0].mxu0
      %v1881 = vpop.f32.mrb[0].mxu0
      %v1882 = vadd.f32 %v1590, %v1881
      %v1883 = vpop.f32.mrb[0].mxu0
      %1884 = vmatprep.mubr.bf16.mxu0 0
      %1885 = vmatmul.mubr.bf16.gmra.mrb[0].mxu0 %v1777
      %v1886 = vpop.f32.mrb[0].mxu0
      %v1887 = vadd.f32 %v1595, %v1886
      %v1888 = vpop.f32.mrb[0].mxu0
      %v1889 = vpop.f32.mrb[0].mxu0
      %v1890 = vadd.f32 %v1598, %v1889
      %v1891 = vpop.f32.mrb[0].mxu0
      %1892 = vmatprep.mubr.bf16.mxu0 0
      %1893 = vmatmul.mubr.bf16.gmra.mrb[0].mxu0 %v1780
      %v1894 = vpop.f32.mrb[0].mxu0
      %v1895 = vadd.f32 %v1603, %v1894
      %v1896 = vpop.f32.mrb[0].mxu0
      %v1897 = vpop.f32.mrb[0].mxu0
      %v1898 = vadd.f32 %v1606, %v1897
      %v1899 = vpop.f32.mrb[0].mxu0
      %1900 = vmatprep.mubr.bf16.mxu0 0
      %1901 = vmatmul.mubr.bf16.gmra.mrb[0].mxu0 %v1783
      %v1902 = vpop.f32.mrb[0].mxu0
      %v1903 = vadd.f32 %v1611, %v1902
      %v1904 = vpop.f32.mrb[0].mxu0
      %v1905 = vpop.f32.mrb[0].mxu0
      %v1906 = vadd.f32 %v1614, %v1905
      %v1907 = vpop.f32.mrb[0].mxu0
      %1908 = vmatprep.mubr.bf16.mxu0 0
      %1909 = vmatmul.mubr.bf16.gmra.mrb[0].mxu0 %v1786
      %v1910 = vpop.f32.mrb[0].mxu0
      %v1911 = vadd.f32 %v1619, %v1910
      %v1912 = vpop.f32.mrb[0].mxu0
      %v1913 = vpop.f32.mrb[0].mxu0
      %v1914 = vadd.f32 %v1622, %v1913
      %v1915 = vpop.f32.mrb[0].mxu0
      %1916 = vmatprep.mubr.bf16.mxu0 0
      %1917 = vmatmul.mubr.bf16.gmra.mrb[0].mxu0 %v1789
      %v1918 = vpop.f32.mrb[0].mxu0
      %v1919 = vadd.f32 %v1627, %v1918
      %v1920 = vpop.f32.mrb[0].mxu0
      %v1921 = vpop.f32.mrb[0].mxu0
      %v1922 = vadd.f32 %v1630, %v1921
      %v1923 = vpop.f32.mrb[0].mxu0
      %1924 = vmatprep.mubr.bf16.mxu0 0
      %1925 = vmatmul.mubr.bf16.gmra.mrb[0].mxu0 %v1792
      %v1926 = vpop.f32.mrb[0].mxu0
      %v1927 = vadd.f32 %v1635, %v1926
      %v1928 = vpop.f32.mrb[0].mxu0
      %v1929 = vpop.f32.mrb[0].mxu0
      %v1930 = vadd.f32 %v1638, %v1929
      %v1931 = vpop.f32.mrb[0].mxu0
      %1932 = vmatprep.mubr.bf16.mxu0 0
      %1933 = vmatmul.mubr.bf16.gmra.mrb[0].mxu0 %v1795
      %v1934 = vpop.f32.mrb[0].mxu0
      %v1935 = vadd.f32 %v1643, %v1934
      %v1936 = vpop.f32.mrb[0].mxu0
      %v1937 = vpop.f32.mrb[0].mxu0
      %v1938 = vadd.f32 %v1646, %v1937
      %v1939 = vpop.f32.mrb[0].mxu0
      %1940 = vmatprep.mubr.bf16.mxu0 0
      %1941 = vmatmul.mubr.bf16.gmra.mrb[0].mxu0 %v1798
      %v1942 = vpop.f32.mrb[0].mxu0
      %v1943 = vadd.f32 %v1651, %v1942
      %v1944 = vpop.f32.mrb[0].mxu0
      %v1945 = vpop.f32.mrb[0].mxu0
      %v1946 = vadd.f32 %v1654, %v1945
      %v1947 = vpop.f32.mrb[0].mxu0
      %1948 = vmatprep.mubr.bf16.mxu0 0
      %1949 = vmatmul.mubr.bf16.gmra.mrb[0].mxu0 %v1801
      %v1950 = vpop.f32.mrb[0].mxu0
      %v1951 = vadd.f32 %v1659, %v1950
      %v1952 = vpop.f32.mrb[0].mxu0
      %v1953 = vpop.f32.mrb[0].mxu0
      %v1954 = vadd.f32 %v1662, %v1953
      %v1955 = vpop.f32.mrb[0].mxu0
      %1956 = vmatprep.mubr.bf16.mxu0 0
      %1957 = vmatmul.mubr.bf16.gmra.mrb[0].mxu0 %v1804
      %v1958 = vpop.f32.mrb[0].mxu0
      %v1959 = vadd.f32 %v1667, %v1958
      %v1960 = vpop.f32.mrb[0].mxu0
      %v1961 = vpop.f32.mrb[0].mxu0
      %v1962 = vadd.f32 %v1670, %v1961
      %v1963 = vpop.f32.mrb[0].mxu0
      %1964 = vmatprep.mubr.bf16.mxu0 0
      %1965 = vmatmul.mubr.bf16.gmra.mrb[0].mxu0 %v1807
      %v1966 = vpop.f32.mrb[0].mxu0
      %v1967 = vadd.f32 %v1675, %v1966
      %v1968 = vpop.f32.mrb[0].mxu0
      %v1969 = vpop.f32.mrb[0].mxu0
      %v1970 = vadd.f32 %v1678, %v1969
      %v1971 = vpop.f32.mrb[0].mxu0
      %1972 = vdwg.mxu0
      %v1973 = vld [vmem:[#allocation2] sm:$0xe]
      %v1974 = vld [vmem:[#allocation2 + $0xc] sm:$0xe]
      %v1975 = vld [vmem:[#allocation2 + $0x18] sm:$0xe]
      %v1976 = vld [vmem:[#allocation2 + $0x24] sm:$0xe]
      %v1977 = vld [vmem:[#allocation2 + $0x30] sm:$0xe]
      %v1978 = vld [vmem:[#allocation2 + $0x3c] sm:$0xe]
      %v1979 = vld [vmem:[#allocation2 + $0x48] sm:$0xe]
      %v1980 = vld [vmem:[#allocation2 + $0x54] sm:$0xe]
      %v1981 = vld [vmem:[#allocation2 + $0x60] sm:$0xe]
      %v1982 = vld [vmem:[#allocation2 + $0x6c] sm:$0xe]
      %v1983 = vld [vmem:[#allocation2 + $0x78] sm:$0xe]
      %v1984 = vld [vmem:[#allocation2 + $0x84] sm:$0xe]
      %v1985 = vld [vmem:[#allocation2 + $0x90] sm:$0xe]
      %v1986 = vld [vmem:[#allocation2 + $0x9c] sm:$0xe]
      %v1987 = vld [vmem:[#allocation2 + $0xa8] sm:$0xe]
      %v1988 = vld [vmem:[#allocation2 + $0xb4] sm:$0xe]
      %vm2021 = vcmask 1042432
      %vm2022 = vcmask 1046532
      %vm2023 = vmor %vm2021, %vm2022
      %v2024 = vrot.slane %v1973, 5
      %v2025 = vrot.slane %v2024, 4
      %v2026 = vrot.slane %v982, 5
      %v2027 = vsel %vm2023, %v2025, %v2026
      %v2028 = vrot.slane %v2026, 4
      %v2029 = vrot.slane %v1014, 5
      %v2030 = vsel %vm2023, %v2028, %v2029
      %v2031 = vrot.slane %v1974, 5
      %v2032 = vrot.slane %v2031, 4
      %v2033 = vrot.slane %v984, 5
      %v2034 = vsel %vm2023, %v2032, %v2033
      %v2035 = vrot.slane %v2033, 4
      %v2036 = vrot.slane %v1015, 5
      %v2037 = vsel %vm2023, %v2035, %v2036
      %v2038 = vrot.slane %v1975, 5
      %v2039 = vrot.slane %v2038, 4
      %v2040 = vrot.slane %v986, 5
      %v2041 = vsel %vm2023, %v2039, %v2040
      %v2042 = vrot.slane %v2040, 4
      %v2043 = vrot.slane %v1016, 5
      %v2044 = vsel %vm2023, %v2042, %v2043
      %v2045 = vrot.slane %v1976, 5
      %v2046 = vrot.slane %v2045, 4
      %v2047 = vrot.slane %v988, 5
      %v2048 = vsel %vm2023, %v2046, %v2047
      %v2049 = vrot.slane %v2047, 4
      %v2050 = vrot.slane %v1017, 5
      %v2051 = vsel %vm2023, %v2049, %v2050
      %v2052 = vrot.slane %v1977, 5
      %v2053 = vrot.slane %v2052, 4
      %v2054 = vrot.slane %v990, 5
      %v2055 = vsel %vm2023, %v2053, %v2054
      %v2056 = vrot.slane %v2054, 4
      %v2057 = vrot.slane %v1018, 5
      %v2058 = vsel %vm2023, %v2056, %v2057
      %v2059 = vrot.slane %v1978, 5
      %v2060 = vrot.slane %v2059, 4
      %v2061 = vrot.slane %v992, 5
      %v2062 = vsel %vm2023, %v2060, %v2061
      %v2063 = vrot.slane %v2061, 4
      %v2064 = vrot.slane %v1019, 5
      %v2065 = vsel %vm2023, %v2063, %v2064
      %v2066 = vrot.slane %v1979, 5
      %v2067 = vrot.slane %v2066, 4
      %v2068 = vrot.slane %v994, 5
      %v2069 = vsel %vm2023, %v2067, %v2068
      %v2070 = vrot.slane %v2068, 4
      %v2071 = vrot.slane %v1020, 5
      %v2072 = vsel %vm2023, %v2070, %v2071
      %v2073 = vrot.slane %v1980, 5
      %v2074 = vrot.slane %v2073, 4
      %v2075 = vrot.slane %v996, 5
      %v2076 = vsel %vm2023, %v2074, %v2075
      %v2077 = vrot.slane %v2075, 4
      %v2078 = vrot.slane %v1021, 5
      %v2079 = vsel %vm2023, %v2077, %v2078
      %v2080 = vrot.slane %v1981, 5
      %v2081 = vrot.slane %v2080, 4
      %v2082 = vrot.slane %v998, 5
      %v2083 = vsel %vm2023, %v2081, %v2082
      %v2084 = vrot.slane %v2082, 4
      %v2085 = vrot.slane %v1022, 5
      %v2086 = vsel %vm2023, %v2084, %v2085
      %v2087 = vrot.slane %v1982, 5
      %v2088 = vrot.slane %v2087, 4
      %v2089 = vrot.slane %v1000, 5
      %v2090 = vsel %vm2023, %v2088, %v2089
      %v2091 = vrot.slane %v2089, 4
      %v2092 = vrot.slane %v1023, 5
      %v2093 = vsel %vm2023, %v2091, %v2092
      %v2094 = vrot.slane %v1983, 5
      %v2095 = vrot.slane %v2094, 4
      %v2096 = vrot.slane %v1002, 5
      %v2097 = vsel %vm2023, %v2095, %v2096
      %v2098 = vrot.slane %v2096, 4
      %v2099 = vrot.slane %v1024, 5
      %v2100 = vsel %vm2023, %v2098, %v2099
      %v2101 = vrot.slane %v1984, 5
      %v2102 = vrot.slane %v2101, 4
      %v2103 = vrot.slane %v1004, 5
      %v2104 = vsel %vm2023, %v2102, %v2103
      %v2105 = vrot.slane %v2103, 4
      %v2106 = vrot.slane %v1025, 5
      %v2107 = vsel %vm2023, %v2105, %v2106
      %v2108 = vrot.slane %v1985, 5
      %v2109 = vrot.slane %v2108, 4
      %v2110 = vrot.slane %v1006, 5
      %v2111 = vsel %vm2023, %v2109, %v2110
      %v2112 = vrot.slane %v2110, 4
      %v2113 = vrot.slane %v1026, 5
      %v2114 = vsel %vm2023, %v2112, %v2113
      %v2115 = vrot.slane %v1986, 5
      %v2116 = vrot.slane %v2115, 4
      %v2117 = vrot.slane %v1008, 5
      %v2118 = vsel %vm2023, %v2116, %v2117
      %v2119 = vrot.slane %v2117, 4
      %v2120 = vrot.slane %v1027, 5
      %v2121 = vsel %vm2023, %v2119, %v2120
      %v2122 = vrot.slane %v1987, 5
      %v2123 = vrot.slane %v2122, 4
      %v2124 = vrot.slane %v1010, 5
      %v2125 = vsel %vm2023, %v2123, %v2124
      %v2126 = vrot.slane %v2124, 4
      %v2127 = vrot.slane %v1028, 5
      %v2128 = vsel %vm2023, %v2126, %v2127
      %v2129 = vrot.slane %v1988, 5
      %v2130 = vrot.slane %v2129, 4
      %v2131 = vrot.slane %v1012, 5
      %v2132 = vsel %vm2023, %v2130, %v2131
      %v2133 = vrot.slane %v2131, 4
      %v2134 = vrot.slane %v1029, 5
      %v2135 = vsel %vm2023, %v2133, %v2134
      %s2136 = scalar_lea.vmem %s1, 4
      %v2137 = vld [vmem:[%s2136] sm:$0x3]
      %v2138 = vunpack.c.l.b16 %v2027
      %v2139 = vunpack.c.l.b16 %v2030
      %v2140 = vunpack.c.l.b16 %v2034
      %v2141 = vunpack.c.l.b16 %v2037
      %v2142 = vunpack.c.l.b16 %v2041
      %v2143 = vunpack.c.l.b16 %v2044
      %v2144 = vunpack.c.l.b16 %v2048
      %v2145 = vunpack.c.l.b16 %v2051
      %v2146 = vunpack.c.l.b16 %v2055
      %v2147 = vunpack.c.l.b16 %v2058
      %v2148 = vunpack.c.l.b16 %v2062
      %v2149 = vunpack.c.l.b16 %v2065
      %v2150 = vunpack.c.l.b16 %v2069
      %v2151 = vunpack.c.l.b16 %v2072
      %v2152 = vunpack.c.l.b16 %v2076
      %v2153 = vunpack.c.l.b16 %v2079
      %v2154 = vunpack.c.l.b16 %v2083
      %v2155 = vunpack.c.l.b16 %v2086
      %v2156 = vunpack.c.l.b16 %v2090
      %v2157 = vunpack.c.l.b16 %v2093
      %v2158 = vunpack.c.l.b16 %v2097
      %v2159 = vunpack.c.l.b16 %v2100
      %v2160 = vunpack.c.l.b16 %v2104
      %v2161 = vunpack.c.l.b16 %v2107
      %v2162 = vunpack.c.l.b16 %v2111
      %v2163 = vunpack.c.l.b16 %v2114
      %v2164 = vunpack.c.l.b16 %v2118
      %v2165 = vunpack.c.l.b16 %v2121
      %v2166 = vunpack.c.l.b16 %v2125
      %v2167 = vunpack.c.l.b16 %v2128
      %v2168 = vunpack.c.l.b16 %v2132
      %v2169 = vunpack.c.l.b16 %v2135
      %v2170 = vpack.c.b16 %v2139, %v2138
      %v2171 = vpack.c.b16 %v2141, %v2140
      %v2172 = vpack.c.b16 %v2143, %v2142
      %v2173 = vpack.c.b16 %v2145, %v2144
      %v2174 = vpack.c.b16 %v2147, %v2146
      %v2175 = vpack.c.b16 %v2149, %v2148
      %v2176 = vpack.c.b16 %v2151, %v2150
      %v2177 = vpack.c.b16 %v2153, %v2152
      %v2178 = vpack.c.b16 %v2155, %v2154
      %v2179 = vpack.c.b16 %v2157, %v2156
      %v2180 = vpack.c.b16 %v2159, %v2158
      %v2181 = vpack.c.b16 %v2161, %v2160
      %v2182 = vpack.c.b16 %v2163, %v2162
      %v2183 = vpack.c.b16 %v2165, %v2164
      %v2184 = vpack.c.b16 %v2167, %v2166
      %v2185 = vpack.c.b16 %v2169, %v2168
      %v2187 = vsel %vm1467, %v2170, 0
      %v2190 = vsel %vm1467, %v2171, 0
      %v2193 = vsel %vm1467, %v2172, 0
      %v2196 = vsel %vm1467, %v2173, 0
      %v2199 = vsel %vm1467, %v2174, 0
      %v2202 = vsel %vm1467, %v2175, 0
      %v2205 = vsel %vm1467, %v2176, 0
      %v2208 = vsel %vm1467, %v2177, 0
      %v2211 = vsel %vm1467, %v2178, 0
      %v2214 = vsel %vm1467, %v2179, 0
      %v2217 = vsel %vm1467, %v2180, 0
      %v2220 = vsel %vm1467, %v2181, 0
      %v2223 = vsel %vm1467, %v2182, 0
      %v2226 = vsel %vm1467, %v2183, 0
      %v2229 = vsel %vm1467, %v2184, 0
      %v2232 = vsel %vm1467, %v2185, 0
      %v2235 = vsel %vm1516, %v2137, 0
      %2237 = vmatprep.subr.bf16.mxu0 0
      %2238 = vmatpush1.bf16.msra.mxu0 %v2235
      %2239 = vmatprep.subr.bf16.mxu0 0
      %2240 = vmatpush1.bf16.msra.mxu0 0
      %2241 = vmatprep.subr.bf16.mxu0 0
      %2242 = vmatpush1.bf16.msra.mxu0 0
      %2243 = vmatprep.subr.bf16.mxu0 0
      %2244 = vmatpush1.bf16.msra.mxu0 0
      %2245 = vmatprep.subr.bf16.mxu0 0
      %2246 = vmatpush1.bf16.msra.mxu0 0
      %2247 = vmatprep.subr.bf16.mxu0 0
      %2248 = vmatpush1.bf16.msra.mxu0 0
      %2249 = vmatprep.subr.bf16.mxu0 0
      %2250 = vmatpush1.bf16.msra.mxu0 0
      %2251 = vmatprep.subr.bf16.mxu0 0
      %2252 = vmatpush1.bf16.msra.mxu0 0
      %2253 = vmatprep.subr.bf16.mxu0 0
      %2254 = vmatpush1.bf16.msra.mxu0 0
      %2255 = vmatprep.subr.bf16.mxu0 0
      %2256 = vmatpush1.bf16.msra.mxu0 0
      %2257 = vmatprep.subr.bf16.mxu0 0
      %2258 = vmatpush1.bf16.msra.mxu0 0
      %2259 = vmatprep.subr.bf16.mxu0 0
      %2260 = vmatpush1.bf16.msra.mxu0 0
      %2261 = vmatprep.subr.bf16.mxu0 0
      %2262 = vmatpush1.bf16.msra.mxu0 0
      %2263 = vmatprep.subr.bf16.mxu0 0
      %2264 = vmatpush1.bf16.msra.mxu0 0
      %2265 = vmatprep.subr.bf16.mxu0 0
      %2266 = vmatpush1.bf16.msra.mxu0 0
      %2267 = vmatprep.subr.bf16.mxu0 0
      %2268 = vmatpush1.bf16.msra.mxu0 0
      %2269 = vmatprep.mubr.bf16.mxu0 0
      %2270 = vmatmul.mubr.bf16.gmra.mrb[0].mxu0 %v2187
      %v2271 = vpop.f32.mrb[0].mxu0
      %v2272 = vadd.f32 0.0, %v2271
      %v2273 = vpop.f32.mrb[0].mxu0
      %v2274 = vpop.f32.mrb[0].mxu0
      %v2275 = vadd.f32 0.0, %v2274
      %v2276 = vpop.f32.mrb[0].mxu0
      %2277 = vmatprep.mubr.bf16.mxu0 0
      %2278 = vmatmul.mubr.bf16.gmra.mrb[0].mxu0 %v2190
      %v2279 = vpop.f32.mrb[0].mxu0
      %v2280 = vadd.f32 0.0, %v2279
      %v2281 = vpop.f32.mrb[0].mxu0
      %v2282 = vpop.f32.mrb[0].mxu0
      %v2283 = vadd.f32 0.0, %v2282
      %v2284 = vpop.f32.mrb[0].mxu0
      %2285 = vmatprep.mubr.bf16.mxu0 0
      %2286 = vmatmul.mubr.bf16.gmra.mrb[0].mxu0 %v2193
      %v2287 = vpop.f32.mrb[0].mxu0
      %v2288 = vadd.f32 0.0, %v2287
      %v2289 = vpop.f32.mrb[0].mxu0
      %v2290 = vpop.f32.mrb[0].mxu0
      %v2291 = vadd.f32 0.0, %v2290
      %v2292 = vpop.f32.mrb[0].mxu0
      %2293 = vmatprep.mubr.bf16.mxu0 0
      %2294 = vmatmul.mubr.bf16.gmra.mrb[0].mxu0 %v2196
      %v2295 = vpop.f32.mrb[0].mxu0
      %v2296 = vadd.f32 0.0, %v2295
      %v2297 = vpop.f32.mrb[0].mxu0
      %v2298 = vpop.f32.mrb[0].mxu0
      %v2299 = vadd.f32 0.0, %v2298
      %v2300 = vpop.f32.mrb[0].mxu0
      %2301 = vmatprep.mubr.bf16.mxu0 0
      %2302 = vmatmul.mubr.bf16.gmra.mrb[0].mxu0 %v2199
      %v2303 = vpop.f32.mrb[0].mxu0
      %v2304 = vadd.f32 0.0, %v2303
      %v2305 = vpop.f32.mrb[0].mxu0
      %v2306 = vpop.f32.mrb[0].mxu0
      %v2307 = vadd.f32 0.0, %v2306
      %v2308 = vpop.f32.mrb[0].mxu0
      %2309 = vmatprep.mubr.bf16.mxu0 0
      %2310 = vmatmul.mubr.bf16.gmra.mrb[0].mxu0 %v2202
      %v2311 = vpop.f32.mrb[0].mxu0
      %v2312 = vadd.f32 0.0, %v2311
      %v2313 = vpop.f32.mrb[0].mxu0
      %v2314 = vpop.f32.mrb[0].mxu0
      %v2315 = vadd.f32 0.0, %v2314
      %v2316 = vpop.f32.mrb[0].mxu0
      %2317 = vmatprep.mubr.bf16.mxu0 0
      %2318 = vmatmul.mubr.bf16.gmra.mrb[0].mxu0 %v2205
      %v2319 = vpop.f32.mrb[0].mxu0
      %v2320 = vadd.f32 0.0, %v2319
      %v2321 = vpop.f32.mrb[0].mxu0
      %v2322 = vpop.f32.mrb[0].mxu0
      %v2323 = vadd.f32 0.0, %v2322
      %v2324 = vpop.f32.mrb[0].mxu0
      %2325 = vmatprep.mubr.bf16.mxu0 0
      %2326 = vmatmul.mubr.bf16.gmra.mrb[0].mxu0 %v2208
      %v2327 = vpop.f32.mrb[0].mxu0
      %v2328 = vadd.f32 0.0, %v2327
      %v2329 = vpop.f32.mrb[0].mxu0
      %v2330 = vpop.f32.mrb[0].mxu0
      %v2331 = vadd.f32 0.0, %v2330
      %v2332 = vpop.f32.mrb[0].mxu0
      %2333 = vmatprep.mubr.bf16.mxu0 0
      %2334 = vmatmul.mubr.bf16.gmra.mrb[0].mxu0 %v2211
      %v2335 = vpop.f32.mrb[0].mxu0
      %v2336 = vadd.f32 0.0, %v2335
      %v2337 = vpop.f32.mrb[0].mxu0
      %v2338 = vpop.f32.mrb[0].mxu0
      %v2339 = vadd.f32 0.0, %v2338
      %v2340 = vpop.f32.mrb[0].mxu0
      %2341 = vmatprep.mubr.bf16.mxu0 0
      %2342 = vmatmul.mubr.bf16.gmra.mrb[0].mxu0 %v2214
      %v2343 = vpop.f32.mrb[0].mxu0
      %v2344 = vadd.f32 0.0, %v2343
      %v2345 = vpop.f32.mrb[0].mxu0
      %v2346 = vpop.f32.mrb[0].mxu0
      %v2347 = vadd.f32 0.0, %v2346
      %v2348 = vpop.f32.mrb[0].mxu0
      %2349 = vmatprep.mubr.bf16.mxu0 0
      %2350 = vmatmul.mubr.bf16.gmra.mrb[0].mxu0 %v2217
      %v2351 = vpop.f32.mrb[0].mxu0
      %v2352 = vadd.f32 0.0, %v2351
      %v2353 = vpop.f32.mrb[0].mxu0
      %v2354 = vpop.f32.mrb[0].mxu0
      %v2355 = vadd.f32 0.0, %v2354
      %v2356 = vpop.f32.mrb[0].mxu0
      %2357 = vmatprep.mubr.bf16.mxu0 0
      %2358 = vmatmul.mubr.bf16.gmra.mrb[0].mxu0 %v2220
      %v2359 = vpop.f32.mrb[0].mxu0
      %v2360 = vadd.f32 0.0, %v2359
      %v2361 = vpop.f32.mrb[0].mxu0
      %v2362 = vpop.f32.mrb[0].mxu0
      %v2363 = vadd.f32 0.0, %v2362
      %v2364 = vpop.f32.mrb[0].mxu0
      %2365 = vmatprep.mubr.bf16.mxu0 0
      %2366 = vmatmul.mubr.bf16.gmra.mrb[0].mxu0 %v2223
      %v2367 = vpop.f32.mrb[0].mxu0
      %v2368 = vadd.f32 0.0, %v2367
      %v2369 = vpop.f32.mrb[0].mxu0
      %v2370 = vpop.f32.mrb[0].mxu0
      %v2371 = vadd.f32 0.0, %v2370
      %v2372 = vpop.f32.mrb[0].mxu0
      %2373 = vmatprep.mubr.bf16.mxu0 0
      %2374 = vmatmul.mubr.bf16.gmra.mrb[0].mxu0 %v2226
      %v2375 = vpop.f32.mrb[0].mxu0
      %v2376 = vadd.f32 0.0, %v2375
      %v2377 = vpop.f32.mrb[0].mxu0
      %v2378 = vpop.f32.mrb[0].mxu0
      %v2379 = vadd.f32 0.0, %v2378
      %v2380 = vpop.f32.mrb[0].mxu0
      %2381 = vmatprep.mubr.bf16.mxu0 0
      %2382 = vmatmul.mubr.bf16.gmra.mrb[0].mxu0 %v2229
      %v2383 = vpop.f32.mrb[0].mxu0
      %v2384 = vadd.f32 0.0, %v2383
      %v2385 = vpop.f32.mrb[0].mxu0
      %v2386 = vpop.f32.mrb[0].mxu0
      %v2387 = vadd.f32 0.0, %v2386
      %v2388 = vpop.f32.mrb[0].mxu0
      %2389 = vmatprep.mubr.bf16.mxu0 0
      %2390 = vmatmul.mubr.bf16.gmra.mrb[0].mxu0 %v2232
      %v2391 = vpop.f32.mrb[0].mxu0
      %v2392 = vadd.f32 0.0, %v2391
      %v2393 = vpop.f32.mrb[0].mxu0
      %v2394 = vpop.f32.mrb[0].mxu0
      %v2395 = vadd.f32 0.0, %v2394
      %v2396 = vpop.f32.mrb[0].mxu0
      %2397 = vdwg.mxu0
      %v2398 = vadd.f32 %v1847, %v2272
      %v2399 = vadd.f32 %v1850, %v2275
      %v2400 = vadd.f32 %v1855, %v2280
      %v2401 = vadd.f32 %v1858, %v2283
      %v2402 = vadd.f32 %v1863, %v2288
      %v2403 = vadd.f32 %v1866, %v2291
      %v2404 = vadd.f32 %v1871, %v2296
      %v2405 = vadd.f32 %v1874, %v2299
      %v2406 = vadd.f32 %v1879, %v2304
      %v2407 = vadd.f32 %v1882, %v2307
      %v2408 = vadd.f32 %v1887, %v2312
      %v2409 = vadd.f32 %v1890, %v2315
      %v2410 = vadd.f32 %v1895, %v2320
      %v2411 = vadd.f32 %v1898, %v2323
      %v2412 = vadd.f32 %v1903, %v2328
      %v2413 = vadd.f32 %v1906, %v2331
      %v2414 = vadd.f32 %v1911, %v2336
      %v2415 = vadd.f32 %v1914, %v2339
      %v2416 = vadd.f32 %v1919, %v2344
      %v2417 = vadd.f32 %v1922, %v2347
      %v2418 = vadd.f32 %v1927, %v2352
      %v2419 = vadd.f32 %v1930, %v2355
      %v2420 = vadd.f32 %v1935, %v2360
      %v2421 = vadd.f32 %v1938, %v2363
      %v2422 = vadd.f32 %v1943, %v2368
      %v2423 = vadd.f32 %v1946, %v2371
      %v2424 = vadd.f32 %v1951, %v2376
      %v2425 = vadd.f32 %v1954, %v2379
      %v2426 = vadd.f32 %v1959, %v2384
      %v2427 = vadd.f32 %v1962, %v2387
      %v2428 = vadd.f32 %v1967, %v2392
      %v2429 = vadd.f32 %v1970, %v2395
      %v2430 = vld [vmem:[%s363] sm:$0xf]
      %v2431 = vld [vmem:[%s363 + $0x4] sm:$0xf]
      %v2432 = vld [vmem:[%s363 + $0xc] sm:$0xf]
      %v2433 = vld [vmem:[%s363 + $0x10] sm:$0xf]
      %v2434 = vld [vmem:[%s363 + $0x18] sm:$0xf]
      %v2435 = vld [vmem:[%s363 + $0x1c] sm:$0xf]
      %v2436 = vld [vmem:[%s363 + $0x24] sm:$0xf]
      %v2437 = vld [vmem:[%s363 + $0x28] sm:$0xf]
      %v2438 = vld [vmem:[%s363 + $0x30] sm:$0xf]
      %v2439 = vld [vmem:[%s363 + $0x34] sm:$0xf]
      %v2440 = vld [vmem:[%s363 + $0x3c] sm:$0xf]
      %v2441 = vld [vmem:[%s363 + $0x40] sm:$0xf]
      %v2442 = vld [vmem:[%s363 + $0x48] sm:$0xf]
      %v2443 = vld [vmem:[%s363 + $0x4c] sm:$0xf]
      %v2444 = vld [vmem:[%s363 + $0x54] sm:$0xf]
      %v2445 = vld [vmem:[%s363 + $0x58] sm:$0xf]
      %v2446 = vld [vmem:[%s363 + $0x60] sm:$0xf]
      %v2447 = vld [vmem:[%s363 + $0x64] sm:$0xf]
      %v2448 = vld [vmem:[%s363 + $0x6c] sm:$0xf]
      %v2449 = vld [vmem:[%s363 + $0x70] sm:$0xf]
      %v2450 = vld [vmem:[%s363 + $0x78] sm:$0xf]
      %v2451 = vld [vmem:[%s363 + $0x7c] sm:$0xf]
      %v2452 = vld [vmem:[%s363 + $0x84] sm:$0xf]
      %v2453 = vld [vmem:[%s363 + $0x88] sm:$0xf]
      %v2454 = vld [vmem:[%s363 + $0x90] sm:$0xf]
      %v2455 = vld [vmem:[%s363 + $0x94] sm:$0xf]
      %v2456 = vld [vmem:[%s363 + $0x9c] sm:$0xf]
      %v2457 = vld [vmem:[%s363 + $0xa0] sm:$0xf]
      %v2458 = vld [vmem:[%s363 + $0xa8] sm:$0xf]
      %v2459 = vld [vmem:[%s363 + $0xac] sm:$0xf]
      %v2460 = vld [vmem:[%s363 + $0xb4] sm:$0xf]
      %v2461 = vld [vmem:[%s363 + $0xb8] sm:$0xf]
      %s2462 = scalar_lea.vmem %s1, 6
      %v2463 = vld [vmem:[%s2462] sm:$0x3]
      %v2496 = vunpack.c.l.b16 %v2430
      %v2497 = vunpack.c.l.b16 %v2431
      %v2498 = vunpack.c.l.b16 %v2432
      %v2499 = vunpack.c.l.b16 %v2433
      %v2500 = vunpack.c.l.b16 %v2434
      %v2501 = vunpack.c.l.b16 %v2435
      %v2502 = vunpack.c.l.b16 %v2436
      %v2503 = vunpack.c.l.b16 %v2437
      %v2504 = vunpack.c.l.b16 %v2438
      %v2505 = vunpack.c.l.b16 %v2439
      %v2506 = vunpack.c.l.b16 %v2440
      %v2507 = vunpack.c.l.b16 %v2441
      %v2508 = vunpack.c.l.b16 %v2442
      %v2509 = vunpack.c.l.b16 %v2443
      %v2510 = vunpack.c.l.b16 %v2444
      %v2511 = vunpack.c.l.b16 %v2445
      %v2512 = vunpack.c.l.b16 %v2446
      %v2513 = vunpack.c.l.b16 %v2447
      %v2514 = vunpack.c.l.b16 %v2448
      %v2515 = vunpack.c.l.b16 %v2449
      %v2516 = vunpack.c.l.b16 %v2450
      %v2517 = vunpack.c.l.b16 %v2451
      %v2518 = vunpack.c.l.b16 %v2452
      %v2519 = vunpack.c.l.b16 %v2453
      %v2520 = vunpack.c.l.b16 %v2454
      %v2521 = vunpack.c.l.b16 %v2455
      %v2522 = vunpack.c.l.b16 %v2456
      %v2523 = vunpack.c.l.b16 %v2457
      %v2524 = vunpack.c.l.b16 %v2458
      %v2525 = vunpack.c.l.b16 %v2459
      %v2526 = vunpack.c.l.b16 %v2460
      %v2527 = vunpack.c.l.b16 %v2461
      %v2528 = vpack.c.b16 %v2497, %v2496
      %v2529 = vpack.c.b16 %v2499, %v2498
      %v2530 = vpack.c.b16 %v2501, %v2500
      %v2531 = vpack.c.b16 %v2503, %v2502
      %v2532 = vpack.c.b16 %v2505, %v2504
      %v2533 = vpack.c.b16 %v2507, %v2506
      %v2534 = vpack.c.b16 %v2509, %v2508
      %v2535 = vpack.c.b16 %v2511, %v2510
      %v2536 = vpack.c.b16 %v2513, %v2512
      %v2537 = vpack.c.b16 %v2515, %v2514
      %v2538 = vpack.c.b16 %v2517, %v2516
      %v2539 = vpack.c.b16 %v2519, %v2518
      %v2540 = vpack.c.b16 %v2521, %v2520
      %v2541 = vpack.c.b16 %v2523, %v2522
      %v2542 = vpack.c.b16 %v2525, %v2524
      %v2543 = vpack.c.b16 %v2527, %v2526
      %v2545 = vsel %vm1467, %v2528, 0
      %v2548 = vsel %vm1467, %v2529, 0
      %v2551 = vsel %vm1467, %v2530, 0
      %v2554 = vsel %vm1467, %v2531, 0
      %v2557 = vsel %vm1467, %v2532, 0
      %v2560 = vsel %vm1467, %v2533, 0
      %v2563 = vsel %vm1467, %v2534, 0
      %v2566 = vsel %vm1467, %v2535, 0
      %v2569 = vsel %vm1467, %v2536, 0
      %v2572 = vsel %vm1467, %v2537, 0
      %v2575 = vsel %vm1467, %v2538, 0
      %v2578 = vsel %vm1467, %v2539, 0
      %v2581 = vsel %vm1467, %v2540, 0
      %v2584 = vsel %vm1467, %v2541, 0
      %v2587 = vsel %vm1467, %v2542, 0
      %v2590 = vsel %vm1467, %v2543, 0
      %v2593 = vsel %vm1516, %v2463, 0
      %2595 = vmatprep.subr.bf16.mxu0 0
      %2596 = vmatpush1.bf16.msra.mxu0 %v2593
      %2597 = vmatprep.subr.bf16.mxu0 0
      %2598 = vmatpush1.bf16.msra.mxu0 0
      %2599 = vmatprep.subr.bf16.mxu0 0
      %2600 = vmatpush1.bf16.msra.mxu0 0
      %2601 = vmatprep.subr.bf16.mxu0 0
      %2602 = vmatpush1.bf16.msra.mxu0 0
      %2603 = vmatprep.subr.bf16.mxu0 0
      %2604 = vmatpush1.bf16.msra.mxu0 0
      %2605 = vmatprep.subr.bf16.mxu0 0
      %2606 = vmatpush1.bf16.msra.mxu0 0
      %2607 = vmatprep.subr.bf16.mxu0 0
      %2608 = vmatpush1.bf16.msra.mxu0 0
      %2609 = vmatprep.subr.bf16.mxu0 0
      %2610 = vmatpush1.bf16.msra.mxu0 0
      %2611 = vmatprep.subr.bf16.mxu0 0
      %2612 = vmatpush1.bf16.msra.mxu0 0
      %2613 = vmatprep.subr.bf16.mxu0 0
      %2614 = vmatpush1.bf16.msra.mxu0 0
      %2615 = vmatprep.subr.bf16.mxu0 0
      %2616 = vmatpush1.bf16.msra.mxu0 0
      %2617 = vmatprep.subr.bf16.mxu0 0
      %2618 = vmatpush1.bf16.msra.mxu0 0
      %2619 = vmatprep.subr.bf16.mxu0 0
      %2620 = vmatpush1.bf16.msra.mxu0 0
      %2621 = vmatprep.subr.bf16.mxu0 0
      %2622 = vmatpush1.bf16.msra.mxu0 0
      %2623 = vmatprep.subr.bf16.mxu0 0
      %2624 = vmatpush1.bf16.msra.mxu0 0
      %2625 = vmatprep.subr.bf16.mxu0 0
      %2626 = vmatpush1.bf16.msra.mxu0 0
      %2627 = vmatprep.mubr.bf16.mxu0 0
      %2628 = vmatmul.mubr.bf16.gmra.mrb[0].mxu0 %v2545
      %v2629 = vpop.f32.mrb[0].mxu0
      %v2630 = vadd.f32 0.0, %v2629
      %v2631 = vpop.f32.mrb[0].mxu0
      %v2632 = vpop.f32.mrb[0].mxu0
      %v2633 = vadd.f32 0.0, %v2632
      %v2634 = vpop.f32.mrb[0].mxu0
      %2635 = vmatprep.mubr.bf16.mxu0 0
      %2636 = vmatmul.mubr.bf16.gmra.mrb[0].mxu0 %v2548
      %v2637 = vpop.f32.mrb[0].mxu0
      %v2638 = vadd.f32 0.0, %v2637
      %v2639 = vpop.f32.mrb[0].mxu0
      %v2640 = vpop.f32.mrb[0].mxu0
      %v2641 = vadd.f32 0.0, %v2640
      %v2642 = vpop.f32.mrb[0].mxu0
      %2643 = vmatprep.mubr.bf16.mxu0 0
      %2644 = vmatmul.mubr.bf16.gmra.mrb[0].mxu0 %v2551
      %v2645 = vpop.f32.mrb[0].mxu0
      %v2646 = vadd.f32 0.0, %v2645
      %v2647 = vpop.f32.mrb[0].mxu0
      %v2648 = vpop.f32.mrb[0].mxu0
      %v2649 = vadd.f32 0.0, %v2648
      %v2650 = vpop.f32.mrb[0].mxu0
      %2651 = vmatprep.mubr.bf16.mxu0 0
      %2652 = vmatmul.mubr.bf16.gmra.mrb[0].mxu0 %v2554
      %v2653 = vpop.f32.mrb[0].mxu0
      %v2654 = vadd.f32 0.0, %v2653
      %v2655 = vpop.f32.mrb[0].mxu0
      %v2656 = vpop.f32.mrb[0].mxu0
      %v2657 = vadd.f32 0.0, %v2656
      %v2658 = vpop.f32.mrb[0].mxu0
      %2659 = vmatprep.mubr.bf16.mxu0 0
      %2660 = vmatmul.mubr.bf16.gmra.mrb[0].mxu0 %v2557
      %v2661 = vpop.f32.mrb[0].mxu0
      %v2662 = vadd.f32 0.0, %v2661
      %v2663 = vpop.f32.mrb[0].mxu0
      %v2664 = vpop.f32.mrb[0].mxu0
      %v2665 = vadd.f32 0.0, %v2664
      %v2666 = vpop.f32.mrb[0].mxu0
      %2667 = vmatprep.mubr.bf16.mxu0 0
      %2668 = vmatmul.mubr.bf16.gmra.mrb[0].mxu0 %v2560
      %v2669 = vpop.f32.mrb[0].mxu0
      %v2670 = vadd.f32 0.0, %v2669
      %v2671 = vpop.f32.mrb[0].mxu0
      %v2672 = vpop.f32.mrb[0].mxu0
      %v2673 = vadd.f32 0.0, %v2672
      %v2674 = vpop.f32.mrb[0].mxu0
      %2675 = vmatprep.mubr.bf16.mxu0 0
      %2676 = vmatmul.mubr.bf16.gmra.mrb[0].mxu0 %v2563
      %v2677 = vpop.f32.mrb[0].mxu0
      %v2678 = vadd.f32 0.0, %v2677
      %v2679 = vpop.f32.mrb[0].mxu0
      %v2680 = vpop.f32.mrb[0].mxu0
      %v2681 = vadd.f32 0.0, %v2680
      %v2682 = vpop.f32.mrb[0].mxu0
      %2683 = vmatprep.mubr.bf16.mxu0 0
      %2684 = vmatmul.mubr.bf16.gmra.mrb[0].mxu0 %v2566
      %v2685 = vpop.f32.mrb[0].mxu0
      %v2686 = vadd.f32 0.0, %v2685
      %v2687 = vpop.f32.mrb[0].mxu0
      %v2688 = vpop.f32.mrb[0].mxu0
      %v2689 = vadd.f32 0.0, %v2688
      %v2690 = vpop.f32.mrb[0].mxu0
      %2691 = vmatprep.mubr.bf16.mxu0 0
      %2692 = vmatmul.mubr.bf16.gmra.mrb[0].mxu0 %v2569
      %v2693 = vpop.f32.mrb[0].mxu0
      %v2694 = vadd.f32 0.0, %v2693
      %v2695 = vpop.f32.mrb[0].mxu0
      %v2696 = vpop.f32.mrb[0].mxu0
      %v2697 = vadd.f32 0.0, %v2696
      %v2698 = vpop.f32.mrb[0].mxu0
      %2699 = vmatprep.mubr.bf16.mxu0 0
      %2700 = vmatmul.mubr.bf16.gmra.mrb[0].mxu0 %v2572
      %v2701 = vpop.f32.mrb[0].mxu0
      %v2702 = vadd.f32 0.0, %v2701
      %v2703 = vpop.f32.mrb[0].mxu0
      %v2704 = vpop.f32.mrb[0].mxu0
      %v2705 = vadd.f32 0.0, %v2704
      %v2706 = vpop.f32.mrb[0].mxu0
      %2707 = vmatprep.mubr.bf16.mxu0 0
      %2708 = vmatmul.mubr.bf16.gmra.mrb[0].mxu0 %v2575
      %v2709 = vpop.f32.mrb[0].mxu0
      %v2710 = vadd.f32 0.0, %v2709
      %v2711 = vpop.f32.mrb[0].mxu0
      %v2712 = vpop.f32.mrb[0].mxu0
      %v2713 = vadd.f32 0.0, %v2712
      %v2714 = vpop.f32.mrb[0].mxu0
      %2715 = vmatprep.mubr.bf16.mxu0 0
      %2716 = vmatmul.mubr.bf16.gmra.mrb[0].mxu0 %v2578
      %v2717 = vpop.f32.mrb[0].mxu0
      %v2718 = vadd.f32 0.0, %v2717
      %v2719 = vpop.f32.mrb[0].mxu0
      %v2720 = vpop.f32.mrb[0].mxu0
      %v2721 = vadd.f32 0.0, %v2720
      %v2722 = vpop.f32.mrb[0].mxu0
      %2723 = vmatprep.mubr.bf16.mxu0 0
      %2724 = vmatmul.mubr.bf16.gmra.mrb[0].mxu0 %v2581
      %v2725 = vpop.f32.mrb[0].mxu0
      %v2726 = vadd.f32 0.0, %v2725
      %v2727 = vpop.f32.mrb[0].mxu0
      %v2728 = vpop.f32.mrb[0].mxu0
      %v2729 = vadd.f32 0.0, %v2728
      %v2730 = vpop.f32.mrb[0].mxu0
      %2731 = vmatprep.mubr.bf16.mxu0 0
      %2732 = vmatmul.mubr.bf16.gmra.mrb[0].mxu0 %v2584
      %v2733 = vpop.f32.mrb[0].mxu0
      %v2734 = vadd.f32 0.0, %v2733
      %v2735 = vpop.f32.mrb[0].mxu0
      %v2736 = vpop.f32.mrb[0].mxu0
      %v2737 = vadd.f32 0.0, %v2736
      %v2738 = vpop.f32.mrb[0].mxu0
      %2739 = vmatprep.mubr.bf16.mxu0 0
      %2740 = vmatmul.mubr.bf16.gmra.mrb[0].mxu0 %v2587
      %v2741 = vpop.f32.mrb[0].mxu0
      %v2742 = vadd.f32 0.0, %v2741
      %v2743 = vpop.f32.mrb[0].mxu0
      %v2744 = vpop.f32.mrb[0].mxu0
      %v2745 = vadd.f32 0.0, %v2744
      %v2746 = vpop.f32.mrb[0].mxu0
      %2747 = vmatprep.mubr.bf16.mxu0 0
      %2748 = vmatmul.mubr.bf16.gmra.mrb[0].mxu0 %v2590
      %v2749 = vpop.f32.mrb[0].mxu0
      %v2750 = vadd.f32 0.0, %v2749
      %v2751 = vpop.f32.mrb[0].mxu0
      %v2752 = vpop.f32.mrb[0].mxu0
      %v2753 = vadd.f32 0.0, %v2752
      %v2754 = vpop.f32.mrb[0].mxu0
      %2755 = vdwg.mxu0
      %v2756 = vadd.f32 %v2398, %v2630
      %v2757 = vadd.f32 %v2399, %v2633
      %v2758 = vadd.f32 %v2400, %v2638
      %v2759 = vadd.f32 %v2401, %v2641
      %v2760 = vadd.f32 %v2402, %v2646
      %v2761 = vadd.f32 %v2403, %v2649
      %v2762 = vadd.f32 %v2404, %v2654
      %v2763 = vadd.f32 %v2405, %v2657
      %v2764 = vadd.f32 %v2406, %v2662
      %v2765 = vadd.f32 %v2407, %v2665
      %v2766 = vadd.f32 %v2408, %v2670
      %v2767 = vadd.f32 %v2409, %v2673
      %v2768 = vadd.f32 %v2410, %v2678
      %v2769 = vadd.f32 %v2411, %v2681
      %v2770 = vadd.f32 %v2412, %v2686
      %v2771 = vadd.f32 %v2413, %v2689
      %v2772 = vadd.f32 %v2414, %v2694
      %v2773 = vadd.f32 %v2415, %v2697
      %v2774 = vadd.f32 %v2416, %v2702
      %v2775 = vadd.f32 %v2417, %v2705
      %v2776 = vadd.f32 %v2418, %v2710
      %v2777 = vadd.f32 %v2419, %v2713
      %v2778 = vadd.f32 %v2420, %v2718
      %v2779 = vadd.f32 %v2421, %v2721
      %v2780 = vadd.f32 %v2422, %v2726
      %v2781 = vadd.f32 %v2423, %v2729
      %v2782 = vadd.f32 %v2424, %v2734
      %v2783 = vadd.f32 %v2425, %v2737
      %v2784 = vadd.f32 %v2426, %v2742
      %v2785 = vadd.f32 %v2427, %v2745
      %v2786 = vadd.f32 %v2428, %v2750
      %v2787 = vadd.f32 %v2429, %v2753
      %v2788 = vld [vmem:[%s363] sm:$0xf]
      %v2789 = vld [vmem:[%s363 + $0x4] sm:$0xf]
      %v2790 = vld [vmem:[%s363 + $0x8] sm:$0x1]
      %v2791 = vld [vmem:[%s363 + $0xc] sm:$0xf]
      %v2792 = vld [vmem:[%s363 + $0x10] sm:$0xf]
      %v2793 = vld [vmem:[%s363 + $0x14] sm:$0x1]
      %v2794 = vld [vmem:[%s363 + $0x18] sm:$0xf]
      %v2795 = vld [vmem:[%s363 + $0x1c] sm:$0xf]
      %v2796 = vld [vmem:[%s363 + $0x20] sm:$0x1]
      %v2797 = vld [vmem:[%s363 + $0x24] sm:$0xf]
      %v2798 = vld [vmem:[%s363 + $0x28] sm:$0xf]
      %v2799 = vld [vmem:[%s363 + $0x2c] sm:$0x1]
      %v2800 = vld [vmem:[%s363 + $0x30] sm:$0xf]
      %v2801 = vld [vmem:[%s363 + $0x34] sm:$0xf]
      %v2802 = vld [vmem:[%s363 + $0x38] sm:$0x1]
      %v2803 = vld [vmem:[%s363 + $0x3c] sm:$0xf]
      %v2804 = vld [vmem:[%s363 + $0x40] sm:$0xf]
      %v2805 = vld [vmem:[%s363 + $0x44] sm:$0x1]
      %v2806 = vld [vmem:[%s363 + $0x48] sm:$0xf]
      %v2807 = vld [vmem:[%s363 + $0x4c] sm:$0xf]
      %v2808 = vld [vmem:[%s363 + $0x50] sm:$0x1]
      %v2809 = vld [vmem:[%s363 + $0x54] sm:$0xf]
      %v2810 = vld [vmem:[%s363 + $0x58] sm:$0xf]
      %v2811 = vld [vmem:[%s363 + $0x5c] sm:$0x1]
      %v2812 = vld [vmem:[%s363 + $0x60] sm:$0xf]
      %v2813 = vld [vmem:[%s363 + $0x64] sm:$0xf]
      %v2814 = vld [vmem:[%s363 + $0x68] sm:$0x1]
      %v2815 = vld [vmem:[%s363 + $0x6c] sm:$0xf]
      %v2816 = vld [vmem:[%s363 + $0x70] sm:$0xf]
      %v2817 = vld [vmem:[%s363 + $0x74] sm:$0x1]
      %v2818 = vld [vmem:[%s363 + $0x78] sm:$0xf]
      %v2819 = vld [vmem:[%s363 + $0x7c] sm:$0xf]
      %v2820 = vld [vmem:[%s363 + $0x80] sm:$0x1]
      %v2821 = vld [vmem:[%s363 + $0x84] sm:$0xf]
      %v2822 = vld [vmem:[%s363 + $0x88] sm:$0xf]
      %v2823 = vld [vmem:[%s363 + $0x8c] sm:$0x1]
      %v2824 = vld [vmem:[%s363 + $0x90] sm:$0xf]
      %v2825 = vld [vmem:[%s363 + $0x94] sm:$0xf]
      %v2826 = vld [vmem:[%s363 + $0x98] sm:$0x1]
      %v2827 = vld [vmem:[%s363 + $0x9c] sm:$0xf]
      %v2828 = vld [vmem:[%s363 + $0xa0] sm:$0xf]
      %v2829 = vld [vmem:[%s363 + $0xa4] sm:$0x1]
      %v2830 = vld [vmem:[%s363 + $0xa8] sm:$0xf]
      %v2831 = vld [vmem:[%s363 + $0xac] sm:$0xf]
      %v2832 = vld [vmem:[%s363 + $0xb0] sm:$0x1]
      %v2833 = vld [vmem:[%s363 + $0xb4] sm:$0xf]
      %v2834 = vld [vmem:[%s363 + $0xb8] sm:$0xf]
      %v2835 = vld [vmem:[%s363 + $0xbc] sm:$0x1]
      %v2837 = vshrl.u32 %v2788, 16
      %v2839 = vrot.slane %v2837, 4
      %v2840 = vshll.u32 %v2788, 16
      %v2842 = vrot.slane %v2840, 5
      %v2843 = vor.u32 %v2839, %v2842
      %v2844 = vrot.slane %v2843, 4
      %v2846 = vshll.u32 %v2789, 16
      %v2848 = vrot.slane %v2846, 5
      %v2849 = vsel %vm1032, %v2844, %v2848
      %v2850 = vshrl.u32 %v2789, 16
      %v2852 = vrot.slane %v2850, 4
      %v2853 = vor.u32 %v2852, %v2848
      %v2854 = vrot.slane %v2853, 4
      %v2856 = vshll.u32 %v2790, 16
      %v2858 = vrot.slane %v2856, 5
      %v2859 = vsel %vm1032, %v2854, %v2858
      %v2861 = vshrl.u32 %v2791, 16
      %v2863 = vrot.slane %v2861, 4
      %v2864 = vshll.u32 %v2791, 16
      %v2866 = vrot.slane %v2864, 5
      %v2867 = vor.u32 %v2863, %v2866
      %v2868 = vrot.slane %v2867, 4
      %v2870 = vshll.u32 %v2792, 16
      %v2872 = vrot.slane %v2870, 5
      %v2873 = vsel %vm1032, %v2868, %v2872
      %v2874 = vshrl.u32 %v2792, 16
      %v2876 = vrot.slane %v2874, 4
      %v2877 = vor.u32 %v2876, %v2872
      %v2878 = vrot.slane %v2877, 4
      %v2880 = vshll.u32 %v2793, 16
      %v2882 = vrot.slane %v2880, 5
      %v2883 = vsel %vm1032, %v2878, %v2882
      %v2885 = vshrl.u32 %v2794, 16
      %v2887 = vrot.slane %v2885, 4
      %v2888 = vshll.u32 %v2794, 16
      %v2890 = vrot.slane %v2888, 5
      %v2891 = vor.u32 %v2887, %v2890
      %v2892 = vrot.slane %v2891, 4
      %v2894 = vshll.u32 %v2795, 16
      %v2896 = vrot.slane %v2894, 5
      %v2897 = vsel %vm1032, %v2892, %v2896
      %v2898 = vshrl.u32 %v2795, 16
      %v2900 = vrot.slane %v2898, 4
      %v2901 = vor.u32 %v2900, %v2896
      %v2902 = vrot.slane %v2901, 4
      %v2904 = vshll.u32 %v2796, 16
      %v2906 = vrot.slane %v2904, 5
      %v2907 = vsel %vm1032, %v2902, %v2906
      %v2909 = vshrl.u32 %v2797, 16
      %v2911 = vrot.slane %v2909, 4
      %v2912 = vshll.u32 %v2797, 16
      %v2914 = vrot.slane %v2912, 5
      %v2915 = vor.u32 %v2911, %v2914
      %v2916 = vrot.slane %v2915, 4
      %v2918 = vshll.u32 %v2798, 16
      %v2920 = vrot.slane %v2918, 5
      %v2921 = vsel %vm1032, %v2916, %v2920
      %v2922 = vshrl.u32 %v2798, 16
      %v2924 = vrot.slane %v2922, 4
      %v2925 = vor.u32 %v2924, %v2920
      %v2926 = vrot.slane %v2925, 4
      %v2928 = vshll.u32 %v2799, 16
      %v2930 = vrot.slane %v2928, 5
      %v2931 = vsel %vm1032, %v2926, %v2930
      %v2933 = vshrl.u32 %v2800, 16
      %v2935 = vrot.slane %v2933, 4
      %v2936 = vshll.u32 %v2800, 16
      %v2938 = vrot.slane %v2936, 5
      %v2939 = vor.u32 %v2935, %v2938
      %v2940 = vrot.slane %v2939, 4
      %v2942 = vshll.u32 %v2801, 16
      %v2944 = vrot.slane %v2942, 5
      %v2945 = vsel %vm1032, %v2940, %v2944
      %v2946 = vshrl.u32 %v2801, 16
      %v2948 = vrot.slane %v2946, 4
      %v2949 = vor.u32 %v2948, %v2944
      %v2950 = vrot.slane %v2949, 4
      %v2952 = vshll.u32 %v2802, 16
      %v2954 = vrot.slane %v2952, 5
      %v2955 = vsel %vm1032, %v2950, %v2954
      %v2957 = vshrl.u32 %v2803, 16
      %v2959 = vrot.slane %v2957, 4
      %v2960 = vshll.u32 %v2803, 16
      %v2962 = vrot.slane %v2960, 5
      %v2963 = vor.u32 %v2959, %v2962
      %v2964 = vrot.slane %v2963, 4
      %v2966 = vshll.u32 %v2804, 16
      %v2968 = vrot.slane %v2966, 5
      %v2969 = vsel %vm1032, %v2964, %v2968
      %v2970 = vshrl.u32 %v2804, 16
      %v2972 = vrot.slane %v2970, 4
      %v2973 = vor.u32 %v2972, %v2968
      %v2974 = vrot.slane %v2973, 4
      %v2976 = vshll.u32 %v2805, 16
      %v2978 = vrot.slane %v2976, 5
      %v2979 = vsel %vm1032, %v2974, %v2978
      %v2981 = vshrl.u32 %v2806, 16
      %v2983 = vrot.slane %v2981, 4
      %v2984 = vshll.u32 %v2806, 16
      %v2986 = vrot.slane %v2984, 5
      %v2987 = vor.u32 %v2983, %v2986
      %v2988 = vrot.slane %v2987, 4
      %v2990 = vshll.u32 %v2807, 16
      %v2992 = vrot.slane %v2990, 5
      %v2993 = vsel %vm1032, %v2988, %v2992
      %v2994 = vshrl.u32 %v2807, 16
      %v2996 = vrot.slane %v2994, 4
      %v2997 = vor.u32 %v2996, %v2992
      %v2998 = vrot.slane %v2997, 4
      %v3000 = vshll.u32 %v2808, 16
      %v3002 = vrot.slane %v3000, 5
      %v3003 = vsel %vm1032, %v2998, %v3002
      %v3005 = vshrl.u32 %v2809, 16
      %v3007 = vrot.slane %v3005, 4
      %v3008 = vshll.u32 %v2809, 16
      %v3010 = vrot.slane %v3008, 5
      %v3011 = vor.u32 %v3007, %v3010
      %v3012 = vrot.slane %v3011, 4
      %v3014 = vshll.u32 %v2810, 16
      %v3016 = vrot.slane %v3014, 5
      %v3017 = vsel %vm1032, %v3012, %v3016
      %v3018 = vshrl.u32 %v2810, 16
      %v3020 = vrot.slane %v3018, 4
      %v3021 = vor.u32 %v3020, %v3016
      %v3022 = vrot.slane %v3021, 4
      %v3024 = vshll.u32 %v2811, 16
      %v3026 = vrot.slane %v3024, 5
      %v3027 = vsel %vm1032, %v3022, %v3026
      %v3029 = vshrl.u32 %v2812, 16
      %v3031 = vrot.slane %v3029, 4
      %v3032 = vshll.u32 %v2812, 16
      %v3034 = vrot.slane %v3032, 5
      %v3035 = vor.u32 %v3031, %v3034
      %v3036 = vrot.slane %v3035, 4
      %v3038 = vshll.u32 %v2813, 16
      %v3040 = vrot.slane %v3038, 5
      %v3041 = vsel %vm1032, %v3036, %v3040
      %v3042 = vshrl.u32 %v2813, 16
      %v3044 = vrot.slane %v3042, 4
      %v3045 = vor.u32 %v3044, %v3040
      %v3046 = vrot.slane %v3045, 4
      %v3048 = vshll.u32 %v2814, 16
      %v3050 = vrot.slane %v3048, 5
      %v3051 = vsel %vm1032, %v3046, %v3050
      %v3053 = vshrl.u32 %v2815, 16
      %v3055 = vrot.slane %v3053, 4
      %v3056 = vshll.u32 %v2815, 16
      %v3058 = vrot.slane %v3056, 5
      %v3059 = vor.u32 %v3055, %v3058
      %v3060 = vrot.slane %v3059, 4
      %v3062 = vshll.u32 %v2816, 16
      %v3064 = vrot.slane %v3062, 5
      %v3065 = vsel %vm1032, %v3060, %v3064
      %v3066 = vshrl.u32 %v2816, 16
      %v3068 = vrot.slane %v3066, 4
      %v3069 = vor.u32 %v3068, %v3064
      %v3070 = vrot.slane %v3069, 4
      %v3072 = vshll.u32 %v2817, 16
      %v3074 = vrot.slane %v3072, 5
      %v3075 = vsel %vm1032, %v3070, %v3074
      %v3077 = vshrl.u32 %v2818, 16
      %v3079 = vrot.slane %v3077, 4
      %v3080 = vshll.u32 %v2818, 16
      %v3082 = vrot.slane %v3080, 5
      %v3083 = vor.u32 %v3079, %v3082
      %v3084 = vrot.slane %v3083, 4
      %v3086 = vshll.u32 %v2819, 16
      %v3088 = vrot.slane %v3086, 5
      %v3089 = vsel %vm1032, %v3084, %v3088
      %v3090 = vshrl.u32 %v2819, 16
      %v3092 = vrot.slane %v3090, 4
      %v3093 = vor.u32 %v3092, %v3088
      %v3094 = vrot.slane %v3093, 4
      %v3096 = vshll.u32 %v2820, 16
      %v3098 = vrot.slane %v3096, 5
      %v3099 = vsel %vm1032, %v3094, %v3098
      %v3101 = vshrl.u32 %v2821, 16
      %v3103 = vrot.slane %v3101, 4
      %v3104 = vshll.u32 %v2821, 16
      %v3106 = vrot.slane %v3104, 5
      %v3107 = vor.u32 %v3103, %v3106
      %v3108 = vrot.slane %v3107, 4
      %v3110 = vshll.u32 %v2822, 16
      %v3112 = vrot.slane %v3110, 5
      %v3113 = vsel %vm1032, %v3108, %v3112
      %v3114 = vshrl.u32 %v2822, 16
      %v3116 = vrot.slane %v3114, 4
      %v3117 = vor.u32 %v3116, %v3112
      %v3118 = vrot.slane %v3117, 4
      %v3120 = vshll.u32 %v2823, 16
      %v3122 = vrot.slane %v3120, 5
      %v3123 = vsel %vm1032, %v3118, %v3122
      %v3125 = vshrl.u32 %v2824, 16
      %v3127 = vrot.slane %v3125, 4
      %v3128 = vshll.u32 %v2824, 16
      %v3130 = vrot.slane %v3128, 5
      %v3131 = vor.u32 %v3127, %v3130
      %v3132 = vrot.slane %v3131, 4
      %v3134 = vshll.u32 %v2825, 16
      %v3136 = vrot.slane %v3134, 5
      %v3137 = vsel %vm1032, %v3132, %v3136
      %v3138 = vshrl.u32 %v2825, 16
      %v3140 = vrot.slane %v3138, 4
      %v3141 = vor.u32 %v3140, %v3136
      %v3142 = vrot.slane %v3141, 4
      %v3144 = vshll.u32 %v2826, 16
      %v3146 = vrot.slane %v3144, 5
      %v3147 = vsel %vm1032, %v3142, %v3146
      %v3149 = vshrl.u32 %v2827, 16
      %v3151 = vrot.slane %v3149, 4
      %v3152 = vshll.u32 %v2827, 16
      %v3154 = vrot.slane %v3152, 5
      %v3155 = vor.u32 %v3151, %v3154
      %v3156 = vrot.slane %v3155, 4
      %v3158 = vshll.u32 %v2828, 16
      %v3160 = vrot.slane %v3158, 5
      %v3161 = vsel %vm1032, %v3156, %v3160
      %v3162 = vshrl.u32 %v2828, 16
      %v3164 = vrot.slane %v3162, 4
      %v3165 = vor.u32 %v3164, %v3160
      %v3166 = vrot.slane %v3165, 4
      %v3168 = vshll.u32 %v2829, 16
      %v3170 = vrot.slane %v3168, 5
      %v3171 = vsel %vm1032, %v3166, %v3170
      %v3173 = vshrl.u32 %v2830, 16
      %v3175 = vrot.slane %v3173, 4
      %v3176 = vshll.u32 %v2830, 16
      %v3178 = vrot.slane %v3176, 5
      %v3179 = vor.u32 %v3175, %v3178
      %v3180 = vrot.slane %v3179, 4
      %v3182 = vshll.u32 %v2831, 16
      %v3184 = vrot.slane %v3182, 5
      %v3185 = vsel %vm1032, %v3180, %v3184
      %v3186 = vshrl.u32 %v2831, 16
      %v3188 = vrot.slane %v3186, 4
      %v3189 = vor.u32 %v3188, %v3184
      %v3190 = vrot.slane %v3189, 4
      %v3192 = vshll.u32 %v2832, 16
      %v3194 = vrot.slane %v3192, 5
      %v3195 = vsel %vm1032, %v3190, %v3194
      %v3197 = vshrl.u32 %v2833, 16
      %v3199 = vrot.slane %v3197, 4
      %v3200 = vshll.u32 %v2833, 16
      %v3202 = vrot.slane %v3200, 5
      %v3203 = vor.u32 %v3199, %v3202
      %v3204 = vrot.slane %v3203, 4
      %v3206 = vshll.u32 %v2834, 16
      %v3208 = vrot.slane %v3206, 5
      %v3209 = vsel %vm1032, %v3204, %v3208
      %v3210 = vshrl.u32 %v2834, 16
      %v3212 = vrot.slane %v3210, 4
      %v3213 = vor.u32 %v3212, %v3208
      %v3214 = vrot.slane %v3213, 4
      %v3216 = vshll.u32 %v2835, 16
      %v3218 = vrot.slane %v3216, 5
      %v3219 = vsel %vm1032, %v3214, %v3218
      %s3220 = scalar_lea.vmem %s1, 8
      %v3221 = vld [vmem:[%s3220] sm:$0x3]
      %v3222 = vunpack.c.l.b16 %v2849
      %v3223 = vunpack.c.l.b16 %v2859
      %v3224 = vunpack.c.l.b16 %v2873
      %v3225 = vunpack.c.l.b16 %v2883
      %v3226 = vunpack.c.l.b16 %v2897
      %v3227 = vunpack.c.l.b16 %v2907
      %v3228 = vunpack.c.l.b16 %v2921
      %v3229 = vunpack.c.l.b16 %v2931
      %v3230 = vunpack.c.l.b16 %v2945
      %v3231 = vunpack.c.l.b16 %v2955
      %v3232 = vunpack.c.l.b16 %v2969
      %v3233 = vunpack.c.l.b16 %v2979
      %v3234 = vunpack.c.l.b16 %v2993
      %v3235 = vunpack.c.l.b16 %v3003
      %v3236 = vunpack.c.l.b16 %v3017
      %v3237 = vunpack.c.l.b16 %v3027
      %v3238 = vunpack.c.l.b16 %v3041
      %v3239 = vunpack.c.l.b16 %v3051
      %v3240 = vunpack.c.l.b16 %v3065
      %v3241 = vunpack.c.l.b16 %v3075
      %v3242 = vunpack.c.l.b16 %v3089
      %v3243 = vunpack.c.l.b16 %v3099
      %v3244 = vunpack.c.l.b16 %v3113
      %v3245 = vunpack.c.l.b16 %v3123
      %v3246 = vunpack.c.l.b16 %v3137
      %v3247 = vunpack.c.l.b16 %v3147
      %v3248 = vunpack.c.l.b16 %v3161
      %v3249 = vunpack.c.l.b16 %v3171
      %v3250 = vunpack.c.l.b16 %v3185
      %v3251 = vunpack.c.l.b16 %v3195
      %v3252 = vunpack.c.l.b16 %v3209
      %v3253 = vunpack.c.l.b16 %v3219
      %v3254 = vpack.c.b16 %v3223, %v3222
      %v3255 = vpack.c.b16 %v3225, %v3224
      %v3256 = vpack.c.b16 %v3227, %v3226
      %v3257 = vpack.c.b16 %v3229, %v3228
      %v3258 = vpack.c.b16 %v3231, %v3230
      %v3259 = vpack.c.b16 %v3233, %v3232
      %v3260 = vpack.c.b16 %v3235, %v3234
      %v3261 = vpack.c.b16 %v3237, %v3236
      %v3262 = vpack.c.b16 %v3239, %v3238
      %v3263 = vpack.c.b16 %v3241, %v3240
      %v3264 = vpack.c.b16 %v3243, %v3242
      %v3265 = vpack.c.b16 %v3245, %v3244
      %v3266 = vpack.c.b16 %v3247, %v3246
      %v3267 = vpack.c.b16 %v3249, %v3248
      %v3268 = vpack.c.b16 %v3251, %v3250
      %v3269 = vpack.c.b16 %v3253, %v3252
      %v3271 = vsel %vm1467, %v3254, 0
      %v3274 = vsel %vm1467, %v3255, 0
      %v3277 = vsel %vm1467, %v3256, 0
      %v3280 = vsel %vm1467, %v3257, 0
      %v3283 = vsel %vm1467, %v3258, 0
      %v3286 = vsel %vm1467, %v3259, 0
      %v3289 = vsel %vm1467, %v3260, 0
      %v3292 = vsel %vm1467, %v3261, 0
      %v3295 = vsel %vm1467, %v3262, 0
      %v3298 = vsel %vm1467, %v3263, 0
      %v3301 = vsel %vm1467, %v3264, 0
      %v3304 = vsel %vm1467, %v3265, 0
      %v3307 = vsel %vm1467, %v3266, 0
      %v3310 = vsel %vm1467, %v3267, 0
      %v3313 = vsel %vm1467, %v3268, 0
      %v3316 = vsel %vm1467, %v3269, 0
      %v3319 = vsel %vm1516, %v3221, 0
      %3321 = vmatprep.subr.bf16.mxu0 0
      %3322 = vmatpush1.bf16.msra.mxu0 %v3319
      %3323 = vmatprep.subr.bf16.mxu0 0
      %3324 = vmatpush1.bf16.msra.mxu0 0
      %3325 = vmatprep.subr.bf16.mxu0 0
      %3326 = vmatpush1.bf16.msra.mxu0 0
      %3327 = vmatprep.subr.bf16.mxu0 0
      %3328 = vmatpush1.bf16.msra.mxu0 0
      %3329 = vmatprep.subr.bf16.mxu0 0
      %3330 = vmatpush1.bf16.msra.mxu0 0
      %3331 = vmatprep.subr.bf16.mxu0 0
      %3332 = vmatpush1.bf16.msra.mxu0 0
      %3333 = vmatprep.subr.bf16.mxu0 0
      %3334 = vmatpush1.bf16.msra.mxu0 0
      %3335 = vmatprep.subr.bf16.mxu0 0
      %3336 = vmatpush1.bf16.msra.mxu0 0
      %3337 = vmatprep.subr.bf16.mxu0 0
      %3338 = vmatpush1.bf16.msra.mxu0 0
      %3339 = vmatprep.subr.bf16.mxu0 0
      %3340 = vmatpush1.bf16.msra.mxu0 0
      %3341 = vmatprep.subr.bf16.mxu0 0
      %3342 = vmatpush1.bf16.msra.mxu0 0
      %3343 = vmatprep.subr.bf16.mxu0 0
      %3344 = vmatpush1.bf16.msra.mxu0 0
      %3345 = vmatprep.subr.bf16.mxu0 0
      %3346 = vmatpush1.bf16.msra.mxu0 0
      %3347 = vmatprep.subr.bf16.mxu0 0
      %3348 = vmatpush1.bf16.msra.mxu0 0
      %3349 = vmatprep.subr.bf16.mxu0 0
      %3350 = vmatpush1.bf16.msra.mxu0 0
      %3351 = vmatprep.subr.bf16.mxu0 0
      %3352 = vmatpush1.bf16.msra.mxu0 0
      %3353 = vmatprep.mubr.bf16.mxu0 0
      %3354 = vmatmul.mubr.bf16.gmra.mrb[0].mxu0 %v3271
      %v3355 = vpop.f32.mrb[0].mxu0
      %v3356 = vadd.f32 0.0, %v3355
      %v3357 = vpop.f32.mrb[0].mxu0
      %v3358 = vpop.f32.mrb[0].mxu0
      %v3359 = vadd.f32 0.0, %v3358
      %v3360 = vpop.f32.mrb[0].mxu0
      %3361 = vmatprep.mubr.bf16.mxu0 0
      %3362 = vmatmul.mubr.bf16.gmra.mrb[0].mxu0 %v3274
      %v3363 = vpop.f32.mrb[0].mxu0
      %v3364 = vadd.f32 0.0, %v3363
      %v3365 = vpop.f32.mrb[0].mxu0
      %v3366 = vpop.f32.mrb[0].mxu0
      %v3367 = vadd.f32 0.0, %v3366
      %v3368 = vpop.f32.mrb[0].mxu0
      %3369 = vmatprep.mubr.bf16.mxu0 0
      %3370 = vmatmul.mubr.bf16.gmra.mrb[0].mxu0 %v3277
      %v3371 = vpop.f32.mrb[0].mxu0
      %v3372 = vadd.f32 0.0, %v3371
      %v3373 = vpop.f32.mrb[0].mxu0
      %v3374 = vpop.f32.mrb[0].mxu0
      %v3375 = vadd.f32 0.0, %v3374
      %v3376 = vpop.f32.mrb[0].mxu0
      %3377 = vmatprep.mubr.bf16.mxu0 0
      %3378 = vmatmul.mubr.bf16.gmra.mrb[0].mxu0 %v3280
      %v3379 = vpop.f32.mrb[0].mxu0
      %v3380 = vadd.f32 0.0, %v3379
      %v3381 = vpop.f32.mrb[0].mxu0
      %v3382 = vpop.f32.mrb[0].mxu0
      %v3383 = vadd.f32 0.0, %v3382
      %v3384 = vpop.f32.mrb[0].mxu0
      %3385 = vmatprep.mubr.bf16.mxu0 0
      %3386 = vmatmul.mubr.bf16.gmra.mrb[0].mxu0 %v3283
      %v3387 = vpop.f32.mrb[0].mxu0
      %v3388 = vadd.f32 0.0, %v3387
      %v3389 = vpop.f32.mrb[0].mxu0
      %v3390 = vpop.f32.mrb[0].mxu0
      %v3391 = vadd.f32 0.0, %v3390
      %v3392 = vpop.f32.mrb[0].mxu0
      %3393 = vmatprep.mubr.bf16.mxu0 0
      %3394 = vmatmul.mubr.bf16.gmra.mrb[0].mxu0 %v3286
      %v3395 = vpop.f32.mrb[0].mxu0
      %v3396 = vadd.f32 0.0, %v3395
      %v3397 = vpop.f32.mrb[0].mxu0
      %v3398 = vpop.f32.mrb[0].mxu0
      %v3399 = vadd.f32 0.0, %v3398
      %v3400 = vpop.f32.mrb[0].mxu0
      %3401 = vmatprep.mubr.bf16.mxu0 0
      %3402 = vmatmul.mubr.bf16.gmra.mrb[0].mxu0 %v3289
      %v3403 = vpop.f32.mrb[0].mxu0
      %v3404 = vadd.f32 0.0, %v3403
      %v3405 = vpop.f32.mrb[0].mxu0
      %v3406 = vpop.f32.mrb[0].mxu0
      %v3407 = vadd.f32 0.0, %v3406
      %v3408 = vpop.f32.mrb[0].mxu0
      %3409 = vmatprep.mubr.bf16.mxu0 0
      %3410 = vmatmul.mubr.bf16.gmra.mrb[0].mxu0 %v3292
      %v3411 = vpop.f32.mrb[0].mxu0
      %v3412 = vadd.f32 0.0, %v3411
      %v3413 = vpop.f32.mrb[0].mxu0
      %v3414 = vpop.f32.mrb[0].mxu0
      %v3415 = vadd.f32 0.0, %v3414
      %v3416 = vpop.f32.mrb[0].mxu0
      %3417 = vmatprep.mubr.bf16.mxu0 0
      %3418 = vmatmul.mubr.bf16.gmra.mrb[0].mxu0 %v3295
      %v3419 = vpop.f32.mrb[0].mxu0
      %v3420 = vadd.f32 0.0, %v3419
      %v3421 = vpop.f32.mrb[0].mxu0
      %v3422 = vpop.f32.mrb[0].mxu0
      %v3423 = vadd.f32 0.0, %v3422
      %v3424 = vpop.f32.mrb[0].mxu0
      %3425 = vmatprep.mubr.bf16.mxu0 0
      %3426 = vmatmul.mubr.bf16.gmra.mrb[0].mxu0 %v3298
      %v3427 = vpop.f32.mrb[0].mxu0
      %v3428 = vadd.f32 0.0, %v3427
      %v3429 = vpop.f32.mrb[0].mxu0
      %v3430 = vpop.f32.mrb[0].mxu0
      %v3431 = vadd.f32 0.0, %v3430
      %v3432 = vpop.f32.mrb[0].mxu0
      %3433 = vmatprep.mubr.bf16.mxu0 0
      %3434 = vmatmul.mubr.bf16.gmra.mrb[0].mxu0 %v3301
      %v3435 = vpop.f32.mrb[0].mxu0
      %v3436 = vadd.f32 0.0, %v3435
      %v3437 = vpop.f32.mrb[0].mxu0
      %v3438 = vpop.f32.mrb[0].mxu0
      %v3439 = vadd.f32 0.0, %v3438
      %v3440 = vpop.f32.mrb[0].mxu0
      %3441 = vmatprep.mubr.bf16.mxu0 0
      %3442 = vmatmul.mubr.bf16.gmra.mrb[0].mxu0 %v3304
      %v3443 = vpop.f32.mrb[0].mxu0
      %v3444 = vadd.f32 0.0, %v3443
      %v3445 = vpop.f32.mrb[0].mxu0
      %v3446 = vpop.f32.mrb[0].mxu0
      %v3447 = vadd.f32 0.0, %v3446
      %v3448 = vpop.f32.mrb[0].mxu0
      %3449 = vmatprep.mubr.bf16.mxu0 0
      %3450 = vmatmul.mubr.bf16.gmra.mrb[0].mxu0 %v3307
      %v3451 = vpop.f32.mrb[0].mxu0
      %v3452 = vadd.f32 0.0, %v3451
      %v3453 = vpop.f32.mrb[0].mxu0
      %v3454 = vpop.f32.mrb[0].mxu0
      %v3455 = vadd.f32 0.0, %v3454
      %v3456 = vpop.f32.mrb[0].mxu0
      %3457 = vmatprep.mubr.bf16.mxu0 0
      %3458 = vmatmul.mubr.bf16.gmra.mrb[0].mxu0 %v3310
      %v3459 = vpop.f32.mrb[0].mxu0
      %v3460 = vadd.f32 0.0, %v3459
      %v3461 = vpop.f32.mrb[0].mxu0
      %v3462 = vpop.f32.mrb[0].mxu0
      %v3463 = vadd.f32 0.0, %v3462
      %v3464 = vpop.f32.mrb[0].mxu0
      %3465 = vmatprep.mubr.bf16.mxu0 0
      %3466 = vmatmul.mubr.bf16.gmra.mrb[0].mxu0 %v3313
      %v3467 = vpop.f32.mrb[0].mxu0
      %v3468 = vadd.f32 0.0, %v3467
      %v3469 = vpop.f32.mrb[0].mxu0
      %v3470 = vpop.f32.mrb[0].mxu0
      %v3471 = vadd.f32 0.0, %v3470
      %v3472 = vpop.f32.mrb[0].mxu0
      %3473 = vmatprep.mubr.bf16.mxu0 0
      %3474 = vmatmul.mubr.bf16.gmra.mrb[0].mxu0 %v3316
      %v3475 = vpop.f32.mrb[0].mxu0
      %v3476 = vadd.f32 0.0, %v3475
      %v3477 = vpop.f32.mrb[0].mxu0
      %v3478 = vpop.f32.mrb[0].mxu0
      %v3479 = vadd.f32 0.0, %v3478
      %v3480 = vpop.f32.mrb[0].mxu0
      %3481 = vdwg.mxu0
      %v3482 = vadd.f32 %v2756, %v3356
      %v3483 = vadd.f32 %v2757, %v3359
      %v3484 = vadd.f32 %v2758, %v3364
      %v3485 = vadd.f32 %v2759, %v3367
      %v3486 = vadd.f32 %v2760, %v3372
      %v3487 = vadd.f32 %v2761, %v3375
      %v3488 = vadd.f32 %v2762, %v3380
      %v3489 = vadd.f32 %v2763, %v3383
      %v3490 = vadd.f32 %v2764, %v3388
      %v3491 = vadd.f32 %v2765, %v3391
      %v3492 = vadd.f32 %v2766, %v3396
      %v3493 = vadd.f32 %v2767, %v3399
      %v3494 = vadd.f32 %v2768, %v3404
      %v3495 = vadd.f32 %v2769, %v3407
      %v3496 = vadd.f32 %v2770, %v3412
      %v3497 = vadd.f32 %v2771, %v3415
      %v3498 = vadd.f32 %v2772, %v3420
      %v3499 = vadd.f32 %v2773, %v3423
      %v3500 = vadd.f32 %v2774, %v3428
      %v3501 = vadd.f32 %v2775, %v3431
      %v3502 = vadd.f32 %v2776, %v3436
      %v3503 = vadd.f32 %v2777, %v3439
      %v3504 = vadd.f32 %v2778, %v3444
      %v3505 = vadd.f32 %v2779, %v3447
      %v3506 = vadd.f32 %v2780, %v3452
      %v3507 = vadd.f32 %v2781, %v3455
      %v3508 = vadd.f32 %v2782, %v3460
      %v3509 = vadd.f32 %v2783, %v3463
      %v3510 = vadd.f32 %v2784, %v3468
      %v3511 = vadd.f32 %v2785, %v3471
      %v3512 = vadd.f32 %v2786, %v3476
      %v3513 = vadd.f32 %v2787, %v3479
      %v3514 = vld [vmem:[%s363] sm:$0xe]
      %v3515 = vld [vmem:[%s363 + $0xc] sm:$0xe]
      %v3516 = vld [vmem:[%s363 + $0x18] sm:$0xe]
      %v3517 = vld [vmem:[%s363 + $0x24] sm:$0xe]
      %v3518 = vld [vmem:[%s363 + $0x30] sm:$0xe]
      %v3519 = vld [vmem:[%s363 + $0x3c] sm:$0xe]
      %v3520 = vld [vmem:[%s363 + $0x48] sm:$0xe]
      %v3521 = vld [vmem:[%s363 + $0x54] sm:$0xe]
      %v3522 = vld [vmem:[%s363 + $0x60] sm:$0xe]
      %v3523 = vld [vmem:[%s363 + $0x6c] sm:$0xe]
      %v3524 = vld [vmem:[%s363 + $0x78] sm:$0xe]
      %v3525 = vld [vmem:[%s363 + $0x84] sm:$0xe]
      %v3526 = vld [vmem:[%s363 + $0x90] sm:$0xe]
      %v3527 = vld [vmem:[%s363 + $0x9c] sm:$0xe]
      %v3528 = vld [vmem:[%s363 + $0xa8] sm:$0xe]
      %v3529 = vld [vmem:[%s363 + $0xb4] sm:$0xe]
      %v3578 = vrot.slane %v3514, 5
      %v3579 = vrot.slane %v3578, 4
      %v3580 = vrot.slane %v2789, 5
      %v3581 = vsel %vm2023, %v3579, %v3580
      %v3582 = vrot.slane %v3580, 4
      %v3583 = vrot.slane %v2790, 5
      %v3584 = vsel %vm2023, %v3582, %v3583
      %v3585 = vrot.slane %v3515, 5
      %v3586 = vrot.slane %v3585, 4
      %v3587 = vrot.slane %v2792, 5
      %v3588 = vsel %vm2023, %v3586, %v3587
      %v3589 = vrot.slane %v3587, 4
      %v3590 = vrot.slane %v2793, 5
      %v3591 = vsel %vm2023, %v3589, %v3590
      %v3592 = vrot.slane %v3516, 5
      %v3593 = vrot.slane %v3592, 4
      %v3594 = vrot.slane %v2795, 5
      %v3595 = vsel %vm2023, %v3593, %v3594
      %v3596 = vrot.slane %v3594, 4
      %v3597 = vrot.slane %v2796, 5
      %v3598 = vsel %vm2023, %v3596, %v3597
      %v3599 = vrot.slane %v3517, 5
      %v3600 = vrot.slane %v3599, 4
      %v3601 = vrot.slane %v2798, 5
      %v3602 = vsel %vm2023, %v3600, %v3601
      %v3603 = vrot.slane %v3601, 4
      %v3604 = vrot.slane %v2799, 5
      %v3605 = vsel %vm2023, %v3603, %v3604
      %v3606 = vrot.slane %v3518, 5
      %v3607 = vrot.slane %v3606, 4
      %v3608 = vrot.slane %v2801, 5
      %v3609 = vsel %vm2023, %v3607, %v3608
      %v3610 = vrot.slane %v3608, 4
      %v3611 = vrot.slane %v2802, 5
      %v3612 = vsel %vm2023, %v3610, %v3611
      %v3613 = vrot.slane %v3519, 5
      %v3614 = vrot.slane %v3613, 4
      %v3615 = vrot.slane %v2804, 5
      %v3616 = vsel %vm2023, %v3614, %v3615
      %v3617 = vrot.slane %v3615, 4
      %v3618 = vrot.slane %v2805, 5
      %v3619 = vsel %vm2023, %v3617, %v3618
      %v3620 = vrot.slane %v3520, 5
      %v3621 = vrot.slane %v3620, 4
      %v3622 = vrot.slane %v2807, 5
      %v3623 = vsel %vm2023, %v3621, %v3622
      %v3624 = vrot.slane %v3622, 4
      %v3625 = vrot.slane %v2808, 5
      %v3626 = vsel %vm2023, %v3624, %v3625
      %v3627 = vrot.slane %v3521, 5
      %v3628 = vrot.slane %v3627, 4
      %v3629 = vrot.slane %v2810, 5
      %v3630 = vsel %vm2023, %v3628, %v3629
      %v3631 = vrot.slane %v3629, 4
      %v3632 = vrot.slane %v2811, 5
      %v3633 = vsel %vm2023, %v3631, %v3632
      %v3634 = vrot.slane %v3522, 5
      %v3635 = vrot.slane %v3634, 4
      %v3636 = vrot.slane %v2813, 5
      %v3637 = vsel %vm2023, %v3635, %v3636
      %v3638 = vrot.slane %v3636, 4
      %v3639 = vrot.slane %v2814, 5
      %v3640 = vsel %vm2023, %v3638, %v3639
      %v3641 = vrot.slane %v3523, 5
      %v3642 = vrot.slane %v3641, 4
      %v3643 = vrot.slane %v2816, 5
      %v3644 = vsel %vm2023, %v3642, %v3643
      %v3645 = vrot.slane %v3643, 4
      %v3646 = vrot.slane %v2817, 5
      %v3647 = vsel %vm2023, %v3645, %v3646
      %v3648 = vrot.slane %v3524, 5
      %v3649 = vrot.slane %v3648, 4
      %v3650 = vrot.slane %v2819, 5
      %v3651 = vsel %vm2023, %v3649, %v3650
      %v3652 = vrot.slane %v3650, 4
      %v3653 = vrot.slane %v2820, 5
      %v3654 = vsel %vm2023, %v3652, %v3653
      %v3655 = vrot.slane %v3525, 5
      %v3656 = vrot.slane %v3655, 4
      %v3657 = vrot.slane %v2822, 5
      %v3658 = vsel %vm2023, %v3656, %v3657
      %v3659 = vrot.slane %v3657, 4
      %v3660 = vrot.slane %v2823, 5
      %v3661 = vsel %vm2023, %v3659, %v3660
      %v3662 = vrot.slane %v3526, 5
      %v3663 = vrot.slane %v3662, 4
      %v3664 = vrot.slane %v2825, 5
      %v3665 = vsel %vm2023, %v3663, %v3664
      %v3666 = vrot.slane %v3664, 4
      %v3667 = vrot.slane %v2826, 5
      %v3668 = vsel %vm2023, %v3666, %v3667
      %v3669 = vrot.slane %v3527, 5
      %v3670 = vrot.slane %v3669, 4
      %v3671 = vrot.slane %v2828, 5
      %v3672 = vsel %vm2023, %v3670, %v3671
      %v3673 = vrot.slane %v3671, 4
      %v3674 = vrot.slane %v2829, 5
      %v3675 = vsel %vm2023, %v3673, %v3674
      %v3676 = vrot.slane %v3528, 5
      %v3677 = vrot.slane %v3676, 4
      %v3678 = vrot.slane %v2831, 5
      %v3679 = vsel %vm2023, %v3677, %v3678
      %v3680 = vrot.slane %v3678, 4
      %v3681 = vrot.slane %v2832, 5
      %v3682 = vsel %vm2023, %v3680, %v3681
      %v3683 = vrot.slane %v3529, 5
      %v3684 = vrot.slane %v3683, 4
      %v3685 = vrot.slane %v2834, 5
      %v3686 = vsel %vm2023, %v3684, %v3685
      %v3687 = vrot.slane %v3685, 4
      %v3688 = vrot.slane %v2835, 5
      %v3689 = vsel %vm2023, %v3687, %v3688
      %s3690 = scalar_lea.vmem %s1, 10
      %v3691 = vld [vmem:[%s3690] sm:$0x3]
      %v3692 = vunpack.c.l.b16 %v3581
      %v3693 = vunpack.c.l.b16 %v3584
      %v3694 = vunpack.c.l.b16 %v3588
      %v3695 = vunpack.c.l.b16 %v3591
      %v3696 = vunpack.c.l.b16 %v3595
      %v3697 = vunpack.c.l.b16 %v3598
      %v3698 = vunpack.c.l.b16 %v3602
      %v3699 = vunpack.c.l.b16 %v3605
      %v3700 = vunpack.c.l.b16 %v3609
      %v3701 = vunpack.c.l.b16 %v3612
      %v3702 = vunpack.c.l.b16 %v3616
      %v3703 = vunpack.c.l.b16 %v3619
      %v3704 = vunpack.c.l.b16 %v3623
      %v3705 = vunpack.c.l.b16 %v3626
      %v3706 = vunpack.c.l.b16 %v3630
      %v3707 = vunpack.c.l.b16 %v3633
      %v3708 = vunpack.c.l.b16 %v3637
      %v3709 = vunpack.c.l.b16 %v3640
      %v3710 = vunpack.c.l.b16 %v3644
      %v3711 = vunpack.c.l.b16 %v3647
      %v3712 = vunpack.c.l.b16 %v3651
      %v3713 = vunpack.c.l.b16 %v3654
      %v3714 = vunpack.c.l.b16 %v3658
      %v3715 = vunpack.c.l.b16 %v3661
      %v3716 = vunpack.c.l.b16 %v3665
      %v3717 = vunpack.c.l.b16 %v3668
      %v3718 = vunpack.c.l.b16 %v3672
      %v3719 = vunpack.c.l.b16 %v3675
      %v3720 = vunpack.c.l.b16 %v3679
      %v3721 = vunpack.c.l.b16 %v3682
      %v3722 = vunpack.c.l.b16 %v3686
      %v3723 = vunpack.c.l.b16 %v3689
      %v3724 = vpack.c.b16 %v3693, %v3692
      %v3725 = vpack.c.b16 %v3695, %v3694
      %v3726 = vpack.c.b16 %v3697, %v3696
      %v3727 = vpack.c.b16 %v3699, %v3698
      %v3728 = vpack.c.b16 %v3701, %v3700
      %v3729 = vpack.c.b16 %v3703, %v3702
      %v3730 = vpack.c.b16 %v3705, %v3704
      %v3731 = vpack.c.b16 %v3707, %v3706
      %v3732 = vpack.c.b16 %v3709, %v3708
      %v3733 = vpack.c.b16 %v3711, %v3710
      %v3734 = vpack.c.b16 %v3713, %v3712
      %v3735 = vpack.c.b16 %v3715, %v3714
      %v3736 = vpack.c.b16 %v3717, %v3716
      %v3737 = vpack.c.b16 %v3719, %v3718
      %v3738 = vpack.c.b16 %v3721, %v3720
      %v3739 = vpack.c.b16 %v3723, %v3722
      %v3741 = vsel %vm1467, %v3724, 0
      %v3744 = vsel %vm1467, %v3725, 0
      %v3747 = vsel %vm1467, %v3726, 0
      %v3750 = vsel %vm1467, %v3727, 0
      %v3753 = vsel %vm1467, %v3728, 0
      %v3756 = vsel %vm1467, %v3729, 0
      %v3759 = vsel %vm1467, %v3730, 0
      %v3762 = vsel %vm1467, %v3731, 0
      %v3765 = vsel %vm1467, %v3732, 0
      %v3768 = vsel %vm1467, %v3733, 0
      %v3771 = vsel %vm1467, %v3734, 0
      %v3774 = vsel %vm1467, %v3735, 0
      %v3777 = vsel %vm1467, %v3736, 0
      %v3780 = vsel %vm1467, %v3737, 0
      %v3783 = vsel %vm1467, %v3738, 0
      %v3786 = vsel %vm1467, %v3739, 0
      %v3789 = vsel %vm1516, %v3691, 0
      %3791 = vmatprep.subr.bf16.mxu0 0
      %3792 = vmatpush1.bf16.msra.mxu0 %v3789
      %3793 = vmatprep.subr.bf16.mxu0 0
      %3794 = vmatpush1.bf16.msra.mxu0 0
      %3795 = vmatprep.subr.bf16.mxu0 0
      %3796 = vmatpush1.bf16.msra.mxu0 0
      %3797 = vmatprep.subr.bf16.mxu0 0
      %3798 = vmatpush1.bf16.msra.mxu0 0
      %3799 = vmatprep.subr.bf16.mxu0 0
      %3800 = vmatpush1.bf16.msra.mxu0 0
      %3801 = vmatprep.subr.bf16.mxu0 0
      %3802 = vmatpush1.bf16.msra.mxu0 0
      %3803 = vmatprep.subr.bf16.mxu0 0
      %3804 = vmatpush1.bf16.msra.mxu0 0
      %3805 = vmatprep.subr.bf16.mxu0 0
      %3806 = vmatpush1.bf16.msra.mxu0 0
      %3807 = vmatprep.subr.bf16.mxu0 0
      %3808 = vmatpush1.bf16.msra.mxu0 0
      %3809 = vmatprep.subr.bf16.mxu0 0
      %3810 = vmatpush1.bf16.msra.mxu0 0
      %3811 = vmatprep.subr.bf16.mxu0 0
      %3812 = vmatpush1.bf16.msra.mxu0 0
      %3813 = vmatprep.subr.bf16.mxu0 0
      %3814 = vmatpush1.bf16.msra.mxu0 0
      %3815 = vmatprep.subr.bf16.mxu0 0
      %3816 = vmatpush1.bf16.msra.mxu0 0
      %3817 = vmatprep.subr.bf16.mxu0 0
      %3818 = vmatpush1.bf16.msra.mxu0 0
      %3819 = vmatprep.subr.bf16.mxu0 0
      %3820 = vmatpush1.bf16.msra.mxu0 0
      %3821 = vmatprep.subr.bf16.mxu0 0
      %3822 = vmatpush1.bf16.msra.mxu0 0
      %3823 = vmatprep.mubr.bf16.mxu0 0
      %3824 = vmatmul.mubr.bf16.gmra.mrb[0].mxu0 %v3741
      %v3825 = vpop.f32.mrb[0].mxu0
      %v3826 = vadd.f32 0.0, %v3825
      %v3827 = vpop.f32.mrb[0].mxu0
      %v3828 = vpop.f32.mrb[0].mxu0
      %v3829 = vadd.f32 0.0, %v3828
      %v3830 = vpop.f32.mrb[0].mxu0
      %3831 = vmatprep.mubr.bf16.mxu0 0
      %3832 = vmatmul.mubr.bf16.gmra.mrb[0].mxu0 %v3744
      %v3833 = vpop.f32.mrb[0].mxu0
      %v3834 = vadd.f32 0.0, %v3833
      %v3835 = vpop.f32.mrb[0].mxu0
      %v3836 = vpop.f32.mrb[0].mxu0
      %v3837 = vadd.f32 0.0, %v3836
      %v3838 = vpop.f32.mrb[0].mxu0
      %3839 = vmatprep.mubr.bf16.mxu0 0
      %3840 = vmatmul.mubr.bf16.gmra.mrb[0].mxu0 %v3747
      %v3841 = vpop.f32.mrb[0].mxu0
      %v3842 = vadd.f32 0.0, %v3841
      %v3843 = vpop.f32.mrb[0].mxu0
      %v3844 = vpop.f32.mrb[0].mxu0
      %v3845 = vadd.f32 0.0, %v3844
      %v3846 = vpop.f32.mrb[0].mxu0
      %3847 = vmatprep.mubr.bf16.mxu0 0
      %3848 = vmatmul.mubr.bf16.gmra.mrb[0].mxu0 %v3750
      %v3849 = vpop.f32.mrb[0].mxu0
      %v3850 = vadd.f32 0.0, %v3849
      %v3851 = vpop.f32.mrb[0].mxu0
      %v3852 = vpop.f32.mrb[0].mxu0
      %v3853 = vadd.f32 0.0, %v3852
      %v3854 = vpop.f32.mrb[0].mxu0
      %3855 = vmatprep.mubr.bf16.mxu0 0
      %3856 = vmatmul.mubr.bf16.gmra.mrb[0].mxu0 %v3753
      %v3857 = vpop.f32.mrb[0].mxu0
      %v3858 = vadd.f32 0.0, %v3857
      %v3859 = vpop.f32.mrb[0].mxu0
      %v3860 = vpop.f32.mrb[0].mxu0
      %v3861 = vadd.f32 0.0, %v3860
      %v3862 = vpop.f32.mrb[0].mxu0
      %3863 = vmatprep.mubr.bf16.mxu0 0
      %3864 = vmatmul.mubr.bf16.gmra.mrb[0].mxu0 %v3756
      %v3865 = vpop.f32.mrb[0].mxu0
      %v3866 = vadd.f32 0.0, %v3865
      %v3867 = vpop.f32.mrb[0].mxu0
      %v3868 = vpop.f32.mrb[0].mxu0
      %v3869 = vadd.f32 0.0, %v3868
      %v3870 = vpop.f32.mrb[0].mxu0
      %3871 = vmatprep.mubr.bf16.mxu0 0
      %3872 = vmatmul.mubr.bf16.gmra.mrb[0].mxu0 %v3759
      %v3873 = vpop.f32.mrb[0].mxu0
      %v3874 = vadd.f32 0.0, %v3873
      %v3875 = vpop.f32.mrb[0].mxu0
      %v3876 = vpop.f32.mrb[0].mxu0
      %v3877 = vadd.f32 0.0, %v3876
      %v3878 = vpop.f32.mrb[0].mxu0
      %3879 = vmatprep.mubr.bf16.mxu0 0
      %3880 = vmatmul.mubr.bf16.gmra.mrb[0].mxu0 %v3762
      %v3881 = vpop.f32.mrb[0].mxu0
      %v3882 = vadd.f32 0.0, %v3881
      %v3883 = vpop.f32.mrb[0].mxu0
      %v3884 = vpop.f32.mrb[0].mxu0
      %v3885 = vadd.f32 0.0, %v3884
      %v3886 = vpop.f32.mrb[0].mxu0
      %3887 = vmatprep.mubr.bf16.mxu0 0
      %3888 = vmatmul.mubr.bf16.gmra.mrb[0].mxu0 %v3765
      %v3889 = vpop.f32.mrb[0].mxu0
      %v3890 = vadd.f32 0.0, %v3889
      %v3891 = vpop.f32.mrb[0].mxu0
      %v3892 = vpop.f32.mrb[0].mxu0
      %v3893 = vadd.f32 0.0, %v3892
      %v3894 = vpop.f32.mrb[0].mxu0
      %3895 = vmatprep.mubr.bf16.mxu0 0
      %3896 = vmatmul.mubr.bf16.gmra.mrb[0].mxu0 %v3768
      %v3897 = vpop.f32.mrb[0].mxu0
      %v3898 = vadd.f32 0.0, %v3897
      %v3899 = vpop.f32.mrb[0].mxu0
      %v3900 = vpop.f32.mrb[0].mxu0
      %v3901 = vadd.f32 0.0, %v3900
      %v3902 = vpop.f32.mrb[0].mxu0
      %3903 = vmatprep.mubr.bf16.mxu0 0
      %3904 = vmatmul.mubr.bf16.gmra.mrb[0].mxu0 %v3771
      %v3905 = vpop.f32.mrb[0].mxu0
      %v3906 = vadd.f32 0.0, %v3905
      %v3907 = vpop.f32.mrb[0].mxu0
      %v3908 = vpop.f32.mrb[0].mxu0
      %v3909 = vadd.f32 0.0, %v3908
      %v3910 = vpop.f32.mrb[0].mxu0
      %3911 = vmatprep.mubr.bf16.mxu0 0
      %3912 = vmatmul.mubr.bf16.gmra.mrb[0].mxu0 %v3774
      %v3913 = vpop.f32.mrb[0].mxu0
      %v3914 = vadd.f32 0.0, %v3913
      %v3915 = vpop.f32.mrb[0].mxu0
      %v3916 = vpop.f32.mrb[0].mxu0
      %v3917 = vadd.f32 0.0, %v3916
      %v3918 = vpop.f32.mrb[0].mxu0
      %3919 = vmatprep.mubr.bf16.mxu0 0
      %3920 = vmatmul.mubr.bf16.gmra.mrb[0].mxu0 %v3777
      %v3921 = vpop.f32.mrb[0].mxu0
      %v3922 = vadd.f32 0.0, %v3921
      %v3923 = vpop.f32.mrb[0].mxu0
      %v3924 = vpop.f32.mrb[0].mxu0
      %v3925 = vadd.f32 0.0, %v3924
      %v3926 = vpop.f32.mrb[0].mxu0
      %3927 = vmatprep.mubr.bf16.mxu0 0
      %3928 = vmatmul.mubr.bf16.gmra.mrb[0].mxu0 %v3780
      %v3929 = vpop.f32.mrb[0].mxu0
      %v3930 = vadd.f32 0.0, %v3929
      %v3931 = vpop.f32.mrb[0].mxu0
      %v3932 = vpop.f32.mrb[0].mxu0
      %v3933 = vadd.f32 0.0, %v3932
      %v3934 = vpop.f32.mrb[0].mxu0
      %3935 = vmatprep.mubr.bf16.mxu0 0
      %3936 = vmatmul.mubr.bf16.gmra.mrb[0].mxu0 %v3783
      %v3937 = vpop.f32.mrb[0].mxu0
      %v3938 = vadd.f32 0.0, %v3937
      %v3939 = vpop.f32.mrb[0].mxu0
      %v3940 = vpop.f32.mrb[0].mxu0
      %v3941 = vadd.f32 0.0, %v3940
      %v3942 = vpop.f32.mrb[0].mxu0
      %3943 = vmatprep.mubr.bf16.mxu0 0
      %3944 = vmatmul.mubr.bf16.gmra.mrb[0].mxu0 %v3786
      %v3945 = vpop.f32.mrb[0].mxu0
      %v3946 = vadd.f32 0.0, %v3945
      %v3947 = vpop.f32.mrb[0].mxu0
      %v3948 = vpop.f32.mrb[0].mxu0
      %v3949 = vadd.f32 0.0, %v3948
      %v3950 = vpop.f32.mrb[0].mxu0
      %3951 = vdwg.mxu0
      %v3952 = vadd.f32 %v3482, %v3826
      %v3953 = vadd.f32 %v3483, %v3829
      %v3954 = vadd.f32 %v3484, %v3834
      %v3955 = vadd.f32 %v3485, %v3837
      %v3956 = vadd.f32 %v3486, %v3842
      %v3957 = vadd.f32 %v3487, %v3845
      %v3958 = vadd.f32 %v3488, %v3850
      %v3959 = vadd.f32 %v3489, %v3853
      %v3960 = vadd.f32 %v3490, %v3858
      %v3961 = vadd.f32 %v3491, %v3861
      %v3962 = vadd.f32 %v3492, %v3866
      %v3963 = vadd.f32 %v3493, %v3869
      %v3964 = vadd.f32 %v3494, %v3874
      %v3965 = vadd.f32 %v3495, %v3877
      %v3966 = vadd.f32 %v3496, %v3882
      %v3967 = vadd.f32 %v3497, %v3885
      %v3968 = vadd.f32 %v3498, %v3890
      %v3969 = vadd.f32 %v3499, %v3893
      %v3970 = vadd.f32 %v3500, %v3898
      %v3971 = vadd.f32 %v3501, %v3901
      %v3972 = vadd.f32 %v3502, %v3906
      %v3973 = vadd.f32 %v3503, %v3909
      %v3974 = vadd.f32 %v3504, %v3914
      %v3975 = vadd.f32 %v3505, %v3917
      %v3976 = vadd.f32 %v3506, %v3922
      %v3977 = vadd.f32 %v3507, %v3925
      %v3978 = vadd.f32 %v3508, %v3930
      %v3979 = vadd.f32 %v3509, %v3933
      %v3980 = vadd.f32 %v3510, %v3938
      %v3981 = vadd.f32 %v3511, %v3941
      %v3982 = vadd.f32 %v3512, %v3946
      %v3983 = vadd.f32 %v3513, %v3949
      %s3984 = scalar_lea.vmem [#allocation2], 24
      %v3985 = vld [vmem:[%s3984] sm:$0xf]
      %v3986 = vld [vmem:[%s3984 + $0x4] sm:$0xf]
      %v3987 = vld [vmem:[%s3984 + $0xc] sm:$0xf]
      %v3988 = vld [vmem:[%s3984 + $0x10] sm:$0xf]
      %v3989 = vld [vmem:[%s3984 + $0x18] sm:$0xf]
      %v3990 = vld [vmem:[%s3984 + $0x1c] sm:$0xf]
      %v3991 = vld [vmem:[%s3984 + $0x24] sm:$0xf]
      %v3992 = vld [vmem:[%s3984 + $0x28] sm:$0xf]
      %v3993 = vld [vmem:[%s3984 + $0x30] sm:$0xf]
      %v3994 = vld [vmem:[%s3984 + $0x34] sm:$0xf]
      %v3995 = vld [vmem:[%s3984 + $0x3c] sm:$0xf]
      %v3996 = vld [vmem:[%s3984 + $0x40] sm:$0xf]
      %v3997 = vld [vmem:[%s3984 + $0x48] sm:$0xf]
      %v3998 = vld [vmem:[%s3984 + $0x4c] sm:$0xf]
      %v3999 = vld [vmem:[%s3984 + $0x54] sm:$0xf]
      %v4000 = vld [vmem:[%s3984 + $0x58] sm:$0xf]
      %v4001 = vld [vmem:[%s3984 + $0x60] sm:$0xf]
      %v4002 = vld [vmem:[%s3984 + $0x64] sm:$0xf]
      %v4003 = vld [vmem:[%s3984 + $0x6c] sm:$0xf]
      %v4004 = vld [vmem:[%s3984 + $0x70] sm:$0xf]
      %v4005 = vld [vmem:[%s3984 + $0x78] sm:$0xf]
      %v4006 = vld [vmem:[%s3984 + $0x7c] sm:$0xf]
      %v4007 = vld [vmem:[%s3984 + $0x84] sm:$0xf]
      %v4008 = vld [vmem:[%s3984 + $0x88] sm:$0xf]
      %v4009 = vld [vmem:[%s3984 + $0x90] sm:$0xf]
      %v4010 = vld [vmem:[%s3984 + $0x94] sm:$0xf]
      %v4011 = vld [vmem:[%s3984 + $0x9c] sm:$0xf]
      %v4012 = vld [vmem:[%s3984 + $0xa0] sm:$0xf]
      %v4013 = vld [vmem:[%s3984 + $0xa8] sm:$0xf]
      %v4014 = vld [vmem:[%s3984 + $0xac] sm:$0xf]
      %v4015 = vld [vmem:[%s3984 + $0xb4] sm:$0xf]
      %v4016 = vld [vmem:[%s3984 + $0xb8] sm:$0xf]
      %s4017 = scalar_lea.vmem %s1, 12
      %v4018 = vld [vmem:[%s4017] sm:$0x3]
      %v4051 = vunpack.c.l.b16 %v3985
      %v4052 = vunpack.c.l.b16 %v3986
      %v4053 = vunpack.c.l.b16 %v3987
      %v4054 = vunpack.c.l.b16 %v3988
      %v4055 = vunpack.c.l.b16 %v3989
      %v4056 = vunpack.c.l.b16 %v3990
      %v4057 = vunpack.c.l.b16 %v3991
      %v4058 = vunpack.c.l.b16 %v3992
      %v4059 = vunpack.c.l.b16 %v3993
      %v4060 = vunpack.c.l.b16 %v3994
      %v4061 = vunpack.c.l.b16 %v3995
      %v4062 = vunpack.c.l.b16 %v3996
      %v4063 = vunpack.c.l.b16 %v3997
      %v4064 = vunpack.c.l.b16 %v3998
      %v4065 = vunpack.c.l.b16 %v3999
      %v4066 = vunpack.c.l.b16 %v4000
      %v4067 = vunpack.c.l.b16 %v4001
      %v4068 = vunpack.c.l.b16 %v4002
      %v4069 = vunpack.c.l.b16 %v4003
      %v4070 = vunpack.c.l.b16 %v4004
      %v4071 = vunpack.c.l.b16 %v4005
      %v4072 = vunpack.c.l.b16 %v4006
      %v4073 = vunpack.c.l.b16 %v4007
      %v4074 = vunpack.c.l.b16 %v4008
      %v4075 = vunpack.c.l.b16 %v4009
      %v4076 = vunpack.c.l.b16 %v4010
      %v4077 = vunpack.c.l.b16 %v4011
      %v4078 = vunpack.c.l.b16 %v4012
      %v4079 = vunpack.c.l.b16 %v4013
      %v4080 = vunpack.c.l.b16 %v4014
      %v4081 = vunpack.c.l.b16 %v4015
      %v4082 = vunpack.c.l.b16 %v4016
      %v4083 = vpack.c.b16 %v4052, %v4051
      %v4084 = vpack.c.b16 %v4054, %v4053
      %v4085 = vpack.c.b16 %v4056, %v4055
      %v4086 = vpack.c.b16 %v4058, %v4057
      %v4087 = vpack.c.b16 %v4060, %v4059
      %v4088 = vpack.c.b16 %v4062, %v4061
      %v4089 = vpack.c.b16 %v4064, %v4063
      %v4090 = vpack.c.b16 %v4066, %v4065
      %v4091 = vpack.c.b16 %v4068, %v4067
      %v4092 = vpack.c.b16 %v4070, %v4069
      %v4093 = vpack.c.b16 %v4072, %v4071
      %v4094 = vpack.c.b16 %v4074, %v4073
      %v4095 = vpack.c.b16 %v4076, %v4075
      %v4096 = vpack.c.b16 %v4078, %v4077
      %v4097 = vpack.c.b16 %v4080, %v4079
      %v4098 = vpack.c.b16 %v4082, %v4081
      %v4100 = vsel %vm1467, %v4083, 0
      %v4103 = vsel %vm1467, %v4084, 0
      %v4106 = vsel %vm1467, %v4085, 0
      %v4109 = vsel %vm1467, %v4086, 0
      %v4112 = vsel %vm1467, %v4087, 0
      %v4115 = vsel %vm1467, %v4088, 0
      %v4118 = vsel %vm1467, %v4089, 0
      %v4121 = vsel %vm1467, %v4090, 0
      %v4124 = vsel %vm1467, %v4091, 0
      %v4127 = vsel %vm1467, %v4092, 0
      %v4130 = vsel %vm1467, %v4093, 0
      %v4133 = vsel %vm1467, %v4094, 0
      %v4136 = vsel %vm1467, %v4095, 0
      %v4139 = vsel %vm1467, %v4096, 0
      %v4142 = vsel %vm1467, %v4097, 0
      %v4145 = vsel %vm1467, %v4098, 0
      %v4148 = vsel %vm1516, %v4018, 0
      %4150 = vmatprep.subr.bf16.mxu0 0
      %4151 = vmatpush1.bf16.msra.mxu0 %v4148
      %4152 = vmatprep.subr.bf16.mxu0 0
      %4153 = vmatpush1.bf16.msra.mxu0 0
      %4154 = vmatprep.subr.bf16.mxu0 0
      %4155 = vmatpush1.bf16.msra.mxu0 0
      %4156 = vmatprep.subr.bf16.mxu0 0
      %4157 = vmatpush1.bf16.msra.mxu0 0
      %4158 = vmatprep.subr.bf16.mxu0 0
      %4159 = vmatpush1.bf16.msra.mxu0 0
      %4160 = vmatprep.subr.bf16.mxu0 0
      %4161 = vmatpush1.bf16.msra.mxu0 0
      %4162 = vmatprep.subr.bf16.mxu0 0
      %4163 = vmatpush1.bf16.msra.mxu0 0
      %4164 = vmatprep.subr.bf16.mxu0 0
      %4165 = vmatpush1.bf16.msra.mxu0 0
      %4166 = vmatprep.subr.bf16.mxu0 0
      %4167 = vmatpush1.bf16.msra.mxu0 0
      %4168 = vmatprep.subr.bf16.mxu0 0
      %4169 = vmatpush1.bf16.msra.mxu0 0
      %4170 = vmatprep.subr.bf16.mxu0 0
      %4171 = vmatpush1.bf16.msra.mxu0 0
      %4172 = vmatprep.subr.bf16.mxu0 0
      %4173 = vmatpush1.bf16.msra.mxu0 0
      %4174 = vmatprep.subr.bf16.mxu0 0
      %4175 = vmatpush1.bf16.msra.mxu0 0
      %4176 = vmatprep.subr.bf16.mxu0 0
      %4177 = vmatpush1.bf16.msra.mxu0 0
      %4178 = vmatprep.subr.bf16.mxu0 0
      %4179 = vmatpush1.bf16.msra.mxu0 0
      %4180 = vmatprep.subr.bf16.mxu0 0
      %4181 = vmatpush1.bf16.msra.mxu0 0
      %4182 = vmatprep.mubr.bf16.mxu0 0
      %4183 = vmatmul.mubr.bf16.gmra.mrb[0].mxu0 %v4100
      %v4184 = vpop.f32.mrb[0].mxu0
      %v4185 = vadd.f32 0.0, %v4184
      %v4186 = vpop.f32.mrb[0].mxu0
      %v4187 = vpop.f32.mrb[0].mxu0
      %v4188 = vadd.f32 0.0, %v4187
      %v4189 = vpop.f32.mrb[0].mxu0
      %4190 = vmatprep.mubr.bf16.mxu0 0
      %4191 = vmatmul.mubr.bf16.gmra.mrb[0].mxu0 %v4103
      %v4192 = vpop.f32.mrb[0].mxu0
      %v4193 = vadd.f32 0.0, %v4192
      %v4194 = vpop.f32.mrb[0].mxu0
      %v4195 = vpop.f32.mrb[0].mxu0
      %v4196 = vadd.f32 0.0, %v4195
      %v4197 = vpop.f32.mrb[0].mxu0
      %4198 = vmatprep.mubr.bf16.mxu0 0
      %4199 = vmatmul.mubr.bf16.gmra.mrb[0].mxu0 %v4106
      %v4200 = vpop.f32.mrb[0].mxu0
      %v4201 = vadd.f32 0.0, %v4200
      %v4202 = vpop.f32.mrb[0].mxu0
      %v4203 = vpop.f32.mrb[0].mxu0
      %v4204 = vadd.f32 0.0, %v4203
      %v4205 = vpop.f32.mrb[0].mxu0
      %4206 = vmatprep.mubr.bf16.mxu0 0
      %4207 = vmatmul.mubr.bf16.gmra.mrb[0].mxu0 %v4109
      %v4208 = vpop.f32.mrb[0].mxu0
      %v4209 = vadd.f32 0.0, %v4208
      %v4210 = vpop.f32.mrb[0].mxu0
      %v4211 = vpop.f32.mrb[0].mxu0
      %v4212 = vadd.f32 0.0, %v4211
      %v4213 = vpop.f32.mrb[0].mxu0
      %4214 = vmatprep.mubr.bf16.mxu0 0
      %4215 = vmatmul.mubr.bf16.gmra.mrb[0].mxu0 %v4112
      %v4216 = vpop.f32.mrb[0].mxu0
      %v4217 = vadd.f32 0.0, %v4216
      %v4218 = vpop.f32.mrb[0].mxu0
      %v4219 = vpop.f32.mrb[0].mxu0
      %v4220 = vadd.f32 0.0, %v4219
      %v4221 = vpop.f32.mrb[0].mxu0
      %4222 = vmatprep.mubr.bf16.mxu0 0
      %4223 = vmatmul.mubr.bf16.gmra.mrb[0].mxu0 %v4115
      %v4224 = vpop.f32.mrb[0].mxu0
      %v4225 = vadd.f32 0.0, %v4224
      %v4226 = vpop.f32.mrb[0].mxu0
      %v4227 = vpop.f32.mrb[0].mxu0
      %v4228 = vadd.f32 0.0, %v4227
      %v4229 = vpop.f32.mrb[0].mxu0
      %4230 = vmatprep.mubr.bf16.mxu0 0
      %4231 = vmatmul.mubr.bf16.gmra.mrb[0].mxu0 %v4118
      %v4232 = vpop.f32.mrb[0].mxu0
      %v4233 = vadd.f32 0.0, %v4232
      %v4234 = vpop.f32.mrb[0].mxu0
      %v4235 = vpop.f32.mrb[0].mxu0
      %v4236 = vadd.f32 0.0, %v4235
      %v4237 = vpop.f32.mrb[0].mxu0
      %4238 = vmatprep.mubr.bf16.mxu0 0
      %4239 = vmatmul.mubr.bf16.gmra.mrb[0].mxu0 %v4121
      %v4240 = vpop.f32.mrb[0].mxu0
      %v4241 = vadd.f32 0.0, %v4240
      %v4242 = vpop.f32.mrb[0].mxu0
      %v4243 = vpop.f32.mrb[0].mxu0
      %v4244 = vadd.f32 0.0, %v4243
      %v4245 = vpop.f32.mrb[0].mxu0
      %4246 = vmatprep.mubr.bf16.mxu0 0
      %4247 = vmatmul.mubr.bf16.gmra.mrb[0].mxu0 %v4124
      %v4248 = vpop.f32.mrb[0].mxu0
      %v4249 = vadd.f32 0.0, %v4248
      %v4250 = vpop.f32.mrb[0].mxu0
      %v4251 = vpop.f32.mrb[0].mxu0
      %v4252 = vadd.f32 0.0, %v4251
      %v4253 = vpop.f32.mrb[0].mxu0
      %4254 = vmatprep.mubr.bf16.mxu0 0
      %4255 = vmatmul.mubr.bf16.gmra.mrb[0].mxu0 %v4127
      %v4256 = vpop.f32.mrb[0].mxu0
      %v4257 = vadd.f32 0.0, %v4256
      %v4258 = vpop.f32.mrb[0].mxu0
      %v4259 = vpop.f32.mrb[0].mxu0
      %v4260 = vadd.f32 0.0, %v4259
      %v4261 = vpop.f32.mrb[0].mxu0
      %4262 = vmatprep.mubr.bf16.mxu0 0
      %4263 = vmatmul.mubr.bf16.gmra.mrb[0].mxu0 %v4130
      %v4264 = vpop.f32.mrb[0].mxu0
      %v4265 = vadd.f32 0.0, %v4264
      %v4266 = vpop.f32.mrb[0].mxu0
      %v4267 = vpop.f32.mrb[0].mxu0
      %v4268 = vadd.f32 0.0, %v4267
      %v4269 = vpop.f32.mrb[0].mxu0
      %4270 = vmatprep.mubr.bf16.mxu0 0
      %4271 = vmatmul.mubr.bf16.gmra.mrb[0].mxu0 %v4133
      %v4272 = vpop.f32.mrb[0].mxu0
      %v4273 = vadd.f32 0.0, %v4272
      %v4274 = vpop.f32.mrb[0].mxu0
      %v4275 = vpop.f32.mrb[0].mxu0
      %v4276 = vadd.f32 0.0, %v4275
      %v4277 = vpop.f32.mrb[0].mxu0
      %4278 = vmatprep.mubr.bf16.mxu0 0
      %4279 = vmatmul.mubr.bf16.gmra.mrb[0].mxu0 %v4136
      %v4280 = vpop.f32.mrb[0].mxu0
      %v4281 = vadd.f32 0.0, %v4280
      %v4282 = vpop.f32.mrb[0].mxu0
      %v4283 = vpop.f32.mrb[0].mxu0
      %v4284 = vadd.f32 0.0, %v4283
      %v4285 = vpop.f32.mrb[0].mxu0
      %4286 = vmatprep.mubr.bf16.mxu0 0
      %4287 = vmatmul.mubr.bf16.gmra.mrb[0].mxu0 %v4139
      %v4288 = vpop.f32.mrb[0].mxu0
      %v4289 = vadd.f32 0.0, %v4288
      %v4290 = vpop.f32.mrb[0].mxu0
      %v4291 = vpop.f32.mrb[0].mxu0
      %v4292 = vadd.f32 0.0, %v4291
      %v4293 = vpop.f32.mrb[0].mxu0
      %4294 = vmatprep.mubr.bf16.mxu0 0
      %4295 = vmatmul.mubr.bf16.gmra.mrb[0].mxu0 %v4142
      %v4296 = vpop.f32.mrb[0].mxu0
      %v4297 = vadd.f32 0.0, %v4296
      %v4298 = vpop.f32.mrb[0].mxu0
      %v4299 = vpop.f32.mrb[0].mxu0
      %v4300 = vadd.f32 0.0, %v4299
      %v4301 = vpop.f32.mrb[0].mxu0
      %4302 = vmatprep.mubr.bf16.mxu0 0
      %4303 = vmatmul.mubr.bf16.gmra.mrb[0].mxu0 %v4145
      %v4304 = vpop.f32.mrb[0].mxu0
      %v4305 = vadd.f32 0.0, %v4304
      %v4306 = vpop.f32.mrb[0].mxu0
      %v4307 = vpop.f32.mrb[0].mxu0
      %v4308 = vadd.f32 0.0, %v4307
      %v4309 = vpop.f32.mrb[0].mxu0
      %4310 = vdwg.mxu0
      %v4311 = vadd.f32 %v3952, %v4185
      %v4312 = vadd.f32 %v3953, %v4188
      %v4313 = vadd.f32 %v3954, %v4193
      %v4314 = vadd.f32 %v3955, %v4196
      %v4315 = vadd.f32 %v3956, %v4201
      %v4316 = vadd.f32 %v3957, %v4204
      %v4317 = vadd.f32 %v3958, %v4209
      %v4318 = vadd.f32 %v3959, %v4212
      %v4319 = vadd.f32 %v3960, %v4217
      %v4320 = vadd.f32 %v3961, %v4220
      %v4321 = vadd.f32 %v3962, %v4225
      %v4322 = vadd.f32 %v3963, %v4228
      %v4323 = vadd.f32 %v3964, %v4233
      %v4324 = vadd.f32 %v3965, %v4236
      %v4325 = vadd.f32 %v3966, %v4241
      %v4326 = vadd.f32 %v3967, %v4244
      %v4327 = vadd.f32 %v3968, %v4249
      %v4328 = vadd.f32 %v3969, %v4252
      %v4329 = vadd.f32 %v3970, %v4257
      %v4330 = vadd.f32 %v3971, %v4260
      %v4331 = vadd.f32 %v3972, %v4265
      %v4332 = vadd.f32 %v3973, %v4268
      %v4333 = vadd.f32 %v3974, %v4273
      %v4334 = vadd.f32 %v3975, %v4276
      %v4335 = vadd.f32 %v3976, %v4281
      %v4336 = vadd.f32 %v3977, %v4284
      %v4337 = vadd.f32 %v3978, %v4289
      %v4338 = vadd.f32 %v3979, %v4292
      %v4339 = vadd.f32 %v3980, %v4297
      %v4340 = vadd.f32 %v3981, %v4300
      %v4341 = vadd.f32 %v3982, %v4305
      %v4342 = vadd.f32 %v3983, %v4308
      %v4343 = vld [vmem:[%s3984] sm:$0xf]
      %v4344 = vld [vmem:[%s3984 + $0x4] sm:$0xf]
      %v4345 = vld [vmem:[%s3984 + $0x8] sm:$0x1]
      %v4346 = vld [vmem:[%s3984 + $0xc] sm:$0xf]
      %v4347 = vld [vmem:[%s3984 + $0x10] sm:$0xf]
      %v4348 = vld [vmem:[%s3984 + $0x14] sm:$0x1]
      %v4349 = vld [vmem:[%s3984 + $0x18] sm:$0xf]
      %v4350 = vld [vmem:[%s3984 + $0x1c] sm:$0xf]
      %v4351 = vld [vmem:[%s3984 + $0x20] sm:$0x1]
      %v4352 = vld [vmem:[%s3984 + $0x24] sm:$0xf]
      %v4353 = vld [vmem:[%s3984 + $0x28] sm:$0xf]
      %v4354 = vld [vmem:[%s3984 + $0x2c] sm:$0x1]
      %v4355 = vld [vmem:[%s3984 + $0x30] sm:$0xf]
      %v4356 = vld [vmem:[%s3984 + $0x34] sm:$0xf]
      %v4357 = vld [vmem:[%s3984 + $0x38] sm:$0x1]
      %v4358 = vld [vmem:[%s3984 + $0x3c] sm:$0xf]
      %v4359 = vld [vmem:[%s3984 + $0x40] sm:$0xf]
      %v4360 = vld [vmem:[%s3984 + $0x44] sm:$0x1]
      %v4361 = vld [vmem:[%s3984 + $0x48] sm:$0xf]
      %v4362 = vld [vmem:[%s3984 + $0x4c] sm:$0xf]
      %v4363 = vld [vmem:[%s3984 + $0x50] sm:$0x1]
      %v4364 = vld [vmem:[%s3984 + $0x54] sm:$0xf]
      %v4365 = vld [vmem:[%s3984 + $0x58] sm:$0xf]
      %v4366 = vld [vmem:[%s3984 + $0x5c] sm:$0x1]
      %v4367 = vld [vmem:[%s3984 + $0x60] sm:$0xf]
      %v4368 = vld [vmem:[%s3984 + $0x64] sm:$0xf]
      %v4369 = vld [vmem:[%s3984 + $0x68] sm:$0x1]
      %v4370 = vld [vmem:[%s3984 + $0x6c] sm:$0xf]
      %v4371 = vld [vmem:[%s3984 + $0x70] sm:$0xf]
      %v4372 = vld [vmem:[%s3984 + $0x74] sm:$0x1]
      %v4373 = vld [vmem:[%s3984 + $0x78] sm:$0xf]
      %v4374 = vld [vmem:[%s3984 + $0x7c] sm:$0xf]
      %v4375 = vld [vmem:[%s3984 + $0x80] sm:$0x1]
      %v4376 = vld [vmem:[%s3984 + $0x84] sm:$0xf]
      %v4377 = vld [vmem:[%s3984 + $0x88] sm:$0xf]
      %v4378 = vld [vmem:[%s3984 + $0x8c] sm:$0x1]
      %v4379 = vld [vmem:[%s3984 + $0x90] sm:$0xf]
      %v4380 = vld [vmem:[%s3984 + $0x94] sm:$0xf]
      %v4381 = vld [vmem:[%s3984 + $0x98] sm:$0x1]
      %v4382 = vld [vmem:[%s3984 + $0x9c] sm:$0xf]
      %v4383 = vld [vmem:[%s3984 + $0xa0] sm:$0xf]
      %v4384 = vld [vmem:[%s3984 + $0xa4] sm:$0x1]
      %v4385 = vld [vmem:[%s3984 + $0xa8] sm:$0xf]
      %v4386 = vld [vmem:[%s3984 + $0xac] sm:$0xf]
      %v4387 = vld [vmem:[%s3984 + $0xb0] sm:$0x1]
      %v4388 = vld [vmem:[%s3984 + $0xb4] sm:$0xf]
      %v4389 = vld [vmem:[%s3984 + $0xb8] sm:$0xf]
      %v4390 = vld [vmem:[%s3984 + $0xbc] sm:$0x1]
      %v4392 = vshrl.u32 %v4343, 16
      %v4394 = vrot.slane %v4392, 4
      %v4395 = vshll.u32 %v4343, 16
      %v4397 = vrot.slane %v4395, 5
      %v4398 = vor.u32 %v4394, %v4397
      %v4399 = vrot.slane %v4398, 4
      %v4401 = vshll.u32 %v4344, 16
      %v4403 = vrot.slane %v4401, 5
      %v4404 = vsel %vm1032, %v4399, %v4403
      %v4405 = vshrl.u32 %v4344, 16
      %v4407 = vrot.slane %v4405, 4
      %v4408 = vor.u32 %v4407, %v4403
      %v4409 = vrot.slane %v4408, 4
      %v4411 = vshll.u32 %v4345, 16
      %v4413 = vrot.slane %v4411, 5
      %v4414 = vsel %vm1032, %v4409, %v4413
      %v4416 = vshrl.u32 %v4346, 16
      %v4418 = vrot.slane %v4416, 4
      %v4419 = vshll.u32 %v4346, 16
      %v4421 = vrot.slane %v4419, 5
      %v4422 = vor.u32 %v4418, %v4421
      %v4423 = vrot.slane %v4422, 4
      %v4425 = vshll.u32 %v4347, 16
      %v4427 = vrot.slane %v4425, 5
      %v4428 = vsel %vm1032, %v4423, %v4427
      %v4429 = vshrl.u32 %v4347, 16
      %v4431 = vrot.slane %v4429, 4
      %v4432 = vor.u32 %v4431, %v4427
      %v4433 = vrot.slane %v4432, 4
      %v4435 = vshll.u32 %v4348, 16
      %v4437 = vrot.slane %v4435, 5
      %v4438 = vsel %vm1032, %v4433, %v4437
      %v4440 = vshrl.u32 %v4349, 16
      %v4442 = vrot.slane %v4440, 4
      %v4443 = vshll.u32 %v4349, 16
      %v4445 = vrot.slane %v4443, 5
      %v4446 = vor.u32 %v4442, %v4445
      %v4447 = vrot.slane %v4446, 4
      %v4449 = vshll.u32 %v4350, 16
      %v4451 = vrot.slane %v4449, 5
      %v4452 = vsel %vm1032, %v4447, %v4451
      %v4453 = vshrl.u32 %v4350, 16
      %v4455 = vrot.slane %v4453, 4
      %v4456 = vor.u32 %v4455, %v4451
      %v4457 = vrot.slane %v4456, 4
      %v4459 = vshll.u32 %v4351, 16
      %v4461 = vrot.slane %v4459, 5
      %v4462 = vsel %vm1032, %v4457, %v4461
      %v4464 = vshrl.u32 %v4352, 16
      %v4466 = vrot.slane %v4464, 4
      %v4467 = vshll.u32 %v4352, 16
      %v4469 = vrot.slane %v4467, 5
      %v4470 = vor.u32 %v4466, %v4469
      %v4471 = vrot.slane %v4470, 4
      %v4473 = vshll.u32 %v4353, 16
      %v4475 = vrot.slane %v4473, 5
      %v4476 = vsel %vm1032, %v4471, %v4475
      %v4477 = vshrl.u32 %v4353, 16
      %v4479 = vrot.slane %v4477, 4
      %v4480 = vor.u32 %v4479, %v4475
      %v4481 = vrot.slane %v4480, 4
      %v4483 = vshll.u32 %v4354, 16
      %v4485 = vrot.slane %v4483, 5
      %v4486 = vsel %vm1032, %v4481, %v4485
      %v4488 = vshrl.u32 %v4355, 16
      %v4490 = vrot.slane %v4488, 4
      %v4491 = vshll.u32 %v4355, 16
      %v4493 = vrot.slane %v4491, 5
      %v4494 = vor.u32 %v4490, %v4493
      %v4495 = vrot.slane %v4494, 4
      %v4497 = vshll.u32 %v4356, 16
      %v4499 = vrot.slane %v4497, 5
      %v4500 = vsel %vm1032, %v4495, %v4499
      %v4501 = vshrl.u32 %v4356, 16
      %v4503 = vrot.slane %v4501, 4
      %v4504 = vor.u32 %v4503, %v4499
      %v4505 = vrot.slane %v4504, 4
      %v4507 = vshll.u32 %v4357, 16
      %v4509 = vrot.slane %v4507, 5
      %v4510 = vsel %vm1032, %v4505, %v4509
      %v4512 = vshrl.u32 %v4358, 16
      %v4514 = vrot.slane %v4512, 4
      %v4515 = vshll.u32 %v4358, 16
      %v4517 = vrot.slane %v4515, 5
      %v4518 = vor.u32 %v4514, %v4517
      %v4519 = vrot.slane %v4518, 4
      %v4521 = vshll.u32 %v4359, 16
      %v4523 = vrot.slane %v4521, 5
      %v4524 = vsel %vm1032, %v4519, %v4523
      %v4525 = vshrl.u32 %v4359, 16
      %v4527 = vrot.slane %v4525, 4
      %v4528 = vor.u32 %v4527, %v4523
      %v4529 = vrot.slane %v4528, 4
      %v4531 = vshll.u32 %v4360, 16
      %v4533 = vrot.slane %v4531, 5
      %v4534 = vsel %vm1032, %v4529, %v4533
      %v4536 = vshrl.u32 %v4361, 16
      %v4538 = vrot.slane %v4536, 4
      %v4539 = vshll.u32 %v4361, 16
      %v4541 = vrot.slane %v4539, 5
      %v4542 = vor.u32 %v4538, %v4541
      %v4543 = vrot.slane %v4542, 4
      %v4545 = vshll.u32 %v4362, 16
      %v4547 = vrot.slane %v4545, 5
      %v4548 = vsel %vm1032, %v4543, %v4547
      %v4549 = vshrl.u32 %v4362, 16
      %v4551 = vrot.slane %v4549, 4
      %v4552 = vor.u32 %v4551, %v4547
      %v4553 = vrot.slane %v4552, 4
      %v4555 = vshll.u32 %v4363, 16
      %v4557 = vrot.slane %v4555, 5
      %v4558 = vsel %vm1032, %v4553, %v4557
      %v4560 = vshrl.u32 %v4364, 16
      %v4562 = vrot.slane %v4560, 4
      %v4563 = vshll.u32 %v4364, 16
      %v4565 = vrot.slane %v4563, 5
      %v4566 = vor.u32 %v4562, %v4565
      %v4567 = vrot.slane %v4566, 4
      %v4569 = vshll.u32 %v4365, 16
      %v4571 = vrot.slane %v4569, 5
      %v4572 = vsel %vm1032, %v4567, %v4571
      %v4573 = vshrl.u32 %v4365, 16
      %v4575 = vrot.slane %v4573, 4
      %v4576 = vor.u32 %v4575, %v4571
      %v4577 = vrot.slane %v4576, 4
      %v4579 = vshll.u32 %v4366, 16
      %v4581 = vrot.slane %v4579, 5
      %v4582 = vsel %vm1032, %v4577, %v4581
      %v4584 = vshrl.u32 %v4367, 16
      %v4586 = vrot.slane %v4584, 4
      %v4587 = vshll.u32 %v4367, 16
      %v4589 = vrot.slane %v4587, 5
      %v4590 = vor.u32 %v4586, %v4589
      %v4591 = vrot.slane %v4590, 4
      %v4593 = vshll.u32 %v4368, 16
      %v4595 = vrot.slane %v4593, 5
      %v4596 = vsel %vm1032, %v4591, %v4595
      %v4597 = vshrl.u32 %v4368, 16
      %v4599 = vrot.slane %v4597, 4
      %v4600 = vor.u32 %v4599, %v4595
      %v4601 = vrot.slane %v4600, 4
      %v4603 = vshll.u32 %v4369, 16
      %v4605 = vrot.slane %v4603, 5
      %v4606 = vsel %vm1032, %v4601, %v4605
      %v4608 = vshrl.u32 %v4370, 16
      %v4610 = vrot.slane %v4608, 4
      %v4611 = vshll.u32 %v4370, 16
      %v4613 = vrot.slane %v4611, 5
      %v4614 = vor.u32 %v4610, %v4613
      %v4615 = vrot.slane %v4614, 4
      %v4617 = vshll.u32 %v4371, 16
      %v4619 = vrot.slane %v4617, 5
      %v4620 = vsel %vm1032, %v4615, %v4619
      %v4621 = vshrl.u32 %v4371, 16
      %v4623 = vrot.slane %v4621, 4
      %v4624 = vor.u32 %v4623, %v4619
      %v4625 = vrot.slane %v4624, 4
      %v4627 = vshll.u32 %v4372, 16
      %v4629 = vrot.slane %v4627, 5
      %v4630 = vsel %vm1032, %v4625, %v4629
      %v4632 = vshrl.u32 %v4373, 16
      %v4634 = vrot.slane %v4632, 4
      %v4635 = vshll.u32 %v4373, 16
      %v4637 = vrot.slane %v4635, 5
      %v4638 = vor.u32 %v4634, %v4637
      %v4639 = vrot.slane %v4638, 4
      %v4641 = vshll.u32 %v4374, 16
      %v4643 = vrot.slane %v4641, 5
      %v4644 = vsel %vm1032, %v4639, %v4643
      %v4645 = vshrl.u32 %v4374, 16
      %v4647 = vrot.slane %v4645, 4
      %v4648 = vor.u32 %v4647, %v4643
      %v4649 = vrot.slane %v4648, 4
      %v4651 = vshll.u32 %v4375, 16
      %v4653 = vrot.slane %v4651, 5
      %v4654 = vsel %vm1032, %v4649, %v4653
      %v4656 = vshrl.u32 %v4376, 16
      %v4658 = vrot.slane %v4656, 4
      %v4659 = vshll.u32 %v4376, 16
      %v4661 = vrot.slane %v4659, 5
      %v4662 = vor.u32 %v4658, %v4661
      %v4663 = vrot.slane %v4662, 4
      %v4665 = vshll.u32 %v4377, 16
      %v4667 = vrot.slane %v4665, 5
      %v4668 = vsel %vm1032, %v4663, %v4667
      %v4669 = vshrl.u32 %v4377, 16
      %v4671 = vrot.slane %v4669, 4
      %v4672 = vor.u32 %v4671, %v4667
      %v4673 = vrot.slane %v4672, 4
      %v4675 = vshll.u32 %v4378, 16
      %v4677 = vrot.slane %v4675, 5
      %v4678 = vsel %vm1032, %v4673, %v4677
      %v4680 = vshrl.u32 %v4379, 16
      %v4682 = vrot.slane %v4680, 4
      %v4683 = vshll.u32 %v4379, 16
      %v4685 = vrot.slane %v4683, 5
      %v4686 = vor.u32 %v4682, %v4685
      %v4687 = vrot.slane %v4686, 4
      %v4689 = vshll.u32 %v4380, 16
      %v4691 = vrot.slane %v4689, 5
      %v4692 = vsel %vm1032, %v4687, %v4691
      %v4693 = vshrl.u32 %v4380, 16
      %v4695 = vrot.slane %v4693, 4
      %v4696 = vor.u32 %v4695, %v4691
      %v4697 = vrot.slane %v4696, 4
      %v4699 = vshll.u32 %v4381, 16
      %v4701 = vrot.slane %v4699, 5
      %v4702 = vsel %vm1032, %v4697, %v4701
      %v4704 = vshrl.u32 %v4382, 16
      %v4706 = vrot.slane %v4704, 4
      %v4707 = vshll.u32 %v4382, 16
      %v4709 = vrot.slane %v4707, 5
      %v4710 = vor.u32 %v4706, %v4709
      %v4711 = vrot.slane %v4710, 4
      %v4713 = vshll.u32 %v4383, 16
      %v4715 = vrot.slane %v4713, 5
      %v4716 = vsel %vm1032, %v4711, %v4715
      %v4717 = vshrl.u32 %v4383, 16
      %v4719 = vrot.slane %v4717, 4
      %v4720 = vor.u32 %v4719, %v4715
      %v4721 = vrot.slane %v4720, 4
      %v4723 = vshll.u32 %v4384, 16
      %v4725 = vrot.slane %v4723, 5
      %v4726 = vsel %vm1032, %v4721, %v4725
      %v4728 = vshrl.u32 %v4385, 16
      %v4730 = vrot.slane %v4728, 4
      %v4731 = vshll.u32 %v4385, 16
      %v4733 = vrot.slane %v4731, 5
      %v4734 = vor.u32 %v4730, %v4733
      %v4735 = vrot.slane %v4734, 4
      %v4737 = vshll.u32 %v4386, 16
      %v4739 = vrot.slane %v4737, 5
      %v4740 = vsel %vm1032, %v4735, %v4739
      %v4741 = vshrl.u32 %v4386, 16
      %v4743 = vrot.slane %v4741, 4
      %v4744 = vor.u32 %v4743, %v4739
      %v4745 = vrot.slane %v4744, 4
      %v4747 = vshll.u32 %v4387, 16
      %v4749 = vrot.slane %v4747, 5
      %v4750 = vsel %vm1032, %v4745, %v4749
      %v4752 = vshrl.u32 %v4388, 16
      %v4754 = vrot.slane %v4752, 4
      %v4755 = vshll.u32 %v4388, 16
      %v4757 = vrot.slane %v4755, 5
      %v4758 = vor.u32 %v4754, %v4757
      %v4759 = vrot.slane %v4758, 4
      %v4761 = vshll.u32 %v4389, 16
      %v4763 = vrot.slane %v4761, 5
      %v4764 = vsel %vm1032, %v4759, %v4763
      %v4765 = vshrl.u32 %v4389, 16
      %v4767 = vrot.slane %v4765, 4
      %v4768 = vor.u32 %v4767, %v4763
      %v4769 = vrot.slane %v4768, 4
      %v4771 = vshll.u32 %v4390, 16
      %v4773 = vrot.slane %v4771, 5
      %v4774 = vsel %vm1032, %v4769, %v4773
      %s4775 = scalar_lea.vmem %s1, 14
      %v4776 = vld [vmem:[%s4775] sm:$0x3]
      %v4777 = vunpack.c.l.b16 %v4404
      %v4778 = vunpack.c.l.b16 %v4414
      %v4779 = vunpack.c.l.b16 %v4428
      %v4780 = vunpack.c.l.b16 %v4438
      %v4781 = vunpack.c.l.b16 %v4452
      %v4782 = vunpack.c.l.b16 %v4462
      %v4783 = vunpack.c.l.b16 %v4476
      %v4784 = vunpack.c.l.b16 %v4486
      %v4785 = vunpack.c.l.b16 %v4500
      %v4786 = vunpack.c.l.b16 %v4510
      %v4787 = vunpack.c.l.b16 %v4524
      %v4788 = vunpack.c.l.b16 %v4534
      %v4789 = vunpack.c.l.b16 %v4548
      %v4790 = vunpack.c.l.b16 %v4558
      %v4791 = vunpack.c.l.b16 %v4572
      %v4792 = vunpack.c.l.b16 %v4582
      %v4793 = vunpack.c.l.b16 %v4596
      %v4794 = vunpack.c.l.b16 %v4606
      %v4795 = vunpack.c.l.b16 %v4620
      %v4796 = vunpack.c.l.b16 %v4630
      %v4797 = vunpack.c.l.b16 %v4644
      %v4798 = vunpack.c.l.b16 %v4654
      %v4799 = vunpack.c.l.b16 %v4668
      %v4800 = vunpack.c.l.b16 %v4678
      %v4801 = vunpack.c.l.b16 %v4692
      %v4802 = vunpack.c.l.b16 %v4702
      %v4803 = vunpack.c.l.b16 %v4716
      %v4804 = vunpack.c.l.b16 %v4726
      %v4805 = vunpack.c.l.b16 %v4740
      %v4806 = vunpack.c.l.b16 %v4750
      %v4807 = vunpack.c.l.b16 %v4764
      %v4808 = vunpack.c.l.b16 %v4774
      %v4809 = vpack.c.b16 %v4778, %v4777
      %v4810 = vpack.c.b16 %v4780, %v4779
      %v4811 = vpack.c.b16 %v4782, %v4781
      %v4812 = vpack.c.b16 %v4784, %v4783
      %v4813 = vpack.c.b16 %v4786, %v4785
      %v4814 = vpack.c.b16 %v4788, %v4787
      %v4815 = vpack.c.b16 %v4790, %v4789
      %v4816 = vpack.c.b16 %v4792, %v4791
      %v4817 = vpack.c.b16 %v4794, %v4793
      %v4818 = vpack.c.b16 %v4796, %v4795
      %v4819 = vpack.c.b16 %v4798, %v4797
      %v4820 = vpack.c.b16 %v4800, %v4799
      %v4821 = vpack.c.b16 %v4802, %v4801
      %v4822 = vpack.c.b16 %v4804, %v4803
      %v4823 = vpack.c.b16 %v4806, %v4805
      %v4824 = vpack.c.b16 %v4808, %v4807
      %v4826 = vsel %vm1467, %v4809, 0
      %v4829 = vsel %vm1467, %v4810, 0
      %v4832 = vsel %vm1467, %v4811, 0
      %v4835 = vsel %vm1467, %v4812, 0
      %v4838 = vsel %vm1467, %v4813, 0
      %v4841 = vsel %vm1467, %v4814, 0
      %v4844 = vsel %vm1467, %v4815, 0
      %v4847 = vsel %vm1467, %v4816, 0
      %v4850 = vsel %vm1467, %v4817, 0
      %v4853 = vsel %vm1467, %v4818, 0
      %v4856 = vsel %vm1467, %v4819, 0
      %v4859 = vsel %vm1467, %v4820, 0
      %v4862 = vsel %vm1467, %v4821, 0
      %v4865 = vsel %vm1467, %v4822, 0
      %v4868 = vsel %vm1467, %v4823, 0
      %v4871 = vsel %vm1467, %v4824, 0
      %v4874 = vsel %vm1516, %v4776, 0
      %4876 = vmatprep.subr.bf16.mxu0 0
      %4877 = vmatpush1.bf16.msra.mxu0 %v4874
      %4878 = vmatprep.subr.bf16.mxu0 0
      %4879 = vmatpush1.bf16.msra.mxu0 0
      %4880 = vmatprep.subr.bf16.mxu0 0
      %4881 = vmatpush1.bf16.msra.mxu0 0
      %4882 = vmatprep.subr.bf16.mxu0 0
      %4883 = vmatpush1.bf16.msra.mxu0 0
      %4884 = vmatprep.subr.bf16.mxu0 0
      %4885 = vmatpush1.bf16.msra.mxu0 0
      %4886 = vmatprep.subr.bf16.mxu0 0
      %4887 = vmatpush1.bf16.msra.mxu0 0
      %4888 = vmatprep.subr.bf16.mxu0 0
      %4889 = vmatpush1.bf16.msra.mxu0 0
      %4890 = vmatprep.subr.bf16.mxu0 0
      %4891 = vmatpush1.bf16.msra.mxu0 0
      %4892 = vmatprep.subr.bf16.mxu0 0
      %4893 = vmatpush1.bf16.msra.mxu0 0
      %4894 = vmatprep.subr.bf16.mxu0 0
      %4895 = vmatpush1.bf16.msra.mxu0 0
      %4896 = vmatprep.subr.bf16.mxu0 0
      %4897 = vmatpush1.bf16.msra.mxu0 0
      %4898 = vmatprep.subr.bf16.mxu0 0
      %4899 = vmatpush1.bf16.msra.mxu0 0
      %4900 = vmatprep.subr.bf16.mxu0 0
      %4901 = vmatpush1.bf16.msra.mxu0 0
      %4902 = vmatprep.subr.bf16.mxu0 0
      %4903 = vmatpush1.bf16.msra.mxu0 0
      %4904 = vmatprep.subr.bf16.mxu0 0
      %4905 = vmatpush1.bf16.msra.mxu0 0
      %4906 = vmatprep.subr.bf16.mxu0 0
      %4907 = vmatpush1.bf16.msra.mxu0 0
      %4908 = vmatprep.mubr.bf16.mxu0 0
      %4909 = vmatmul.mubr.bf16.gmra.mrb[0].mxu0 %v4826
      %v4910 = vpop.f32.mrb[0].mxu0
      %v4911 = vadd.f32 0.0, %v4910
      %v4912 = vpop.f32.mrb[0].mxu0
      %v4913 = vpop.f32.mrb[0].mxu0
      %v4914 = vadd.f32 0.0, %v4913
      %v4915 = vpop.f32.mrb[0].mxu0
      %4916 = vmatprep.mubr.bf16.mxu0 0
      %4917 = vmatmul.mubr.bf16.gmra.mrb[0].mxu0 %v4829
      %v4918 = vpop.f32.mrb[0].mxu0
      %v4919 = vadd.f32 0.0, %v4918
      %v4920 = vpop.f32.mrb[0].mxu0
      %v4921 = vpop.f32.mrb[0].mxu0
      %v4922 = vadd.f32 0.0, %v4921
      %v4923 = vpop.f32.mrb[0].mxu0
      %4924 = vmatprep.mubr.bf16.mxu0 0
      %4925 = vmatmul.mubr.bf16.gmra.mrb[0].mxu0 %v4832
      %v4926 = vpop.f32.mrb[0].mxu0
      %v4927 = vadd.f32 0.0, %v4926
      %v4928 = vpop.f32.mrb[0].mxu0
      %v4929 = vpop.f32.mrb[0].mxu0
      %v4930 = vadd.f32 0.0, %v4929
      %v4931 = vpop.f32.mrb[0].mxu0
      %4932 = vmatprep.mubr.bf16.mxu0 0
      %4933 = vmatmul.mubr.bf16.gmra.mrb[0].mxu0 %v4835
      %v4934 = vpop.f32.mrb[0].mxu0
      %v4935 = vadd.f32 0.0, %v4934
      %v4936 = vpop.f32.mrb[0].mxu0
      %v4937 = vpop.f32.mrb[0].mxu0
      %v4938 = vadd.f32 0.0, %v4937
      %v4939 = vpop.f32.mrb[0].mxu0
      %4940 = vmatprep.mubr.bf16.mxu0 0
      %4941 = vmatmul.mubr.bf16.gmra.mrb[0].mxu0 %v4838
      %v4942 = vpop.f32.mrb[0].mxu0
      %v4943 = vadd.f32 0.0, %v4942
      %v4944 = vpop.f32.mrb[0].mxu0
      %v4945 = vpop.f32.mrb[0].mxu0
      %v4946 = vadd.f32 0.0, %v4945
      %v4947 = vpop.f32.mrb[0].mxu0
      %4948 = vmatprep.mubr.bf16.mxu0 0
      %4949 = vmatmul.mubr.bf16.gmra.mrb[0].mxu0 %v4841
      %v4950 = vpop.f32.mrb[0].mxu0
      %v4951 = vadd.f32 0.0, %v4950
      %v4952 = vpop.f32.mrb[0].mxu0
      %v4953 = vpop.f32.mrb[0].mxu0
      %v4954 = vadd.f32 0.0, %v4953
      %v4955 = vpop.f32.mrb[0].mxu0
      %4956 = vmatprep.mubr.bf16.mxu0 0
      %4957 = vmatmul.mubr.bf16.gmra.mrb[0].mxu0 %v4844
      %v4958 = vpop.f32.mrb[0].mxu0
      %v4959 = vadd.f32 0.0, %v4958
      %v4960 = vpop.f32.mrb[0].mxu0
      %v4961 = vpop.f32.mrb[0].mxu0
      %v4962 = vadd.f32 0.0, %v4961
      %v4963 = vpop.f32.mrb[0].mxu0
      %4964 = vmatprep.mubr.bf16.mxu0 0
      %4965 = vmatmul.mubr.bf16.gmra.mrb[0].mxu0 %v4847
      %v4966 = vpop.f32.mrb[0].mxu0
      %v4967 = vadd.f32 0.0, %v4966
      %v4968 = vpop.f32.mrb[0].mxu0
      %v4969 = vpop.f32.mrb[0].mxu0
      %v4970 = vadd.f32 0.0, %v4969
      %v4971 = vpop.f32.mrb[0].mxu0
      %4972 = vmatprep.mubr.bf16.mxu0 0
      %4973 = vmatmul.mubr.bf16.gmra.mrb[0].mxu0 %v4850
      %v4974 = vpop.f32.mrb[0].mxu0
      %v4975 = vadd.f32 0.0, %v4974
      %v4976 = vpop.f32.mrb[0].mxu0
      %v4977 = vpop.f32.mrb[0].mxu0
      %v4978 = vadd.f32 0.0, %v4977
      %v4979 = vpop.f32.mrb[0].mxu0
      %4980 = vmatprep.mubr.bf16.mxu0 0
      %4981 = vmatmul.mubr.bf16.gmra.mrb[0].mxu0 %v4853
      %v4982 = vpop.f32.mrb[0].mxu0
      %v4983 = vadd.f32 0.0, %v4982
      %v4984 = vpop.f32.mrb[0].mxu0
      %v4985 = vpop.f32.mrb[0].mxu0
      %v4986 = vadd.f32 0.0, %v4985
      %v4987 = vpop.f32.mrb[0].mxu0
      %4988 = vmatprep.mubr.bf16.mxu0 0
      %4989 = vmatmul.mubr.bf16.gmra.mrb[0].mxu0 %v4856
      %v4990 = vpop.f32.mrb[0].mxu0
      %v4991 = vadd.f32 0.0, %v4990
      %v4992 = vpop.f32.mrb[0].mxu0
      %v4993 = vpop.f32.mrb[0].mxu0
      %v4994 = vadd.f32 0.0, %v4993
      %v4995 = vpop.f32.mrb[0].mxu0
      %4996 = vmatprep.mubr.bf16.mxu0 0
      %4997 = vmatmul.mubr.bf16.gmra.mrb[0].mxu0 %v4859
      %v4998 = vpop.f32.mrb[0].mxu0
      %v4999 = vadd.f32 0.0, %v4998
      %v5000 = vpop.f32.mrb[0].mxu0
      %v5001 = vpop.f32.mrb[0].mxu0
      %v5002 = vadd.f32 0.0, %v5001
      %v5003 = vpop.f32.mrb[0].mxu0
      %5004 = vmatprep.mubr.bf16.mxu0 0
      %5005 = vmatmul.mubr.bf16.gmra.mrb[0].mxu0 %v4862
      %v5006 = vpop.f32.mrb[0].mxu0
      %v5007 = vadd.f32 0.0, %v5006
      %v5008 = vpop.f32.mrb[0].mxu0
      %v5009 = vpop.f32.mrb[0].mxu0
      %v5010 = vadd.f32 0.0, %v5009
      %v5011 = vpop.f32.mrb[0].mxu0
      %5012 = vmatprep.mubr.bf16.mxu0 0
      %5013 = vmatmul.mubr.bf16.gmra.mrb[0].mxu0 %v4865
      %v5014 = vpop.f32.mrb[0].mxu0
      %v5015 = vadd.f32 0.0, %v5014
      %v5016 = vpop.f32.mrb[0].mxu0
      %v5017 = vpop.f32.mrb[0].mxu0
      %v5018 = vadd.f32 0.0, %v5017
      %v5019 = vpop.f32.mrb[0].mxu0
      %5020 = vmatprep.mubr.bf16.mxu0 0
      %5021 = vmatmul.mubr.bf16.gmra.mrb[0].mxu0 %v4868
      %v5022 = vpop.f32.mrb[0].mxu0
      %v5023 = vadd.f32 0.0, %v5022
      %v5024 = vpop.f32.mrb[0].mxu0
      %v5025 = vpop.f32.mrb[0].mxu0
      %v5026 = vadd.f32 0.0, %v5025
      %v5027 = vpop.f32.mrb[0].mxu0
      %5028 = vmatprep.mubr.bf16.mxu0 0
      %5029 = vmatmul.mubr.bf16.gmra.mrb[0].mxu0 %v4871
      %v5030 = vpop.f32.mrb[0].mxu0
      %v5031 = vadd.f32 0.0, %v5030
      %v5032 = vpop.f32.mrb[0].mxu0
      %v5033 = vpop.f32.mrb[0].mxu0
      %v5034 = vadd.f32 0.0, %v5033
      %v5035 = vpop.f32.mrb[0].mxu0
      %5036 = vdwg.mxu0
      %v5037 = vadd.f32 %v4311, %v4911
      %v5038 = vadd.f32 %v4312, %v4914
      %v5039 = vadd.f32 %v4313, %v4919
      %v5040 = vadd.f32 %v4314, %v4922
      %v5041 = vadd.f32 %v4315, %v4927
      %v5042 = vadd.f32 %v4316, %v4930
      %v5043 = vadd.f32 %v4317, %v4935
      %v5044 = vadd.f32 %v4318, %v4938
      %v5045 = vadd.f32 %v4319, %v4943
      %v5046 = vadd.f32 %v4320, %v4946
      %v5047 = vadd.f32 %v4321, %v4951
      %v5048 = vadd.f32 %v4322, %v4954
      %v5049 = vadd.f32 %v4323, %v4959
      %v5050 = vadd.f32 %v4324, %v4962
      %v5051 = vadd.f32 %v4325, %v4967
      %v5052 = vadd.f32 %v4326, %v4970
      %v5053 = vadd.f32 %v4327, %v4975
      %v5054 = vadd.f32 %v4328, %v4978
      %v5055 = vadd.f32 %v4329, %v4983
      %v5056 = vadd.f32 %v4330, %v4986
      %v5057 = vadd.f32 %v4331, %v4991
      %v5058 = vadd.f32 %v4332, %v4994
      %v5059 = vadd.f32 %v4333, %v4999
      %v5060 = vadd.f32 %v4334, %v5002
      %v5061 = vadd.f32 %v4335, %v5007
      %v5062 = vadd.f32 %v4336, %v5010
      %v5063 = vadd.f32 %v4337, %v5015
      %v5064 = vadd.f32 %v4338, %v5018
      %v5065 = vadd.f32 %v4339, %v5023
      %v5066 = vadd.f32 %v4340, %v5026
      %v5067 = vadd.f32 %v4341, %v5031
      %v5068 = vadd.f32 %v4342, %v5034
      %v5069 = vld [vmem:[%s3984] sm:$0xe]
      %v5070 = vld [vmem:[%s3984 + $0xc] sm:$0xe]
      %v5071 = vld [vmem:[%s3984 + $0x18] sm:$0xe]
      %v5072 = vld [vmem:[%s3984 + $0x24] sm:$0xe]
      %v5073 = vld [vmem:[%s3984 + $0x30] sm:$0xe]
      %v5074 = vld [vmem:[%s3984 + $0x3c] sm:$0xe]
      %v5075 = vld [vmem:[%s3984 + $0x48] sm:$0xe]
      %v5076 = vld [vmem:[%s3984 + $0x54] sm:$0xe]
      %v5077 = vld [vmem:[%s3984 + $0x60] sm:$0xe]
      %v5078 = vld [vmem:[%s3984 + $0x6c] sm:$0xe]
      %v5079 = vld [vmem:[%s3984 + $0x78] sm:$0xe]
      %v5080 = vld [vmem:[%s3984 + $0x84] sm:$0xe]
      %v5081 = vld [vmem:[%s3984 + $0x90] sm:$0xe]
      %v5082 = vld [vmem:[%s3984 + $0x9c] sm:$0xe]
      %v5083 = vld [vmem:[%s3984 + $0xa8] sm:$0xe]
      %v5084 = vld [vmem:[%s3984 + $0xb4] sm:$0xe]
      %v5133 = vrot.slane %v5069, 5
      %v5134 = vrot.slane %v5133, 4
      %v5135 = vrot.slane %v4344, 5
      %v5136 = vsel %vm2023, %v5134, %v5135
      %v5137 = vrot.slane %v5135, 4
      %v5138 = vrot.slane %v4345, 5
      %v5139 = vsel %vm2023, %v5137, %v5138
      %v5140 = vrot.slane %v5070, 5
      %v5141 = vrot.slane %v5140, 4
      %v5142 = vrot.slane %v4347, 5
      %v5143 = vsel %vm2023, %v5141, %v5142
      %v5144 = vrot.slane %v5142, 4
      %v5145 = vrot.slane %v4348, 5
      %v5146 = vsel %vm2023, %v5144, %v5145
      %v5147 = vrot.slane %v5071, 5
      %v5148 = vrot.slane %v5147, 4
      %v5149 = vrot.slane %v4350, 5
      %v5150 = vsel %vm2023, %v5148, %v5149
      %v5151 = vrot.slane %v5149, 4
      %v5152 = vrot.slane %v4351, 5
      %v5153 = vsel %vm2023, %v5151, %v5152
      %v5154 = vrot.slane %v5072, 5
      %v5155 = vrot.slane %v5154, 4
      %v5156 = vrot.slane %v4353, 5
      %v5157 = vsel %vm2023, %v5155, %v5156
      %v5158 = vrot.slane %v5156, 4
      %v5159 = vrot.slane %v4354, 5
      %v5160 = vsel %vm2023, %v5158, %v5159
      %v5161 = vrot.slane %v5073, 5
      %v5162 = vrot.slane %v5161, 4
      %v5163 = vrot.slane %v4356, 5
      %v5164 = vsel %vm2023, %v5162, %v5163
      %v5165 = vrot.slane %v5163, 4
      %v5166 = vrot.slane %v4357, 5
      %v5167 = vsel %vm2023, %v5165, %v5166
      %v5168 = vrot.slane %v5074, 5
      %v5169 = vrot.slane %v5168, 4
      %v5170 = vrot.slane %v4359, 5
      %v5171 = vsel %vm2023, %v5169, %v5170
      %v5172 = vrot.slane %v5170, 4
      %v5173 = vrot.slane %v4360, 5
      %v5174 = vsel %vm2023, %v5172, %v5173
      %v5175 = vrot.slane %v5075, 5
      %v5176 = vrot.slane %v5175, 4
      %v5177 = vrot.slane %v4362, 5
      %v5178 = vsel %vm2023, %v5176, %v5177
      %v5179 = vrot.slane %v5177, 4
      %v5180 = vrot.slane %v4363, 5
      %v5181 = vsel %vm2023, %v5179, %v5180
      %v5182 = vrot.slane %v5076, 5
      %v5183 = vrot.slane %v5182, 4
      %v5184 = vrot.slane %v4365, 5
      %v5185 = vsel %vm2023, %v5183, %v5184
      %v5186 = vrot.slane %v5184, 4
      %v5187 = vrot.slane %v4366, 5
      %v5188 = vsel %vm2023, %v5186, %v5187
      %v5189 = vrot.slane %v5077, 5
      %v5190 = vrot.slane %v5189, 4
      %v5191 = vrot.slane %v4368, 5
      %v5192 = vsel %vm2023, %v5190, %v5191
      %v5193 = vrot.slane %v5191, 4
      %v5194 = vrot.slane %v4369, 5
      %v5195 = vsel %vm2023, %v5193, %v5194
      %v5196 = vrot.slane %v5078, 5
      %v5197 = vrot.slane %v5196, 4
      %v5198 = vrot.slane %v4371, 5
      %v5199 = vsel %vm2023, %v5197, %v5198
      %v5200 = vrot.slane %v5198, 4
      %v5201 = vrot.slane %v4372, 5
      %v5202 = vsel %vm2023, %v5200, %v5201
      %v5203 = vrot.slane %v5079, 5
      %v5204 = vrot.slane %v5203, 4
      %v5205 = vrot.slane %v4374, 5
      %v5206 = vsel %vm2023, %v5204, %v5205
      %v5207 = vrot.slane %v5205, 4
      %v5208 = vrot.slane %v4375, 5
      %v5209 = vsel %vm2023, %v5207, %v5208
      %v5210 = vrot.slane %v5080, 5
      %v5211 = vrot.slane %v5210, 4
      %v5212 = vrot.slane %v4377, 5
      %v5213 = vsel %vm2023, %v5211, %v5212
      %v5214 = vrot.slane %v5212, 4
      %v5215 = vrot.slane %v4378, 5
      %v5216 = vsel %vm2023, %v5214, %v5215
      %v5217 = vrot.slane %v5081, 5
      %v5218 = vrot.slane %v5217, 4
      %v5219 = vrot.slane %v4380, 5
      %v5220 = vsel %vm2023, %v5218, %v5219
      %v5221 = vrot.slane %v5219, 4
      %v5222 = vrot.slane %v4381, 5
      %v5223 = vsel %vm2023, %v5221, %v5222
      %v5224 = vrot.slane %v5082, 5
      %v5225 = vrot.slane %v5224, 4
      %v5226 = vrot.slane %v4383, 5
      %v5227 = vsel %vm2023, %v5225, %v5226
      %v5228 = vrot.slane %v5226, 4
      %v5229 = vrot.slane %v4384, 5
      %v5230 = vsel %vm2023, %v5228, %v5229
      %v5231 = vrot.slane %v5083, 5
      %v5232 = vrot.slane %v5231, 4
      %v5233 = vrot.slane %v4386, 5
      %v5234 = vsel %vm2023, %v5232, %v5233
      %v5235 = vrot.slane %v5233, 4
      %v5236 = vrot.slane %v4387, 5
      %v5237 = vsel %vm2023, %v5235, %v5236
      %v5238 = vrot.slane %v5084, 5
      %v5239 = vrot.slane %v5238, 4
      %v5240 = vrot.slane %v4389, 5
      %v5241 = vsel %vm2023, %v5239, %v5240
      %v5242 = vrot.slane %v5240, 4
      %v5243 = vrot.slane %v4390, 5
      %v5244 = vsel %vm2023, %v5242, %v5243
      %s5245 = scalar_lea.vmem %s1, 16
      %v5246 = vld [vmem:[%s5245] sm:$0x3]
      %v5247 = vunpack.c.l.b16 %v5136
      %v5248 = vunpack.c.l.b16 %v5139
      %v5249 = vunpack.c.l.b16 %v5143
      %v5250 = vunpack.c.l.b16 %v5146
      %v5251 = vunpack.c.l.b16 %v5150
      %v5252 = vunpack.c.l.b16 %v5153
      %v5253 = vunpack.c.l.b16 %v5157
      %v5254 = vunpack.c.l.b16 %v5160
      %v5255 = vunpack.c.l.b16 %v5164
      %v5256 = vunpack.c.l.b16 %v5167
      %v5257 = vunpack.c.l.b16 %v5171
      %v5258 = vunpack.c.l.b16 %v5174
      %v5259 = vunpack.c.l.b16 %v5178
      %v5260 = vunpack.c.l.b16 %v5181
      %v5261 = vunpack.c.l.b16 %v5185
      %v5262 = vunpack.c.l.b16 %v5188
      %v5263 = vunpack.c.l.b16 %v5192
      %v5264 = vunpack.c.l.b16 %v5195
      %v5265 = vunpack.c.l.b16 %v5199
      %v5266 = vunpack.c.l.b16 %v5202
      %v5267 = vunpack.c.l.b16 %v5206
      %v5268 = vunpack.c.l.b16 %v5209
      %v5269 = vunpack.c.l.b16 %v5213
      %v5270 = vunpack.c.l.b16 %v5216
      %v5271 = vunpack.c.l.b16 %v5220
      %v5272 = vunpack.c.l.b16 %v5223
      %v5273 = vunpack.c.l.b16 %v5227
      %v5274 = vunpack.c.l.b16 %v5230
      %v5275 = vunpack.c.l.b16 %v5234
      %v5276 = vunpack.c.l.b16 %v5237
      %v5277 = vunpack.c.l.b16 %v5241
      %v5278 = vunpack.c.l.b16 %v5244
      %v5279 = vpack.c.b16 %v5248, %v5247
      %v5280 = vpack.c.b16 %v5250, %v5249
      %v5281 = vpack.c.b16 %v5252, %v5251
      %v5282 = vpack.c.b16 %v5254, %v5253
      %v5283 = vpack.c.b16 %v5256, %v5255
      %v5284 = vpack.c.b16 %v5258, %v5257
      %v5285 = vpack.c.b16 %v5260, %v5259
      %v5286 = vpack.c.b16 %v5262, %v5261
      %v5287 = vpack.c.b16 %v5264, %v5263
      %v5288 = vpack.c.b16 %v5266, %v5265
      %v5289 = vpack.c.b16 %v5268, %v5267
      %v5290 = vpack.c.b16 %v5270, %v5269
      %v5291 = vpack.c.b16 %v5272, %v5271
      %v5292 = vpack.c.b16 %v5274, %v5273
      %v5293 = vpack.c.b16 %v5276, %v5275
      %v5294 = vpack.c.b16 %v5278, %v5277
      %v5296 = vsel %vm1467, %v5279, 0
      %v5299 = vsel %vm1467, %v5280, 0
      %v5302 = vsel %vm1467, %v5281, 0
      %v5305 = vsel %vm1467, %v5282, 0
      %v5308 = vsel %vm1467, %v5283, 0
      %v5311 = vsel %vm1467, %v5284, 0
      %v5314 = vsel %vm1467, %v5285, 0
      %v5317 = vsel %vm1467, %v5286, 0
      %v5320 = vsel %vm1467, %v5287, 0
      %v5323 = vsel %vm1467, %v5288, 0
      %v5326 = vsel %vm1467, %v5289, 0
      %v5329 = vsel %vm1467, %v5290, 0
      %v5332 = vsel %vm1467, %v5291, 0
      %v5335 = vsel %vm1467, %v5292, 0
      %v5338 = vsel %vm1467, %v5293, 0
      %v5341 = vsel %vm1467, %v5294, 0
      %v5344 = vsel %vm1516, %v5246, 0
      %5346 = vmatprep.subr.bf16.mxu0 0
      %5347 = vmatpush1.bf16.msra.mxu0 %v5344
      %5348 = vmatprep.subr.bf16.mxu0 0
      %5349 = vmatpush1.bf16.msra.mxu0 0
      %5350 = vmatprep.subr.bf16.mxu0 0
      %5351 = vmatpush1.bf16.msra.mxu0 0
      %5352 = vmatprep.subr.bf16.mxu0 0
      %5353 = vmatpush1.bf16.msra.mxu0 0
      %5354 = vmatprep.subr.bf16.mxu0 0
      %5355 = vmatpush1.bf16.msra.mxu0 0
      %5356 = vmatprep.subr.bf16.mxu0 0
      %5357 = vmatpush1.bf16.msra.mxu0 0
      %5358 = vmatprep.subr.bf16.mxu0 0
      %5359 = vmatpush1.bf16.msra.mxu0 0
      %5360 = vmatprep.subr.bf16.mxu0 0
      %5361 = vmatpush1.bf16.msra.mxu0 0
      %5362 = vmatprep.subr.bf16.mxu0 0
      %5363 = vmatpush1.bf16.msra.mxu0 0
      %5364 = vmatprep.subr.bf16.mxu0 0
      %5365 = vmatpush1.bf16.msra.mxu0 0
      %5366 = vmatprep.subr.bf16.mxu0 0
      %5367 = vmatpush1.bf16.msra.mxu0 0
      %5368 = vmatprep.subr.bf16.mxu0 0
      %5369 = vmatpush1.bf16.msra.mxu0 0
      %5370 = vmatprep.subr.bf16.mxu0 0
      %5371 = vmatpush1.bf16.msra.mxu0 0
      %5372 = vmatprep.subr.bf16.mxu0 0
      %5373 = vmatpush1.bf16.msra.mxu0 0
      %5374 = vmatprep.subr.bf16.mxu0 0
      %5375 = vmatpush1.bf16.msra.mxu0 0
      %5376 = vmatprep.subr.bf16.mxu0 0
      %5377 = vmatpush1.bf16.msra.mxu0 0
      %5378 = vmatprep.mubr.bf16.mxu0 0
      %5379 = vmatmul.mubr.bf16.gmra.mrb[0].mxu0 %v5296
      %v5380 = vpop.f32.mrb[0].mxu0
      %v5381 = vadd.f32 0.0, %v5380
      %v5382 = vpop.f32.mrb[0].mxu0
      %v5383 = vpop.f32.mrb[0].mxu0
      %v5384 = vadd.f32 0.0, %v5383
      %v5385 = vpop.f32.mrb[0].mxu0
      %5386 = vmatprep.mubr.bf16.mxu0 0
      %5387 = vmatmul.mubr.bf16.gmra.mrb[0].mxu0 %v5299
      %v5388 = vpop.f32.mrb[0].mxu0
      %v5389 = vadd.f32 0.0, %v5388
      %v5390 = vpop.f32.mrb[0].mxu0
      %v5391 = vpop.f32.mrb[0].mxu0
      %v5392 = vadd.f32 0.0, %v5391
      %v5393 = vpop.f32.mrb[0].mxu0
      %5394 = vmatprep.mubr.bf16.mxu0 0
      %5395 = vmatmul.mubr.bf16.gmra.mrb[0].mxu0 %v5302
      %v5396 = vpop.f32.mrb[0].mxu0
      %v5397 = vadd.f32 0.0, %v5396
      %v5398 = vpop.f32.mrb[0].mxu0
      %v5399 = vpop.f32.mrb[0].mxu0
      %v5400 = vadd.f32 0.0, %v5399
      %v5401 = vpop.f32.mrb[0].mxu0
      %5402 = vmatprep.mubr.bf16.mxu0 0
      %5403 = vmatmul.mubr.bf16.gmra.mrb[0].mxu0 %v5305
      %v5404 = vpop.f32.mrb[0].mxu0
      %v5405 = vadd.f32 0.0, %v5404
      %v5406 = vpop.f32.mrb[0].mxu0
      %v5407 = vpop.f32.mrb[0].mxu0
      %v5408 = vadd.f32 0.0, %v5407
      %v5409 = vpop.f32.mrb[0].mxu0
      %5410 = vmatprep.mubr.bf16.mxu0 0
      %5411 = vmatmul.mubr.bf16.gmra.mrb[0].mxu0 %v5308
      %v5412 = vpop.f32.mrb[0].mxu0
      %v5413 = vadd.f32 0.0, %v5412
      %v5414 = vpop.f32.mrb[0].mxu0
      %v5415 = vpop.f32.mrb[0].mxu0
      %v5416 = vadd.f32 0.0, %v5415
      %v5417 = vpop.f32.mrb[0].mxu0
      %5418 = vmatprep.mubr.bf16.mxu0 0
      %5419 = vmatmul.mubr.bf16.gmra.mrb[0].mxu0 %v5311
      %v5420 = vpop.f32.mrb[0].mxu0
      %v5421 = vadd.f32 0.0, %v5420
      %v5422 = vpop.f32.mrb[0].mxu0
      %v5423 = vpop.f32.mrb[0].mxu0
      %v5424 = vadd.f32 0.0, %v5423
      %v5425 = vpop.f32.mrb[0].mxu0
      %5426 = vmatprep.mubr.bf16.mxu0 0
      %5427 = vmatmul.mubr.bf16.gmra.mrb[0].mxu0 %v5314
      %v5428 = vpop.f32.mrb[0].mxu0
      %v5429 = vadd.f32 0.0, %v5428
      %v5430 = vpop.f32.mrb[0].mxu0
      %v5431 = vpop.f32.mrb[0].mxu0
      %v5432 = vadd.f32 0.0, %v5431
      %v5433 = vpop.f32.mrb[0].mxu0
      %5434 = vmatprep.mubr.bf16.mxu0 0
      %5435 = vmatmul.mubr.bf16.gmra.mrb[0].mxu0 %v5317
      %v5436 = vpop.f32.mrb[0].mxu0
      %v5437 = vadd.f32 0.0, %v5436
      %v5438 = vpop.f32.mrb[0].mxu0
      %v5439 = vpop.f32.mrb[0].mxu0
      %v5440 = vadd.f32 0.0, %v5439
      %v5441 = vpop.f32.mrb[0].mxu0
      %5442 = vmatprep.mubr.bf16.mxu0 0
      %5443 = vmatmul.mubr.bf16.gmra.mrb[0].mxu0 %v5320
      %v5444 = vpop.f32.mrb[0].mxu0
      %v5445 = vadd.f32 0.0, %v5444
      %v5446 = vpop.f32.mrb[0].mxu0
      %v5447 = vpop.f32.mrb[0].mxu0
      %v5448 = vadd.f32 0.0, %v5447
      %v5449 = vpop.f32.mrb[0].mxu0
      %5450 = vmatprep.mubr.bf16.mxu0 0
      %5451 = vmatmul.mubr.bf16.gmra.mrb[0].mxu0 %v5323
      %v5452 = vpop.f32.mrb[0].mxu0
      %v5453 = vadd.f32 0.0, %v5452
      %v5454 = vpop.f32.mrb[0].mxu0
      %v5455 = vpop.f32.mrb[0].mxu0
      %v5456 = vadd.f32 0.0, %v5455
      %v5457 = vpop.f32.mrb[0].mxu0
      %5458 = vmatprep.mubr.bf16.mxu0 0
      %5459 = vmatmul.mubr.bf16.gmra.mrb[0].mxu0 %v5326
      %v5460 = vpop.f32.mrb[0].mxu0
      %v5461 = vadd.f32 0.0, %v5460
      %v5462 = vpop.f32.mrb[0].mxu0
      %v5463 = vpop.f32.mrb[0].mxu0
      %v5464 = vadd.f32 0.0, %v5463
      %v5465 = vpop.f32.mrb[0].mxu0
      %5466 = vmatprep.mubr.bf16.mxu0 0
      %5467 = vmatmul.mubr.bf16.gmra.mrb[0].mxu0 %v5329
      %v5468 = vpop.f32.mrb[0].mxu0
      %v5469 = vadd.f32 0.0, %v5468
      %v5470 = vpop.f32.mrb[0].mxu0
      %v5471 = vpop.f32.mrb[0].mxu0
      %v5472 = vadd.f32 0.0, %v5471
      %v5473 = vpop.f32.mrb[0].mxu0
      %5474 = vmatprep.mubr.bf16.mxu0 0
      %5475 = vmatmul.mubr.bf16.gmra.mrb[0].mxu0 %v5332
      %v5476 = vpop.f32.mrb[0].mxu0
      %v5477 = vadd.f32 0.0, %v5476
      %v5478 = vpop.f32.mrb[0].mxu0
      %v5479 = vpop.f32.mrb[0].mxu0
      %v5480 = vadd.f32 0.0, %v5479
      %v5481 = vpop.f32.mrb[0].mxu0
      %5482 = vmatprep.mubr.bf16.mxu0 0
      %5483 = vmatmul.mubr.bf16.gmra.mrb[0].mxu0 %v5335
      %v5484 = vpop.f32.mrb[0].mxu0
      %v5485 = vadd.f32 0.0, %v5484
      %v5486 = vpop.f32.mrb[0].mxu0
      %v5487 = vpop.f32.mrb[0].mxu0
      %v5488 = vadd.f32 0.0, %v5487
      %v5489 = vpop.f32.mrb[0].mxu0
      %5490 = vmatprep.mubr.bf16.mxu0 0
      %5491 = vmatmul.mubr.bf16.gmra.mrb[0].mxu0 %v5338
      %v5492 = vpop.f32.mrb[0].mxu0
      %v5493 = vadd.f32 0.0, %v5492
      %v5494 = vpop.f32.mrb[0].mxu0
      %v5495 = vpop.f32.mrb[0].mxu0
      %v5496 = vadd.f32 0.0, %v5495
      %v5497 = vpop.f32.mrb[0].mxu0
      %5498 = vmatprep.mubr.bf16.mxu0 0
      %5499 = vmatmul.mubr.bf16.gmra.mrb[0].mxu0 %v5341
      %v5500 = vpop.f32.mrb[0].mxu0
      %v5501 = vadd.f32 0.0, %v5500
      %v5502 = vpop.f32.mrb[0].mxu0
      %v5503 = vpop.f32.mrb[0].mxu0
      %v5504 = vadd.f32 0.0, %v5503
      %v5505 = vpop.f32.mrb[0].mxu0
      %5506 = vdwg.mxu0
      %v5507 = vadd.f32 %v5037, %v5381
      %v5508 = vadd.f32 %v5038, %v5384
      %v5509 = vadd.f32 %v5039, %v5389
      %v5510 = vadd.f32 %v5040, %v5392
      %v5511 = vadd.f32 %v5041, %v5397
      %v5512 = vadd.f32 %v5042, %v5400
      %v5513 = vadd.f32 %v5043, %v5405
      %v5514 = vadd.f32 %v5044, %v5408
      %v5515 = vadd.f32 %v5045, %v5413
      %v5516 = vadd.f32 %v5046, %v5416
      %v5517 = vadd.f32 %v5047, %v5421
      %v5518 = vadd.f32 %v5048, %v5424
      %v5519 = vadd.f32 %v5049, %v5429
      %v5520 = vadd.f32 %v5050, %v5432
      %v5521 = vadd.f32 %v5051, %v5437
      %v5522 = vadd.f32 %v5052, %v5440
      %v5523 = vadd.f32 %v5053, %v5445
      %v5524 = vadd.f32 %v5054, %v5448
      %v5525 = vadd.f32 %v5055, %v5453
      %v5526 = vadd.f32 %v5056, %v5456
      %v5527 = vadd.f32 %v5057, %v5461
      %v5528 = vadd.f32 %v5058, %v5464
      %v5529 = vadd.f32 %v5059, %v5469
      %v5530 = vadd.f32 %v5060, %v5472
      %v5531 = vadd.f32 %v5061, %v5477
      %v5532 = vadd.f32 %v5062, %v5480
      %v5533 = vadd.f32 %v5063, %v5485
      %v5534 = vadd.f32 %v5064, %v5488
      %v5535 = vadd.f32 %v5065, %v5493
      %v5536 = vadd.f32 %v5066, %v5496
      %v5537 = vadd.f32 %v5067, %v5501
      %v5538 = vadd.f32 %v5068, %v5504
      %v5539 = vmax.f32 %v5507, 0.0
      %v5540 = vmax.f32 %v5508, 0.0
      %v5541 = vmax.f32 %v5509, 0.0
      %v5542 = vmax.f32 %v5510, 0.0
      %v5543 = vmax.f32 %v5511, 0.0
      %v5544 = vmax.f32 %v5512, 0.0
      %v5545 = vmax.f32 %v5513, 0.0
      %v5546 = vmax.f32 %v5514, 0.0
      %v5547 = vmax.f32 %v5515, 0.0
      %v5548 = vmax.f32 %v5516, 0.0
      %v5549 = vmax.f32 %v5517, 0.0
      %v5550 = vmax.f32 %v5518, 0.0
      %v5551 = vmax.f32 %v5519, 0.0
      %v5552 = vmax.f32 %v5520, 0.0
      %v5553 = vmax.f32 %v5521, 0.0
      %v5554 = vmax.f32 %v5522, 0.0
      %v5555 = vmax.f32 %v5523, 0.0
      %v5556 = vmax.f32 %v5524, 0.0
      %v5557 = vmax.f32 %v5525, 0.0
      %v5558 = vmax.f32 %v5526, 0.0
      %v5559 = vmax.f32 %v5527, 0.0
      %v5560 = vmax.f32 %v5528, 0.0
      %v5561 = vmax.f32 %v5529, 0.0
      %v5562 = vmax.f32 %v5530, 0.0
      %v5563 = vmax.f32 %v5531, 0.0
      %v5564 = vmax.f32 %v5532, 0.0
      %v5565 = vmax.f32 %v5533, 0.0
      %v5566 = vmax.f32 %v5534, 0.0
      %v5567 = vmax.f32 %v5535, 0.0
      %v5568 = vmax.f32 %v5536, 0.0
      %v5569 = vmax.f32 %v5537, 0.0
      %v5570 = vmax.f32 %v5538, 0.0
      %v5571 = vpack.c.bf16 %v5540, %v5539
      %v5572 = vpack.c.bf16 %v5542, %v5541
      %v5573 = vpack.c.bf16 %v5544, %v5543
      %v5574 = vpack.c.bf16 %v5546, %v5545
      %v5575 = vpack.c.bf16 %v5548, %v5547
      %v5576 = vpack.c.bf16 %v5550, %v5549
      %v5577 = vpack.c.bf16 %v5552, %v5551
      %v5578 = vpack.c.bf16 %v5554, %v5553
      %v5579 = vpack.c.bf16 %v5556, %v5555
      %v5580 = vpack.c.bf16 %v5558, %v5557
      %v5581 = vpack.c.bf16 %v5560, %v5559
      %v5582 = vpack.c.bf16 %v5562, %v5561
      %v5583 = vpack.c.bf16 %v5564, %v5563
      %v5584 = vpack.c.bf16 %v5566, %v5565
      %v5585 = vpack.c.bf16 %v5568, %v5567
      %v5586 = vpack.c.bf16 %v5570, %v5569
      %vm5587 = vcmask 60416
      %5588 = vst.msk [vmem:[#allocation3] sm:$0xf] %vm5587, 0
      %5589 = vst.msk [vmem:[#allocation3 + $0x4] sm:$0xf] %vm5587, 0
      %vm5590 = vcmask 57344
      %5591 = vst.msk [vmem:[#allocation3 + $0x8] sm:$0x1] %vm5590, 0
      %s5592 = scalar_lea.vmem [#allocation3], 204
      %5593 = vst.msk [vmem:[%s5592] sm:$0xf] %vm5587, 0
      %5594 = vst.msk [vmem:[%s5592 + $0x4] sm:$0xf] %vm5587, 0
      %5595 = vst.msk [vmem:[%s5592 + $0x8] sm:$0x1] %vm5590, 0
      %s5596 = scalar_lea.vmem [#allocation3], 12
      %vm5597 = vcmask 57344
      %vm5598 = vmand %vm5597, %vm365
      %v5599 = vld [vmem:[%s5596] sm:$0x1]
      %v5600 = vsel %vm5598, 0, %v5599
      %5601 = vst [vmem:[%s5596] sm:$0x1] %v5600
      %v5602 = vld [vmem:[%s5596 + $0xc] sm:$0x1]
      %v5603 = vsel %vm5598, 0, %v5602
      %5604 = vst [vmem:[%s5596 + $0xc] sm:$0x1] %v5603
      %v5605 = vld [vmem:[%s5596 + $0x18] sm:$0x1]
      %v5606 = vsel %vm5598, 0, %v5605
      %5607 = vst [vmem:[%s5596 + $0x18] sm:$0x1] %v5606
      %v5608 = vld [vmem:[%s5596 + $0x24] sm:$0x1]
      %v5609 = vsel %vm5598, 0, %v5608
      %5610 = vst [vmem:[%s5596 + $0x24] sm:$0x1] %v5609
      %v5611 = vld [vmem:[%s5596 + $0x30] sm:$0x1]
      %v5612 = vsel %vm5598, 0, %v5611
      %5613 = vst [vmem:[%s5596 + $0x30] sm:$0x1] %v5612
      %v5614 = vld [vmem:[%s5596 + $0x3c] sm:$0x1]
      %v5615 = vsel %vm5598, 0, %v5614
      %5616 = vst [vmem:[%s5596 + $0x3c] sm:$0x1] %v5615
      %v5617 = vld [vmem:[%s5596 + $0x48] sm:$0x1]
      %v5618 = vsel %vm5598, 0, %v5617
      %5619 = vst [vmem:[%s5596 + $0x48] sm:$0x1] %v5618
      %v5620 = vld [vmem:[%s5596 + $0x54] sm:$0x1]
      %v5621 = vsel %vm5598, 0, %v5620
      %5622 = vst [vmem:[%s5596 + $0x54] sm:$0x1] %v5621
      %v5623 = vld [vmem:[%s5596 + $0x60] sm:$0x1]
      %v5624 = vsel %vm5598, 0, %v5623
      %5625 = vst [vmem:[%s5596 + $0x60] sm:$0x1] %v5624
      %v5626 = vld [vmem:[%s5596 + $0x6c] sm:$0x1]
      %v5627 = vsel %vm5598, 0, %v5626
      %5628 = vst [vmem:[%s5596 + $0x6c] sm:$0x1] %v5627
      %v5629 = vld [vmem:[%s5596 + $0x78] sm:$0x1]
      %v5630 = vsel %vm5598, 0, %v5629
      %5631 = vst [vmem:[%s5596 + $0x78] sm:$0x1] %v5630
      %v5632 = vld [vmem:[%s5596 + $0x84] sm:$0x1]
      %v5633 = vsel %vm5598, 0, %v5632
      %5634 = vst [vmem:[%s5596 + $0x84] sm:$0x1] %v5633
      %v5635 = vld [vmem:[%s5596 + $0x90] sm:$0x1]
      %v5636 = vsel %vm5598, 0, %v5635
      %5637 = vst [vmem:[%s5596 + $0x90] sm:$0x1] %v5636
      %v5638 = vld [vmem:[%s5596 + $0x9c] sm:$0x1]
      %v5639 = vsel %vm5598, 0, %v5638
      %5640 = vst [vmem:[%s5596 + $0x9c] sm:$0x1] %v5639
      %v5641 = vld [vmem:[%s5596 + $0xa8] sm:$0x1]
      %v5642 = vsel %vm5598, 0, %v5641
      %5643 = vst [vmem:[%s5596 + $0xa8] sm:$0x1] %v5642
      %v5644 = vld [vmem:[%s5596 + $0xb4] sm:$0x1]
      %v5645 = vsel %vm5598, 0, %v5644
      %5646 = vst [vmem:[%s5596 + $0xb4] sm:$0x1] %v5645
      %vm5647 = vmand %vm5597, %vm415
      %v5648 = vld [vmem:[%s5596 + $0x8] sm:$0x1]
      %v5649 = vsel %vm5647, 0, %v5648
      %5650 = vst [vmem:[%s5596 + $0x8] sm:$0x1] %v5649
      %v5651 = vld [vmem:[%s5596 + $0x14] sm:$0x1]
      %v5652 = vsel %vm5647, 0, %v5651
      %5653 = vst [vmem:[%s5596 + $0x14] sm:$0x1] %v5652
      %v5654 = vld [vmem:[%s5596 + $0x20] sm:$0x1]
      %v5655 = vsel %vm5647, 0, %v5654
      %5656 = vst [vmem:[%s5596 + $0x20] sm:$0x1] %v5655
      %v5657 = vld [vmem:[%s5596 + $0x2c] sm:$0x1]
      %v5658 = vsel %vm5647, 0, %v5657
      %5659 = vst [vmem:[%s5596 + $0x2c] sm:$0x1] %v5658
      %v5660 = vld [vmem:[%s5596 + $0x38] sm:$0x1]
      %v5661 = vsel %vm5647, 0, %v5660
      %5662 = vst [vmem:[%s5596 + $0x38] sm:$0x1] %v5661
      %v5663 = vld [vmem:[%s5596 + $0x44] sm:$0x1]
      %v5664 = vsel %vm5647, 0, %v5663
      %5665 = vst [vmem:[%s5596 + $0x44] sm:$0x1] %v5664
      %v5666 = vld [vmem:[%s5596 + $0x50] sm:$0x1]
      %v5667 = vsel %vm5647, 0, %v5666
      %5668 = vst [vmem:[%s5596 + $0x50] sm:$0x1] %v5667
      %v5669 = vld [vmem:[%s5596 + $0x5c] sm:$0x1]
      %v5670 = vsel %vm5647, 0, %v5669
      %5671 = vst [vmem:[%s5596 + $0x5c] sm:$0x1] %v5670
      %v5672 = vld [vmem:[%s5596 + $0x68] sm:$0x1]
      %v5673 = vsel %vm5647, 0, %v5672
      %5674 = vst [vmem:[%s5596 + $0x68] sm:$0x1] %v5673
      %v5675 = vld [vmem:[%s5596 + $0x74] sm:$0x1]
      %v5676 = vsel %vm5647, 0, %v5675
      %5677 = vst [vmem:[%s5596 + $0x74] sm:$0x1] %v5676
      %v5678 = vld [vmem:[%s5596 + $0x80] sm:$0x1]
      %v5679 = vsel %vm5647, 0, %v5678
      %5680 = vst [vmem:[%s5596 + $0x80] sm:$0x1] %v5679
      %v5681 = vld [vmem:[%s5596 + $0x8c] sm:$0x1]
      %v5682 = vsel %vm5647, 0, %v5681
      %5683 = vst [vmem:[%s5596 + $0x8c] sm:$0x1] %v5682
      %v5684 = vld [vmem:[%s5596 + $0x98] sm:$0x1]
      %v5685 = vsel %vm5647, 0, %v5684
      %5686 = vst [vmem:[%s5596 + $0x98] sm:$0x1] %v5685
      %v5687 = vld [vmem:[%s5596 + $0xa4] sm:$0x1]
      %v5688 = vsel %vm5647, 0, %v5687
      %5689 = vst [vmem:[%s5596 + $0xa4] sm:$0x1] %v5688
      %v5690 = vld [vmem:[%s5596 + $0xb0] sm:$0x1]
      %v5691 = vsel %vm5647, 0, %v5690
      %5692 = vst [vmem:[%s5596 + $0xb0] sm:$0x1] %v5691
      %v5693 = vld [vmem:[%s5596 + $0xbc] sm:$0x1]
      %v5694 = vsel %vm5647, 0, %v5693
      %5695 = vst [vmem:[%s5596 + $0xbc] sm:$0x1] %v5694
      %v5712 = vunpack.c.l.b16 %v5571
      %v5713 = vunpack.c.h.b16 %v5571
      %v5714 = vunpack.c.l.b16 %v5572
      %v5715 = vunpack.c.h.b16 %v5572
      %v5716 = vunpack.c.l.b16 %v5573
      %v5717 = vunpack.c.h.b16 %v5573
      %v5718 = vunpack.c.l.b16 %v5574
      %v5719 = vunpack.c.h.b16 %v5574
      %v5720 = vunpack.c.l.b16 %v5575
      %v5721 = vunpack.c.h.b16 %v5575
      %v5722 = vunpack.c.l.b16 %v5576
      %v5723 = vunpack.c.h.b16 %v5576
      %v5724 = vunpack.c.l.b16 %v5577
      %v5725 = vunpack.c.h.b16 %v5577
      %v5726 = vunpack.c.l.b16 %v5578
      %v5727 = vunpack.c.h.b16 %v5578
      %v5728 = vunpack.c.l.b16 %v5579
      %v5729 = vunpack.c.h.b16 %v5579
      %v5730 = vunpack.c.l.b16 %v5580
      %v5731 = vunpack.c.h.b16 %v5580
      %v5732 = vunpack.c.l.b16 %v5581
      %v5733 = vunpack.c.h.b16 %v5581
      %v5734 = vunpack.c.l.b16 %v5582
      %v5735 = vunpack.c.h.b16 %v5582
      %v5736 = vunpack.c.l.b16 %v5583
      %v5737 = vunpack.c.h.b16 %v5583
      %v5738 = vunpack.c.l.b16 %v5584
      %v5739 = vunpack.c.h.b16 %v5584
      %v5740 = vunpack.c.l.b16 %v5585
      %v5741 = vunpack.c.h.b16 %v5585
      %v5742 = vunpack.c.l.b16 %v5586
      %v5743 = vunpack.c.h.b16 %v5586
      %v5744 = vpack.c.b16 %v5712, %v5712
      %v5745 = vpack.c.b16 %v5713, %v5713
      %v5746 = vpack.c.b16 %v5714, %v5714
      %v5747 = vpack.c.b16 %v5715, %v5715
      %v5748 = vpack.c.b16 %v5716, %v5716
      %v5749 = vpack.c.b16 %v5717, %v5717
      %v5750 = vpack.c.b16 %v5718, %v5718
      %v5751 = vpack.c.b16 %v5719, %v5719
      %v5752 = vpack.c.b16 %v5720, %v5720
      %v5753 = vpack.c.b16 %v5721, %v5721
      %v5754 = vpack.c.b16 %v5722, %v5722
      %v5755 = vpack.c.b16 %v5723, %v5723
      %v5756 = vpack.c.b16 %v5724, %v5724
      %v5757 = vpack.c.b16 %v5725, %v5725
      %v5758 = vpack.c.b16 %v5726, %v5726
      %v5759 = vpack.c.b16 %v5727, %v5727
      %v5760 = vpack.c.b16 %v5728, %v5728
      %v5761 = vpack.c.b16 %v5729, %v5729
      %v5762 = vpack.c.b16 %v5730, %v5730
      %v5763 = vpack.c.b16 %v5731, %v5731
      %v5764 = vpack.c.b16 %v5732, %v5732
      %v5765 = vpack.c.b16 %v5733, %v5733
      %v5766 = vpack.c.b16 %v5734, %v5734
      %v5767 = vpack.c.b16 %v5735, %v5735
      %v5768 = vpack.c.b16 %v5736, %v5736
      %v5769 = vpack.c.b16 %v5737, %v5737
      %v5770 = vpack.c.b16 %v5738, %v5738
      %v5771 = vpack.c.b16 %v5739, %v5739
      %v5772 = vpack.c.b16 %v5740, %v5740
      %v5773 = vpack.c.b16 %v5741, %v5741
      %v5774 = vpack.c.b16 %v5742, %v5742
      %v5775 = vpack.c.b16 %v5743, %v5743
      %v5777 = vshrl.u32 %v5744, 16
      %v5779 = vrot.slane %v5777, 7
      %v5780 = vshll.u32 %v5744, 16
      %v5782 = vor.u32 %v5779, %v5780
      %v5783 = vrot.slane %v5779, 4
      %v5785 = vshrl.u32 %v5745, 16
      %v5787 = vrot.slane %v5785, 7
      %v5788 = vshll.u32 %v5745, 16
      %v5790 = vor.u32 %v5787, %v5788
      %v5791 = vsel %vm546, %v5783, %v5790
      %v5792 = vrot.slane %v5787, 4
      %v5794 = vshrl.u32 %v5746, 16
      %v5796 = vrot.slane %v5794, 7
      %v5797 = vshll.u32 %v5746, 16
      %v5799 = vor.u32 %v5796, %v5797
      %v5800 = vrot.slane %v5796, 4
      %v5802 = vshrl.u32 %v5747, 16
      %v5804 = vrot.slane %v5802, 7
      %v5805 = vshll.u32 %v5747, 16
      %v5807 = vor.u32 %v5804, %v5805
      %v5808 = vsel %vm546, %v5800, %v5807
      %v5809 = vrot.slane %v5804, 4
      %v5811 = vshrl.u32 %v5748, 16
      %v5813 = vrot.slane %v5811, 7
      %v5814 = vshll.u32 %v5748, 16
      %v5816 = vor.u32 %v5813, %v5814
      %v5817 = vrot.slane %v5813, 4
      %v5819 = vshrl.u32 %v5749, 16
      %v5821 = vrot.slane %v5819, 7
      %v5822 = vshll.u32 %v5749, 16
      %v5824 = vor.u32 %v5821, %v5822
      %v5825 = vsel %vm546, %v5817, %v5824
      %v5826 = vrot.slane %v5821, 4
      %v5828 = vshrl.u32 %v5750, 16
      %v5830 = vrot.slane %v5828, 7
      %v5831 = vshll.u32 %v5750, 16
      %v5833 = vor.u32 %v5830, %v5831
      %v5834 = vrot.slane %v5830, 4
      %v5836 = vshrl.u32 %v5751, 16
      %v5838 = vrot.slane %v5836, 7
      %v5839 = vshll.u32 %v5751, 16
      %v5841 = vor.u32 %v5838, %v5839
      %v5842 = vsel %vm546, %v5834, %v5841
      %v5843 = vrot.slane %v5838, 4
      %v5845 = vshrl.u32 %v5752, 16
      %v5847 = vrot.slane %v5845, 7
      %v5848 = vshll.u32 %v5752, 16
      %v5850 = vor.u32 %v5847, %v5848
      %v5851 = vrot.slane %v5847, 4
      %v5853 = vshrl.u32 %v5753, 16
      %v5855 = vrot.slane %v5853, 7
      %v5856 = vshll.u32 %v5753, 16
      %v5858 = vor.u32 %v5855, %v5856
      %v5859 = vsel %vm546, %v5851, %v5858
      %v5860 = vrot.slane %v5855, 4
      %v5862 = vshrl.u32 %v5754, 16
      %v5864 = vrot.slane %v5862, 7
      %v5865 = vshll.u32 %v5754, 16
      %v5867 = vor.u32 %v5864, %v5865
      %v5868 = vrot.slane %v5864, 4
      %v5870 = vshrl.u32 %v5755, 16
      %v5872 = vrot.slane %v5870, 7
      %v5873 = vshll.u32 %v5755, 16
      %v5875 = vor.u32 %v5872, %v5873
      %v5876 = vsel %vm546, %v5868, %v5875
      %v5877 = vrot.slane %v5872, 4
      %v5879 = vshrl.u32 %v5756, 16
      %v5881 = vrot.slane %v5879, 7
      %v5882 = vshll.u32 %v5756, 16
      %v5884 = vor.u32 %v5881, %v5882
      %v5885 = vrot.slane %v5881, 4
      %v5887 = vshrl.u32 %v5757, 16
      %v5889 = vrot.slane %v5887, 7
      %v5890 = vshll.u32 %v5757, 16
      %v5892 = vor.u32 %v5889, %v5890
      %v5893 = vsel %vm546, %v5885, %v5892
      %v5894 = vrot.slane %v5889, 4
      %v5896 = vshrl.u32 %v5758, 16
      %v5898 = vrot.slane %v5896, 7
      %v5899 = vshll.u32 %v5758, 16
      %v5901 = vor.u32 %v5898, %v5899
      %v5902 = vrot.slane %v5898, 4
      %v5904 = vshrl.u32 %v5759, 16
      %v5906 = vrot.slane %v5904, 7
      %v5907 = vshll.u32 %v5759, 16
      %v5909 = vor.u32 %v5906, %v5907
      %v5910 = vsel %vm546, %v5902, %v5909
      %v5911 = vrot.slane %v5906, 4
      %v5913 = vshrl.u32 %v5760, 16
      %v5915 = vrot.slane %v5913, 7
      %v5916 = vshll.u32 %v5760, 16
      %v5918 = vor.u32 %v5915, %v5916
      %v5919 = vrot.slane %v5915, 4
      %v5921 = vshrl.u32 %v5761, 16
      %v5923 = vrot.slane %v5921, 7
      %v5924 = vshll.u32 %v5761, 16
      %v5926 = vor.u32 %v5923, %v5924
      %v5927 = vsel %vm546, %v5919, %v5926
      %v5928 = vrot.slane %v5923, 4
      %v5930 = vshrl.u32 %v5762, 16
      %v5932 = vrot.slane %v5930, 7
      %v5933 = vshll.u32 %v5762, 16
      %v5935 = vor.u32 %v5932, %v5933
      %v5936 = vrot.slane %v5932, 4
      %v5938 = vshrl.u32 %v5763, 16
      %v5940 = vrot.slane %v5938, 7
      %v5941 = vshll.u32 %v5763, 16
      %v5943 = vor.u32 %v5940, %v5941
      %v5944 = vsel %vm546, %v5936, %v5943
      %v5945 = vrot.slane %v5940, 4
      %v5947 = vshrl.u32 %v5764, 16
      %v5949 = vrot.slane %v5947, 7
      %v5950 = vshll.u32 %v5764, 16
      %v5952 = vor.u32 %v5949, %v5950
      %v5953 = vrot.slane %v5949, 4
      %v5955 = vshrl.u32 %v5765, 16
      %v5957 = vrot.slane %v5955, 7
      %v5958 = vshll.u32 %v5765, 16
      %v5960 = vor.u32 %v5957, %v5958
      %v5961 = vsel %vm546, %v5953, %v5960
      %v5962 = vrot.slane %v5957, 4
      %v5964 = vshrl.u32 %v5766, 16
      %v5966 = vrot.slane %v5964, 7
      %v5967 = vshll.u32 %v5766, 16
      %v5969 = vor.u32 %v5966, %v5967
      %v5970 = vrot.slane %v5966, 4
      %v5972 = vshrl.u32 %v5767, 16
      %v5974 = vrot.slane %v5972, 7
      %v5975 = vshll.u32 %v5767, 16
      %v5977 = vor.u32 %v5974, %v5975
      %v5978 = vsel %vm546, %v5970, %v5977
      %v5979 = vrot.slane %v5974, 4
      %v5981 = vshrl.u32 %v5768, 16
      %v5983 = vrot.slane %v5981, 7
      %v5984 = vshll.u32 %v5768, 16
      %v5986 = vor.u32 %v5983, %v5984
      %v5987 = vrot.slane %v5983, 4
      %v5989 = vshrl.u32 %v5769, 16
      %v5991 = vrot.slane %v5989, 7
      %v5992 = vshll.u32 %v5769, 16
      %v5994 = vor.u32 %v5991, %v5992
      %v5995 = vsel %vm546, %v5987, %v5994
      %v5996 = vrot.slane %v5991, 4
      %v5998 = vshrl.u32 %v5770, 16
      %v6000 = vrot.slane %v5998, 7
      %v6001 = vshll.u32 %v5770, 16
      %v6003 = vor.u32 %v6000, %v6001
      %v6004 = vrot.slane %v6000, 4
      %v6006 = vshrl.u32 %v5771, 16
      %v6008 = vrot.slane %v6006, 7
      %v6009 = vshll.u32 %v5771, 16
      %v6011 = vor.u32 %v6008, %v6009
      %v6012 = vsel %vm546, %v6004, %v6011
      %v6013 = vrot.slane %v6008, 4
      %v6015 = vshrl.u32 %v5772, 16
      %v6017 = vrot.slane %v6015, 7
      %v6018 = vshll.u32 %v5772, 16
      %v6020 = vor.u32 %v6017, %v6018
      %v6021 = vrot.slane %v6017, 4
      %v6023 = vshrl.u32 %v5773, 16
      %v6025 = vrot.slane %v6023, 7
      %v6026 = vshll.u32 %v5773, 16
      %v6028 = vor.u32 %v6025, %v6026
      %v6029 = vsel %vm546, %v6021, %v6028
      %v6030 = vrot.slane %v6025, 4
      %v6032 = vshrl.u32 %v5774, 16
      %v6034 = vrot.slane %v6032, 7
      %v6035 = vshll.u32 %v5774, 16
      %v6037 = vor.u32 %v6034, %v6035
      %v6038 = vrot.slane %v6034, 4
      %v6040 = vshrl.u32 %v5775, 16
      %v6042 = vrot.slane %v6040, 7
      %v6043 = vshll.u32 %v5775, 16
      %v6045 = vor.u32 %v6042, %v6043
      %v6046 = vsel %vm546, %v6038, %v6045
      %v6047 = vrot.slane %v6042, 4
      %vm6096 = vcmask 60416
      %vm6097 = vmand %vm6096, %vm415
      %v6098 = vld [vmem:[%s5596] sm:$0xf]
      %v6099 = vsel %vm6097, %v5782, %v6098
      %6100 = vst [vmem:[%s5596] sm:$0xf] %v6099
      %6101 = vst.msk [vmem:[%s5596 + $0x4] sm:$0xf] %vm5587, %v5791
      %v6102 = vld [vmem:[%s5596 + $0x8] sm:$0x1]
      %v6103 = vsel %vm5598, %v5792, %v6102
      %6104 = vst [vmem:[%s5596 + $0x8] sm:$0x1] %v6103
      %v6105 = vld [vmem:[%s5596 + $0xc] sm:$0xf]
      %v6106 = vsel %vm6097, %v5799, %v6105
      %6107 = vst [vmem:[%s5596 + $0xc] sm:$0xf] %v6106
      %6108 = vst.msk [vmem:[%s5596 + $0x10] sm:$0xf] %vm5587, %v5808
      %v6109 = vld [vmem:[%s5596 + $0x14] sm:$0x1]
      %v6110 = vsel %vm5598, %v5809, %v6109
      %6111 = vst [vmem:[%s5596 + $0x14] sm:$0x1] %v6110
      %v6112 = vld [vmem:[%s5596 + $0x18] sm:$0xf]
      %v6113 = vsel %vm6097, %v5816, %v6112
      %6114 = vst [vmem:[%s5596 + $0x18] sm:$0xf] %v6113
      %6115 = vst.msk [vmem:[%s5596 + $0x1c] sm:$0xf] %vm5587, %v5825
      %v6116 = vld [vmem:[%s5596 + $0x20] sm:$0x1]
      %v6117 = vsel %vm5598, %v5826, %v6116
      %6118 = vst [vmem:[%s5596 + $0x20] sm:$0x1] %v6117
      %v6119 = vld [vmem:[%s5596 + $0x24] sm:$0xf]
      %v6120 = vsel %vm6097, %v5833, %v6119
      %6121 = vst [vmem:[%s5596 + $0x24] sm:$0xf] %v6120
      %6122 = vst.msk [vmem:[%s5596 + $0x28] sm:$0xf] %vm5587, %v5842
      %v6123 = vld [vmem:[%s5596 + $0x2c] sm:$0x1]
      %v6124 = vsel %vm5598, %v5843, %v6123
      %6125 = vst [vmem:[%s5596 + $0x2c] sm:$0x1] %v6124
      %v6126 = vld [vmem:[%s5596 + $0x30] sm:$0xf]
      %v6127 = vsel %vm6097, %v5850, %v6126
      %6128 = vst [vmem:[%s5596 + $0x30] sm:$0xf] %v6127
      %6129 = vst.msk [vmem:[%s5596 + $0x34] sm:$0xf] %vm5587, %v5859
      %v6130 = vld [vmem:[%s5596 + $0x38] sm:$0x1]
      %v6131 = vsel %vm5598, %v5860, %v6130
      %6132 = vst [vmem:[%s5596 + $0x38] sm:$0x1] %v6131
      %v6133 = vld [vmem:[%s5596 + $0x3c] sm:$0xf]
      %v6134 = vsel %vm6097, %v5867, %v6133
      %6135 = vst [vmem:[%s5596 + $0x3c] sm:$0xf] %v6134
      %6136 = vst.msk [vmem:[%s5596 + $0x40] sm:$0xf] %vm5587, %v5876
      %v6137 = vld [vmem:[%s5596 + $0x44] sm:$0x1]
      %v6138 = vsel %vm5598, %v5877, %v6137
      %6139 = vst [vmem:[%s5596 + $0x44] sm:$0x1] %v6138
      %v6140 = vld [vmem:[%s5596 + $0x48] sm:$0xf]
      %v6141 = vsel %vm6097, %v5884, %v6140
      %6142 = vst [vmem:[%s5596 + $0x48] sm:$0xf] %v6141
      %6143 = vst.msk [vmem:[%s5596 + $0x4c] sm:$0xf] %vm5587, %v5893
      %v6144 = vld [vmem:[%s5596 + $0x50] sm:$0x1]
      %v6145 = vsel %vm5598, %v5894, %v6144
      %6146 = vst [vmem:[%s5596 + $0x50] sm:$0x1] %v6145
      %v6147 = vld [vmem:[%s5596 + $0x54] sm:$0xf]
      %v6148 = vsel %vm6097, %v5901, %v6147
      %6149 = vst [vmem:[%s5596 + $0x54] sm:$0xf] %v6148
      %6150 = vst.msk [vmem:[%s5596 + $0x58] sm:$0xf] %vm5587, %v5910
      %v6151 = vld [vmem:[%s5596 + $0x5c] sm:$0x1]
      %v6152 = vsel %vm5598, %v5911, %v6151
      %6153 = vst [vmem:[%s5596 + $0x5c] sm:$0x1] %v6152
      %v6154 = vld [vmem:[%s5596 + $0x60] sm:$0xf]
      %v6155 = vsel %vm6097, %v5918, %v6154
      %6156 = vst [vmem:[%s5596 + $0x60] sm:$0xf] %v6155
      %6157 = vst.msk [vmem:[%s5596 + $0x64] sm:$0xf] %vm5587, %v5927
      %v6158 = vld [vmem:[%s5596 + $0x68] sm:$0x1]
      %v6159 = vsel %vm5598, %v5928, %v6158
      %6160 = vst [vmem:[%s5596 + $0x68] sm:$0x1] %v6159
      %v6161 = vld [vmem:[%s5596 + $0x6c] sm:$0xf]
      %v6162 = vsel %vm6097, %v5935, %v6161
      %6163 = vst [vmem:[%s5596 + $0x6c] sm:$0xf] %v6162
      %6164 = vst.msk [vmem:[%s5596 + $0x70] sm:$0xf] %vm5587, %v5944
      %v6165 = vld [vmem:[%s5596 + $0x74] sm:$0x1]
      %v6166 = vsel %vm5598, %v5945, %v6165
      %6167 = vst [vmem:[%s5596 + $0x74] sm:$0x1] %v6166
      %v6168 = vld [vmem:[%s5596 + $0x78] sm:$0xf]
      %v6169 = vsel %vm6097, %v5952, %v6168
      %6170 = vst [vmem:[%s5596 + $0x78] sm:$0xf] %v6169
      %6171 = vst.msk [vmem:[%s5596 + $0x7c] sm:$0xf] %vm5587, %v5961
      %v6172 = vld [vmem:[%s5596 + $0x80] sm:$0x1]
      %v6173 = vsel %vm5598, %v5962, %v6172
      %6174 = vst [vmem:[%s5596 + $0x80] sm:$0x1] %v6173
      %v6175 = vld [vmem:[%s5596 + $0x84] sm:$0xf]
      %v6176 = vsel %vm6097, %v5969, %v6175
      %6177 = vst [vmem:[%s5596 + $0x84] sm:$0xf] %v6176
      %6178 = vst.msk [vmem:[%s5596 + $0x88] sm:$0xf] %vm5587, %v5978
      %v6179 = vld [vmem:[%s5596 + $0x8c] sm:$0x1]
      %v6180 = vsel %vm5598, %v5979, %v6179
      %6181 = vst [vmem:[%s5596 + $0x8c] sm:$0x1] %v6180
      %v6182 = vld [vmem:[%s5596 + $0x90] sm:$0xf]
      %v6183 = vsel %vm6097, %v5986, %v6182
      %6184 = vst [vmem:[%s5596 + $0x90] sm:$0xf] %v6183
      %6185 = vst.msk [vmem:[%s5596 + $0x94] sm:$0xf] %vm5587, %v5995
      %v6186 = vld [vmem:[%s5596 + $0x98] sm:$0x1]
      %v6187 = vsel %vm5598, %v5996, %v6186
      %6188 = vst [vmem:[%s5596 + $0x98] sm:$0x1] %v6187
      %v6189 = vld [vmem:[%s5596 + $0x9c] sm:$0xf]
      %v6190 = vsel %vm6097, %v6003, %v6189
      %6191 = vst [vmem:[%s5596 + $0x9c] sm:$0xf] %v6190
      %6192 = vst.msk [vmem:[%s5596 + $0xa0] sm:$0xf] %vm5587, %v6012
      %v6193 = vld [vmem:[%s5596 + $0xa4] sm:$0x1]
      %v6194 = vsel %vm5598, %v6013, %v6193
      %6195 = vst [vmem:[%s5596 + $0xa4] sm:$0x1] %v6194
      %v6196 = vld [vmem:[%s5596 + $0xa8] sm:$0xf]
      %v6197 = vsel %vm6097, %v6020, %v6196
      %6198 = vst [vmem:[%s5596 + $0xa8] sm:$0xf] %v6197
      %6199 = vst.msk [vmem:[%s5596 + $0xac] sm:$0xf] %vm5587, %v6029
      %v6200 = vld [vmem:[%s5596 + $0xb0] sm:$0x1]
      %v6201 = vsel %vm5598, %v6030, %v6200
      %6202 = vst [vmem:[%s5596 + $0xb0] sm:$0x1] %v6201
      %v6203 = vld [vmem:[%s5596 + $0xb4] sm:$0xf]
      %v6204 = vsel %vm6097, %v6037, %v6203
      %6205 = vst [vmem:[%s5596 + $0xb4] sm:$0xf] %v6204
      %6206 = vst.msk [vmem:[%s5596 + $0xb8] sm:$0xf] %vm5587, %v6046
      %v6207 = vld [vmem:[%s5596 + $0xbc] sm:$0x1]
      %v6208 = vsel %vm5598, %v6047, %v6207
      %6209 = vst [vmem:[%s5596 + $0xbc] sm:$0x1] %v6208
      %v6210 = vld [vmem:[#allocation3] sm:$0xf]
      %v6211 = vld [vmem:[#allocation3 + $0x4] sm:$0xf]
      %v6212 = vld [vmem:[#allocation3 + $0xc] sm:$0xf]
      %v6213 = vld [vmem:[#allocation3 + $0x10] sm:$0xf]
      %v6214 = vld [vmem:[#allocation3 + $0x18] sm:$0xf]
      %v6215 = vld [vmem:[#allocation3 + $0x1c] sm:$0xf]
      %v6216 = vld [vmem:[#allocation3 + $0x24] sm:$0xf]
      %v6217 = vld [vmem:[#allocation3 + $0x28] sm:$0xf]
      %v6218 = vld [vmem:[#allocation3 + $0x30] sm:$0xf]
      %v6219 = vld [vmem:[#allocation3 + $0x34] sm:$0xf]
      %v6220 = vld [vmem:[#allocation3 + $0x3c] sm:$0xf]
      %v6221 = vld [vmem:[#allocation3 + $0x40] sm:$0xf]
      %v6222 = vld [vmem:[#allocation3 + $0x48] sm:$0xf]
      %v6223 = vld [vmem:[#allocation3 + $0x4c] sm:$0xf]
      %v6224 = vld [vmem:[#allocation3 + $0x54] sm:$0xf]
      %v6225 = vld [vmem:[#allocation3 + $0x58] sm:$0xf]
      %v6226 = vld [vmem:[#allocation3 + $0x60] sm:$0xf]
      %v6227 = vld [vmem:[#allocation3 + $0x64] sm:$0xf]
      %v6228 = vld [vmem:[#allocation3 + $0x6c] sm:$0xf]
      %v6229 = vld [vmem:[#allocation3 + $0x70] sm:$0xf]
      %v6230 = vld [vmem:[#allocation3 + $0x78] sm:$0xf]
      %v6231 = vld [vmem:[#allocation3 + $0x7c] sm:$0xf]
      %v6232 = vld [vmem:[#allocation3 + $0x84] sm:$0xf]
      %v6233 = vld [vmem:[#allocation3 + $0x88] sm:$0xf]
      %v6234 = vld [vmem:[#allocation3 + $0x90] sm:$0xf]
      %v6235 = vld [vmem:[#allocation3 + $0x94] sm:$0xf]
      %v6236 = vld [vmem:[#allocation3 + $0x9c] sm:$0xf]
      %v6237 = vld [vmem:[#allocation3 + $0xa0] sm:$0xf]
      %v6238 = vld [vmem:[#allocation3 + $0xa8] sm:$0xf]
      %v6239 = vld [vmem:[#allocation3 + $0xac] sm:$0xf]
      %v6240 = vld [vmem:[#allocation3 + $0xb4] sm:$0xf]
      %v6241 = vld [vmem:[#allocation3 + $0xb8] sm:$0xf]
      %v6242 = vld [vmem:[%s2] sm:$0xf]
      %v6243 = vld [vmem:[#allocation3 + $0x8] sm:$0x1]
      %v6244 = vld [vmem:[#allocation3 + $0x14] sm:$0x1]
      %v6245 = vld [vmem:[#allocation3 + $0x20] sm:$0x1]
      %v6246 = vld [vmem:[#allocation3 + $0x2c] sm:$0x1]
      %v6247 = vld [vmem:[#allocation3 + $0x38] sm:$0x1]
      %v6248 = vld [vmem:[#allocation3 + $0x44] sm:$0x1]
      %v6249 = vld [vmem:[#allocation3 + $0x50] sm:$0x1]
      %v6250 = vld [vmem:[#allocation3 + $0x5c] sm:$0x1]
      %v6251 = vld [vmem:[#allocation3 + $0x68] sm:$0x1]
      %v6252 = vld [vmem:[#allocation3 + $0x74] sm:$0x1]
      %v6253 = vld [vmem:[#allocation3 + $0x80] sm:$0x1]
      %v6254 = vld [vmem:[#allocation3 + $0x8c] sm:$0x1]
      %v6255 = vld [vmem:[#allocation3 + $0x98] sm:$0x1]
      %v6256 = vld [vmem:[#allocation3 + $0xa4] sm:$0x1]
      %v6257 = vld [vmem:[#allocation3 + $0xb0] sm:$0x1]
      %v6258 = vld [vmem:[#allocation3 + $0xbc] sm:$0x1]
      %v6260 = vshrl.u32 %v6210, 16
      %v6262 = vrot.slane %v6260, 4
      %v6263 = vshll.u32 %v6210, 16
      %v6265 = vrot.slane %v6263, 5
      %v6266 = vor.u32 %v6262, %v6265
      %v6267 = vrot.slane %v6266, 4
      %v6269 = vshll.u32 %v6211, 16
      %v6271 = vrot.slane %v6269, 5
      %v6272 = vsel %vm1032, %v6267, %v6271
      %v6273 = vshrl.u32 %v6211, 16
      %v6275 = vrot.slane %v6273, 4
      %v6276 = vor.u32 %v6275, %v6271
      %v6277 = vrot.slane %v6276, 4
      %v6279 = vshll.u32 %v6243, 16
      %v6281 = vrot.slane %v6279, 5
      %v6282 = vsel %vm1032, %v6277, %v6281
      %v6284 = vshrl.u32 %v6212, 16
      %v6286 = vrot.slane %v6284, 4
      %v6287 = vshll.u32 %v6212, 16
      %v6289 = vrot.slane %v6287, 5
      %v6290 = vor.u32 %v6286, %v6289
      %v6291 = vrot.slane %v6290, 4
      %v6293 = vshll.u32 %v6213, 16
      %v6295 = vrot.slane %v6293, 5
      %v6296 = vsel %vm1032, %v6291, %v6295
      %v6297 = vshrl.u32 %v6213, 16
      %v6299 = vrot.slane %v6297, 4
      %v6300 = vor.u32 %v6299, %v6295
      %v6301 = vrot.slane %v6300, 4
      %v6303 = vshll.u32 %v6244, 16
      %v6305 = vrot.slane %v6303, 5
      %v6306 = vsel %vm1032, %v6301, %v6305
      %v6308 = vshrl.u32 %v6214, 16
      %v6310 = vrot.slane %v6308, 4
      %v6311 = vshll.u32 %v6214, 16
      %v6313 = vrot.slane %v6311, 5
      %v6314 = vor.u32 %v6310, %v6313
      %v6315 = vrot.slane %v6314, 4
      %v6317 = vshll.u32 %v6215, 16
      %v6319 = vrot.slane %v6317, 5
      %v6320 = vsel %vm1032, %v6315, %v6319
      %v6321 = vshrl.u32 %v6215, 16
      %v6323 = vrot.slane %v6321, 4
      %v6324 = vor.u32 %v6323, %v6319
      %v6325 = vrot.slane %v6324, 4
      %v6327 = vshll.u32 %v6245, 16
      %v6329 = vrot.slane %v6327, 5
      %v6330 = vsel %vm1032, %v6325, %v6329
      %v6332 = vshrl.u32 %v6216, 16
      %v6334 = vrot.slane %v6332, 4
      %v6335 = vshll.u32 %v6216, 16
      %v6337 = vrot.slane %v6335, 5
      %v6338 = vor.u32 %v6334, %v6337
      %v6339 = vrot.slane %v6338, 4
      %v6341 = vshll.u32 %v6217, 16
      %v6343 = vrot.slane %v6341, 5
      %v6344 = vsel %vm1032, %v6339, %v6343
      %v6345 = vshrl.u32 %v6217, 16
      %v6347 = vrot.slane %v6345, 4
      %v6348 = vor.u32 %v6347, %v6343
      %v6349 = vrot.slane %v6348, 4
      %v6351 = vshll.u32 %v6246, 16
      %v6353 = vrot.slane %v6351, 5
      %v6354 = vsel %vm1032, %v6349, %v6353
      %v6356 = vshrl.u32 %v6218, 16
      %v6358 = vrot.slane %v6356, 4
      %v6359 = vshll.u32 %v6218, 16
      %v6361 = vrot.slane %v6359, 5
      %v6362 = vor.u32 %v6358, %v6361
      %v6363 = vrot.slane %v6362, 4
      %v6365 = vshll.u32 %v6219, 16
      %v6367 = vrot.slane %v6365, 5
      %v6368 = vsel %vm1032, %v6363, %v6367
      %v6369 = vshrl.u32 %v6219, 16
      %v6371 = vrot.slane %v6369, 4
      %v6372 = vor.u32 %v6371, %v6367
      %v6373 = vrot.slane %v6372, 4
      %v6375 = vshll.u32 %v6247, 16
      %v6377 = vrot.slane %v6375, 5
      %v6378 = vsel %vm1032, %v6373, %v6377
      %v6380 = vshrl.u32 %v6220, 16
      %v6382 = vrot.slane %v6380, 4
      %v6383 = vshll.u32 %v6220, 16
      %v6385 = vrot.slane %v6383, 5
      %v6386 = vor.u32 %v6382, %v6385
      %v6387 = vrot.slane %v6386, 4
      %v6389 = vshll.u32 %v6221, 16
      %v6391 = vrot.slane %v6389, 5
      %v6392 = vsel %vm1032, %v6387, %v6391
      %v6393 = vshrl.u32 %v6221, 16
      %v6395 = vrot.slane %v6393, 4
      %v6396 = vor.u32 %v6395, %v6391
      %v6397 = vrot.slane %v6396, 4
      %v6399 = vshll.u32 %v6248, 16
      %v6401 = vrot.slane %v6399, 5
      %v6402 = vsel %vm1032, %v6397, %v6401
      %v6404 = vshrl.u32 %v6222, 16
      %v6406 = vrot.slane %v6404, 4
      %v6407 = vshll.u32 %v6222, 16
      %v6409 = vrot.slane %v6407, 5
      %v6410 = vor.u32 %v6406, %v6409
      %v6411 = vrot.slane %v6410, 4
      %v6413 = vshll.u32 %v6223, 16
      %v6415 = vrot.slane %v6413, 5
      %v6416 = vsel %vm1032, %v6411, %v6415
      %v6417 = vshrl.u32 %v6223, 16
      %v6419 = vrot.slane %v6417, 4
      %v6420 = vor.u32 %v6419, %v6415
      %v6421 = vrot.slane %v6420, 4
      %v6423 = vshll.u32 %v6249, 16
      %v6425 = vrot.slane %v6423, 5
      %v6426 = vsel %vm1032, %v6421, %v6425
      %v6428 = vshrl.u32 %v6224, 16
      %v6430 = vrot.slane %v6428, 4
      %v6431 = vshll.u32 %v6224, 16
      %v6433 = vrot.slane %v6431, 5
      %v6434 = vor.u32 %v6430, %v6433
      %v6435 = vrot.slane %v6434, 4
      %v6437 = vshll.u32 %v6225, 16
      %v6439 = vrot.slane %v6437, 5
      %v6440 = vsel %vm1032, %v6435, %v6439
      %v6441 = vshrl.u32 %v6225, 16
      %v6443 = vrot.slane %v6441, 4
      %v6444 = vor.u32 %v6443, %v6439
      %v6445 = vrot.slane %v6444, 4
      %v6447 = vshll.u32 %v6250, 16
      %v6449 = vrot.slane %v6447, 5
      %v6450 = vsel %vm1032, %v6445, %v6449
      %v6452 = vshrl.u32 %v6226, 16
      %v6454 = vrot.slane %v6452, 4
      %v6455 = vshll.u32 %v6226, 16
      %v6457 = vrot.slane %v6455, 5
      %v6458 = vor.u32 %v6454, %v6457
      %v6459 = vrot.slane %v6458, 4
      %v6461 = vshll.u32 %v6227, 16
      %v6463 = vrot.slane %v6461, 5
      %v6464 = vsel %vm1032, %v6459, %v6463
      %v6465 = vshrl.u32 %v6227, 16
      %v6467 = vrot.slane %v6465, 4
      %v6468 = vor.u32 %v6467, %v6463
      %v6469 = vrot.slane %v6468, 4
      %v6471 = vshll.u32 %v6251, 16
      %v6473 = vrot.slane %v6471, 5
      %v6474 = vsel %vm1032, %v6469, %v6473
      %v6476 = vshrl.u32 %v6228, 16
      %v6478 = vrot.slane %v6476, 4
      %v6479 = vshll.u32 %v6228, 16
      %v6481 = vrot.slane %v6479, 5
      %v6482 = vor.u32 %v6478, %v6481
      %v6483 = vrot.slane %v6482, 4
      %v6485 = vshll.u32 %v6229, 16
      %v6487 = vrot.slane %v6485, 5
      %v6488 = vsel %vm1032, %v6483, %v6487
      %v6489 = vshrl.u32 %v6229, 16
      %v6491 = vrot.slane %v6489, 4
      %v6492 = vor.u32 %v6491, %v6487
      %v6493 = vrot.slane %v6492, 4
      %v6495 = vshll.u32 %v6252, 16
      %v6497 = vrot.slane %v6495, 5
      %v6498 = vsel %vm1032, %v6493, %v6497
      %v6500 = vshrl.u32 %v6230, 16
      %v6502 = vrot.slane %v6500, 4
      %v6503 = vshll.u32 %v6230, 16
      %v6505 = vrot.slane %v6503, 5
      %v6506 = vor.u32 %v6502, %v6505
      %v6507 = vrot.slane %v6506, 4
      %v6509 = vshll.u32 %v6231, 16
      %v6511 = vrot.slane %v6509, 5
      %v6512 = vsel %vm1032, %v6507, %v6511
      %v6513 = vshrl.u32 %v6231, 16
      %v6515 = vrot.slane %v6513, 4
      %v6516 = vor.u32 %v6515, %v6511
      %v6517 = vrot.slane %v6516, 4
      %v6519 = vshll.u32 %v6253, 16
      %v6521 = vrot.slane %v6519, 5
      %v6522 = vsel %vm1032, %v6517, %v6521
      %v6524 = vshrl.u32 %v6232, 16
      %v6526 = vrot.slane %v6524, 4
      %v6527 = vshll.u32 %v6232, 16
      %v6529 = vrot.slane %v6527, 5
      %v6530 = vor.u32 %v6526, %v6529
      %v6531 = vrot.slane %v6530, 4
      %v6533 = vshll.u32 %v6233, 16
      %v6535 = vrot.slane %v6533, 5
      %v6536 = vsel %vm1032, %v6531, %v6535
      %v6537 = vshrl.u32 %v6233, 16
      %v6539 = vrot.slane %v6537, 4
      %v6540 = vor.u32 %v6539, %v6535
      %v6541 = vrot.slane %v6540, 4
      %v6543 = vshll.u32 %v6254, 16
      %v6545 = vrot.slane %v6543, 5
      %v6546 = vsel %vm1032, %v6541, %v6545
      %v6548 = vshrl.u32 %v6234, 16
      %v6550 = vrot.slane %v6548, 4
      %v6551 = vshll.u32 %v6234, 16
      %v6553 = vrot.slane %v6551, 5
      %v6554 = vor.u32 %v6550, %v6553
      %v6555 = vrot.slane %v6554, 4
      %v6557 = vshll.u32 %v6235, 16
      %v6559 = vrot.slane %v6557, 5
      %v6560 = vsel %vm1032, %v6555, %v6559
      %v6561 = vshrl.u32 %v6235, 16
      %v6563 = vrot.slane %v6561, 4
      %v6564 = vor.u32 %v6563, %v6559
      %v6565 = vrot.slane %v6564, 4
      %v6567 = vshll.u32 %v6255, 16
      %v6569 = vrot.slane %v6567, 5
      %v6570 = vsel %vm1032, %v6565, %v6569
      %v6572 = vshrl.u32 %v6236, 16
      %v6574 = vrot.slane %v6572, 4
      %v6575 = vshll.u32 %v6236, 16
      %v6577 = vrot.slane %v6575, 5
      %v6578 = vor.u32 %v6574, %v6577
      %v6579 = vrot.slane %v6578, 4
      %v6581 = vshll.u32 %v6237, 16
      %v6583 = vrot.slane %v6581, 5
      %v6584 = vsel %vm1032, %v6579, %v6583
      %v6585 = vshrl.u32 %v6237, 16
      %v6587 = vrot.slane %v6585, 4
      %v6588 = vor.u32 %v6587, %v6583
      %v6589 = vrot.slane %v6588, 4
      %v6591 = vshll.u32 %v6256, 16
      %v6593 = vrot.slane %v6591, 5
      %v6594 = vsel %vm1032, %v6589, %v6593
      %v6596 = vshrl.u32 %v6238, 16
      %v6598 = vrot.slane %v6596, 4
      %v6599 = vshll.u32 %v6238, 16
      %v6601 = vrot.slane %v6599, 5
      %v6602 = vor.u32 %v6598, %v6601
      %v6603 = vrot.slane %v6602, 4
      %v6605 = vshll.u32 %v6239, 16
      %v6607 = vrot.slane %v6605, 5
      %v6608 = vsel %vm1032, %v6603, %v6607
      %v6609 = vshrl.u32 %v6239, 16
      %v6611 = vrot.slane %v6609, 4
      %v6612 = vor.u32 %v6611, %v6607
      %v6613 = vrot.slane %v6612, 4
      %v6615 = vshll.u32 %v6257, 16
      %v6617 = vrot.slane %v6615, 5
      %v6618 = vsel %vm1032, %v6613, %v6617
      %v6620 = vshrl.u32 %v6240, 16
      %v6622 = vrot.slane %v6620, 4
      %v6623 = vshll.u32 %v6240, 16
      %v6625 = vrot.slane %v6623, 5
      %v6626 = vor.u32 %v6622, %v6625
      %v6627 = vrot.slane %v6626, 4
      %v6629 = vshll.u32 %v6241, 16
      %v6631 = vrot.slane %v6629, 5
      %v6632 = vsel %vm1032, %v6627, %v6631
      %v6633 = vshrl.u32 %v6241, 16
      %v6635 = vrot.slane %v6633, 4
      %v6636 = vor.u32 %v6635, %v6631
      %v6637 = vrot.slane %v6636, 4
      %v6639 = vshll.u32 %v6258, 16
      %v6641 = vrot.slane %v6639, 5
      %v6642 = vsel %vm1032, %v6637, %v6641
      %s6643 = scalar_lea.vmem %s2, 4
      %v6644 = vld [vmem:[%s6643] sm:$0xf]
      %v6645 = vunpack.c.l.b16 %v6272
      %v6646 = vunpack.c.l.b16 %v6282
      %v6647 = vunpack.c.l.b16 %v6296
      %v6648 = vunpack.c.l.b16 %v6306
      %v6649 = vunpack.c.l.b16 %v6320
      %v6650 = vunpack.c.l.b16 %v6330
      %v6651 = vunpack.c.l.b16 %v6344
      %v6652 = vunpack.c.l.b16 %v6354
      %v6653 = vunpack.c.l.b16 %v6368
      %v6654 = vunpack.c.l.b16 %v6378
      %v6655 = vunpack.c.l.b16 %v6392
      %v6656 = vunpack.c.l.b16 %v6402
      %v6657 = vunpack.c.l.b16 %v6416
      %v6658 = vunpack.c.l.b16 %v6426
      %v6659 = vunpack.c.l.b16 %v6440
      %v6660 = vunpack.c.l.b16 %v6450
      %v6661 = vunpack.c.l.b16 %v6464
      %v6662 = vunpack.c.l.b16 %v6474
      %v6663 = vunpack.c.l.b16 %v6488
      %v6664 = vunpack.c.l.b16 %v6498
      %v6665 = vunpack.c.l.b16 %v6512
      %v6666 = vunpack.c.l.b16 %v6522
      %v6667 = vunpack.c.l.b16 %v6536
      %v6668 = vunpack.c.l.b16 %v6546
      %v6669 = vunpack.c.l.b16 %v6560
      %v6670 = vunpack.c.l.b16 %v6570
      %v6671 = vunpack.c.l.b16 %v6584
      %v6672 = vunpack.c.l.b16 %v6594
      %v6673 = vunpack.c.l.b16 %v6608
      %v6674 = vunpack.c.l.b16 %v6618
      %v6675 = vunpack.c.l.b16 %v6632
      %v6676 = vunpack.c.l.b16 %v6642
      %v6677 = vpack.c.b16 %v6646, %v6645
      %v6678 = vpack.c.b16 %v6648, %v6647
      %v6679 = vpack.c.b16 %v6650, %v6649
      %v6680 = vpack.c.b16 %v6652, %v6651
      %v6681 = vpack.c.b16 %v6654, %v6653
      %v6682 = vpack.c.b16 %v6656, %v6655
      %v6683 = vpack.c.b16 %v6658, %v6657
      %v6684 = vpack.c.b16 %v6660, %v6659
      %v6685 = vpack.c.b16 %v6662, %v6661
      %v6686 = vpack.c.b16 %v6664, %v6663
      %v6687 = vpack.c.b16 %v6666, %v6665
      %v6688 = vpack.c.b16 %v6668, %v6667
      %v6689 = vpack.c.b16 %v6670, %v6669
      %v6690 = vpack.c.b16 %v6672, %v6671
      %v6691 = vpack.c.b16 %v6674, %v6673
      %v6692 = vpack.c.b16 %v6676, %v6675
      %vm6693 = vcmask 64512
      %v6695 = vsel %vm6693, %v6677, 0
      %v6698 = vsel %vm6693, %v6678, 0
      %v6701 = vsel %vm6693, %v6679, 0
      %v6704 = vsel %vm6693, %v6680, 0
      %v6707 = vsel %vm6693, %v6681, 0
      %v6710 = vsel %vm6693, %v6682, 0
      %v6713 = vsel %vm6693, %v6683, 0
      %v6716 = vsel %vm6693, %v6684, 0
      %v6719 = vsel %vm6693, %v6685, 0
      %v6722 = vsel %vm6693, %v6686, 0
      %v6725 = vsel %vm6693, %v6687, 0
      %v6728 = vsel %vm6693, %v6688, 0
      %v6731 = vsel %vm6693, %v6689, 0
      %v6734 = vsel %vm6693, %v6690, 0
      %v6737 = vsel %vm6693, %v6691, 0
      %v6740 = vsel %vm6693, %v6692, 0
      %vm6742 = vcmask 1043456
      %v6744 = vsel %vm6742, %v6644, 0
      %6746 = vmatprep.subr.bf16.mxu0 0
      %6747 = vmatpush1.bf16.msra.mxu0 %v6744
      %6748 = vmatprep.subr.bf16.mxu0 0
      %6749 = vmatpush1.bf16.msra.mxu0 0
      %6750 = vmatprep.subr.bf16.mxu0 0
      %6751 = vmatpush1.bf16.msra.mxu0 0
      %6752 = vmatprep.subr.bf16.mxu0 0
      %6753 = vmatpush1.bf16.msra.mxu0 0
      %6754 = vmatprep.subr.bf16.mxu0 0
      %6755 = vmatpush1.bf16.msra.mxu0 0
      %6756 = vmatprep.subr.bf16.mxu0 0
      %6757 = vmatpush1.bf16.msra.mxu0 0
      %6758 = vmatprep.subr.bf16.mxu0 0
      %6759 = vmatpush1.bf16.msra.mxu0 0
      %6760 = vmatprep.subr.bf16.mxu0 0
      %6761 = vmatpush1.bf16.msra.mxu0 0
      %6762 = vmatprep.subr.bf16.mxu0 0
      %6763 = vmatpush1.bf16.msra.mxu0 0
      %6764 = vmatprep.subr.bf16.mxu0 0
      %6765 = vmatpush1.bf16.msra.mxu0 0
      %6766 = vmatprep.subr.bf16.mxu0 0
      %6767 = vmatpush1.bf16.msra.mxu0 0
      %6768 = vmatprep.subr.bf16.mxu0 0
      %6769 = vmatpush1.bf16.msra.mxu0 0
      %6770 = vmatprep.subr.bf16.mxu0 0
      %6771 = vmatpush1.bf16.msra.mxu0 0
      %6772 = vmatprep.subr.bf16.mxu0 0
      %6773 = vmatpush1.bf16.msra.mxu0 0
      %6774 = vmatprep.subr.bf16.mxu0 0
      %6775 = vmatpush1.bf16.msra.mxu0 0
      %6776 = vmatprep.subr.bf16.mxu0 0
      %6777 = vmatpush1.bf16.msra.mxu0 0
      %6778 = vmatprep.mubr.bf16.mxu0 0
      %6779 = vmatmul.mubr.bf16.gmra.mrb[0].mxu0 %v6695
      %v6780 = vpop.f32.mrb[0].mxu0
      %v6781 = vadd.f32 0.0, %v6780
      %v6782 = vpop.f32.mrb[0].mxu0
      %v6783 = vpop.f32.mrb[0].mxu0
      %v6784 = vadd.f32 0.0, %v6783
      %v6785 = vpop.f32.mrb[0].mxu0
      %6786 = vmatprep.mubr.bf16.mxu0 0
      %6787 = vmatmul.mubr.bf16.gmra.mrb[0].mxu0 %v6698
      %v6788 = vpop.f32.mrb[0].mxu0
      %v6789 = vadd.f32 0.0, %v6788
      %v6790 = vpop.f32.mrb[0].mxu0
      %v6791 = vpop.f32.mrb[0].mxu0
      %v6792 = vadd.f32 0.0, %v6791
      %v6793 = vpop.f32.mrb[0].mxu0
      %6794 = vmatprep.mubr.bf16.mxu0 0
      %6795 = vmatmul.mubr.bf16.gmra.mrb[0].mxu0 %v6701
      %v6796 = vpop.f32.mrb[0].mxu0
      %v6797 = vadd.f32 0.0, %v6796
      %v6798 = vpop.f32.mrb[0].mxu0
      %v6799 = vpop.f32.mrb[0].mxu0
      %v6800 = vadd.f32 0.0, %v6799
      %v6801 = vpop.f32.mrb[0].mxu0
      %6802 = vmatprep.mubr.bf16.mxu0 0
      %6803 = vmatmul.mubr.bf16.gmra.mrb[0].mxu0 %v6704
      %v6804 = vpop.f32.mrb[0].mxu0
      %v6805 = vadd.f32 0.0, %v6804
      %v6806 = vpop.f32.mrb[0].mxu0
      %v6807 = vpop.f32.mrb[0].mxu0
      %v6808 = vadd.f32 0.0, %v6807
      %v6809 = vpop.f32.mrb[0].mxu0
      %6810 = vmatprep.mubr.bf16.mxu0 0
      %6811 = vmatmul.mubr.bf16.gmra.mrb[0].mxu0 %v6707
      %v6812 = vpop.f32.mrb[0].mxu0
      %v6813 = vadd.f32 0.0, %v6812
      %v6814 = vpop.f32.mrb[0].mxu0
      %v6815 = vpop.f32.mrb[0].mxu0
      %v6816 = vadd.f32 0.0, %v6815
      %v6817 = vpop.f32.mrb[0].mxu0
      %6818 = vmatprep.mubr.bf16.mxu0 0
      %6819 = vmatmul.mubr.bf16.gmra.mrb[0].mxu0 %v6710
      %v6820 = vpop.f32.mrb[0].mxu0
      %v6821 = vadd.f32 0.0, %v6820
      %v6822 = vpop.f32.mrb[0].mxu0
      %v6823 = vpop.f32.mrb[0].mxu0
      %v6824 = vadd.f32 0.0, %v6823
      %v6825 = vpop.f32.mrb[0].mxu0
      %6826 = vmatprep.mubr.bf16.mxu0 0
      %6827 = vmatmul.mubr.bf16.gmra.mrb[0].mxu0 %v6713
      %v6828 = vpop.f32.mrb[0].mxu0
      %v6829 = vadd.f32 0.0, %v6828
      %v6830 = vpop.f32.mrb[0].mxu0
      %v6831 = vpop.f32.mrb[0].mxu0
      %v6832 = vadd.f32 0.0, %v6831
      %v6833 = vpop.f32.mrb[0].mxu0
      %6834 = vmatprep.mubr.bf16.mxu0 0
      %6835 = vmatmul.mubr.bf16.gmra.mrb[0].mxu0 %v6716
      %v6836 = vpop.f32.mrb[0].mxu0
      %v6837 = vadd.f32 0.0, %v6836
      %v6838 = vpop.f32.mrb[0].mxu0
      %v6839 = vpop.f32.mrb[0].mxu0
      %v6840 = vadd.f32 0.0, %v6839
      %v6841 = vpop.f32.mrb[0].mxu0
      %6842 = vmatprep.mubr.bf16.mxu0 0
      %6843 = vmatmul.mubr.bf16.gmra.mrb[0].mxu0 %v6719
      %v6844 = vpop.f32.mrb[0].mxu0
      %v6845 = vadd.f32 0.0, %v6844
      %v6846 = vpop.f32.mrb[0].mxu0
      %v6847 = vpop.f32.mrb[0].mxu0
      %v6848 = vadd.f32 0.0, %v6847
      %v6849 = vpop.f32.mrb[0].mxu0
      %6850 = vmatprep.mubr.bf16.mxu0 0
      %6851 = vmatmul.mubr.bf16.gmra.mrb[0].mxu0 %v6722
      %v6852 = vpop.f32.mrb[0].mxu0
      %v6853 = vadd.f32 0.0, %v6852
      %v6854 = vpop.f32.mrb[0].mxu0
      %v6855 = vpop.f32.mrb[0].mxu0
      %v6856 = vadd.f32 0.0, %v6855
      %v6857 = vpop.f32.mrb[0].mxu0
      %6858 = vmatprep.mubr.bf16.mxu0 0
      %6859 = vmatmul.mubr.bf16.gmra.mrb[0].mxu0 %v6725
      %v6860 = vpop.f32.mrb[0].mxu0
      %v6861 = vadd.f32 0.0, %v6860
      %v6862 = vpop.f32.mrb[0].mxu0
      %v6863 = vpop.f32.mrb[0].mxu0
      %v6864 = vadd.f32 0.0, %v6863
      %v6865 = vpop.f32.mrb[0].mxu0
      %6866 = vmatprep.mubr.bf16.mxu0 0
      %6867 = vmatmul.mubr.bf16.gmra.mrb[0].mxu0 %v6728
      %v6868 = vpop.f32.mrb[0].mxu0
      %v6869 = vadd.f32 0.0, %v6868
      %v6870 = vpop.f32.mrb[0].mxu0
      %v6871 = vpop.f32.mrb[0].mxu0
      %v6872 = vadd.f32 0.0, %v6871
      %v6873 = vpop.f32.mrb[0].mxu0
      %6874 = vmatprep.mubr.bf16.mxu0 0
      %6875 = vmatmul.mubr.bf16.gmra.mrb[0].mxu0 %v6731
      %v6876 = vpop.f32.mrb[0].mxu0
      %v6877 = vadd.f32 0.0, %v6876
      %v6878 = vpop.f32.mrb[0].mxu0
      %v6879 = vpop.f32.mrb[0].mxu0
      %v6880 = vadd.f32 0.0, %v6879
      %v6881 = vpop.f32.mrb[0].mxu0
      %6882 = vmatprep.mubr.bf16.mxu0 0
      %6883 = vmatmul.mubr.bf16.gmra.mrb[0].mxu0 %v6734
      %v6884 = vpop.f32.mrb[0].mxu0
      %v6885 = vadd.f32 0.0, %v6884
      %v6886 = vpop.f32.mrb[0].mxu0
      %v6887 = vpop.f32.mrb[0].mxu0
      %v6888 = vadd.f32 0.0, %v6887
      %v6889 = vpop.f32.mrb[0].mxu0
      %6890 = vmatprep.mubr.bf16.mxu0 0
      %6891 = vmatmul.mubr.bf16.gmra.mrb[0].mxu0 %v6737
      %v6892 = vpop.f32.mrb[0].mxu0
      %v6893 = vadd.f32 0.0, %v6892
      %v6894 = vpop.f32.mrb[0].mxu0
      %v6895 = vpop.f32.mrb[0].mxu0
      %v6896 = vadd.f32 0.0, %v6895
      %v6897 = vpop.f32.mrb[0].mxu0
      %6898 = vmatprep.mubr.bf16.mxu0 0
      %6899 = vmatmul.mubr.bf16.gmra.mrb[0].mxu0 %v6740
      %v6900 = vpop.f32.mrb[0].mxu0
      %v6901 = vadd.f32 0.0, %v6900
      %v6902 = vpop.f32.mrb[0].mxu0
      %v6903 = vpop.f32.mrb[0].mxu0
      %v6904 = vadd.f32 0.0, %v6903
      %v6905 = vpop.f32.mrb[0].mxu0
      %6906 = vdwg.mxu0
      %v6939 = vunpack.c.l.b16 %v6210
      %v6940 = vunpack.c.l.b16 %v6211
      %v6941 = vunpack.c.l.b16 %v6212
      %v6942 = vunpack.c.l.b16 %v6213
      %v6943 = vunpack.c.l.b16 %v6214
      %v6944 = vunpack.c.l.b16 %v6215
      %v6945 = vunpack.c.l.b16 %v6216
      %v6946 = vunpack.c.l.b16 %v6217
      %v6947 = vunpack.c.l.b16 %v6218
      %v6948 = vunpack.c.l.b16 %v6219
      %v6949 = vunpack.c.l.b16 %v6220
      %v6950 = vunpack.c.l.b16 %v6221
      %v6951 = vunpack.c.l.b16 %v6222
      %v6952 = vunpack.c.l.b16 %v6223
      %v6953 = vunpack.c.l.b16 %v6224
      %v6954 = vunpack.c.l.b16 %v6225
      %v6955 = vunpack.c.l.b16 %v6226
      %v6956 = vunpack.c.l.b16 %v6227
      %v6957 = vunpack.c.l.b16 %v6228
      %v6958 = vunpack.c.l.b16 %v6229
      %v6959 = vunpack.c.l.b16 %v6230
      %v6960 = vunpack.c.l.b16 %v6231
      %v6961 = vunpack.c.l.b16 %v6232
      %v6962 = vunpack.c.l.b16 %v6233
      %v6963 = vunpack.c.l.b16 %v6234
      %v6964 = vunpack.c.l.b16 %v6235
      %v6965 = vunpack.c.l.b16 %v6236
      %v6966 = vunpack.c.l.b16 %v6237
      %v6967 = vunpack.c.l.b16 %v6238
      %v6968 = vunpack.c.l.b16 %v6239
      %v6969 = vunpack.c.l.b16 %v6240
      %v6970 = vunpack.c.l.b16 %v6241
      %v6971 = vpack.c.b16 %v6940, %v6939
      %v6972 = vpack.c.b16 %v6942, %v6941
      %v6973 = vpack.c.b16 %v6944, %v6943
      %v6974 = vpack.c.b16 %v6946, %v6945
      %v6975 = vpack.c.b16 %v6948, %v6947
      %v6976 = vpack.c.b16 %v6950, %v6949
      %v6977 = vpack.c.b16 %v6952, %v6951
      %v6978 = vpack.c.b16 %v6954, %v6953
      %v6979 = vpack.c.b16 %v6956, %v6955
      %v6980 = vpack.c.b16 %v6958, %v6957
      %v6981 = vpack.c.b16 %v6960, %v6959
      %v6982 = vpack.c.b16 %v6962, %v6961
      %v6983 = vpack.c.b16 %v6964, %v6963
      %v6984 = vpack.c.b16 %v6966, %v6965
      %v6985 = vpack.c.b16 %v6968, %v6967
      %v6986 = vpack.c.b16 %v6970, %v6969
      %v6988 = vsel %vm6693, %v6971, 0
      %v6991 = vsel %vm6693, %v6972, 0
      %v6994 = vsel %vm6693, %v6973, 0
      %v6997 = vsel %vm6693, %v6974, 0
      %v7000 = vsel %vm6693, %v6975, 0
      %v7003 = vsel %vm6693, %v6976, 0
      %v7006 = vsel %vm6693, %v6977, 0
      %v7009 = vsel %vm6693, %v6978, 0
      %v7012 = vsel %vm6693, %v6979, 0
      %v7015 = vsel %vm6693, %v6980, 0
      %v7018 = vsel %vm6693, %v6981, 0
      %v7021 = vsel %vm6693, %v6982, 0
      %v7024 = vsel %vm6693, %v6983, 0
      %v7027 = vsel %vm6693, %v6984, 0
      %v7030 = vsel %vm6693, %v6985, 0
      %v7033 = vsel %vm6693, %v6986, 0
      %v7036 = vsel %vm6742, %v6242, 0
      %7038 = vmatprep.subr.bf16.mxu0 0
      %7039 = vmatpush1.bf16.msra.mxu0 %v7036
      %7040 = vmatprep.subr.bf16.mxu0 0
      %7041 = vmatpush1.bf16.msra.mxu0 0
      %7042 = vmatprep.subr.bf16.mxu0 0
      %7043 = vmatpush1.bf16.msra.mxu0 0
      %7044 = vmatprep.subr.bf16.mxu0 0
      %7045 = vmatpush1.bf16.msra.mxu0 0
      %7046 = vmatprep.subr.bf16.mxu0 0
      %7047 = vmatpush1.bf16.msra.mxu0 0
      %7048 = vmatprep.subr.bf16.mxu0 0
      %7049 = vmatpush1.bf16.msra.mxu0 0
      %7050 = vmatprep.subr.bf16.mxu0 0
      %7051 = vmatpush1.bf16.msra.mxu0 0
      %7052 = vmatprep.subr.bf16.mxu0 0
      %7053 = vmatpush1.bf16.msra.mxu0 0
      %7054 = vmatprep.subr.bf16.mxu0 0
      %7055 = vmatpush1.bf16.msra.mxu0 0
      %7056 = vmatprep.subr.bf16.mxu0 0
      %7057 = vmatpush1.bf16.msra.mxu0 0
      %7058 = vmatprep.subr.bf16.mxu0 0
      %7059 = vmatpush1.bf16.msra.mxu0 0
      %7060 = vmatprep.subr.bf16.mxu0 0
      %7061 = vmatpush1.bf16.msra.mxu0 0
      %7062 = vmatprep.subr.bf16.mxu0 0
      %7063 = vmatpush1.bf16.msra.mxu0 0
      %7064 = vmatprep.subr.bf16.mxu0 0
      %7065 = vmatpush1.bf16.msra.mxu0 0
      %7066 = vmatprep.subr.bf16.mxu0 0
      %7067 = vmatpush1.bf16.msra.mxu0 0
      %7068 = vmatprep.subr.bf16.mxu0 0
      %7069 = vmatpush1.bf16.msra.mxu0 0
      %7070 = vmatprep.mubr.bf16.mxu0 0
      %7071 = vmatmul.mubr.bf16.gmra.mrb[0].mxu0 %v6988
      %v7072 = vpop.f32.mrb[0].mxu0
      %v7073 = vadd.f32 %v6781, %v7072
      %v7074 = vpop.f32.mrb[0].mxu0
      %v7075 = vpop.f32.mrb[0].mxu0
      %v7076 = vadd.f32 %v6784, %v7075
      %v7077 = vpop.f32.mrb[0].mxu0
      %7078 = vmatprep.mubr.bf16.mxu0 0
      %7079 = vmatmul.mubr.bf16.gmra.mrb[0].mxu0 %v6991
      %v7080 = vpop.f32.mrb[0].mxu0
      %v7081 = vadd.f32 %v6789, %v7080
      %v7082 = vpop.f32.mrb[0].mxu0
      %v7083 = vpop.f32.mrb[0].mxu0
      %v7084 = vadd.f32 %v6792, %v7083
      %v7085 = vpop.f32.mrb[0].mxu0
      %7086 = vmatprep.mubr.bf16.mxu0 0
      %7087 = vmatmul.mubr.bf16.gmra.mrb[0].mxu0 %v6994
      %v7088 = vpop.f32.mrb[0].mxu0
      %v7089 = vadd.f32 %v6797, %v7088
      %v7090 = vpop.f32.mrb[0].mxu0
      %v7091 = vpop.f32.mrb[0].mxu0
      %v7092 = vadd.f32 %v6800, %v7091
      %v7093 = vpop.f32.mrb[0].mxu0
      %7094 = vmatprep.mubr.bf16.mxu0 0
      %7095 = vmatmul.mubr.bf16.gmra.mrb[0].mxu0 %v6997
      %v7096 = vpop.f32.mrb[0].mxu0
      %v7097 = vadd.f32 %v6805, %v7096
      %v7098 = vpop.f32.mrb[0].mxu0
      %v7099 = vpop.f32.mrb[0].mxu0
      %v7100 = vadd.f32 %v6808, %v7099
      %v7101 = vpop.f32.mrb[0].mxu0
      %7102 = vmatprep.mubr.bf16.mxu0 0
      %7103 = vmatmul.mubr.bf16.gmra.mrb[0].mxu0 %v7000
      %v7104 = vpop.f32.mrb[0].mxu0
      %v7105 = vadd.f32 %v6813, %v7104
      %v7106 = vpop.f32.mrb[0].mxu0
      %v7107 = vpop.f32.mrb[0].mxu0
      %v7108 = vadd.f32 %v6816, %v7107
      %v7109 = vpop.f32.mrb[0].mxu0
      %7110 = vmatprep.mubr.bf16.mxu0 0
      %7111 = vmatmul.mubr.bf16.gmra.mrb[0].mxu0 %v7003
      %v7112 = vpop.f32.mrb[0].mxu0
      %v7113 = vadd.f32 %v6821, %v7112
      %v7114 = vpop.f32.mrb[0].mxu0
      %v7115 = vpop.f32.mrb[0].mxu0
      %v7116 = vadd.f32 %v6824, %v7115
      %v7117 = vpop.f32.mrb[0].mxu0
      %7118 = vmatprep.mubr.bf16.mxu0 0
      %7119 = vmatmul.mubr.bf16.gmra.mrb[0].mxu0 %v7006
      %v7120 = vpop.f32.mrb[0].mxu0
      %v7121 = vadd.f32 %v6829, %v7120
      %v7122 = vpop.f32.mrb[0].mxu0
      %v7123 = vpop.f32.mrb[0].mxu0
      %v7124 = vadd.f32 %v6832, %v7123
      %v7125 = vpop.f32.mrb[0].mxu0
      %7126 = vmatprep.mubr.bf16.mxu0 0
      %7127 = vmatmul.mubr.bf16.gmra.mrb[0].mxu0 %v7009
      %v7128 = vpop.f32.mrb[0].mxu0
      %v7129 = vadd.f32 %v6837, %v7128
      %v7130 = vpop.f32.mrb[0].mxu0
      %v7131 = vpop.f32.mrb[0].mxu0
      %v7132 = vadd.f32 %v6840, %v7131
      %v7133 = vpop.f32.mrb[0].mxu0
      %7134 = vmatprep.mubr.bf16.mxu0 0
      %7135 = vmatmul.mubr.bf16.gmra.mrb[0].mxu0 %v7012
      %v7136 = vpop.f32.mrb[0].mxu0
      %v7137 = vadd.f32 %v6845, %v7136
      %v7138 = vpop.f32.mrb[0].mxu0
      %v7139 = vpop.f32.mrb[0].mxu0
      %v7140 = vadd.f32 %v6848, %v7139
      %v7141 = vpop.f32.mrb[0].mxu0
      %7142 = vmatprep.mubr.bf16.mxu0 0
      %7143 = vmatmul.mubr.bf16.gmra.mrb[0].mxu0 %v7015
      %v7144 = vpop.f32.mrb[0].mxu0
      %v7145 = vadd.f32 %v6853, %v7144
      %v7146 = vpop.f32.mrb[0].mxu0
      %v7147 = vpop.f32.mrb[0].mxu0
      %v7148 = vadd.f32 %v6856, %v7147
      %v7149 = vpop.f32.mrb[0].mxu0
      %7150 = vmatprep.mubr.bf16.mxu0 0
      %7151 = vmatmul.mubr.bf16.gmra.mrb[0].mxu0 %v7018
      %v7152 = vpop.f32.mrb[0].mxu0
      %v7153 = vadd.f32 %v6861, %v7152
      %v7154 = vpop.f32.mrb[0].mxu0
      %v7155 = vpop.f32.mrb[0].mxu0
      %v7156 = vadd.f32 %v6864, %v7155
      %v7157 = vpop.f32.mrb[0].mxu0
      %7158 = vmatprep.mubr.bf16.mxu0 0
      %7159 = vmatmul.mubr.bf16.gmra.mrb[0].mxu0 %v7021
      %v7160 = vpop.f32.mrb[0].mxu0
      %v7161 = vadd.f32 %v6869, %v7160
      %v7162 = vpop.f32.mrb[0].mxu0
      %v7163 = vpop.f32.mrb[0].mxu0
      %v7164 = vadd.f32 %v6872, %v7163
      %v7165 = vpop.f32.mrb[0].mxu0
      %7166 = vmatprep.mubr.bf16.mxu0 0
      %7167 = vmatmul.mubr.bf16.gmra.mrb[0].mxu0 %v7024
      %v7168 = vpop.f32.mrb[0].mxu0
      %v7169 = vadd.f32 %v6877, %v7168
      %v7170 = vpop.f32.mrb[0].mxu0
      %v7171 = vpop.f32.mrb[0].mxu0
      %v7172 = vadd.f32 %v6880, %v7171
      %v7173 = vpop.f32.mrb[0].mxu0
      %7174 = vmatprep.mubr.bf16.mxu0 0
      %7175 = vmatmul.mubr.bf16.gmra.mrb[0].mxu0 %v7027
      %v7176 = vpop.f32.mrb[0].mxu0
      %v7177 = vadd.f32 %v6885, %v7176
      %v7178 = vpop.f32.mrb[0].mxu0
      %v7179 = vpop.f32.mrb[0].mxu0
      %v7180 = vadd.f32 %v6888, %v7179
      %v7181 = vpop.f32.mrb[0].mxu0
      %7182 = vmatprep.mubr.bf16.mxu0 0
      %7183 = vmatmul.mubr.bf16.gmra.mrb[0].mxu0 %v7030
      %v7184 = vpop.f32.mrb[0].mxu0
      %v7185 = vadd.f32 %v6893, %v7184
      %v7186 = vpop.f32.mrb[0].mxu0
      %v7187 = vpop.f32.mrb[0].mxu0
      %v7188 = vadd.f32 %v6896, %v7187
      %v7189 = vpop.f32.mrb[0].mxu0
      %7190 = vmatprep.mubr.bf16.mxu0 0
      %7191 = vmatmul.mubr.bf16.gmra.mrb[0].mxu0 %v7033
      %v7192 = vpop.f32.mrb[0].mxu0
      %v7193 = vadd.f32 %v6901, %v7192
      %v7194 = vpop.f32.mrb[0].mxu0
      %v7195 = vpop.f32.mrb[0].mxu0
      %v7196 = vadd.f32 %v6904, %v7195
      %v7197 = vpop.f32.mrb[0].mxu0
      %7198 = vdwg.mxu0
      %v7199 = vld [vmem:[#allocation3] sm:$0xe]
      %v7200 = vld [vmem:[#allocation3 + $0xc] sm:$0xe]
      %v7201 = vld [vmem:[#allocation3 + $0x18] sm:$0xe]
      %v7202 = vld [vmem:[#allocation3 + $0x24] sm:$0xe]
      %v7203 = vld [vmem:[#allocation3 + $0x30] sm:$0xe]
      %v7204 = vld [vmem:[#allocation3 + $0x3c] sm:$0xe]
      %v7205 = vld [vmem:[#allocation3 + $0x48] sm:$0xe]
      %v7206 = vld [vmem:[#allocation3 + $0x54] sm:$0xe]
      %v7207 = vld [vmem:[#allocation3 + $0x60] sm:$0xe]
      %v7208 = vld [vmem:[#allocation3 + $0x6c] sm:$0xe]
      %v7209 = vld [vmem:[#allocation3 + $0x78] sm:$0xe]
      %v7210 = vld [vmem:[#allocation3 + $0x84] sm:$0xe]
      %v7211 = vld [vmem:[#allocation3 + $0x90] sm:$0xe]
      %v7212 = vld [vmem:[#allocation3 + $0x9c] sm:$0xe]
      %v7213 = vld [vmem:[#allocation3 + $0xa8] sm:$0xe]
      %v7214 = vld [vmem:[#allocation3 + $0xb4] sm:$0xe]
      %v7247 = vrot.slane %v7199, 5
      %v7248 = vrot.slane %v7247, 4
      %v7249 = vrot.slane %v6211, 5
      %v7250 = vsel %vm2023, %v7248, %v7249
      %v7251 = vrot.slane %v7249, 4
      %v7252 = vrot.slane %v6243, 5
      %v7253 = vsel %vm2023, %v7251, %v7252
      %v7254 = vrot.slane %v7200, 5
      %v7255 = vrot.slane %v7254, 4
      %v7256 = vrot.slane %v6213, 5
      %v7257 = vsel %vm2023, %v7255, %v7256
      %v7258 = vrot.slane %v7256, 4
      %v7259 = vrot.slane %v6244, 5
      %v7260 = vsel %vm2023, %v7258, %v7259
      %v7261 = vrot.slane %v7201, 5
      %v7262 = vrot.slane %v7261, 4
      %v7263 = vrot.slane %v6215, 5
      %v7264 = vsel %vm2023, %v7262, %v7263
      %v7265 = vrot.slane %v7263, 4
      %v7266 = vrot.slane %v6245, 5
      %v7267 = vsel %vm2023, %v7265, %v7266
      %v7268 = vrot.slane %v7202, 5
      %v7269 = vrot.slane %v7268, 4
      %v7270 = vrot.slane %v6217, 5
      %v7271 = vsel %vm2023, %v7269, %v7270
      %v7272 = vrot.slane %v7270, 4
      %v7273 = vrot.slane %v6246, 5
      %v7274 = vsel %vm2023, %v7272, %v7273
      %v7275 = vrot.slane %v7203, 5
      %v7276 = vrot.slane %v7275, 4
      %v7277 = vrot.slane %v6219, 5
      %v7278 = vsel %vm2023, %v7276, %v7277
      %v7279 = vrot.slane %v7277, 4
      %v7280 = vrot.slane %v6247, 5
      %v7281 = vsel %vm2023, %v7279, %v7280
      %v7282 = vrot.slane %v7204, 5
      %v7283 = vrot.slane %v7282, 4
      %v7284 = vrot.slane %v6221, 5
      %v7285 = vsel %vm2023, %v7283, %v7284
      %v7286 = vrot.slane %v7284, 4
      %v7287 = vrot.slane %v6248, 5
      %v7288 = vsel %vm2023, %v7286, %v7287
      %v7289 = vrot.slane %v7205, 5
      %v7290 = vrot.slane %v7289, 4
      %v7291 = vrot.slane %v6223, 5
      %v7292 = vsel %vm2023, %v7290, %v7291
      %v7293 = vrot.slane %v7291, 4
      %v7294 = vrot.slane %v6249, 5
      %v7295 = vsel %vm2023, %v7293, %v7294
      %v7296 = vrot.slane %v7206, 5
      %v7297 = vrot.slane %v7296, 4
      %v7298 = vrot.slane %v6225, 5
      %v7299 = vsel %vm2023, %v7297, %v7298
      %v7300 = vrot.slane %v7298, 4
      %v7301 = vrot.slane %v6250, 5
      %v7302 = vsel %vm2023, %v7300, %v7301
      %v7303 = vrot.slane %v7207, 5
      %v7304 = vrot.slane %v7303, 4
      %v7305 = vrot.slane %v6227, 5
      %v7306 = vsel %vm2023, %v7304, %v7305
      %v7307 = vrot.slane %v7305, 4
      %v7308 = vrot.slane %v6251, 5
      %v7309 = vsel %vm2023, %v7307, %v7308
      %v7310 = vrot.slane %v7208, 5
      %v7311 = vrot.slane %v7310, 4
      %v7312 = vrot.slane %v6229, 5
      %v7313 = vsel %vm2023, %v7311, %v7312
      %v7314 = vrot.slane %v7312, 4
      %v7315 = vrot.slane %v6252, 5
      %v7316 = vsel %vm2023, %v7314, %v7315
      %v7317 = vrot.slane %v7209, 5
      %v7318 = vrot.slane %v7317, 4
      %v7319 = vrot.slane %v6231, 5
      %v7320 = vsel %vm2023, %v7318, %v7319
      %v7321 = vrot.slane %v7319, 4
      %v7322 = vrot.slane %v6253, 5
      %v7323 = vsel %vm2023, %v7321, %v7322
      %v7324 = vrot.slane %v7210, 5
      %v7325 = vrot.slane %v7324, 4
      %v7326 = vrot.slane %v6233, 5
      %v7327 = vsel %vm2023, %v7325, %v7326
      %v7328 = vrot.slane %v7326, 4
      %v7329 = vrot.slane %v6254, 5
      %v7330 = vsel %vm2023, %v7328, %v7329
      %v7331 = vrot.slane %v7211, 5
      %v7332 = vrot.slane %v7331, 4
      %v7333 = vrot.slane %v6235, 5
      %v7334 = vsel %vm2023, %v7332, %v7333
      %v7335 = vrot.slane %v7333, 4
      %v7336 = vrot.slane %v6255, 5
      %v7337 = vsel %vm2023, %v7335, %v7336
      %v7338 = vrot.slane %v7212, 5
      %v7339 = vrot.slane %v7338, 4
      %v7340 = vrot.slane %v6237, 5
      %v7341 = vsel %vm2023, %v7339, %v7340
      %v7342 = vrot.slane %v7340, 4
      %v7343 = vrot.slane %v6256, 5
      %v7344 = vsel %vm2023, %v7342, %v7343
      %v7345 = vrot.slane %v7213, 5
      %v7346 = vrot.slane %v7345, 4
      %v7347 = vrot.slane %v6239, 5
      %v7348 = vsel %vm2023, %v7346, %v7347
      %v7349 = vrot.slane %v7347, 4
      %v7350 = vrot.slane %v6257, 5
      %v7351 = vsel %vm2023, %v7349, %v7350
      %v7352 = vrot.slane %v7214, 5
      %v7353 = vrot.slane %v7352, 4
      %v7354 = vrot.slane %v6241, 5
      %v7355 = vsel %vm2023, %v7353, %v7354
      %v7356 = vrot.slane %v7354, 4
      %v7357 = vrot.slane %v6258, 5
      %v7358 = vsel %vm2023, %v7356, %v7357
      %s7359 = scalar_lea.vmem %s2, 8
      %v7360 = vld [vmem:[%s7359] sm:$0xf]
      %v7361 = vunpack.c.l.b16 %v7250
      %v7362 = vunpack.c.l.b16 %v7253
      %v7363 = vunpack.c.l.b16 %v7257
      %v7364 = vunpack.c.l.b16 %v7260
      %v7365 = vunpack.c.l.b16 %v7264
      %v7366 = vunpack.c.l.b16 %v7267
      %v7367 = vunpack.c.l.b16 %v7271
      %v7368 = vunpack.c.l.b16 %v7274
      %v7369 = vunpack.c.l.b16 %v7278
      %v7370 = vunpack.c.l.b16 %v7281
      %v7371 = vunpack.c.l.b16 %v7285
      %v7372 = vunpack.c.l.b16 %v7288
      %v7373 = vunpack.c.l.b16 %v7292
      %v7374 = vunpack.c.l.b16 %v7295
      %v7375 = vunpack.c.l.b16 %v7299
      %v7376 = vunpack.c.l.b16 %v7302
      %v7377 = vunpack.c.l.b16 %v7306
      %v7378 = vunpack.c.l.b16 %v7309
      %v7379 = vunpack.c.l.b16 %v7313
      %v7380 = vunpack.c.l.b16 %v7316
      %v7381 = vunpack.c.l.b16 %v7320
      %v7382 = vunpack.c.l.b16 %v7323
      %v7383 = vunpack.c.l.b16 %v7327
      %v7384 = vunpack.c.l.b16 %v7330
      %v7385 = vunpack.c.l.b16 %v7334
      %v7386 = vunpack.c.l.b16 %v7337
      %v7387 = vunpack.c.l.b16 %v7341
      %v7388 = vunpack.c.l.b16 %v7344
      %v7389 = vunpack.c.l.b16 %v7348
      %v7390 = vunpack.c.l.b16 %v7351
      %v7391 = vunpack.c.l.b16 %v7355
      %v7392 = vunpack.c.l.b16 %v7358
      %v7393 = vpack.c.b16 %v7362, %v7361
      %v7394 = vpack.c.b16 %v7364, %v7363
      %v7395 = vpack.c.b16 %v7366, %v7365
      %v7396 = vpack.c.b16 %v7368, %v7367
      %v7397 = vpack.c.b16 %v7370, %v7369
      %v7398 = vpack.c.b16 %v7372, %v7371
      %v7399 = vpack.c.b16 %v7374, %v7373
      %v7400 = vpack.c.b16 %v7376, %v7375
      %v7401 = vpack.c.b16 %v7378, %v7377
      %v7402 = vpack.c.b16 %v7380, %v7379
      %v7403 = vpack.c.b16 %v7382, %v7381
      %v7404 = vpack.c.b16 %v7384, %v7383
      %v7405 = vpack.c.b16 %v7386, %v7385
      %v7406 = vpack.c.b16 %v7388, %v7387
      %v7407 = vpack.c.b16 %v7390, %v7389
      %v7408 = vpack.c.b16 %v7392, %v7391
      %v7410 = vsel %vm6693, %v7393, 0
      %v7413 = vsel %vm6693, %v7394, 0
      %v7416 = vsel %vm6693, %v7395, 0
      %v7419 = vsel %vm6693, %v7396, 0
      %v7422 = vsel %vm6693, %v7397, 0
      %v7425 = vsel %vm6693, %v7398, 0
      %v7428 = vsel %vm6693, %v7399, 0
      %v7431 = vsel %vm6693, %v7400, 0
      %v7434 = vsel %vm6693, %v7401, 0
      %v7437 = vsel %vm6693, %v7402, 0
      %v7440 = vsel %vm6693, %v7403, 0
      %v7443 = vsel %vm6693, %v7404, 0
      %v7446 = vsel %vm6693, %v7405, 0
      %v7449 = vsel %vm6693, %v7406, 0
      %v7452 = vsel %vm6693, %v7407, 0
      %v7455 = vsel %vm6693, %v7408, 0
      %v7458 = vsel %vm6742, %v7360, 0
      %7460 = vmatprep.subr.bf16.mxu0 0
      %7461 = vmatpush1.bf16.msra.mxu0 %v7458
      %7462 = vmatprep.subr.bf16.mxu0 0
      %7463 = vmatpush1.bf16.msra.mxu0 0
      %7464 = vmatprep.subr.bf16.mxu0 0
      %7465 = vmatpush1.bf16.msra.mxu0 0
      %7466 = vmatprep.subr.bf16.mxu0 0
      %7467 = vmatpush1.bf16.msra.mxu0 0
      %7468 = vmatprep.subr.bf16.mxu0 0
      %7469 = vmatpush1.bf16.msra.mxu0 0
      %7470 = vmatprep.subr.bf16.mxu0 0
      %7471 = vmatpush1.bf16.msra.mxu0 0
      %7472 = vmatprep.subr.bf16.mxu0 0
      %7473 = vmatpush1.bf16.msra.mxu0 0
      %7474 = vmatprep.subr.bf16.mxu0 0
      %7475 = vmatpush1.bf16.msra.mxu0 0
      %7476 = vmatprep.subr.bf16.mxu0 0
      %7477 = vmatpush1.bf16.msra.mxu0 0
      %7478 = vmatprep.subr.bf16.mxu0 0
      %7479 = vmatpush1.bf16.msra.mxu0 0
      %7480 = vmatprep.subr.bf16.mxu0 0
      %7481 = vmatpush1.bf16.msra.mxu0 0
      %7482 = vmatprep.subr.bf16.mxu0 0
      %7483 = vmatpush1.bf16.msra.mxu0 0
      %7484 = vmatprep.subr.bf16.mxu0 0
      %7485 = vmatpush1.bf16.msra.mxu0 0
      %7486 = vmatprep.subr.bf16.mxu0 0
      %7487 = vmatpush1.bf16.msra.mxu0 0
      %7488 = vmatprep.subr.bf16.mxu0 0
      %7489 = vmatpush1.bf16.msra.mxu0 0
      %7490 = vmatprep.subr.bf16.mxu0 0
      %7491 = vmatpush1.bf16.msra.mxu0 0
      %7492 = vmatprep.mubr.bf16.mxu0 0
      %7493 = vmatmul.mubr.bf16.gmra.mrb[0].mxu0 %v7410
      %v7494 = vpop.f32.mrb[0].mxu0
      %v7495 = vadd.f32 0.0, %v7494
      %v7496 = vpop.f32.mrb[0].mxu0
      %v7497 = vpop.f32.mrb[0].mxu0
      %v7498 = vadd.f32 0.0, %v7497
      %v7499 = vpop.f32.mrb[0].mxu0
      %7500 = vmatprep.mubr.bf16.mxu0 0
      %7501 = vmatmul.mubr.bf16.gmra.mrb[0].mxu0 %v7413
      %v7502 = vpop.f32.mrb[0].mxu0
      %v7503 = vadd.f32 0.0, %v7502
      %v7504 = vpop.f32.mrb[0].mxu0
      %v7505 = vpop.f32.mrb[0].mxu0
      %v7506 = vadd.f32 0.0, %v7505
      %v7507 = vpop.f32.mrb[0].mxu0
      %7508 = vmatprep.mubr.bf16.mxu0 0
      %7509 = vmatmul.mubr.bf16.gmra.mrb[0].mxu0 %v7416
      %v7510 = vpop.f32.mrb[0].mxu0
      %v7511 = vadd.f32 0.0, %v7510
      %v7512 = vpop.f32.mrb[0].mxu0
      %v7513 = vpop.f32.mrb[0].mxu0
      %v7514 = vadd.f32 0.0, %v7513
      %v7515 = vpop.f32.mrb[0].mxu0
      %7516 = vmatprep.mubr.bf16.mxu0 0
      %7517 = vmatmul.mubr.bf16.gmra.mrb[0].mxu0 %v7419
      %v7518 = vpop.f32.mrb[0].mxu0
      %v7519 = vadd.f32 0.0, %v7518
      %v7520 = vpop.f32.mrb[0].mxu0
      %v7521 = vpop.f32.mrb[0].mxu0
      %v7522 = vadd.f32 0.0, %v7521
      %v7523 = vpop.f32.mrb[0].mxu0
      %7524 = vmatprep.mubr.bf16.mxu0 0
      %7525 = vmatmul.mubr.bf16.gmra.mrb[0].mxu0 %v7422
      %v7526 = vpop.f32.mrb[0].mxu0
      %v7527 = vadd.f32 0.0, %v7526
      %v7528 = vpop.f32.mrb[0].mxu0
      %v7529 = vpop.f32.mrb[0].mxu0
      %v7530 = vadd.f32 0.0, %v7529
      %v7531 = vpop.f32.mrb[0].mxu0
      %7532 = vmatprep.mubr.bf16.mxu0 0
      %7533 = vmatmul.mubr.bf16.gmra.mrb[0].mxu0 %v7425
      %v7534 = vpop.f32.mrb[0].mxu0
      %v7535 = vadd.f32 0.0, %v7534
      %v7536 = vpop.f32.mrb[0].mxu0
      %v7537 = vpop.f32.mrb[0].mxu0
      %v7538 = vadd.f32 0.0, %v7537
      %v7539 = vpop.f32.mrb[0].mxu0
      %7540 = vmatprep.mubr.bf16.mxu0 0
      %7541 = vmatmul.mubr.bf16.gmra.mrb[0].mxu0 %v7428
      %v7542 = vpop.f32.mrb[0].mxu0
      %v7543 = vadd.f32 0.0, %v7542
      %v7544 = vpop.f32.mrb[0].mxu0
      %v7545 = vpop.f32.mrb[0].mxu0
      %v7546 = vadd.f32 0.0, %v7545
      %v7547 = vpop.f32.mrb[0].mxu0
      %7548 = vmatprep.mubr.bf16.mxu0 0
      %7549 = vmatmul.mubr.bf16.gmra.mrb[0].mxu0 %v7431
      %v7550 = vpop.f32.mrb[0].mxu0
      %v7551 = vadd.f32 0.0, %v7550
      %v7552 = vpop.f32.mrb[0].mxu0
      %v7553 = vpop.f32.mrb[0].mxu0
      %v7554 = vadd.f32 0.0, %v7553
      %v7555 = vpop.f32.mrb[0].mxu0
      %7556 = vmatprep.mubr.bf16.mxu0 0
      %7557 = vmatmul.mubr.bf16.gmra.mrb[0].mxu0 %v7434
      %v7558 = vpop.f32.mrb[0].mxu0
      %v7559 = vadd.f32 0.0, %v7558
      %v7560 = vpop.f32.mrb[0].mxu0
      %v7561 = vpop.f32.mrb[0].mxu0
      %v7562 = vadd.f32 0.0, %v7561
      %v7563 = vpop.f32.mrb[0].mxu0
      %7564 = vmatprep.mubr.bf16.mxu0 0
      %7565 = vmatmul.mubr.bf16.gmra.mrb[0].mxu0 %v7437
      %v7566 = vpop.f32.mrb[0].mxu0
      %v7567 = vadd.f32 0.0, %v7566
      %v7568 = vpop.f32.mrb[0].mxu0
      %v7569 = vpop.f32.mrb[0].mxu0
      %v7570 = vadd.f32 0.0, %v7569
      %v7571 = vpop.f32.mrb[0].mxu0
      %7572 = vmatprep.mubr.bf16.mxu0 0
      %7573 = vmatmul.mubr.bf16.gmra.mrb[0].mxu0 %v7440
      %v7574 = vpop.f32.mrb[0].mxu0
      %v7575 = vadd.f32 0.0, %v7574
      %v7576 = vpop.f32.mrb[0].mxu0
      %v7577 = vpop.f32.mrb[0].mxu0
      %v7578 = vadd.f32 0.0, %v7577
      %v7579 = vpop.f32.mrb[0].mxu0
      %7580 = vmatprep.mubr.bf16.mxu0 0
      %7581 = vmatmul.mubr.bf16.gmra.mrb[0].mxu0 %v7443
      %v7582 = vpop.f32.mrb[0].mxu0
      %v7583 = vadd.f32 0.0, %v7582
      %v7584 = vpop.f32.mrb[0].mxu0
      %v7585 = vpop.f32.mrb[0].mxu0
      %v7586 = vadd.f32 0.0, %v7585
      %v7587 = vpop.f32.mrb[0].mxu0
      %7588 = vmatprep.mubr.bf16.mxu0 0
      %7589 = vmatmul.mubr.bf16.gmra.mrb[0].mxu0 %v7446
      %v7590 = vpop.f32.mrb[0].mxu0
      %v7591 = vadd.f32 0.0, %v7590
      %v7592 = vpop.f32.mrb[0].mxu0
      %v7593 = vpop.f32.mrb[0].mxu0
      %v7594 = vadd.f32 0.0, %v7593
      %v7595 = vpop.f32.mrb[0].mxu0
      %7596 = vmatprep.mubr.bf16.mxu0 0
      %7597 = vmatmul.mubr.bf16.gmra.mrb[0].mxu0 %v7449
      %v7598 = vpop.f32.mrb[0].mxu0
      %v7599 = vadd.f32 0.0, %v7598
      %v7600 = vpop.f32.mrb[0].mxu0
      %v7601 = vpop.f32.mrb[0].mxu0
      %v7602 = vadd.f32 0.0, %v7601
      %v7603 = vpop.f32.mrb[0].mxu0
      %7604 = vmatprep.mubr.bf16.mxu0 0
      %7605 = vmatmul.mubr.bf16.gmra.mrb[0].mxu0 %v7452
      %v7606 = vpop.f32.mrb[0].mxu0
      %v7607 = vadd.f32 0.0, %v7606
      %v7608 = vpop.f32.mrb[0].mxu0
      %v7609 = vpop.f32.mrb[0].mxu0
      %v7610 = vadd.f32 0.0, %v7609
      %v7611 = vpop.f32.mrb[0].mxu0
      %7612 = vmatprep.mubr.bf16.mxu0 0
      %7613 = vmatmul.mubr.bf16.gmra.mrb[0].mxu0 %v7455
      %v7614 = vpop.f32.mrb[0].mxu0
      %v7615 = vadd.f32 0.0, %v7614
      %v7616 = vpop.f32.mrb[0].mxu0
      %v7617 = vpop.f32.mrb[0].mxu0
      %v7618 = vadd.f32 0.0, %v7617
      %v7619 = vpop.f32.mrb[0].mxu0
      %7620 = vdwg.mxu0
      %v7621 = vadd.f32 %v7073, %v7495
      %v7622 = vadd.f32 %v7076, %v7498
      %v7623 = vadd.f32 %v7081, %v7503
      %v7624 = vadd.f32 %v7084, %v7506
      %v7625 = vadd.f32 %v7089, %v7511
      %v7626 = vadd.f32 %v7092, %v7514
      %v7627 = vadd.f32 %v7097, %v7519
      %v7628 = vadd.f32 %v7100, %v7522
      %v7629 = vadd.f32 %v7105, %v7527
      %v7630 = vadd.f32 %v7108, %v7530
      %v7631 = vadd.f32 %v7113, %v7535
      %v7632 = vadd.f32 %v7116, %v7538
      %v7633 = vadd.f32 %v7121, %v7543
      %v7634 = vadd.f32 %v7124, %v7546
      %v7635 = vadd.f32 %v7129, %v7551
      %v7636 = vadd.f32 %v7132, %v7554
      %v7637 = vadd.f32 %v7137, %v7559
      %v7638 = vadd.f32 %v7140, %v7562
      %v7639 = vadd.f32 %v7145, %v7567
      %v7640 = vadd.f32 %v7148, %v7570
      %v7641 = vadd.f32 %v7153, %v7575
      %v7642 = vadd.f32 %v7156, %v7578
      %v7643 = vadd.f32 %v7161, %v7583
      %v7644 = vadd.f32 %v7164, %v7586
      %v7645 = vadd.f32 %v7169, %v7591
      %v7646 = vadd.f32 %v7172, %v7594
      %v7647 = vadd.f32 %v7177, %v7599
      %v7648 = vadd.f32 %v7180, %v7602
      %v7649 = vadd.f32 %v7185, %v7607
      %v7650 = vadd.f32 %v7188, %v7610
      %v7651 = vadd.f32 %v7193, %v7615
      %v7652 = vadd.f32 %v7196, %v7618
      %v7653 = vld [vmem:[%s5596] sm:$0xf]
      %v7654 = vld [vmem:[%s5596 + $0x4] sm:$0xf]
      %v7655 = vld [vmem:[%s5596 + $0xc] sm:$0xf]
      %v7656 = vld [vmem:[%s5596 + $0x10] sm:$0xf]
      %v7657 = vld [vmem:[%s5596 + $0x18] sm:$0xf]
      %v7658 = vld [vmem:[%s5596 + $0x1c] sm:$0xf]
      %v7659 = vld [vmem:[%s5596 + $0x24] sm:$0xf]
      %v7660 = vld [vmem:[%s5596 + $0x28] sm:$0xf]
      %v7661 = vld [vmem:[%s5596 + $0x30] sm:$0xf]
      %v7662 = vld [vmem:[%s5596 + $0x34] sm:$0xf]
      %v7663 = vld [vmem:[%s5596 + $0x3c] sm:$0xf]
      %v7664 = vld [vmem:[%s5596 + $0x40] sm:$0xf]
      %v7665 = vld [vmem:[%s5596 + $0x48] sm:$0xf]
      %v7666 = vld [vmem:[%s5596 + $0x4c] sm:$0xf]
      %v7667 = vld [vmem:[%s5596 + $0x54] sm:$0xf]
      %v7668 = vld [vmem:[%s5596 + $0x58] sm:$0xf]
      %v7669 = vld [vmem:[%s5596 + $0x60] sm:$0xf]
      %v7670 = vld [vmem:[%s5596 + $0x64] sm:$0xf]
      %v7671 = vld [vmem:[%s5596 + $0x6c] sm:$0xf]
      %v7672 = vld [vmem:[%s5596 + $0x70] sm:$0xf]
      %v7673 = vld [vmem:[%s5596 + $0x78] sm:$0xf]
      %v7674 = vld [vmem:[%s5596 + $0x7c] sm:$0xf]
      %v7675 = vld [vmem:[%s5596 + $0x84] sm:$0xf]
      %v7676 = vld [vmem:[%s5596 + $0x88] sm:$0xf]
      %v7677 = vld [vmem:[%s5596 + $0x90] sm:$0xf]
      %v7678 = vld [vmem:[%s5596 + $0x94] sm:$0xf]
      %v7679 = vld [vmem:[%s5596 + $0x9c] sm:$0xf]
      %v7680 = vld [vmem:[%s5596 + $0xa0] sm:$0xf]
      %v7681 = vld [vmem:[%s5596 + $0xa8] sm:$0xf]
      %v7682 = vld [vmem:[%s5596 + $0xac] sm:$0xf]
      %v7683 = vld [vmem:[%s5596 + $0xb4] sm:$0xf]
      %v7684 = vld [vmem:[%s5596 + $0xb8] sm:$0xf]
      %s7685 = scalar_lea.vmem %s2, 12
      %v7686 = vld [vmem:[%s7685] sm:$0xf]
      %v7719 = vunpack.c.l.b16 %v7653
      %v7720 = vunpack.c.l.b16 %v7654
      %v7721 = vunpack.c.l.b16 %v7655
      %v7722 = vunpack.c.l.b16 %v7656
      %v7723 = vunpack.c.l.b16 %v7657
      %v7724 = vunpack.c.l.b16 %v7658
      %v7725 = vunpack.c.l.b16 %v7659
      %v7726 = vunpack.c.l.b16 %v7660
      %v7727 = vunpack.c.l.b16 %v7661
      %v7728 = vunpack.c.l.b16 %v7662
      %v7729 = vunpack.c.l.b16 %v7663
      %v7730 = vunpack.c.l.b16 %v7664
      %v7731 = vunpack.c.l.b16 %v7665
      %v7732 = vunpack.c.l.b16 %v7666
      %v7733 = vunpack.c.l.b16 %v7667
      %v7734 = vunpack.c.l.b16 %v7668
      %v7735 = vunpack.c.l.b16 %v7669
      %v7736 = vunpack.c.l.b16 %v7670
      %v7737 = vunpack.c.l.b16 %v7671
      %v7738 = vunpack.c.l.b16 %v7672
      %v7739 = vunpack.c.l.b16 %v7673
      %v7740 = vunpack.c.l.b16 %v7674
      %v7741 = vunpack.c.l.b16 %v7675
      %v7742 = vunpack.c.l.b16 %v7676
      %v7743 = vunpack.c.l.b16 %v7677
      %v7744 = vunpack.c.l.b16 %v7678
      %v7745 = vunpack.c.l.b16 %v7679
      %v7746 = vunpack.c.l.b16 %v7680
      %v7747 = vunpack.c.l.b16 %v7681
      %v7748 = vunpack.c.l.b16 %v7682
      %v7749 = vunpack.c.l.b16 %v7683
      %v7750 = vunpack.c.l.b16 %v7684
      %v7751 = vpack.c.b16 %v7720, %v7719
      %v7752 = vpack.c.b16 %v7722, %v7721
      %v7753 = vpack.c.b16 %v7724, %v7723
      %v7754 = vpack.c.b16 %v7726, %v7725
      %v7755 = vpack.c.b16 %v7728, %v7727
      %v7756 = vpack.c.b16 %v7730, %v7729
      %v7757 = vpack.c.b16 %v7732, %v7731
      %v7758 = vpack.c.b16 %v7734, %v7733
      %v7759 = vpack.c.b16 %v7736, %v7735
      %v7760 = vpack.c.b16 %v7738, %v7737
      %v7761 = vpack.c.b16 %v7740, %v7739
      %v7762 = vpack.c.b16 %v7742, %v7741
      %v7763 = vpack.c.b16 %v7744, %v7743
      %v7764 = vpack.c.b16 %v7746, %v7745
      %v7765 = vpack.c.b16 %v7748, %v7747
      %v7766 = vpack.c.b16 %v7750, %v7749
      %v7768 = vsel %vm6693, %v7751, 0
      %v7771 = vsel %vm6693, %v7752, 0
      %v7774 = vsel %vm6693, %v7753, 0
      %v7777 = vsel %vm6693, %v7754, 0
      %v7780 = vsel %vm6693, %v7755, 0
      %v7783 = vsel %vm6693, %v7756, 0
      %v7786 = vsel %vm6693, %v7757, 0
      %v7789 = vsel %vm6693, %v7758, 0
      %v7792 = vsel %vm6693, %v7759, 0
      %v7795 = vsel %vm6693, %v7760, 0
      %v7798 = vsel %vm6693, %v7761, 0
      %v7801 = vsel %vm6693, %v7762, 0
      %v7804 = vsel %vm6693, %v7763, 0
      %v7807 = vsel %vm6693, %v7764, 0
      %v7810 = vsel %vm6693, %v7765, 0
      %v7813 = vsel %vm6693, %v7766, 0
      %v7816 = vsel %vm6742, %v7686, 0
      %7818 = vmatprep.subr.bf16.mxu0 0
      %7819 = vmatpush1.bf16.msra.mxu0 %v7816
      %7820 = vmatprep.subr.bf16.mxu0 0
      %7821 = vmatpush1.bf16.msra.mxu0 0
      %7822 = vmatprep.subr.bf16.mxu0 0
      %7823 = vmatpush1.bf16.msra.mxu0 0
      %7824 = vmatprep.subr.bf16.mxu0 0
      %7825 = vmatpush1.bf16.msra.mxu0 0
      %7826 = vmatprep.subr.bf16.mxu0 0
      %7827 = vmatpush1.bf16.msra.mxu0 0
      %7828 = vmatprep.subr.bf16.mxu0 0
      %7829 = vmatpush1.bf16.msra.mxu0 0
      %7830 = vmatprep.subr.bf16.mxu0 0
      %7831 = vmatpush1.bf16.msra.mxu0 0
      %7832 = vmatprep.subr.bf16.mxu0 0
      %7833 = vmatpush1.bf16.msra.mxu0 0
      %7834 = vmatprep.subr.bf16.mxu0 0
      %7835 = vmatpush1.bf16.msra.mxu0 0
      %7836 = vmatprep.subr.bf16.mxu0 0
      %7837 = vmatpush1.bf16.msra.mxu0 0
      %7838 = vmatprep.subr.bf16.mxu0 0
      %7839 = vmatpush1.bf16.msra.mxu0 0
      %7840 = vmatprep.subr.bf16.mxu0 0
      %7841 = vmatpush1.bf16.msra.mxu0 0
      %7842 = vmatprep.subr.bf16.mxu0 0
      %7843 = vmatpush1.bf16.msra.mxu0 0
      %7844 = vmatprep.subr.bf16.mxu0 0
      %7845 = vmatpush1.bf16.msra.mxu0 0
      %7846 = vmatprep.subr.bf16.mxu0 0
      %7847 = vmatpush1.bf16.msra.mxu0 0
      %7848 = vmatprep.subr.bf16.mxu0 0
      %7849 = vmatpush1.bf16.msra.mxu0 0
      %7850 = vmatprep.mubr.bf16.mxu0 0
      %7851 = vmatmul.mubr.bf16.gmra.mrb[0].mxu0 %v7768
      %v7852 = vpop.f32.mrb[0].mxu0
      %v7853 = vadd.f32 0.0, %v7852
      %v7854 = vpop.f32.mrb[0].mxu0
      %v7855 = vpop.f32.mrb[0].mxu0
      %v7856 = vadd.f32 0.0, %v7855
      %v7857 = vpop.f32.mrb[0].mxu0
      %7858 = vmatprep.mubr.bf16.mxu0 0
      %7859 = vmatmul.mubr.bf16.gmra.mrb[0].mxu0 %v7771
      %v7860 = vpop.f32.mrb[0].mxu0
      %v7861 = vadd.f32 0.0, %v7860
      %v7862 = vpop.f32.mrb[0].mxu0
      %v7863 = vpop.f32.mrb[0].mxu0
      %v7864 = vadd.f32 0.0, %v7863
      %v7865 = vpop.f32.mrb[0].mxu0
      %7866 = vmatprep.mubr.bf16.mxu0 0
      %7867 = vmatmul.mubr.bf16.gmra.mrb[0].mxu0 %v7774
      %v7868 = vpop.f32.mrb[0].mxu0
      %v7869 = vadd.f32 0.0, %v7868
      %v7870 = vpop.f32.mrb[0].mxu0
      %v7871 = vpop.f32.mrb[0].mxu0
      %v7872 = vadd.f32 0.0, %v7871
      %v7873 = vpop.f32.mrb[0].mxu0
      %7874 = vmatprep.mubr.bf16.mxu0 0
      %7875 = vmatmul.mubr.bf16.gmra.mrb[0].mxu0 %v7777
      %v7876 = vpop.f32.mrb[0].mxu0
      %v7877 = vadd.f32 0.0, %v7876
      %v7878 = vpop.f32.mrb[0].mxu0
      %v7879 = vpop.f32.mrb[0].mxu0
      %v7880 = vadd.f32 0.0, %v7879
      %v7881 = vpop.f32.mrb[0].mxu0
      %7882 = vmatprep.mubr.bf16.mxu0 0
      %7883 = vmatmul.mubr.bf16.gmra.mrb[0].mxu0 %v7780
      %v7884 = vpop.f32.mrb[0].mxu0
      %v7885 = vadd.f32 0.0, %v7884
      %v7886 = vpop.f32.mrb[0].mxu0
      %v7887 = vpop.f32.mrb[0].mxu0
      %v7888 = vadd.f32 0.0, %v7887
      %v7889 = vpop.f32.mrb[0].mxu0
      %7890 = vmatprep.mubr.bf16.mxu0 0
      %7891 = vmatmul.mubr.bf16.gmra.mrb[0].mxu0 %v7783
      %v7892 = vpop.f32.mrb[0].mxu0
      %v7893 = vadd.f32 0.0, %v7892
      %v7894 = vpop.f32.mrb[0].mxu0
      %v7895 = vpop.f32.mrb[0].mxu0
      %v7896 = vadd.f32 0.0, %v7895
      %v7897 = vpop.f32.mrb[0].mxu0
      %7898 = vmatprep.mubr.bf16.mxu0 0
      %7899 = vmatmul.mubr.bf16.gmra.mrb[0].mxu0 %v7786
      %v7900 = vpop.f32.mrb[0].mxu0
      %v7901 = vadd.f32 0.0, %v7900
      %v7902 = vpop.f32.mrb[0].mxu0
      %v7903 = vpop.f32.mrb[0].mxu0
      %v7904 = vadd.f32 0.0, %v7903
      %v7905 = vpop.f32.mrb[0].mxu0
      %7906 = vmatprep.mubr.bf16.mxu0 0
      %7907 = vmatmul.mubr.bf16.gmra.mrb[0].mxu0 %v7789
      %v7908 = vpop.f32.mrb[0].mxu0
      %v7909 = vadd.f32 0.0, %v7908
      %v7910 = vpop.f32.mrb[0].mxu0
      %v7911 = vpop.f32.mrb[0].mxu0
      %v7912 = vadd.f32 0.0, %v7911
      %v7913 = vpop.f32.mrb[0].mxu0
      %7914 = vmatprep.mubr.bf16.mxu0 0
      %7915 = vmatmul.mubr.bf16.gmra.mrb[0].mxu0 %v7792
      %v7916 = vpop.f32.mrb[0].mxu0
      %v7917 = vadd.f32 0.0, %v7916
      %v7918 = vpop.f32.mrb[0].mxu0
      %v7919 = vpop.f32.mrb[0].mxu0
      %v7920 = vadd.f32 0.0, %v7919
      %v7921 = vpop.f32.mrb[0].mxu0
      %7922 = vmatprep.mubr.bf16.mxu0 0
      %7923 = vmatmul.mubr.bf16.gmra.mrb[0].mxu0 %v7795
      %v7924 = vpop.f32.mrb[0].mxu0
      %v7925 = vadd.f32 0.0, %v7924
      %v7926 = vpop.f32.mrb[0].mxu0
      %v7927 = vpop.f32.mrb[0].mxu0
      %v7928 = vadd.f32 0.0, %v7927
      %v7929 = vpop.f32.mrb[0].mxu0
      %7930 = vmatprep.mubr.bf16.mxu0 0
      %7931 = vmatmul.mubr.bf16.gmra.mrb[0].mxu0 %v7798
      %v7932 = vpop.f32.mrb[0].mxu0
      %v7933 = vadd.f32 0.0, %v7932
      %v7934 = vpop.f32.mrb[0].mxu0
      %v7935 = vpop.f32.mrb[0].mxu0
      %v7936 = vadd.f32 0.0, %v7935
      %v7937 = vpop.f32.mrb[0].mxu0
      %7938 = vmatprep.mubr.bf16.mxu0 0
      %7939 = vmatmul.mubr.bf16.gmra.mrb[0].mxu0 %v7801
      %v7940 = vpop.f32.mrb[0].mxu0
      %v7941 = vadd.f32 0.0, %v7940
      %v7942 = vpop.f32.mrb[0].mxu0
      %v7943 = vpop.f32.mrb[0].mxu0
      %v7944 = vadd.f32 0.0, %v7943
      %v7945 = vpop.f32.mrb[0].mxu0
      %7946 = vmatprep.mubr.bf16.mxu0 0
      %7947 = vmatmul.mubr.bf16.gmra.mrb[0].mxu0 %v7804
      %v7948 = vpop.f32.mrb[0].mxu0
      %v7949 = vadd.f32 0.0, %v7948
      %v7950 = vpop.f32.mrb[0].mxu0
      %v7951 = vpop.f32.mrb[0].mxu0
      %v7952 = vadd.f32 0.0, %v7951
      %v7953 = vpop.f32.mrb[0].mxu0
      %7954 = vmatprep.mubr.bf16.mxu0 0
      %7955 = vmatmul.mubr.bf16.gmra.mrb[0].mxu0 %v7807
      %v7956 = vpop.f32.mrb[0].mxu0
      %v7957 = vadd.f32 0.0, %v7956
      %v7958 = vpop.f32.mrb[0].mxu0
      %v7959 = vpop.f32.mrb[0].mxu0
      %v7960 = vadd.f32 0.0, %v7959
      %v7961 = vpop.f32.mrb[0].mxu0
      %7962 = vmatprep.mubr.bf16.mxu0 0
      %7963 = vmatmul.mubr.bf16.gmra.mrb[0].mxu0 %v7810
      %v7964 = vpop.f32.mrb[0].mxu0
      %v7965 = vadd.f32 0.0, %v7964
      %v7966 = vpop.f32.mrb[0].mxu0
      %v7967 = vpop.f32.mrb[0].mxu0
      %v7968 = vadd.f32 0.0, %v7967
      %v7969 = vpop.f32.mrb[0].mxu0
      %7970 = vmatprep.mubr.bf16.mxu0 0
      %7971 = vmatmul.mubr.bf16.gmra.mrb[0].mxu0 %v7813
      %v7972 = vpop.f32.mrb[0].mxu0
      %v7973 = vadd.f32 0.0, %v7972
      %v7974 = vpop.f32.mrb[0].mxu0
      %v7975 = vpop.f32.mrb[0].mxu0
      %v7976 = vadd.f32 0.0, %v7975
      %v7977 = vpop.f32.mrb[0].mxu0
      %7978 = vdwg.mxu0
      %v7979 = vadd.f32 %v7621, %v7853
      %v7980 = vadd.f32 %v7622, %v7856
      %v7981 = vadd.f32 %v7623, %v7861
      %v7982 = vadd.f32 %v7624, %v7864
      %v7983 = vadd.f32 %v7625, %v7869
      %v7984 = vadd.f32 %v7626, %v7872
      %v7985 = vadd.f32 %v7627, %v7877
      %v7986 = vadd.f32 %v7628, %v7880
      %v7987 = vadd.f32 %v7629, %v7885
      %v7988 = vadd.f32 %v7630, %v7888
      %v7989 = vadd.f32 %v7631, %v7893
      %v7990 = vadd.f32 %v7632, %v7896
      %v7991 = vadd.f32 %v7633, %v7901
      %v7992 = vadd.f32 %v7634, %v7904
      %v7993 = vadd.f32 %v7635, %v7909
      %v7994 = vadd.f32 %v7636, %v7912
      %v7995 = vadd.f32 %v7637, %v7917
      %v7996 = vadd.f32 %v7638, %v7920
      %v7997 = vadd.f32 %v7639, %v7925
      %v7998 = vadd.f32 %v7640, %v7928
      %v7999 = vadd.f32 %v7641, %v7933
      %v8000 = vadd.f32 %v7642, %v7936
      %v8001 = vadd.f32 %v7643, %v7941
      %v8002 = vadd.f32 %v7644, %v7944
      %v8003 = vadd.f32 %v7645, %v7949
      %v8004 = vadd.f32 %v7646, %v7952
      %v8005 = vadd.f32 %v7647, %v7957
      %v8006 = vadd.f32 %v7648, %v7960
      %v8007 = vadd.f32 %v7649, %v7965
      %v8008 = vadd.f32 %v7650, %v7968
      %v8009 = vadd.f32 %v7651, %v7973
      %v8010 = vadd.f32 %v7652, %v7976
      %v8011 = vld [vmem:[%s5596] sm:$0xf]
      %v8012 = vld [vmem:[%s5596 + $0x4] sm:$0xf]
      %v8013 = vld [vmem:[%s5596 + $0x8] sm:$0x1]
      %v8014 = vld [vmem:[%s5596 + $0xc] sm:$0xf]
      %v8015 = vld [vmem:[%s5596 + $0x10] sm:$0xf]
      %v8016 = vld [vmem:[%s5596 + $0x14] sm:$0x1]
      %v8017 = vld [vmem:[%s5596 + $0x18] sm:$0xf]
      %v8018 = vld [vmem:[%s5596 + $0x1c] sm:$0xf]
      %v8019 = vld [vmem:[%s5596 + $0x20] sm:$0x1]
      %v8020 = vld [vmem:[%s5596 + $0x24] sm:$0xf]
      %v8021 = vld [vmem:[%s5596 + $0x28] sm:$0xf]
      %v8022 = vld [vmem:[%s5596 + $0x2c] sm:$0x1]
      %v8023 = vld [vmem:[%s5596 + $0x30] sm:$0xf]
      %v8024 = vld [vmem:[%s5596 + $0x34] sm:$0xf]
      %v8025 = vld [vmem:[%s5596 + $0x38] sm:$0x1]
      %v8026 = vld [vmem:[%s5596 + $0x3c] sm:$0xf]
      %v8027 = vld [vmem:[%s5596 + $0x40] sm:$0xf]
      %v8028 = vld [vmem:[%s5596 + $0x44] sm:$0x1]
      %v8029 = vld [vmem:[%s5596 + $0x48] sm:$0xf]
      %v8030 = vld [vmem:[%s5596 + $0x4c] sm:$0xf]
      %v8031 = vld [vmem:[%s5596 + $0x50] sm:$0x1]
      %v8032 = vld [vmem:[%s5596 + $0x54] sm:$0xf]
      %v8033 = vld [vmem:[%s5596 + $0x58] sm:$0xf]
      %v8034 = vld [vmem:[%s5596 + $0x5c] sm:$0x1]
      %v8035 = vld [vmem:[%s5596 + $0x60] sm:$0xf]
      %v8036 = vld [vmem:[%s5596 + $0x64] sm:$0xf]
      %v8037 = vld [vmem:[%s5596 + $0x68] sm:$0x1]
      %v8038 = vld [vmem:[%s5596 + $0x6c] sm:$0xf]
      %v8039 = vld [vmem:[%s5596 + $0x70] sm:$0xf]
      %v8040 = vld [vmem:[%s5596 + $0x74] sm:$0x1]
      %v8041 = vld [vmem:[%s5596 + $0x78] sm:$0xf]
      %v8042 = vld [vmem:[%s5596 + $0x7c] sm:$0xf]
      %v8043 = vld [vmem:[%s5596 + $0x80] sm:$0x1]
      %v8044 = vld [vmem:[%s5596 + $0x84] sm:$0xf]
      %v8045 = vld [vmem:[%s5596 + $0x88] sm:$0xf]
      %v8046 = vld [vmem:[%s5596 + $0x8c] sm:$0x1]
      %v8047 = vld [vmem:[%s5596 + $0x90] sm:$0xf]
      %v8048 = vld [vmem:[%s5596 + $0x94] sm:$0xf]
      %v8049 = vld [vmem:[%s5596 + $0x98] sm:$0x1]
      %v8050 = vld [vmem:[%s5596 + $0x9c] sm:$0xf]
      %v8051 = vld [vmem:[%s5596 + $0xa0] sm:$0xf]
      %v8052 = vld [vmem:[%s5596 + $0xa4] sm:$0x1]
      %v8053 = vld [vmem:[%s5596 + $0xa8] sm:$0xf]
      %v8054 = vld [vmem:[%s5596 + $0xac] sm:$0xf]
      %v8055 = vld [vmem:[%s5596 + $0xb0] sm:$0x1]
      %v8056 = vld [vmem:[%s5596 + $0xb4] sm:$0xf]
      %v8057 = vld [vmem:[%s5596 + $0xb8] sm:$0xf]
      %v8058 = vld [vmem:[%s5596 + $0xbc] sm:$0x1]
      %v8060 = vshrl.u32 %v8011, 16
      %v8062 = vrot.slane %v8060, 4
      %v8063 = vshll.u32 %v8011, 16
      %v8065 = vrot.slane %v8063, 5
      %v8066 = vor.u32 %v8062, %v8065
      %v8067 = vrot.slane %v8066, 4
      %v8069 = vshll.u32 %v8012, 16
      %v8071 = vrot.slane %v8069, 5
      %v8072 = vsel %vm1032, %v8067, %v8071
      %v8073 = vshrl.u32 %v8012, 16
      %v8075 = vrot.slane %v8073, 4
      %v8076 = vor.u32 %v8075, %v8071
      %v8077 = vrot.slane %v8076, 4
      %v8079 = vshll.u32 %v8013, 16
      %v8081 = vrot.slane %v8079, 5
      %v8082 = vsel %vm1032, %v8077, %v8081
      %v8084 = vshrl.u32 %v8014, 16
      %v8086 = vrot.slane %v8084, 4
      %v8087 = vshll.u32 %v8014, 16
      %v8089 = vrot.slane %v8087, 5
      %v8090 = vor.u32 %v8086, %v8089
      %v8091 = vrot.slane %v8090, 4
      %v8093 = vshll.u32 %v8015, 16
      %v8095 = vrot.slane %v8093, 5
      %v8096 = vsel %vm1032, %v8091, %v8095
      %v8097 = vshrl.u32 %v8015, 16
      %v8099 = vrot.slane %v8097, 4
      %v8100 = vor.u32 %v8099, %v8095
      %v8101 = vrot.slane %v8100, 4
      %v8103 = vshll.u32 %v8016, 16
      %v8105 = vrot.slane %v8103, 5
      %v8106 = vsel %vm1032, %v8101, %v8105
      %v8108 = vshrl.u32 %v8017, 16
      %v8110 = vrot.slane %v8108, 4
      %v8111 = vshll.u32 %v8017, 16
      %v8113 = vrot.slane %v8111, 5
      %v8114 = vor.u32 %v8110, %v8113
      %v8115 = vrot.slane %v8114, 4
      %v8117 = vshll.u32 %v8018, 16
      %v8119 = vrot.slane %v8117, 5
      %v8120 = vsel %vm1032, %v8115, %v8119
      %v8121 = vshrl.u32 %v8018, 16
      %v8123 = vrot.slane %v8121, 4
      %v8124 = vor.u32 %v8123, %v8119
      %v8125 = vrot.slane %v8124, 4
      %v8127 = vshll.u32 %v8019, 16
      %v8129 = vrot.slane %v8127, 5
      %v8130 = vsel %vm1032, %v8125, %v8129
      %v8132 = vshrl.u32 %v8020, 16
      %v8134 = vrot.slane %v8132, 4
      %v8135 = vshll.u32 %v8020, 16
      %v8137 = vrot.slane %v8135, 5
      %v8138 = vor.u32 %v8134, %v8137
      %v8139 = vrot.slane %v8138, 4
      %v8141 = vshll.u32 %v8021, 16
      %v8143 = vrot.slane %v8141, 5
      %v8144 = vsel %vm1032, %v8139, %v8143
      %v8145 = vshrl.u32 %v8021, 16
      %v8147 = vrot.slane %v8145, 4
      %v8148 = vor.u32 %v8147, %v8143
      %v8149 = vrot.slane %v8148, 4
      %v8151 = vshll.u32 %v8022, 16
      %v8153 = vrot.slane %v8151, 5
      %v8154 = vsel %vm1032, %v8149, %v8153
      %v8156 = vshrl.u32 %v8023, 16
      %v8158 = vrot.slane %v8156, 4
      %v8159 = vshll.u32 %v8023, 16
      %v8161 = vrot.slane %v8159, 5
      %v8162 = vor.u32 %v8158, %v8161
      %v8163 = vrot.slane %v8162, 4
      %v8165 = vshll.u32 %v8024, 16
      %v8167 = vrot.slane %v8165, 5
      %v8168 = vsel %vm1032, %v8163, %v8167
      %v8169 = vshrl.u32 %v8024, 16
      %v8171 = vrot.slane %v8169, 4
      %v8172 = vor.u32 %v8171, %v8167
      %v8173 = vrot.slane %v8172, 4
      %v8175 = vshll.u32 %v8025, 16
      %v8177 = vrot.slane %v8175, 5
      %v8178 = vsel %vm1032, %v8173, %v8177
      %v8180 = vshrl.u32 %v8026, 16
      %v8182 = vrot.slane %v8180, 4
      %v8183 = vshll.u32 %v8026, 16
      %v8185 = vrot.slane %v8183, 5
      %v8186 = vor.u32 %v8182, %v8185
      %v8187 = vrot.slane %v8186, 4
      %v8189 = vshll.u32 %v8027, 16
      %v8191 = vrot.slane %v8189, 5
      %v8192 = vsel %vm1032, %v8187, %v8191
      %v8193 = vshrl.u32 %v8027, 16
      %v8195 = vrot.slane %v8193, 4
      %v8196 = vor.u32 %v8195, %v8191
      %v8197 = vrot.slane %v8196, 4
      %v8199 = vshll.u32 %v8028, 16
      %v8201 = vrot.slane %v8199, 5
      %v8202 = vsel %vm1032, %v8197, %v8201
      %v8204 = vshrl.u32 %v8029, 16
      %v8206 = vrot.slane %v8204, 4
      %v8207 = vshll.u32 %v8029, 16
      %v8209 = vrot.slane %v8207, 5
      %v8210 = vor.u32 %v8206, %v8209
      %v8211 = vrot.slane %v8210, 4
      %v8213 = vshll.u32 %v8030, 16
      %v8215 = vrot.slane %v8213, 5
      %v8216 = vsel %vm1032, %v8211, %v8215
      %v8217 = vshrl.u32 %v8030, 16
      %v8219 = vrot.slane %v8217, 4
      %v8220 = vor.u32 %v8219, %v8215
      %v8221 = vrot.slane %v8220, 4
      %v8223 = vshll.u32 %v8031, 16
      %v8225 = vrot.slane %v8223, 5
      %v8226 = vsel %vm1032, %v8221, %v8225
      %v8228 = vshrl.u32 %v8032, 16
      %v8230 = vrot.slane %v8228, 4
      %v8231 = vshll.u32 %v8032, 16
      %v8233 = vrot.slane %v8231, 5
      %v8234 = vor.u32 %v8230, %v8233
      %v8235 = vrot.slane %v8234, 4
      %v8237 = vshll.u32 %v8033, 16
      %v8239 = vrot.slane %v8237, 5
      %v8240 = vsel %vm1032, %v8235, %v8239
      %v8241 = vshrl.u32 %v8033, 16
      %v8243 = vrot.slane %v8241, 4
      %v8244 = vor.u32 %v8243, %v8239
      %v8245 = vrot.slane %v8244, 4
      %v8247 = vshll.u32 %v8034, 16
      %v8249 = vrot.slane %v8247, 5
      %v8250 = vsel %vm1032, %v8245, %v8249
      %v8252 = vshrl.u32 %v8035, 16
      %v8254 = vrot.slane %v8252, 4
      %v8255 = vshll.u32 %v8035, 16
      %v8257 = vrot.slane %v8255, 5
      %v8258 = vor.u32 %v8254, %v8257
      %v8259 = vrot.slane %v8258, 4
      %v8261 = vshll.u32 %v8036, 16
      %v8263 = vrot.slane %v8261, 5
      %v8264 = vsel %vm1032, %v8259, %v8263
      %v8265 = vshrl.u32 %v8036, 16
      %v8267 = vrot.slane %v8265, 4
      %v8268 = vor.u32 %v8267, %v8263
      %v8269 = vrot.slane %v8268, 4
      %v8271 = vshll.u32 %v8037, 16
      %v8273 = vrot.slane %v8271, 5
      %v8274 = vsel %vm1032, %v8269, %v8273
      %v8276 = vshrl.u32 %v8038, 16
      %v8278 = vrot.slane %v8276, 4
      %v8279 = vshll.u32 %v8038, 16
      %v8281 = vrot.slane %v8279, 5
      %v8282 = vor.u32 %v8278, %v8281
      %v8283 = vrot.slane %v8282, 4
      %v8285 = vshll.u32 %v8039, 16
      %v8287 = vrot.slane %v8285, 5
      %v8288 = vsel %vm1032, %v8283, %v8287
      %v8289 = vshrl.u32 %v8039, 16
      %v8291 = vrot.slane %v8289, 4
      %v8292 = vor.u32 %v8291, %v8287
      %v8293 = vrot.slane %v8292, 4
      %v8295 = vshll.u32 %v8040, 16
      %v8297 = vrot.slane %v8295, 5
      %v8298 = vsel %vm1032, %v8293, %v8297
      %v8300 = vshrl.u32 %v8041, 16
      %v8302 = vrot.slane %v8300, 4
      %v8303 = vshll.u32 %v8041, 16
      %v8305 = vrot.slane %v8303, 5
      %v8306 = vor.u32 %v8302, %v8305
      %v8307 = vrot.slane %v8306, 4
      %v8309 = vshll.u32 %v8042, 16
      %v8311 = vrot.slane %v8309, 5
      %v8312 = vsel %vm1032, %v8307, %v8311
      %v8313 = vshrl.u32 %v8042, 16
      %v8315 = vrot.slane %v8313, 4
      %v8316 = vor.u32 %v8315, %v8311
      %v8317 = vrot.slane %v8316, 4
      %v8319 = vshll.u32 %v8043, 16
      %v8321 = vrot.slane %v8319, 5
      %v8322 = vsel %vm1032, %v8317, %v8321
      %v8324 = vshrl.u32 %v8044, 16
      %v8326 = vrot.slane %v8324, 4
      %v8327 = vshll.u32 %v8044, 16
      %v8329 = vrot.slane %v8327, 5
      %v8330 = vor.u32 %v8326, %v8329
      %v8331 = vrot.slane %v8330, 4
      %v8333 = vshll.u32 %v8045, 16
      %v8335 = vrot.slane %v8333, 5
      %v8336 = vsel %vm1032, %v8331, %v8335
      %v8337 = vshrl.u32 %v8045, 16
      %v8339 = vrot.slane %v8337, 4
      %v8340 = vor.u32 %v8339, %v8335
      %v8341 = vrot.slane %v8340, 4
      %v8343 = vshll.u32 %v8046, 16
      %v8345 = vrot.slane %v8343, 5
      %v8346 = vsel %vm1032, %v8341, %v8345
      %v8348 = vshrl.u32 %v8047, 16
      %v8350 = vrot.slane %v8348, 4
      %v8351 = vshll.u32 %v8047, 16
      %v8353 = vrot.slane %v8351, 5
      %v8354 = vor.u32 %v8350, %v8353
      %v8355 = vrot.slane %v8354, 4
      %v8357 = vshll.u32 %v8048, 16
      %v8359 = vrot.slane %v8357, 5
      %v8360 = vsel %vm1032, %v8355, %v8359
      %v8361 = vshrl.u32 %v8048, 16
      %v8363 = vrot.slane %v8361, 4
      %v8364 = vor.u32 %v8363, %v8359
      %v8365 = vrot.slane %v8364, 4
      %v8367 = vshll.u32 %v8049, 16
      %v8369 = vrot.slane %v8367, 5
      %v8370 = vsel %vm1032, %v8365, %v8369
      %v8372 = vshrl.u32 %v8050, 16
      %v8374 = vrot.slane %v8372, 4
      %v8375 = vshll.u32 %v8050, 16
      %v8377 = vrot.slane %v8375, 5
      %v8378 = vor.u32 %v8374, %v8377
      %v8379 = vrot.slane %v8378, 4
      %v8381 = vshll.u32 %v8051, 16
      %v8383 = vrot.slane %v8381, 5
      %v8384 = vsel %vm1032, %v8379, %v8383
      %v8385 = vshrl.u32 %v8051, 16
      %v8387 = vrot.slane %v8385, 4
      %v8388 = vor.u32 %v8387, %v8383
      %v8389 = vrot.slane %v8388, 4
      %v8391 = vshll.u32 %v8052, 16
      %v8393 = vrot.slane %v8391, 5
      %v8394 = vsel %vm1032, %v8389, %v8393
      %v8396 = vshrl.u32 %v8053, 16
      %v8398 = vrot.slane %v8396, 4
      %v8399 = vshll.u32 %v8053, 16
      %v8401 = vrot.slane %v8399, 5
      %v8402 = vor.u32 %v8398, %v8401
      %v8403 = vrot.slane %v8402, 4
      %v8405 = vshll.u32 %v8054, 16
      %v8407 = vrot.slane %v8405, 5
      %v8408 = vsel %vm1032, %v8403, %v8407
      %v8409 = vshrl.u32 %v8054, 16
      %v8411 = vrot.slane %v8409, 4
      %v8412 = vor.u32 %v8411, %v8407
      %v8413 = vrot.slane %v8412, 4
      %v8415 = vshll.u32 %v8055, 16
      %v8417 = vrot.slane %v8415, 5
      %v8418 = vsel %vm1032, %v8413, %v8417
      %v8420 = vshrl.u32 %v8056, 16
      %v8422 = vrot.slane %v8420, 4
      %v8423 = vshll.u32 %v8056, 16
      %v8425 = vrot.slane %v8423, 5
      %v8426 = vor.u32 %v8422, %v8425
      %v8427 = vrot.slane %v8426, 4
      %v8429 = vshll.u32 %v8057, 16
      %v8431 = vrot.slane %v8429, 5
      %v8432 = vsel %vm1032, %v8427, %v8431
      %v8433 = vshrl.u32 %v8057, 16
      %v8435 = vrot.slane %v8433, 4
      %v8436 = vor.u32 %v8435, %v8431
      %v8437 = vrot.slane %v8436, 4
      %v8439 = vshll.u32 %v8058, 16
      %v8441 = vrot.slane %v8439, 5
      %v8442 = vsel %vm1032, %v8437, %v8441
      %s8443 = scalar_lea.vmem %s2, 16
      %v8444 = vld [vmem:[%s8443] sm:$0xf]
      %v8445 = vunpack.c.l.b16 %v8072
      %v8446 = vunpack.c.l.b16 %v8082
      %v8447 = vunpack.c.l.b16 %v8096
      %v8448 = vunpack.c.l.b16 %v8106
      %v8449 = vunpack.c.l.b16 %v8120
      %v8450 = vunpack.c.l.b16 %v8130
      %v8451 = vunpack.c.l.b16 %v8144
      %v8452 = vunpack.c.l.b16 %v8154
      %v8453 = vunpack.c.l.b16 %v8168
      %v8454 = vunpack.c.l.b16 %v8178
      %v8455 = vunpack.c.l.b16 %v8192
      %v8456 = vunpack.c.l.b16 %v8202
      %v8457 = vunpack.c.l.b16 %v8216
      %v8458 = vunpack.c.l.b16 %v8226
      %v8459 = vunpack.c.l.b16 %v8240
      %v8460 = vunpack.c.l.b16 %v8250
      %v8461 = vunpack.c.l.b16 %v8264
      %v8462 = vunpack.c.l.b16 %v8274
      %v8463 = vunpack.c.l.b16 %v8288
      %v8464 = vunpack.c.l.b16 %v8298
      %v8465 = vunpack.c.l.b16 %v8312
      %v8466 = vunpack.c.l.b16 %v8322
      %v8467 = vunpack.c.l.b16 %v8336
      %v8468 = vunpack.c.l.b16 %v8346
      %v8469 = vunpack.c.l.b16 %v8360
      %v8470 = vunpack.c.l.b16 %v8370
      %v8471 = vunpack.c.l.b16 %v8384
      %v8472 = vunpack.c.l.b16 %v8394
      %v8473 = vunpack.c.l.b16 %v8408
      %v8474 = vunpack.c.l.b16 %v8418
      %v8475 = vunpack.c.l.b16 %v8432
      %v8476 = vunpack.c.l.b16 %v8442
      %v8477 = vpack.c.b16 %v8446, %v8445
      %v8478 = vpack.c.b16 %v8448, %v8447
      %v8479 = vpack.c.b16 %v8450, %v8449
      %v8480 = vpack.c.b16 %v8452, %v8451
      %v8481 = vpack.c.b16 %v8454, %v8453
      %v8482 = vpack.c.b16 %v8456, %v8455
      %v8483 = vpack.c.b16 %v8458, %v8457
      %v8484 = vpack.c.b16 %v8460, %v8459
      %v8485 = vpack.c.b16 %v8462, %v8461
      %v8486 = vpack.c.b16 %v8464, %v8463
      %v8487 = vpack.c.b16 %v8466, %v8465
      %v8488 = vpack.c.b16 %v8468, %v8467
      %v8489 = vpack.c.b16 %v8470, %v8469
      %v8490 = vpack.c.b16 %v8472, %v8471
      %v8491 = vpack.c.b16 %v8474, %v8473
      %v8492 = vpack.c.b16 %v8476, %v8475
      %v8494 = vsel %vm6693, %v8477, 0
      %v8497 = vsel %vm6693, %v8478, 0
      %v8500 = vsel %vm6693, %v8479, 0
      %v8503 = vsel %vm6693, %v8480, 0
      %v8506 = vsel %vm6693, %v8481, 0
      %v8509 = vsel %vm6693, %v8482, 0
      %v8512 = vsel %vm6693, %v8483, 0
      %v8515 = vsel %vm6693, %v8484, 0
      %v8518 = vsel %vm6693, %v8485, 0
      %v8521 = vsel %vm6693, %v8486, 0
      %v8524 = vsel %vm6693, %v8487, 0
      %v8527 = vsel %vm6693, %v8488, 0
      %v8530 = vsel %vm6693, %v8489, 0
      %v8533 = vsel %vm6693, %v8490, 0
      %v8536 = vsel %vm6693, %v8491, 0
      %v8539 = vsel %vm6693, %v8492, 0
      %v8542 = vsel %vm6742, %v8444, 0
      %8544 = vmatprep.subr.bf16.mxu0 0
      %8545 = vmatpush1.bf16.msra.mxu0 %v8542
      %8546 = vmatprep.subr.bf16.mxu0 0
      %8547 = vmatpush1.bf16.msra.mxu0 0
      %8548 = vmatprep.subr.bf16.mxu0 0
      %8549 = vmatpush1.bf16.msra.mxu0 0
      %8550 = vmatprep.subr.bf16.mxu0 0
      %8551 = vmatpush1.bf16.msra.mxu0 0
      %8552 = vmatprep.subr.bf16.mxu0 0
      %8553 = vmatpush1.bf16.msra.mxu0 0
      %8554 = vmatprep.subr.bf16.mxu0 0
      %8555 = vmatpush1.bf16.msra.mxu0 0
      %8556 = vmatprep.subr.bf16.mxu0 0
      %8557 = vmatpush1.bf16.msra.mxu0 0
      %8558 = vmatprep.subr.bf16.mxu0 0
      %8559 = vmatpush1.bf16.msra.mxu0 0
      %8560 = vmatprep.subr.bf16.mxu0 0
      %8561 = vmatpush1.bf16.msra.mxu0 0
      %8562 = vmatprep.subr.bf16.mxu0 0
      %8563 = vmatpush1.bf16.msra.mxu0 0
      %8564 = vmatprep.subr.bf16.mxu0 0
      %8565 = vmatpush1.bf16.msra.mxu0 0
      %8566 = vmatprep.subr.bf16.mxu0 0
      %8567 = vmatpush1.bf16.msra.mxu0 0
      %8568 = vmatprep.subr.bf16.mxu0 0
      %8569 = vmatpush1.bf16.msra.mxu0 0
      %8570 = vmatprep.subr.bf16.mxu0 0
      %8571 = vmatpush1.bf16.msra.mxu0 0
      %8572 = vmatprep.subr.bf16.mxu0 0
      %8573 = vmatpush1.bf16.msra.mxu0 0
      %8574 = vmatprep.subr.bf16.mxu0 0
      %8575 = vmatpush1.bf16.msra.mxu0 0
      %8576 = vmatprep.mubr.bf16.mxu0 0
      %8577 = vmatmul.mubr.bf16.gmra.mrb[0].mxu0 %v8494
      %v8578 = vpop.f32.mrb[0].mxu0
      %v8579 = vadd.f32 0.0, %v8578
      %v8580 = vpop.f32.mrb[0].mxu0
      %v8581 = vpop.f32.mrb[0].mxu0
      %v8582 = vadd.f32 0.0, %v8581
      %v8583 = vpop.f32.mrb[0].mxu0
      %8584 = vmatprep.mubr.bf16.mxu0 0
      %8585 = vmatmul.mubr.bf16.gmra.mrb[0].mxu0 %v8497
      %v8586 = vpop.f32.mrb[0].mxu0
      %v8587 = vadd.f32 0.0, %v8586
      %v8588 = vpop.f32.mrb[0].mxu0
      %v8589 = vpop.f32.mrb[0].mxu0
      %v8590 = vadd.f32 0.0, %v8589
      %v8591 = vpop.f32.mrb[0].mxu0
      %8592 = vmatprep.mubr.bf16.mxu0 0
      %8593 = vmatmul.mubr.bf16.gmra.mrb[0].mxu0 %v8500
      %v8594 = vpop.f32.mrb[0].mxu0
      %v8595 = vadd.f32 0.0, %v8594
      %v8596 = vpop.f32.mrb[0].mxu0
      %v8597 = vpop.f32.mrb[0].mxu0
      %v8598 = vadd.f32 0.0, %v8597
      %v8599 = vpop.f32.mrb[0].mxu0
      %8600 = vmatprep.mubr.bf16.mxu0 0
      %8601 = vmatmul.mubr.bf16.gmra.mrb[0].mxu0 %v8503
      %v8602 = vpop.f32.mrb[0].mxu0
      %v8603 = vadd.f32 0.0, %v8602
      %v8604 = vpop.f32.mrb[0].mxu0
      %v8605 = vpop.f32.mrb[0].mxu0
      %v8606 = vadd.f32 0.0, %v8605
      %v8607 = vpop.f32.mrb[0].mxu0
      %8608 = vmatprep.mubr.bf16.mxu0 0
      %8609 = vmatmul.mubr.bf16.gmra.mrb[0].mxu0 %v8506
      %v8610 = vpop.f32.mrb[0].mxu0
      %v8611 = vadd.f32 0.0, %v8610
      %v8612 = vpop.f32.mrb[0].mxu0
      %v8613 = vpop.f32.mrb[0].mxu0
      %v8614 = vadd.f32 0.0, %v8613
      %v8615 = vpop.f32.mrb[0].mxu0
      %8616 = vmatprep.mubr.bf16.mxu0 0
      %8617 = vmatmul.mubr.bf16.gmra.mrb[0].mxu0 %v8509
      %v8618 = vpop.f32.mrb[0].mxu0
      %v8619 = vadd.f32 0.0, %v8618
      %v8620 = vpop.f32.mrb[0].mxu0
      %v8621 = vpop.f32.mrb[0].mxu0
      %v8622 = vadd.f32 0.0, %v8621
      %v8623 = vpop.f32.mrb[0].mxu0
      %8624 = vmatprep.mubr.bf16.mxu0 0
      %8625 = vmatmul.mubr.bf16.gmra.mrb[0].mxu0 %v8512
      %v8626 = vpop.f32.mrb[0].mxu0
      %v8627 = vadd.f32 0.0, %v8626
      %v8628 = vpop.f32.mrb[0].mxu0
      %v8629 = vpop.f32.mrb[0].mxu0
      %v8630 = vadd.f32 0.0, %v8629
      %v8631 = vpop.f32.mrb[0].mxu0
      %8632 = vmatprep.mubr.bf16.mxu0 0
      %8633 = vmatmul.mubr.bf16.gmra.mrb[0].mxu0 %v8515
      %v8634 = vpop.f32.mrb[0].mxu0
      %v8635 = vadd.f32 0.0, %v8634
      %v8636 = vpop.f32.mrb[0].mxu0
      %v8637 = vpop.f32.mrb[0].mxu0
      %v8638 = vadd.f32 0.0, %v8637
      %v8639 = vpop.f32.mrb[0].mxu0
      %8640 = vmatprep.mubr.bf16.mxu0 0
      %8641 = vmatmul.mubr.bf16.gmra.mrb[0].mxu0 %v8518
      %v8642 = vpop.f32.mrb[0].mxu0
      %v8643 = vadd.f32 0.0, %v8642
      %v8644 = vpop.f32.mrb[0].mxu0
      %v8645 = vpop.f32.mrb[0].mxu0
      %v8646 = vadd.f32 0.0, %v8645
      %v8647 = vpop.f32.mrb[0].mxu0
      %8648 = vmatprep.mubr.bf16.mxu0 0
      %8649 = vmatmul.mubr.bf16.gmra.mrb[0].mxu0 %v8521
      %v8650 = vpop.f32.mrb[0].mxu0
      %v8651 = vadd.f32 0.0, %v8650
      %v8652 = vpop.f32.mrb[0].mxu0
      %v8653 = vpop.f32.mrb[0].mxu0
      %v8654 = vadd.f32 0.0, %v8653
      %v8655 = vpop.f32.mrb[0].mxu0
      %8656 = vmatprep.mubr.bf16.mxu0 0
      %8657 = vmatmul.mubr.bf16.gmra.mrb[0].mxu0 %v8524
      %v8658 = vpop.f32.mrb[0].mxu0
      %v8659 = vadd.f32 0.0, %v8658
      %v8660 = vpop.f32.mrb[0].mxu0
      %v8661 = vpop.f32.mrb[0].mxu0
      %v8662 = vadd.f32 0.0, %v8661
      %v8663 = vpop.f32.mrb[0].mxu0
      %8664 = vmatprep.mubr.bf16.mxu0 0
      %8665 = vmatmul.mubr.bf16.gmra.mrb[0].mxu0 %v8527
      %v8666 = vpop.f32.mrb[0].mxu0
      %v8667 = vadd.f32 0.0, %v8666
      %v8668 = vpop.f32.mrb[0].mxu0
      %v8669 = vpop.f32.mrb[0].mxu0
      %v8670 = vadd.f32 0.0, %v8669
      %v8671 = vpop.f32.mrb[0].mxu0
      %8672 = vmatprep.mubr.bf16.mxu0 0
      %8673 = vmatmul.mubr.bf16.gmra.mrb[0].mxu0 %v8530
      %v8674 = vpop.f32.mrb[0].mxu0
      %v8675 = vadd.f32 0.0, %v8674
      %v8676 = vpop.f32.mrb[0].mxu0
      %v8677 = vpop.f32.mrb[0].mxu0
      %v8678 = vadd.f32 0.0, %v8677
      %v8679 = vpop.f32.mrb[0].mxu0
      %8680 = vmatprep.mubr.bf16.mxu0 0
      %8681 = vmatmul.mubr.bf16.gmra.mrb[0].mxu0 %v8533
      %v8682 = vpop.f32.mrb[0].mxu0
      %v8683 = vadd.f32 0.0, %v8682
      %v8684 = vpop.f32.mrb[0].mxu0
      %v8685 = vpop.f32.mrb[0].mxu0
      %v8686 = vadd.f32 0.0, %v8685
      %v8687 = vpop.f32.mrb[0].mxu0
      %8688 = vmatprep.mubr.bf16.mxu0 0
      %8689 = vmatmul.mubr.bf16.gmra.mrb[0].mxu0 %v8536
      %v8690 = vpop.f32.mrb[0].mxu0
      %v8691 = vadd.f32 0.0, %v8690
      %v8692 = vpop.f32.mrb[0].mxu0
      %v8693 = vpop.f32.mrb[0].mxu0
      %v8694 = vadd.f32 0.0, %v8693
      %v8695 = vpop.f32.mrb[0].mxu0
      %8696 = vmatprep.mubr.bf16.mxu0 0
      %8697 = vmatmul.mubr.bf16.gmra.mrb[0].mxu0 %v8539
      %v8698 = vpop.f32.mrb[0].mxu0
      %v8699 = vadd.f32 0.0, %v8698
      %v8700 = vpop.f32.mrb[0].mxu0
      %v8701 = vpop.f32.mrb[0].mxu0
      %v8702 = vadd.f32 0.0, %v8701
      %v8703 = vpop.f32.mrb[0].mxu0
      %8704 = vdwg.mxu0
      %v8705 = vadd.f32 %v7979, %v8579
      %v8706 = vadd.f32 %v7980, %v8582
      %v8707 = vadd.f32 %v7981, %v8587
      %v8708 = vadd.f32 %v7982, %v8590
      %v8709 = vadd.f32 %v7983, %v8595
      %v8710 = vadd.f32 %v7984, %v8598
      %v8711 = vadd.f32 %v7985, %v8603
      %v8712 = vadd.f32 %v7986, %v8606
      %v8713 = vadd.f32 %v7987, %v8611
      %v8714 = vadd.f32 %v7988, %v8614
      %v8715 = vadd.f32 %v7989, %v8619
      %v8716 = vadd.f32 %v7990, %v8622
      %v8717 = vadd.f32 %v7991, %v8627
      %v8718 = vadd.f32 %v7992, %v8630
      %v8719 = vadd.f32 %v7993, %v8635
      %v8720 = vadd.f32 %v7994, %v8638
      %v8721 = vadd.f32 %v7995, %v8643
      %v8722 = vadd.f32 %v7996, %v8646
      %v8723 = vadd.f32 %v7997, %v8651
      %v8724 = vadd.f32 %v7998, %v8654
      %v8725 = vadd.f32 %v7999, %v8659
      %v8726 = vadd.f32 %v8000, %v8662
      %v8727 = vadd.f32 %v8001, %v8667
      %v8728 = vadd.f32 %v8002, %v8670
      %v8729 = vadd.f32 %v8003, %v8675
      %v8730 = vadd.f32 %v8004, %v8678
      %v8731 = vadd.f32 %v8005, %v8683
      %v8732 = vadd.f32 %v8006, %v8686
      %v8733 = vadd.f32 %v8007, %v8691
      %v8734 = vadd.f32 %v8008, %v8694
      %v8735 = vadd.f32 %v8009, %v8699
      %v8736 = vadd.f32 %v8010, %v8702
      %v8737 = vld [vmem:[%s5596] sm:$0xe]
      %v8738 = vld [vmem:[%s5596 + $0xc] sm:$0xe]
      %v8739 = vld [vmem:[%s5596 + $0x18] sm:$0xe]
      %v8740 = vld [vmem:[%s5596 + $0x24] sm:$0xe]
      %v8741 = vld [vmem:[%s5596 + $0x30] sm:$0xe]
      %v8742 = vld [vmem:[%s5596 + $0x3c] sm:$0xe]
      %v8743 = vld [vmem:[%s5596 + $0x48] sm:$0xe]
      %v8744 = vld [vmem:[%s5596 + $0x54] sm:$0xe]
      %v8745 = vld [vmem:[%s5596 + $0x60] sm:$0xe]
      %v8746 = vld [vmem:[%s5596 + $0x6c] sm:$0xe]
      %v8747 = vld [vmem:[%s5596 + $0x78] sm:$0xe]
      %v8748 = vld [vmem:[%s5596 + $0x84] sm:$0xe]
      %v8749 = vld [vmem:[%s5596 + $0x90] sm:$0xe]
      %v8750 = vld [vmem:[%s5596 + $0x9c] sm:$0xe]
      %v8751 = vld [vmem:[%s5596 + $0xa8] sm:$0xe]
      %v8752 = vld [vmem:[%s5596 + $0xb4] sm:$0xe]
      %v8801 = vrot.slane %v8737, 5
      %v8802 = vrot.slane %v8801, 4
      %v8803 = vrot.slane %v8012, 5
      %v8804 = vsel %vm2023, %v8802, %v8803
      %v8805 = vrot.slane %v8803, 4
      %v8806 = vrot.slane %v8013, 5
      %v8807 = vsel %vm2023, %v8805, %v8806
      %v8808 = vrot.slane %v8738, 5
      %v8809 = vrot.slane %v8808, 4
      %v8810 = vrot.slane %v8015, 5
      %v8811 = vsel %vm2023, %v8809, %v8810
      %v8812 = vrot.slane %v8810, 4
      %v8813 = vrot.slane %v8016, 5
      %v8814 = vsel %vm2023, %v8812, %v8813
      %v8815 = vrot.slane %v8739, 5
      %v8816 = vrot.slane %v8815, 4
      %v8817 = vrot.slane %v8018, 5
      %v8818 = vsel %vm2023, %v8816, %v8817
      %v8819 = vrot.slane %v8817, 4
      %v8820 = vrot.slane %v8019, 5
      %v8821 = vsel %vm2023, %v8819, %v8820
      %v8822 = vrot.slane %v8740, 5
      %v8823 = vrot.slane %v8822, 4
      %v8824 = vrot.slane %v8021, 5
      %v8825 = vsel %vm2023, %v8823, %v8824
      %v8826 = vrot.slane %v8824, 4
      %v8827 = vrot.slane %v8022, 5
      %v8828 = vsel %vm2023, %v8826, %v8827
      %v8829 = vrot.slane %v8741, 5
      %v8830 = vrot.slane %v8829, 4
      %v8831 = vrot.slane %v8024, 5
      %v8832 = vsel %vm2023, %v8830, %v8831
      %v8833 = vrot.slane %v8831, 4
      %v8834 = vrot.slane %v8025, 5
      %v8835 = vsel %vm2023, %v8833, %v8834
      %v8836 = vrot.slane %v8742, 5
      %v8837 = vrot.slane %v8836, 4
      %v8838 = vrot.slane %v8027, 5
      %v8839 = vsel %vm2023, %v8837, %v8838
      %v8840 = vrot.slane %v8838, 4
      %v8841 = vrot.slane %v8028, 5
      %v8842 = vsel %vm2023, %v8840, %v8841
      %v8843 = vrot.slane %v8743, 5
      %v8844 = vrot.slane %v8843, 4
      %v8845 = vrot.slane %v8030, 5
      %v8846 = vsel %vm2023, %v8844, %v8845
      %v8847 = vrot.slane %v8845, 4
      %v8848 = vrot.slane %v8031, 5
      %v8849 = vsel %vm2023, %v8847, %v8848
      %v8850 = vrot.slane %v8744, 5
      %v8851 = vrot.slane %v8850, 4
      %v8852 = vrot.slane %v8033, 5
      %v8853 = vsel %vm2023, %v8851, %v8852
      %v8854 = vrot.slane %v8852, 4
      %v8855 = vrot.slane %v8034, 5
      %v8856 = vsel %vm2023, %v8854, %v8855
      %v8857 = vrot.slane %v8745, 5
      %v8858 = vrot.slane %v8857, 4
      %v8859 = vrot.slane %v8036, 5
      %v8860 = vsel %vm2023, %v8858, %v8859
      %v8861 = vrot.slane %v8859, 4
      %v8862 = vrot.slane %v8037, 5
      %v8863 = vsel %vm2023, %v8861, %v8862
      %v8864 = vrot.slane %v8746, 5
      %v8865 = vrot.slane %v8864, 4
      %v8866 = vrot.slane %v8039, 5
      %v8867 = vsel %vm2023, %v8865, %v8866
      %v8868 = vrot.slane %v8866, 4
      %v8869 = vrot.slane %v8040, 5
      %v8870 = vsel %vm2023, %v8868, %v8869
      %v8871 = vrot.slane %v8747, 5
      %v8872 = vrot.slane %v8871, 4
      %v8873 = vrot.slane %v8042, 5
      %v8874 = vsel %vm2023, %v8872, %v8873
      %v8875 = vrot.slane %v8873, 4
      %v8876 = vrot.slane %v8043, 5
      %v8877 = vsel %vm2023, %v8875, %v8876
      %v8878 = vrot.slane %v8748, 5
      %v8879 = vrot.slane %v8878, 4
      %v8880 = vrot.slane %v8045, 5
      %v8881 = vsel %vm2023, %v8879, %v8880
      %v8882 = vrot.slane %v8880, 4
      %v8883 = vrot.slane %v8046, 5
      %v8884 = vsel %vm2023, %v8882, %v8883
      %v8885 = vrot.slane %v8749, 5
      %v8886 = vrot.slane %v8885, 4
      %v8887 = vrot.slane %v8048, 5
      %v8888 = vsel %vm2023, %v8886, %v8887
      %v8889 = vrot.slane %v8887, 4
      %v8890 = vrot.slane %v8049, 5
      %v8891 = vsel %vm2023, %v8889, %v8890
      %v8892 = vrot.slane %v8750, 5
      %v8893 = vrot.slane %v8892, 4
      %v8894 = vrot.slane %v8051, 5
      %v8895 = vsel %vm2023, %v8893, %v8894
      %v8896 = vrot.slane %v8894, 4
      %v8897 = vrot.slane %v8052, 5
      %v8898 = vsel %vm2023, %v8896, %v8897
      %v8899 = vrot.slane %v8751, 5
      %v8900 = vrot.slane %v8899, 4
      %v8901 = vrot.slane %v8054, 5
      %v8902 = vsel %vm2023, %v8900, %v8901
      %v8903 = vrot.slane %v8901, 4
      %v8904 = vrot.slane %v8055, 5
      %v8905 = vsel %vm2023, %v8903, %v8904
      %v8906 = vrot.slane %v8752, 5
      %v8907 = vrot.slane %v8906, 4
      %v8908 = vrot.slane %v8057, 5
      %v8909 = vsel %vm2023, %v8907, %v8908
      %v8910 = vrot.slane %v8908, 4
      %v8911 = vrot.slane %v8058, 5
      %v8912 = vsel %vm2023, %v8910, %v8911
      %s8913 = scalar_lea.vmem %s2, 20
      %v8914 = vld [vmem:[%s8913] sm:$0xf]
      %v8915 = vunpack.c.l.b16 %v8804
      %v8916 = vunpack.c.l.b16 %v8807
      %v8917 = vunpack.c.l.b16 %v8811
      %v8918 = vunpack.c.l.b16 %v8814
      %v8919 = vunpack.c.l.b16 %v8818
      %v8920 = vunpack.c.l.b16 %v8821
      %v8921 = vunpack.c.l.b16 %v8825
      %v8922 = vunpack.c.l.b16 %v8828
      %v8923 = vunpack.c.l.b16 %v8832
      %v8924 = vunpack.c.l.b16 %v8835
      %v8925 = vunpack.c.l.b16 %v8839
      %v8926 = vunpack.c.l.b16 %v8842
      %v8927 = vunpack.c.l.b16 %v8846
      %v8928 = vunpack.c.l.b16 %v8849
      %v8929 = vunpack.c.l.b16 %v8853
      %v8930 = vunpack.c.l.b16 %v8856
      %v8931 = vunpack.c.l.b16 %v8860
      %v8932 = vunpack.c.l.b16 %v8863
      %v8933 = vunpack.c.l.b16 %v8867
      %v8934 = vunpack.c.l.b16 %v8870
      %v8935 = vunpack.c.l.b16 %v8874
      %v8936 = vunpack.c.l.b16 %v8877
      %v8937 = vunpack.c.l.b16 %v8881
      %v8938 = vunpack.c.l.b16 %v8884
      %v8939 = vunpack.c.l.b16 %v8888
      %v8940 = vunpack.c.l.b16 %v8891
      %v8941 = vunpack.c.l.b16 %v8895
      %v8942 = vunpack.c.l.b16 %v8898
      %v8943 = vunpack.c.l.b16 %v8902
      %v8944 = vunpack.c.l.b16 %v8905
      %v8945 = vunpack.c.l.b16 %v8909
      %v8946 = vunpack.c.l.b16 %v8912
      %v8947 = vpack.c.b16 %v8916, %v8915
      %v8948 = vpack.c.b16 %v8918, %v8917
      %v8949 = vpack.c.b16 %v8920, %v8919
      %v8950 = vpack.c.b16 %v8922, %v8921
      %v8951 = vpack.c.b16 %v8924, %v8923
      %v8952 = vpack.c.b16 %v8926, %v8925
      %v8953 = vpack.c.b16 %v8928, %v8927
      %v8954 = vpack.c.b16 %v8930, %v8929
      %v8955 = vpack.c.b16 %v8932, %v8931
      %v8956 = vpack.c.b16 %v8934, %v8933
      %v8957 = vpack.c.b16 %v8936, %v8935
      %v8958 = vpack.c.b16 %v8938, %v8937
      %v8959 = vpack.c.b16 %v8940, %v8939
      %v8960 = vpack.c.b16 %v8942, %v8941
      %v8961 = vpack.c.b16 %v8944, %v8943
      %v8962 = vpack.c.b16 %v8946, %v8945
      %v8964 = vsel %vm6693, %v8947, 0
      %v8967 = vsel %vm6693, %v8948, 0
      %v8970 = vsel %vm6693, %v8949, 0
      %v8973 = vsel %vm6693, %v8950, 0
      %v8976 = vsel %vm6693, %v8951, 0
      %v8979 = vsel %vm6693, %v8952, 0
      %v8982 = vsel %vm6693, %v8953, 0
      %v8985 = vsel %vm6693, %v8954, 0
      %v8988 = vsel %vm6693, %v8955, 0
      %v8991 = vsel %vm6693, %v8956, 0
      %v8994 = vsel %vm6693, %v8957, 0
      %v8997 = vsel %vm6693, %v8958, 0
      %v9000 = vsel %vm6693, %v8959, 0
      %v9003 = vsel %vm6693, %v8960, 0
      %v9006 = vsel %vm6693, %v8961, 0
      %v9009 = vsel %vm6693, %v8962, 0
      %v9012 = vsel %vm6742, %v8914, 0
      %9014 = vmatprep.subr.bf16.mxu0 0
      %9015 = vmatpush1.bf16.msra.mxu0 %v9012
      %9016 = vmatprep.subr.bf16.mxu0 0
      %9017 = vmatpush1.bf16.msra.mxu0 0
      %9018 = vmatprep.subr.bf16.mxu0 0
      %9019 = vmatpush1.bf16.msra.mxu0 0
      %9020 = vmatprep.subr.bf16.mxu0 0
      %9021 = vmatpush1.bf16.msra.mxu0 0
      %9022 = vmatprep.subr.bf16.mxu0 0
      %9023 = vmatpush1.bf16.msra.mxu0 0
      %9024 = vmatprep.subr.bf16.mxu0 0
      %9025 = vmatpush1.bf16.msra.mxu0 0
      %9026 = vmatprep.subr.bf16.mxu0 0
      %9027 = vmatpush1.bf16.msra.mxu0 0
      %9028 = vmatprep.subr.bf16.mxu0 0
      %9029 = vmatpush1.bf16.msra.mxu0 0
      %9030 = vmatprep.subr.bf16.mxu0 0
      %9031 = vmatpush1.bf16.msra.mxu0 0
      %9032 = vmatprep.subr.bf16.mxu0 0
      %9033 = vmatpush1.bf16.msra.mxu0 0
      %9034 = vmatprep.subr.bf16.mxu0 0
      %9035 = vmatpush1.bf16.msra.mxu0 0
      %9036 = vmatprep.subr.bf16.mxu0 0
      %9037 = vmatpush1.bf16.msra.mxu0 0
      %9038 = vmatprep.subr.bf16.mxu0 0
      %9039 = vmatpush1.bf16.msra.mxu0 0
      %9040 = vmatprep.subr.bf16.mxu0 0
      %9041 = vmatpush1.bf16.msra.mxu0 0
      %9042 = vmatprep.subr.bf16.mxu0 0
      %9043 = vmatpush1.bf16.msra.mxu0 0
      %9044 = vmatprep.subr.bf16.mxu0 0
      %9045 = vmatpush1.bf16.msra.mxu0 0
      %9046 = vmatprep.mubr.bf16.mxu0 0
      %9047 = vmatmul.mubr.bf16.gmra.mrb[0].mxu0 %v8964
      %v9048 = vpop.f32.mrb[0].mxu0
      %v9049 = vadd.f32 0.0, %v9048
      %v9050 = vpop.f32.mrb[0].mxu0
      %v9051 = vpop.f32.mrb[0].mxu0
      %v9052 = vadd.f32 0.0, %v9051
      %v9053 = vpop.f32.mrb[0].mxu0
      %9054 = vmatprep.mubr.bf16.mxu0 0
      %9055 = vmatmul.mubr.bf16.gmra.mrb[0].mxu0 %v8967
      %v9056 = vpop.f32.mrb[0].mxu0
      %v9057 = vadd.f32 0.0, %v9056
      %v9058 = vpop.f32.mrb[0].mxu0
      %v9059 = vpop.f32.mrb[0].mxu0
      %v9060 = vadd.f32 0.0, %v9059
      %v9061 = vpop.f32.mrb[0].mxu0
      %9062 = vmatprep.mubr.bf16.mxu0 0
      %9063 = vmatmul.mubr.bf16.gmra.mrb[0].mxu0 %v8970
      %v9064 = vpop.f32.mrb[0].mxu0
      %v9065 = vadd.f32 0.0, %v9064
      %v9066 = vpop.f32.mrb[0].mxu0
      %v9067 = vpop.f32.mrb[0].mxu0
      %v9068 = vadd.f32 0.0, %v9067
      %v9069 = vpop.f32.mrb[0].mxu0
      %9070 = vmatprep.mubr.bf16.mxu0 0
      %9071 = vmatmul.mubr.bf16.gmra.mrb[0].mxu0 %v8973
      %v9072 = vpop.f32.mrb[0].mxu0
      %v9073 = vadd.f32 0.0, %v9072
      %v9074 = vpop.f32.mrb[0].mxu0
      %v9075 = vpop.f32.mrb[0].mxu0
      %v9076 = vadd.f32 0.0, %v9075
      %v9077 = vpop.f32.mrb[0].mxu0
      %9078 = vmatprep.mubr.bf16.mxu0 0
      %9079 = vmatmul.mubr.bf16.gmra.mrb[0].mxu0 %v8976
      %v9080 = vpop.f32.mrb[0].mxu0
      %v9081 = vadd.f32 0.0, %v9080
      %v9082 = vpop.f32.mrb[0].mxu0
      %v9083 = vpop.f32.mrb[0].mxu0
      %v9084 = vadd.f32 0.0, %v9083
      %v9085 = vpop.f32.mrb[0].mxu0
      %9086 = vmatprep.mubr.bf16.mxu0 0
      %9087 = vmatmul.mubr.bf16.gmra.mrb[0].mxu0 %v8979
      %v9088 = vpop.f32.mrb[0].mxu0
      %v9089 = vadd.f32 0.0, %v9088
      %v9090 = vpop.f32.mrb[0].mxu0
      %v9091 = vpop.f32.mrb[0].mxu0
      %v9092 = vadd.f32 0.0, %v9091
      %v9093 = vpop.f32.mrb[0].mxu0
      %9094 = vmatprep.mubr.bf16.mxu0 0
      %9095 = vmatmul.mubr.bf16.gmra.mrb[0].mxu0 %v8982
      %v9096 = vpop.f32.mrb[0].mxu0
      %v9097 = vadd.f32 0.0, %v9096
      %v9098 = vpop.f32.mrb[0].mxu0
      %v9099 = vpop.f32.mrb[0].mxu0
      %v9100 = vadd.f32 0.0, %v9099
      %v9101 = vpop.f32.mrb[0].mxu0
      %9102 = vmatprep.mubr.bf16.mxu0 0
      %9103 = vmatmul.mubr.bf16.gmra.mrb[0].mxu0 %v8985
      %v9104 = vpop.f32.mrb[0].mxu0
      %v9105 = vadd.f32 0.0, %v9104
      %v9106 = vpop.f32.mrb[0].mxu0
      %v9107 = vpop.f32.mrb[0].mxu0
      %v9108 = vadd.f32 0.0, %v9107
      %v9109 = vpop.f32.mrb[0].mxu0
      %9110 = vmatprep.mubr.bf16.mxu0 0
      %9111 = vmatmul.mubr.bf16.gmra.mrb[0].mxu0 %v8988
      %v9112 = vpop.f32.mrb[0].mxu0
      %v9113 = vadd.f32 0.0, %v9112
      %v9114 = vpop.f32.mrb[0].mxu0
      %v9115 = vpop.f32.mrb[0].mxu0
      %v9116 = vadd.f32 0.0, %v9115
      %v9117 = vpop.f32.mrb[0].mxu0
      %9118 = vmatprep.mubr.bf16.mxu0 0
      %9119 = vmatmul.mubr.bf16.gmra.mrb[0].mxu0 %v8991
      %v9120 = vpop.f32.mrb[0].mxu0
      %v9121 = vadd.f32 0.0, %v9120
      %v9122 = vpop.f32.mrb[0].mxu0
      %v9123 = vpop.f32.mrb[0].mxu0
      %v9124 = vadd.f32 0.0, %v9123
      %v9125 = vpop.f32.mrb[0].mxu0
      %9126 = vmatprep.mubr.bf16.mxu0 0
      %9127 = vmatmul.mubr.bf16.gmra.mrb[0].mxu0 %v8994
      %v9128 = vpop.f32.mrb[0].mxu0
      %v9129 = vadd.f32 0.0, %v9128
      %v9130 = vpop.f32.mrb[0].mxu0
      %v9131 = vpop.f32.mrb[0].mxu0
      %v9132 = vadd.f32 0.0, %v9131
      %v9133 = vpop.f32.mrb[0].mxu0
      %9134 = vmatprep.mubr.bf16.mxu0 0
      %9135 = vmatmul.mubr.bf16.gmra.mrb[0].mxu0 %v8997
      %v9136 = vpop.f32.mrb[0].mxu0
      %v9137 = vadd.f32 0.0, %v9136
      %v9138 = vpop.f32.mrb[0].mxu0
      %v9139 = vpop.f32.mrb[0].mxu0
      %v9140 = vadd.f32 0.0, %v9139
      %v9141 = vpop.f32.mrb[0].mxu0
      %9142 = vmatprep.mubr.bf16.mxu0 0
      %9143 = vmatmul.mubr.bf16.gmra.mrb[0].mxu0 %v9000
      %v9144 = vpop.f32.mrb[0].mxu0
      %v9145 = vadd.f32 0.0, %v9144
      %v9146 = vpop.f32.mrb[0].mxu0
      %v9147 = vpop.f32.mrb[0].mxu0
      %v9148 = vadd.f32 0.0, %v9147
      %v9149 = vpop.f32.mrb[0].mxu0
      %9150 = vmatprep.mubr.bf16.mxu0 0
      %9151 = vmatmul.mubr.bf16.gmra.mrb[0].mxu0 %v9003
      %v9152 = vpop.f32.mrb[0].mxu0
      %v9153 = vadd.f32 0.0, %v9152
      %v9154 = vpop.f32.mrb[0].mxu0
      %v9155 = vpop.f32.mrb[0].mxu0
      %v9156 = vadd.f32 0.0, %v9155
      %v9157 = vpop.f32.mrb[0].mxu0
      %9158 = vmatprep.mubr.bf16.mxu0 0
      %9159 = vmatmul.mubr.bf16.gmra.mrb[0].mxu0 %v9006
      %v9160 = vpop.f32.mrb[0].mxu0
      %v9161 = vadd.f32 0.0, %v9160
      %v9162 = vpop.f32.mrb[0].mxu0
      %v9163 = vpop.f32.mrb[0].mxu0
      %v9164 = vadd.f32 0.0, %v9163
      %v9165 = vpop.f32.mrb[0].mxu0
      %9166 = vmatprep.mubr.bf16.mxu0 0
      %9167 = vmatmul.mubr.bf16.gmra.mrb[0].mxu0 %v9009
      %v9168 = vpop.f32.mrb[0].mxu0
      %v9169 = vadd.f32 0.0, %v9168
      %v9170 = vpop.f32.mrb[0].mxu0
      %v9171 = vpop.f32.mrb[0].mxu0
      %v9172 = vadd.f32 0.0, %v9171
      %v9173 = vpop.f32.mrb[0].mxu0
      %9174 = vdwg.mxu0
      %v9175 = vadd.f32 %v8705, %v9049
      %v9176 = vadd.f32 %v8706, %v9052
      %v9177 = vadd.f32 %v8707, %v9057
      %v9178 = vadd.f32 %v8708, %v9060
      %v9179 = vadd.f32 %v8709, %v9065
      %v9180 = vadd.f32 %v8710, %v9068
      %v9181 = vadd.f32 %v8711, %v9073
      %v9182 = vadd.f32 %v8712, %v9076
      %v9183 = vadd.f32 %v8713, %v9081
      %v9184 = vadd.f32 %v8714, %v9084
      %v9185 = vadd.f32 %v8715, %v9089
      %v9186 = vadd.f32 %v8716, %v9092
      %v9187 = vadd.f32 %v8717, %v9097
      %v9188 = vadd.f32 %v8718, %v9100
      %v9189 = vadd.f32 %v8719, %v9105
      %v9190 = vadd.f32 %v8720, %v9108
      %v9191 = vadd.f32 %v8721, %v9113
      %v9192 = vadd.f32 %v8722, %v9116
      %v9193 = vadd.f32 %v8723, %v9121
      %v9194 = vadd.f32 %v8724, %v9124
      %v9195 = vadd.f32 %v8725, %v9129
      %v9196 = vadd.f32 %v8726, %v9132
      %v9197 = vadd.f32 %v8727, %v9137
      %v9198 = vadd.f32 %v8728, %v9140
      %v9199 = vadd.f32 %v8729, %v9145
      %v9200 = vadd.f32 %v8730, %v9148
      %v9201 = vadd.f32 %v8731, %v9153
      %v9202 = vadd.f32 %v8732, %v9156
      %v9203 = vadd.f32 %v8733, %v9161
      %v9204 = vadd.f32 %v8734, %v9164
      %v9205 = vadd.f32 %v8735, %v9169
      %v9206 = vadd.f32 %v8736, %v9172
      %s9207 = scalar_lea.vmem [#allocation3], 24
      %v9208 = vld [vmem:[%s9207] sm:$0xf]
      %v9209 = vld [vmem:[%s9207 + $0x4] sm:$0xf]
      %v9210 = vld [vmem:[%s9207 + $0xc] sm:$0xf]
      %v9211 = vld [vmem:[%s9207 + $0x10] sm:$0xf]
      %v9212 = vld [vmem:[%s9207 + $0x18] sm:$0xf]
      %v9213 = vld [vmem:[%s9207 + $0x1c] sm:$0xf]
      %v9214 = vld [vmem:[%s9207 + $0x24] sm:$0xf]
      %v9215 = vld [vmem:[%s9207 + $0x28] sm:$0xf]
      %v9216 = vld [vmem:[%s9207 + $0x30] sm:$0xf]
      %v9217 = vld [vmem:[%s9207 + $0x34] sm:$0xf]
      %v9218 = vld [vmem:[%s9207 + $0x3c] sm:$0xf]
      %v9219 = vld [vmem:[%s9207 + $0x40] sm:$0xf]
      %v9220 = vld [vmem:[%s9207 + $0x48] sm:$0xf]
      %v9221 = vld [vmem:[%s9207 + $0x4c] sm:$0xf]
      %v9222 = vld [vmem:[%s9207 + $0x54] sm:$0xf]
      %v9223 = vld [vmem:[%s9207 + $0x58] sm:$0xf]
      %v9224 = vld [vmem:[%s9207 + $0x60] sm:$0xf]
      %v9225 = vld [vmem:[%s9207 + $0x64] sm:$0xf]
      %v9226 = vld [vmem:[%s9207 + $0x6c] sm:$0xf]
      %v9227 = vld [vmem:[%s9207 + $0x70] sm:$0xf]
      %v9228 = vld [vmem:[%s9207 + $0x78] sm:$0xf]
      %v9229 = vld [vmem:[%s9207 + $0x7c] sm:$0xf]
      %v9230 = vld [vmem:[%s9207 + $0x84] sm:$0xf]
      %v9231 = vld [vmem:[%s9207 + $0x88] sm:$0xf]
      %v9232 = vld [vmem:[%s9207 + $0x90] sm:$0xf]
      %v9233 = vld [vmem:[%s9207 + $0x94] sm:$0xf]
      %v9234 = vld [vmem:[%s9207 + $0x9c] sm:$0xf]
      %v9235 = vld [vmem:[%s9207 + $0xa0] sm:$0xf]
      %v9236 = vld [vmem:[%s9207 + $0xa8] sm:$0xf]
      %v9237 = vld [vmem:[%s9207 + $0xac] sm:$0xf]
      %v9238 = vld [vmem:[%s9207 + $0xb4] sm:$0xf]
      %v9239 = vld [vmem:[%s9207 + $0xb8] sm:$0xf]
      %s9240 = scalar_lea.vmem %s2, 24
      %v9241 = vld [vmem:[%s9240] sm:$0xf]
      %v9274 = vunpack.c.l.b16 %v9208
      %v9275 = vunpack.c.l.b16 %v9209
      %v9276 = vunpack.c.l.b16 %v9210
      %v9277 = vunpack.c.l.b16 %v9211
      %v9278 = vunpack.c.l.b16 %v9212
      %v9279 = vunpack.c.l.b16 %v9213
      %v9280 = vunpack.c.l.b16 %v9214
      %v9281 = vunpack.c.l.b16 %v9215
      %v9282 = vunpack.c.l.b16 %v9216
      %v9283 = vunpack.c.l.b16 %v9217
      %v9284 = vunpack.c.l.b16 %v9218
      %v9285 = vunpack.c.l.b16 %v9219
      %v9286 = vunpack.c.l.b16 %v9220
      %v9287 = vunpack.c.l.b16 %v9221
      %v9288 = vunpack.c.l.b16 %v9222
      %v9289 = vunpack.c.l.b16 %v9223
      %v9290 = vunpack.c.l.b16 %v9224
      %v9291 = vunpack.c.l.b16 %v9225
      %v9292 = vunpack.c.l.b16 %v9226
      %v9293 = vunpack.c.l.b16 %v9227
      %v9294 = vunpack.c.l.b16 %v9228
      %v9295 = vunpack.c.l.b16 %v9229
      %v9296 = vunpack.c.l.b16 %v9230
      %v9297 = vunpack.c.l.b16 %v9231
      %v9298 = vunpack.c.l.b16 %v9232
      %v9299 = vunpack.c.l.b16 %v9233
      %v9300 = vunpack.c.l.b16 %v9234
      %v9301 = vunpack.c.l.b16 %v9235
      %v9302 = vunpack.c.l.b16 %v9236
      %v9303 = vunpack.c.l.b16 %v9237
      %v9304 = vunpack.c.l.b16 %v9238
      %v9305 = vunpack.c.l.b16 %v9239
      %v9306 = vpack.c.b16 %v9275, %v9274
      %v9307 = vpack.c.b16 %v9277, %v9276
      %v9308 = vpack.c.b16 %v9279, %v9278
      %v9309 = vpack.c.b16 %v9281, %v9280
      %v9310 = vpack.c.b16 %v9283, %v9282
      %v9311 = vpack.c.b16 %v9285, %v9284
      %v9312 = vpack.c.b16 %v9287, %v9286
      %v9313 = vpack.c.b16 %v9289, %v9288
      %v9314 = vpack.c.b16 %v9291, %v9290
      %v9315 = vpack.c.b16 %v9293, %v9292
      %v9316 = vpack.c.b16 %v9295, %v9294
      %v9317 = vpack.c.b16 %v9297, %v9296
      %v9318 = vpack.c.b16 %v9299, %v9298
      %v9319 = vpack.c.b16 %v9301, %v9300
      %v9320 = vpack.c.b16 %v9303, %v9302
      %v9321 = vpack.c.b16 %v9305, %v9304
      %v9323 = vsel %vm6693, %v9306, 0
      %v9326 = vsel %vm6693, %v9307, 0
      %v9329 = vsel %vm6693, %v9308, 0
      %v9332 = vsel %vm6693, %v9309, 0
      %v9335 = vsel %vm6693, %v9310, 0
      %v9338 = vsel %vm6693, %v9311, 0
      %v9341 = vsel %vm6693, %v9312, 0
      %v9344 = vsel %vm6693, %v9313, 0
      %v9347 = vsel %vm6693, %v9314, 0
      %v9350 = vsel %vm6693, %v9315, 0
      %v9353 = vsel %vm6693, %v9316, 0
      %v9356 = vsel %vm6693, %v9317, 0
      %v9359 = vsel %vm6693, %v9318, 0
      %v9362 = vsel %vm6693, %v9319, 0
      %v9365 = vsel %vm6693, %v9320, 0
      %v9368 = vsel %vm6693, %v9321, 0
      %v9371 = vsel %vm6742, %v9241, 0
      %9373 = vmatprep.subr.bf16.mxu0 0
      %9374 = vmatpush1.bf16.msra.mxu0 %v9371
      %9375 = vmatprep.subr.bf16.mxu0 0
      %9376 = vmatpush1.bf16.msra.mxu0 0
      %9377 = vmatprep.subr.bf16.mxu0 0
      %9378 = vmatpush1.bf16.msra.mxu0 0
      %9379 = vmatprep.subr.bf16.mxu0 0
      %9380 = vmatpush1.bf16.msra.mxu0 0
      %9381 = vmatprep.subr.bf16.mxu0 0
      %9382 = vmatpush1.bf16.msra.mxu0 0
      %9383 = vmatprep.subr.bf16.mxu0 0
      %9384 = vmatpush1.bf16.msra.mxu0 0
      %9385 = vmatprep.subr.bf16.mxu0 0
      %9386 = vmatpush1.bf16.msra.mxu0 0
      %9387 = vmatprep.subr.bf16.mxu0 0
      %9388 = vmatpush1.bf16.msra.mxu0 0
      %9389 = vmatprep.subr.bf16.mxu0 0
      %9390 = vmatpush1.bf16.msra.mxu0 0
      %9391 = vmatprep.subr.bf16.mxu0 0
      %9392 = vmatpush1.bf16.msra.mxu0 0
      %9393 = vmatprep.subr.bf16.mxu0 0
      %9394 = vmatpush1.bf16.msra.mxu0 0
      %9395 = vmatprep.subr.bf16.mxu0 0
      %9396 = vmatpush1.bf16.msra.mxu0 0
      %9397 = vmatprep.subr.bf16.mxu0 0
      %9398 = vmatpush1.bf16.msra.mxu0 0
      %9399 = vmatprep.subr.bf16.mxu0 0
      %9400 = vmatpush1.bf16.msra.mxu0 0
      %9401 = vmatprep.subr.bf16.mxu0 0
      %9402 = vmatpush1.bf16.msra.mxu0 0
      %9403 = vmatprep.subr.bf16.mxu0 0
      %9404 = vmatpush1.bf16.msra.mxu0 0
      %9405 = vmatprep.mubr.bf16.mxu0 0
      %9406 = vmatmul.mubr.bf16.gmra.mrb[0].mxu0 %v9323
      %v9407 = vpop.f32.mrb[0].mxu0
      %v9408 = vadd.f32 0.0, %v9407
      %v9409 = vpop.f32.mrb[0].mxu0
      %v9410 = vpop.f32.mrb[0].mxu0
      %v9411 = vadd.f32 0.0, %v9410
      %v9412 = vpop.f32.mrb[0].mxu0
      %9413 = vmatprep.mubr.bf16.mxu0 0
      %9414 = vmatmul.mubr.bf16.gmra.mrb[0].mxu0 %v9326
      %v9415 = vpop.f32.mrb[0].mxu0
      %v9416 = vadd.f32 0.0, %v9415
      %v9417 = vpop.f32.mrb[0].mxu0
      %v9418 = vpop.f32.mrb[0].mxu0
      %v9419 = vadd.f32 0.0, %v9418
      %v9420 = vpop.f32.mrb[0].mxu0
      %9421 = vmatprep.mubr.bf16.mxu0 0
      %9422 = vmatmul.mubr.bf16.gmra.mrb[0].mxu0 %v9329
      %v9423 = vpop.f32.mrb[0].mxu0
      %v9424 = vadd.f32 0.0, %v9423
      %v9425 = vpop.f32.mrb[0].mxu0
      %v9426 = vpop.f32.mrb[0].mxu0
      %v9427 = vadd.f32 0.0, %v9426
      %v9428 = vpop.f32.mrb[0].mxu0
      %9429 = vmatprep.mubr.bf16.mxu0 0
      %9430 = vmatmul.mubr.bf16.gmra.mrb[0].mxu0 %v9332
      %v9431 = vpop.f32.mrb[0].mxu0
      %v9432 = vadd.f32 0.0, %v9431
      %v9433 = vpop.f32.mrb[0].mxu0
      %v9434 = vpop.f32.mrb[0].mxu0
      %v9435 = vadd.f32 0.0, %v9434
      %v9436 = vpop.f32.mrb[0].mxu0
      %9437 = vmatprep.mubr.bf16.mxu0 0
      %9438 = vmatmul.mubr.bf16.gmra.mrb[0].mxu0 %v9335
      %v9439 = vpop.f32.mrb[0].mxu0
      %v9440 = vadd.f32 0.0, %v9439
      %v9441 = vpop.f32.mrb[0].mxu0
      %v9442 = vpop.f32.mrb[0].mxu0
      %v9443 = vadd.f32 0.0, %v9442
      %v9444 = vpop.f32.mrb[0].mxu0
      %9445 = vmatprep.mubr.bf16.mxu0 0
      %9446 = vmatmul.mubr.bf16.gmra.mrb[0].mxu0 %v9338
      %v9447 = vpop.f32.mrb[0].mxu0
      %v9448 = vadd.f32 0.0, %v9447
      %v9449 = vpop.f32.mrb[0].mxu0
      %v9450 = vpop.f32.mrb[0].mxu0
      %v9451 = vadd.f32 0.0, %v9450
      %v9452 = vpop.f32.mrb[0].mxu0
      %9453 = vmatprep.mubr.bf16.mxu0 0
      %9454 = vmatmul.mubr.bf16.gmra.mrb[0].mxu0 %v9341
      %v9455 = vpop.f32.mrb[0].mxu0
      %v9456 = vadd.f32 0.0, %v9455
      %v9457 = vpop.f32.mrb[0].mxu0
      %v9458 = vpop.f32.mrb[0].mxu0
      %v9459 = vadd.f32 0.0, %v9458
      %v9460 = vpop.f32.mrb[0].mxu0
      %9461 = vmatprep.mubr.bf16.mxu0 0
      %9462 = vmatmul.mubr.bf16.gmra.mrb[0].mxu0 %v9344
      %v9463 = vpop.f32.mrb[0].mxu0
      %v9464 = vadd.f32 0.0, %v9463
      %v9465 = vpop.f32.mrb[0].mxu0
      %v9466 = vpop.f32.mrb[0].mxu0
      %v9467 = vadd.f32 0.0, %v9466
      %v9468 = vpop.f32.mrb[0].mxu0
      %9469 = vmatprep.mubr.bf16.mxu0 0
      %9470 = vmatmul.mubr.bf16.gmra.mrb[0].mxu0 %v9347
      %v9471 = vpop.f32.mrb[0].mxu0
      %v9472 = vadd.f32 0.0, %v9471
      %v9473 = vpop.f32.mrb[0].mxu0
      %v9474 = vpop.f32.mrb[0].mxu0
      %v9475 = vadd.f32 0.0, %v9474
      %v9476 = vpop.f32.mrb[0].mxu0
      %9477 = vmatprep.mubr.bf16.mxu0 0
      %9478 = vmatmul.mubr.bf16.gmra.mrb[0].mxu0 %v9350
      %v9479 = vpop.f32.mrb[0].mxu0
      %v9480 = vadd.f32 0.0, %v9479
      %v9481 = vpop.f32.mrb[0].mxu0
      %v9482 = vpop.f32.mrb[0].mxu0
      %v9483 = vadd.f32 0.0, %v9482
      %v9484 = vpop.f32.mrb[0].mxu0
      %9485 = vmatprep.mubr.bf16.mxu0 0
      %9486 = vmatmul.mubr.bf16.gmra.mrb[0].mxu0 %v9353
      %v9487 = vpop.f32.mrb[0].mxu0
      %v9488 = vadd.f32 0.0, %v9487
      %v9489 = vpop.f32.mrb[0].mxu0
      %v9490 = vpop.f32.mrb[0].mxu0
      %v9491 = vadd.f32 0.0, %v9490
      %v9492 = vpop.f32.mrb[0].mxu0
      %9493 = vmatprep.mubr.bf16.mxu0 0
      %9494 = vmatmul.mubr.bf16.gmra.mrb[0].mxu0 %v9356
      %v9495 = vpop.f32.mrb[0].mxu0
      %v9496 = vadd.f32 0.0, %v9495
      %v9497 = vpop.f32.mrb[0].mxu0
      %v9498 = vpop.f32.mrb[0].mxu0
      %v9499 = vadd.f32 0.0, %v9498
      %v9500 = vpop.f32.mrb[0].mxu0
      %9501 = vmatprep.mubr.bf16.mxu0 0
      %9502 = vmatmul.mubr.bf16.gmra.mrb[0].mxu0 %v9359
      %v9503 = vpop.f32.mrb[0].mxu0
      %v9504 = vadd.f32 0.0, %v9503
      %v9505 = vpop.f32.mrb[0].mxu0
      %v9506 = vpop.f32.mrb[0].mxu0
      %v9507 = vadd.f32 0.0, %v9506
      %v9508 = vpop.f32.mrb[0].mxu0
      %9509 = vmatprep.mubr.bf16.mxu0 0
      %9510 = vmatmul.mubr.bf16.gmra.mrb[0].mxu0 %v9362
      %v9511 = vpop.f32.mrb[0].mxu0
      %v9512 = vadd.f32 0.0, %v9511
      %v9513 = vpop.f32.mrb[0].mxu0
      %v9514 = vpop.f32.mrb[0].mxu0
      %v9515 = vadd.f32 0.0, %v9514
      %v9516 = vpop.f32.mrb[0].mxu0
      %9517 = vmatprep.mubr.bf16.mxu0 0
      %9518 = vmatmul.mubr.bf16.gmra.mrb[0].mxu0 %v9365
      %v9519 = vpop.f32.mrb[0].mxu0
      %v9520 = vadd.f32 0.0, %v9519
      %v9521 = vpop.f32.mrb[0].mxu0
      %v9522 = vpop.f32.mrb[0].mxu0
      %v9523 = vadd.f32 0.0, %v9522
      %v9524 = vpop.f32.mrb[0].mxu0
      %9525 = vmatprep.mubr.bf16.mxu0 0
      %9526 = vmatmul.mubr.bf16.gmra.mrb[0].mxu0 %v9368
      %v9527 = vpop.f32.mrb[0].mxu0
      %v9528 = vadd.f32 0.0, %v9527
      %v9529 = vpop.f32.mrb[0].mxu0
      %v9530 = vpop.f32.mrb[0].mxu0
      %v9531 = vadd.f32 0.0, %v9530
      %v9532 = vpop.f32.mrb[0].mxu0
      %9533 = vdwg.mxu0
      %v9534 = vadd.f32 %v9175, %v9408
      %v9535 = vadd.f32 %v9176, %v9411
      %v9536 = vadd.f32 %v9177, %v9416
      %v9537 = vadd.f32 %v9178, %v9419
      %v9538 = vadd.f32 %v9179, %v9424
      %v9539 = vadd.f32 %v9180, %v9427
      %v9540 = vadd.f32 %v9181, %v9432
      %v9541 = vadd.f32 %v9182, %v9435
      %v9542 = vadd.f32 %v9183, %v9440
      %v9543 = vadd.f32 %v9184, %v9443
      %v9544 = vadd.f32 %v9185, %v9448
      %v9545 = vadd.f32 %v9186, %v9451
      %v9546 = vadd.f32 %v9187, %v9456
      %v9547 = vadd.f32 %v9188, %v9459
      %v9548 = vadd.f32 %v9189, %v9464
      %v9549 = vadd.f32 %v9190, %v9467
      %v9550 = vadd.f32 %v9191, %v9472
      %v9551 = vadd.f32 %v9192, %v9475
      %v9552 = vadd.f32 %v9193, %v9480
      %v9553 = vadd.f32 %v9194, %v9483
      %v9554 = vadd.f32 %v9195, %v9488
      %v9555 = vadd.f32 %v9196, %v9491
      %v9556 = vadd.f32 %v9197, %v9496
      %v9557 = vadd.f32 %v9198, %v9499
      %v9558 = vadd.f32 %v9199, %v9504
      %v9559 = vadd.f32 %v9200, %v9507
      %v9560 = vadd.f32 %v9201, %v9512
      %v9561 = vadd.f32 %v9202, %v9515
      %v9562 = vadd.f32 %v9203, %v9520
      %v9563 = vadd.f32 %v9204, %v9523
      %v9564 = vadd.f32 %v9205, %v9528
      %v9565 = vadd.f32 %v9206, %v9531
      %v9566 = vld [vmem:[%s9207] sm:$0xf]
      %v9567 = vld [vmem:[%s9207 + $0x4] sm:$0xf]
      %v9568 = vld [vmem:[%s9207 + $0x8] sm:$0x1]
      %v9569 = vld [vmem:[%s9207 + $0xc] sm:$0xf]
      %v9570 = vld [vmem:[%s9207 + $0x10] sm:$0xf]
      %v9571 = vld [vmem:[%s9207 + $0x14] sm:$0x1]
      %v9572 = vld [vmem:[%s9207 + $0x18] sm:$0xf]
      %v9573 = vld [vmem:[%s9207 + $0x1c] sm:$0xf]
      %v9574 = vld [vmem:[%s9207 + $0x20] sm:$0x1]
      %v9575 = vld [vmem:[%s9207 + $0x24] sm:$0xf]
      %v9576 = vld [vmem:[%s9207 + $0x28] sm:$0xf]
      %v9577 = vld [vmem:[%s9207 + $0x2c] sm:$0x1]
      %v9578 = vld [vmem:[%s9207 + $0x30] sm:$0xf]
      %v9579 = vld [vmem:[%s9207 + $0x34] sm:$0xf]
      %v9580 = vld [vmem:[%s9207 + $0x38] sm:$0x1]
      %v9581 = vld [vmem:[%s9207 + $0x3c] sm:$0xf]
      %v9582 = vld [vmem:[%s9207 + $0x40] sm:$0xf]
      %v9583 = vld [vmem:[%s9207 + $0x44] sm:$0x1]
      %v9584 = vld [vmem:[%s9207 + $0x48] sm:$0xf]
      %v9585 = vld [vmem:[%s9207 + $0x4c] sm:$0xf]
      %v9586 = vld [vmem:[%s9207 + $0x50] sm:$0x1]
      %v9587 = vld [vmem:[%s9207 + $0x54] sm:$0xf]
      %v9588 = vld [vmem:[%s9207 + $0x58] sm:$0xf]
      %v9589 = vld [vmem:[%s9207 + $0x5c] sm:$0x1]
      %v9590 = vld [vmem:[%s9207 + $0x60] sm:$0xf]
      %v9591 = vld [vmem:[%s9207 + $0x64] sm:$0xf]
      %v9592 = vld [vmem:[%s9207 + $0x68] sm:$0x1]
      %v9593 = vld [vmem:[%s9207 + $0x6c] sm:$0xf]
      %v9594 = vld [vmem:[%s9207 + $0x70] sm:$0xf]
      %v9595 = vld [vmem:[%s9207 + $0x74] sm:$0x1]
      %v9596 = vld [vmem:[%s9207 + $0x78] sm:$0xf]
      %v9597 = vld [vmem:[%s9207 + $0x7c] sm:$0xf]
      %v9598 = vld [vmem:[%s9207 + $0x80] sm:$0x1]
      %v9599 = vld [vmem:[%s9207 + $0x84] sm:$0xf]
      %v9600 = vld [vmem:[%s9207 + $0x88] sm:$0xf]
      %v9601 = vld [vmem:[%s9207 + $0x8c] sm:$0x1]
      %v9602 = vld [vmem:[%s9207 + $0x90] sm:$0xf]
      %v9603 = vld [vmem:[%s9207 + $0x94] sm:$0xf]
      %v9604 = vld [vmem:[%s9207 + $0x98] sm:$0x1]
      %v9605 = vld [vmem:[%s9207 + $0x9c] sm:$0xf]
      %v9606 = vld [vmem:[%s9207 + $0xa0] sm:$0xf]
      %v9607 = vld [vmem:[%s9207 + $0xa4] sm:$0x1]
      %v9608 = vld [vmem:[%s9207 + $0xa8] sm:$0xf]
      %v9609 = vld [vmem:[%s9207 + $0xac] sm:$0xf]
      %v9610 = vld [vmem:[%s9207 + $0xb0] sm:$0x1]
      %v9611 = vld [vmem:[%s9207 + $0xb4] sm:$0xf]
      %v9612 = vld [vmem:[%s9207 + $0xb8] sm:$0xf]
      %v9613 = vld [vmem:[%s9207 + $0xbc] sm:$0x1]
      %v9615 = vshrl.u32 %v9566, 16
      %v9617 = vrot.slane %v9615, 4
      %v9618 = vshll.u32 %v9566, 16
      %v9620 = vrot.slane %v9618, 5
      %v9621 = vor.u32 %v9617, %v9620
      %v9622 = vrot.slane %v9621, 4
      %v9624 = vshll.u32 %v9567, 16
      %v9626 = vrot.slane %v9624, 5
      %v9627 = vsel %vm1032, %v9622, %v9626
      %v9628 = vshrl.u32 %v9567, 16
      %v9630 = vrot.slane %v9628, 4
      %v9631 = vor.u32 %v9630, %v9626
      %v9632 = vrot.slane %v9631, 4
      %v9634 = vshll.u32 %v9568, 16
      %v9636 = vrot.slane %v9634, 5
      %v9637 = vsel %vm1032, %v9632, %v9636
      %v9639 = vshrl.u32 %v9569, 16
      %v9641 = vrot.slane %v9639, 4
      %v9642 = vshll.u32 %v9569, 16
      %v9644 = vrot.slane %v9642, 5
      %v9645 = vor.u32 %v9641, %v9644
      %v9646 = vrot.slane %v9645, 4
      %v9648 = vshll.u32 %v9570, 16
      %v9650 = vrot.slane %v9648, 5
      %v9651 = vsel %vm1032, %v9646, %v9650
      %v9652 = vshrl.u32 %v9570, 16
      %v9654 = vrot.slane %v9652, 4
      %v9655 = vor.u32 %v9654, %v9650
      %v9656 = vrot.slane %v9655, 4
      %v9658 = vshll.u32 %v9571, 16
      %v9660 = vrot.slane %v9658, 5
      %v9661 = vsel %vm1032, %v9656, %v9660
      %v9663 = vshrl.u32 %v9572, 16
      %v9665 = vrot.slane %v9663, 4
      %v9666 = vshll.u32 %v9572, 16
      %v9668 = vrot.slane %v9666, 5
      %v9669 = vor.u32 %v9665, %v9668
      %v9670 = vrot.slane %v9669, 4
      %v9672 = vshll.u32 %v9573, 16
      %v9674 = vrot.slane %v9672, 5
      %v9675 = vsel %vm1032, %v9670, %v9674
      %v9676 = vshrl.u32 %v9573, 16
      %v9678 = vrot.slane %v9676, 4
      %v9679 = vor.u32 %v9678, %v9674
      %v9680 = vrot.slane %v9679, 4
      %v9682 = vshll.u32 %v9574, 16
      %v9684 = vrot.slane %v9682, 5
      %v9685 = vsel %vm1032, %v9680, %v9684
      %v9687 = vshrl.u32 %v9575, 16
      %v9689 = vrot.slane %v9687, 4
      %v9690 = vshll.u32 %v9575, 16
      %v9692 = vrot.slane %v9690, 5
      %v9693 = vor.u32 %v9689, %v9692
      %v9694 = vrot.slane %v9693, 4
      %v9696 = vshll.u32 %v9576, 16
      %v9698 = vrot.slane %v9696, 5
      %v9699 = vsel %vm1032, %v9694, %v9698
      %v9700 = vshrl.u32 %v9576, 16
      %v9702 = vrot.slane %v9700, 4
      %v9703 = vor.u32 %v9702, %v9698
      %v9704 = vrot.slane %v9703, 4
      %v9706 = vshll.u32 %v9577, 16
      %v9708 = vrot.slane %v9706, 5
      %v9709 = vsel %vm1032, %v9704, %v9708
      %v9711 = vshrl.u32 %v9578, 16
      %v9713 = vrot.slane %v9711, 4
      %v9714 = vshll.u32 %v9578, 16
      %v9716 = vrot.slane %v9714, 5
      %v9717 = vor.u32 %v9713, %v9716
      %v9718 = vrot.slane %v9717, 4
      %v9720 = vshll.u32 %v9579, 16
      %v9722 = vrot.slane %v9720, 5
      %v9723 = vsel %vm1032, %v9718, %v9722
      %v9724 = vshrl.u32 %v9579, 16
      %v9726 = vrot.slane %v9724, 4
      %v9727 = vor.u32 %v9726, %v9722
      %v9728 = vrot.slane %v9727, 4
      %v9730 = vshll.u32 %v9580, 16
      %v9732 = vrot.slane %v9730, 5
      %v9733 = vsel %vm1032, %v9728, %v9732
      %v9735 = vshrl.u32 %v9581, 16
      %v9737 = vrot.slane %v9735, 4
      %v9738 = vshll.u32 %v9581, 16
      %v9740 = vrot.slane %v9738, 5
      %v9741 = vor.u32 %v9737, %v9740
      %v9742 = vrot.slane %v9741, 4
      %v9744 = vshll.u32 %v9582, 16
      %v9746 = vrot.slane %v9744, 5
      %v9747 = vsel %vm1032, %v9742, %v9746
      %v9748 = vshrl.u32 %v9582, 16
      %v9750 = vrot.slane %v9748, 4
      %v9751 = vor.u32 %v9750, %v9746
      %v9752 = vrot.slane %v9751, 4
      %v9754 = vshll.u32 %v9583, 16
      %v9756 = vrot.slane %v9754, 5
      %v9757 = vsel %vm1032, %v9752, %v9756
      %v9759 = vshrl.u32 %v9584, 16
      %v9761 = vrot.slane %v9759, 4
      %v9762 = vshll.u32 %v9584, 16
      %v9764 = vrot.slane %v9762, 5
      %v9765 = vor.u32 %v9761, %v9764
      %v9766 = vrot.slane %v9765, 4
      %v9768 = vshll.u32 %v9585, 16
      %v9770 = vrot.slane %v9768, 5
      %v9771 = vsel %vm1032, %v9766, %v9770
      %v9772 = vshrl.u32 %v9585, 16
      %v9774 = vrot.slane %v9772, 4
      %v9775 = vor.u32 %v9774, %v9770
      %v9776 = vrot.slane %v9775, 4
      %v9778 = vshll.u32 %v9586, 16
      %v9780 = vrot.slane %v9778, 5
      %v9781 = vsel %vm1032, %v9776, %v9780
      %v9783 = vshrl.u32 %v9587, 16
      %v9785 = vrot.slane %v9783, 4
      %v9786 = vshll.u32 %v9587, 16
      %v9788 = vrot.slane %v9786, 5
      %v9789 = vor.u32 %v9785, %v9788
      %v9790 = vrot.slane %v9789, 4
      %v9792 = vshll.u32 %v9588, 16
      %v9794 = vrot.slane %v9792, 5
      %v9795 = vsel %vm1032, %v9790, %v9794
      %v9796 = vshrl.u32 %v9588, 16
      %v9798 = vrot.slane %v9796, 4
      %v9799 = vor.u32 %v9798, %v9794
      %v9800 = vrot.slane %v9799, 4
      %v9802 = vshll.u32 %v9589, 16
      %v9804 = vrot.slane %v9802, 5
      %v9805 = vsel %vm1032, %v9800, %v9804
      %v9807 = vshrl.u32 %v9590, 16
      %v9809 = vrot.slane %v9807, 4
      %v9810 = vshll.u32 %v9590, 16
      %v9812 = vrot.slane %v9810, 5
      %v9813 = vor.u32 %v9809, %v9812
      %v9814 = vrot.slane %v9813, 4
      %v9816 = vshll.u32 %v9591, 16
      %v9818 = vrot.slane %v9816, 5
      %v9819 = vsel %vm1032, %v9814, %v9818
      %v9820 = vshrl.u32 %v9591, 16
      %v9822 = vrot.slane %v9820, 4
      %v9823 = vor.u32 %v9822, %v9818
      %v9824 = vrot.slane %v9823, 4
      %v9826 = vshll.u32 %v9592, 16
      %v9828 = vrot.slane %v9826, 5
      %v9829 = vsel %vm1032, %v9824, %v9828
      %v9831 = vshrl.u32 %v9593, 16
      %v9833 = vrot.slane %v9831, 4
      %v9834 = vshll.u32 %v9593, 16
      %v9836 = vrot.slane %v9834, 5
      %v9837 = vor.u32 %v9833, %v9836
      %v9838 = vrot.slane %v9837, 4
      %v9840 = vshll.u32 %v9594, 16
      %v9842 = vrot.slane %v9840, 5
      %v9843 = vsel %vm1032, %v9838, %v9842
      %v9844 = vshrl.u32 %v9594, 16
      %v9846 = vrot.slane %v9844, 4
      %v9847 = vor.u32 %v9846, %v9842
      %v9848 = vrot.slane %v9847, 4
      %v9850 = vshll.u32 %v9595, 16
      %v9852 = vrot.slane %v9850, 5
      %v9853 = vsel %vm1032, %v9848, %v9852
      %v9855 = vshrl.u32 %v9596, 16
      %v9857 = vrot.slane %v9855, 4
      %v9858 = vshll.u32 %v9596, 16
      %v9860 = vrot.slane %v9858, 5
      %v9861 = vor.u32 %v9857, %v9860
      %v9862 = vrot.slane %v9861, 4
      %v9864 = vshll.u32 %v9597, 16
      %v9866 = vrot.slane %v9864, 5
      %v9867 = vsel %vm1032, %v9862, %v9866
      %v9868 = vshrl.u32 %v9597, 16
      %v9870 = vrot.slane %v9868, 4
      %v9871 = vor.u32 %v9870, %v9866
      %v9872 = vrot.slane %v9871, 4
      %v9874 = vshll.u32 %v9598, 16
      %v9876 = vrot.slane %v9874, 5
      %v9877 = vsel %vm1032, %v9872, %v9876
      %v9879 = vshrl.u32 %v9599, 16
      %v9881 = vrot.slane %v9879, 4
      %v9882 = vshll.u32 %v9599, 16
      %v9884 = vrot.slane %v9882, 5
      %v9885 = vor.u32 %v9881, %v9884
      %v9886 = vrot.slane %v9885, 4
      %v9888 = vshll.u32 %v9600, 16
      %v9890 = vrot.slane %v9888, 5
      %v9891 = vsel %vm1032, %v9886, %v9890
      %v9892 = vshrl.u32 %v9600, 16
      %v9894 = vrot.slane %v9892, 4
      %v9895 = vor.u32 %v9894, %v9890
      %v9896 = vrot.slane %v9895, 4
      %v9898 = vshll.u32 %v9601, 16
      %v9900 = vrot.slane %v9898, 5
      %v9901 = vsel %vm1032, %v9896, %v9900
      %v9903 = vshrl.u32 %v9602, 16
      %v9905 = vrot.slane %v9903, 4
      %v9906 = vshll.u32 %v9602, 16
      %v9908 = vrot.slane %v9906, 5
      %v9909 = vor.u32 %v9905, %v9908
      %v9910 = vrot.slane %v9909, 4
      %v9912 = vshll.u32 %v9603, 16
      %v9914 = vrot.slane %v9912, 5
      %v9915 = vsel %vm1032, %v9910, %v9914
      %v9916 = vshrl.u32 %v9603, 16
      %v9918 = vrot.slane %v9916, 4
      %v9919 = vor.u32 %v9918, %v9914
      %v9920 = vrot.slane %v9919, 4
      %v9922 = vshll.u32 %v9604, 16
      %v9924 = vrot.slane %v9922, 5
      %v9925 = vsel %vm1032, %v9920, %v9924
      %v9927 = vshrl.u32 %v9605, 16
      %v9929 = vrot.slane %v9927, 4
      %v9930 = vshll.u32 %v9605, 16
      %v9932 = vrot.slane %v9930, 5
      %v9933 = vor.u32 %v9929, %v9932
      %v9934 = vrot.slane %v9933, 4
      %v9936 = vshll.u32 %v9606, 16
      %v9938 = vrot.slane %v9936, 5
      %v9939 = vsel %vm1032, %v9934, %v9938
      %v9940 = vshrl.u32 %v9606, 16
      %v9942 = vrot.slane %v9940, 4
      %v9943 = vor.u32 %v9942, %v9938
      %v9944 = vrot.slane %v9943, 4
      %v9946 = vshll.u32 %v9607, 16
      %v9948 = vrot.slane %v9946, 5
      %v9949 = vsel %vm1032, %v9944, %v9948
      %v9951 = vshrl.u32 %v9608, 16
      %v9953 = vrot.slane %v9951, 4
      %v9954 = vshll.u32 %v9608, 16
      %v9956 = vrot.slane %v9954, 5
      %v9957 = vor.u32 %v9953, %v9956
      %v9958 = vrot.slane %v9957, 4
      %v9960 = vshll.u32 %v9609, 16
      %v9962 = vrot.slane %v9960, 5
      %v9963 = vsel %vm1032, %v9958, %v9962
      %v9964 = vshrl.u32 %v9609, 16
      %v9966 = vrot.slane %v9964, 4
      %v9967 = vor.u32 %v9966, %v9962
      %v9968 = vrot.slane %v9967, 4
      %v9970 = vshll.u32 %v9610, 16
      %v9972 = vrot.slane %v9970, 5
      %v9973 = vsel %vm1032, %v9968, %v9972
      %v9975 = vshrl.u32 %v9611, 16
      %v9977 = vrot.slane %v9975, 4
      %v9978 = vshll.u32 %v9611, 16
      %v9980 = vrot.slane %v9978, 5
      %v9981 = vor.u32 %v9977, %v9980
      %v9982 = vrot.slane %v9981, 4
      %v9984 = vshll.u32 %v9612, 16
      %v9986 = vrot.slane %v9984, 5
      %v9987 = vsel %vm1032, %v9982, %v9986
      %v9988 = vshrl.u32 %v9612, 16
      %v9990 = vrot.slane %v9988, 4
      %v9991 = vor.u32 %v9990, %v9986
      %v9992 = vrot.slane %v9991, 4
      %v9994 = vshll.u32 %v9613, 16
      %v9996 = vrot.slane %v9994, 5
      %v9997 = vsel %vm1032, %v9992, %v9996
      %s9998 = scalar_lea.vmem %s2, 28
      %v9999 = vld [vmem:[%s9998] sm:$0xf]
      %v10000 = vunpack.c.l.b16 %v9627
      %v10001 = vunpack.c.l.b16 %v9637
      %v10002 = vunpack.c.l.b16 %v9651
      %v10003 = vunpack.c.l.b16 %v9661
      %v10004 = vunpack.c.l.b16 %v9675
      %v10005 = vunpack.c.l.b16 %v9685
      %v10006 = vunpack.c.l.b16 %v9699
      %v10007 = vunpack.c.l.b16 %v9709
      %v10008 = vunpack.c.l.b16 %v9723
      %v10009 = vunpack.c.l.b16 %v9733
      %v10010 = vunpack.c.l.b16 %v9747
      %v10011 = vunpack.c.l.b16 %v9757
      %v10012 = vunpack.c.l.b16 %v9771
      %v10013 = vunpack.c.l.b16 %v9781
      %v10014 = vunpack.c.l.b16 %v9795
      %v10015 = vunpack.c.l.b16 %v9805
      %v10016 = vunpack.c.l.b16 %v9819
      %v10017 = vunpack.c.l.b16 %v9829
      %v10018 = vunpack.c.l.b16 %v9843
      %v10019 = vunpack.c.l.b16 %v9853
      %v10020 = vunpack.c.l.b16 %v9867
      %v10021 = vunpack.c.l.b16 %v9877
      %v10022 = vunpack.c.l.b16 %v9891
      %v10023 = vunpack.c.l.b16 %v9901
      %v10024 = vunpack.c.l.b16 %v9915
      %v10025 = vunpack.c.l.b16 %v9925
      %v10026 = vunpack.c.l.b16 %v9939
      %v10027 = vunpack.c.l.b16 %v9949
      %v10028 = vunpack.c.l.b16 %v9963
      %v10029 = vunpack.c.l.b16 %v9973
      %v10030 = vunpack.c.l.b16 %v9987
      %v10031 = vunpack.c.l.b16 %v9997
      %v10032 = vpack.c.b16 %v10001, %v10000
      %v10033 = vpack.c.b16 %v10003, %v10002
      %v10034 = vpack.c.b16 %v10005, %v10004
      %v10035 = vpack.c.b16 %v10007, %v10006
      %v10036 = vpack.c.b16 %v10009, %v10008
      %v10037 = vpack.c.b16 %v10011, %v10010
      %v10038 = vpack.c.b16 %v10013, %v10012
      %v10039 = vpack.c.b16 %v10015, %v10014
      %v10040 = vpack.c.b16 %v10017, %v10016
      %v10041 = vpack.c.b16 %v10019, %v10018
      %v10042 = vpack.c.b16 %v10021, %v10020
      %v10043 = vpack.c.b16 %v10023, %v10022
      %v10044 = vpack.c.b16 %v10025, %v10024
      %v10045 = vpack.c.b16 %v10027, %v10026
      %v10046 = vpack.c.b16 %v10029, %v10028
      %v10047 = vpack.c.b16 %v10031, %v10030
      %v10049 = vsel %vm6693, %v10032, 0
      %v10052 = vsel %vm6693, %v10033, 0
      %v10055 = vsel %vm6693, %v10034, 0
      %v10058 = vsel %vm6693, %v10035, 0
      %v10061 = vsel %vm6693, %v10036, 0
      %v10064 = vsel %vm6693, %v10037, 0
      %v10067 = vsel %vm6693, %v10038, 0
      %v10070 = vsel %vm6693, %v10039, 0
      %v10073 = vsel %vm6693, %v10040, 0
      %v10076 = vsel %vm6693, %v10041, 0
      %v10079 = vsel %vm6693, %v10042, 0
      %v10082 = vsel %vm6693, %v10043, 0
      %v10085 = vsel %vm6693, %v10044, 0
      %v10088 = vsel %vm6693, %v10045, 0
      %v10091 = vsel %vm6693, %v10046, 0
      %v10094 = vsel %vm6693, %v10047, 0
      %v10097 = vsel %vm6742, %v9999, 0
      %10099 = vmatprep.subr.bf16.mxu0 0
      %10100 = vmatpush1.bf16.msra.mxu0 %v10097
      %10101 = vmatprep.subr.bf16.mxu0 0
      %10102 = vmatpush1.bf16.msra.mxu0 0
      %10103 = vmatprep.subr.bf16.mxu0 0
      %10104 = vmatpush1.bf16.msra.mxu0 0
      %10105 = vmatprep.subr.bf16.mxu0 0
      %10106 = vmatpush1.bf16.msra.mxu0 0
      %10107 = vmatprep.subr.bf16.mxu0 0
      %10108 = vmatpush1.bf16.msra.mxu0 0
      %10109 = vmatprep.subr.bf16.mxu0 0
      %10110 = vmatpush1.bf16.msra.mxu0 0
      %10111 = vmatprep.subr.bf16.mxu0 0
      %10112 = vmatpush1.bf16.msra.mxu0 0
      %10113 = vmatprep.subr.bf16.mxu0 0
      %10114 = vmatpush1.bf16.msra.mxu0 0
      %10115 = vmatprep.subr.bf16.mxu0 0
      %10116 = vmatpush1.bf16.msra.mxu0 0
      %10117 = vmatprep.subr.bf16.mxu0 0
      %10118 = vmatpush1.bf16.msra.mxu0 0
      %10119 = vmatprep.subr.bf16.mxu0 0
      %10120 = vmatpush1.bf16.msra.mxu0 0
      %10121 = vmatprep.subr.bf16.mxu0 0
      %10122 = vmatpush1.bf16.msra.mxu0 0
      %10123 = vmatprep.subr.bf16.mxu0 0
      %10124 = vmatpush1.bf16.msra.mxu0 0
      %10125 = vmatprep.subr.bf16.mxu0 0
      %10126 = vmatpush1.bf16.msra.mxu0 0
      %10127 = vmatprep.subr.bf16.mxu0 0
      %10128 = vmatpush1.bf16.msra.mxu0 0
      %10129 = vmatprep.subr.bf16.mxu0 0
      %10130 = vmatpush1.bf16.msra.mxu0 0
      %10131 = vmatprep.mubr.bf16.mxu0 0
      %10132 = vmatmul.mubr.bf16.gmra.mrb[0].mxu0 %v10049
      %v10133 = vpop.f32.mrb[0].mxu0
      %v10134 = vadd.f32 0.0, %v10133
      %v10135 = vpop.f32.mrb[0].mxu0
      %v10136 = vpop.f32.mrb[0].mxu0
      %v10137 = vadd.f32 0.0, %v10136
      %v10138 = vpop.f32.mrb[0].mxu0
      %10139 = vmatprep.mubr.bf16.mxu0 0
      %10140 = vmatmul.mubr.bf16.gmra.mrb[0].mxu0 %v10052
      %v10141 = vpop.f32.mrb[0].mxu0
      %v10142 = vadd.f32 0.0, %v10141
      %v10143 = vpop.f32.mrb[0].mxu0
      %v10144 = vpop.f32.mrb[0].mxu0
      %v10145 = vadd.f32 0.0, %v10144
      %v10146 = vpop.f32.mrb[0].mxu0
      %10147 = vmatprep.mubr.bf16.mxu0 0
      %10148 = vmatmul.mubr.bf16.gmra.mrb[0].mxu0 %v10055
      %v10149 = vpop.f32.mrb[0].mxu0
      %v10150 = vadd.f32 0.0, %v10149
      %v10151 = vpop.f32.mrb[0].mxu0
      %v10152 = vpop.f32.mrb[0].mxu0
      %v10153 = vadd.f32 0.0, %v10152
      %v10154 = vpop.f32.mrb[0].mxu0
      %10155 = vmatprep.mubr.bf16.mxu0 0
      %10156 = vmatmul.mubr.bf16.gmra.mrb[0].mxu0 %v10058
      %v10157 = vpop.f32.mrb[0].mxu0
      %v10158 = vadd.f32 0.0, %v10157
      %v10159 = vpop.f32.mrb[0].mxu0
      %v10160 = vpop.f32.mrb[0].mxu0
      %v10161 = vadd.f32 0.0, %v10160
      %v10162 = vpop.f32.mrb[0].mxu0
      %10163 = vmatprep.mubr.bf16.mxu0 0
      %10164 = vmatmul.mubr.bf16.gmra.mrb[0].mxu0 %v10061
      %v10165 = vpop.f32.mrb[0].mxu0
      %v10166 = vadd.f32 0.0, %v10165
      %v10167 = vpop.f32.mrb[0].mxu0
      %v10168 = vpop.f32.mrb[0].mxu0
      %v10169 = vadd.f32 0.0, %v10168
      %v10170 = vpop.f32.mrb[0].mxu0
      %10171 = vmatprep.mubr.bf16.mxu0 0
      %10172 = vmatmul.mubr.bf16.gmra.mrb[0].mxu0 %v10064
      %v10173 = vpop.f32.mrb[0].mxu0
      %v10174 = vadd.f32 0.0, %v10173
      %v10175 = vpop.f32.mrb[0].mxu0
      %v10176 = vpop.f32.mrb[0].mxu0
      %v10177 = vadd.f32 0.0, %v10176
      %v10178 = vpop.f32.mrb[0].mxu0
      %10179 = vmatprep.mubr.bf16.mxu0 0
      %10180 = vmatmul.mubr.bf16.gmra.mrb[0].mxu0 %v10067
      %v10181 = vpop.f32.mrb[0].mxu0
      %v10182 = vadd.f32 0.0, %v10181
      %v10183 = vpop.f32.mrb[0].mxu0
      %v10184 = vpop.f32.mrb[0].mxu0
      %v10185 = vadd.f32 0.0, %v10184
      %v10186 = vpop.f32.mrb[0].mxu0
      %10187 = vmatprep.mubr.bf16.mxu0 0
      %10188 = vmatmul.mubr.bf16.gmra.mrb[0].mxu0 %v10070
      %v10189 = vpop.f32.mrb[0].mxu0
      %v10190 = vadd.f32 0.0, %v10189
      %v10191 = vpop.f32.mrb[0].mxu0
      %v10192 = vpop.f32.mrb[0].mxu0
      %v10193 = vadd.f32 0.0, %v10192
      %v10194 = vpop.f32.mrb[0].mxu0
      %10195 = vmatprep.mubr.bf16.mxu0 0
      %10196 = vmatmul.mubr.bf16.gmra.mrb[0].mxu0 %v10073
      %v10197 = vpop.f32.mrb[0].mxu0
      %v10198 = vadd.f32 0.0, %v10197
      %v10199 = vpop.f32.mrb[0].mxu0
      %v10200 = vpop.f32.mrb[0].mxu0
      %v10201 = vadd.f32 0.0, %v10200
      %v10202 = vpop.f32.mrb[0].mxu0
      %10203 = vmatprep.mubr.bf16.mxu0 0
      %10204 = vmatmul.mubr.bf16.gmra.mrb[0].mxu0 %v10076
      %v10205 = vpop.f32.mrb[0].mxu0
      %v10206 = vadd.f32 0.0, %v10205
      %v10207 = vpop.f32.mrb[0].mxu0
      %v10208 = vpop.f32.mrb[0].mxu0
      %v10209 = vadd.f32 0.0, %v10208
      %v10210 = vpop.f32.mrb[0].mxu0
      %10211 = vmatprep.mubr.bf16.mxu0 0
      %10212 = vmatmul.mubr.bf16.gmra.mrb[0].mxu0 %v10079
      %v10213 = vpop.f32.mrb[0].mxu0
      %v10214 = vadd.f32 0.0, %v10213
      %v10215 = vpop.f32.mrb[0].mxu0
      %v10216 = vpop.f32.mrb[0].mxu0
      %v10217 = vadd.f32 0.0, %v10216
      %v10218 = vpop.f32.mrb[0].mxu0
      %10219 = vmatprep.mubr.bf16.mxu0 0
      %10220 = vmatmul.mubr.bf16.gmra.mrb[0].mxu0 %v10082
      %v10221 = vpop.f32.mrb[0].mxu0
      %v10222 = vadd.f32 0.0, %v10221
      %v10223 = vpop.f32.mrb[0].mxu0
      %v10224 = vpop.f32.mrb[0].mxu0
      %v10225 = vadd.f32 0.0, %v10224
      %v10226 = vpop.f32.mrb[0].mxu0
      %10227 = vmatprep.mubr.bf16.mxu0 0
      %10228 = vmatmul.mubr.bf16.gmra.mrb[0].mxu0 %v10085
      %v10229 = vpop.f32.mrb[0].mxu0
      %v10230 = vadd.f32 0.0, %v10229
      %v10231 = vpop.f32.mrb[0].mxu0
      %v10232 = vpop.f32.mrb[0].mxu0
      %v10233 = vadd.f32 0.0, %v10232
      %v10234 = vpop.f32.mrb[0].mxu0
      %10235 = vmatprep.mubr.bf16.mxu0 0
      %10236 = vmatmul.mubr.bf16.gmra.mrb[0].mxu0 %v10088
      %v10237 = vpop.f32.mrb[0].mxu0
      %v10238 = vadd.f32 0.0, %v10237
      %v10239 = vpop.f32.mrb[0].mxu0
      %v10240 = vpop.f32.mrb[0].mxu0
      %v10241 = vadd.f32 0.0, %v10240
      %v10242 = vpop.f32.mrb[0].mxu0
      %10243 = vmatprep.mubr.bf16.mxu0 0
      %10244 = vmatmul.mubr.bf16.gmra.mrb[0].mxu0 %v10091
      %v10245 = vpop.f32.mrb[0].mxu0
      %v10246 = vadd.f32 0.0, %v10245
      %v10247 = vpop.f32.mrb[0].mxu0
      %v10248 = vpop.f32.mrb[0].mxu0
      %v10249 = vadd.f32 0.0, %v10248
      %v10250 = vpop.f32.mrb[0].mxu0
      %10251 = vmatprep.mubr.bf16.mxu0 0
      %10252 = vmatmul.mubr.bf16.gmra.mrb[0].mxu0 %v10094
      %v10253 = vpop.f32.mrb[0].mxu0
      %v10254 = vadd.f32 0.0, %v10253
      %v10255 = vpop.f32.mrb[0].mxu0
      %v10256 = vpop.f32.mrb[0].mxu0
      %v10257 = vadd.f32 0.0, %v10256
      %v10258 = vpop.f32.mrb[0].mxu0
      %10259 = vdwg.mxu0
      %v10260 = vadd.f32 %v9534, %v10134
      %v10261 = vadd.f32 %v9535, %v10137
      %v10262 = vadd.f32 %v9536, %v10142
      %v10263 = vadd.f32 %v9537, %v10145
      %v10264 = vadd.f32 %v9538, %v10150
      %v10265 = vadd.f32 %v9539, %v10153
      %v10266 = vadd.f32 %v9540, %v10158
      %v10267 = vadd.f32 %v9541, %v10161
      %v10268 = vadd.f32 %v9542, %v10166
      %v10269 = vadd.f32 %v9543, %v10169
      %v10270 = vadd.f32 %v9544, %v10174
      %v10271 = vadd.f32 %v9545, %v10177
      %v10272 = vadd.f32 %v9546, %v10182
      %v10273 = vadd.f32 %v9547, %v10185
      %v10274 = vadd.f32 %v9548, %v10190
      %v10275 = vadd.f32 %v9549, %v10193
      %v10276 = vadd.f32 %v9550, %v10198
      %v10277 = vadd.f32 %v9551, %v10201
      %v10278 = vadd.f32 %v9552, %v10206
      %v10279 = vadd.f32 %v9553, %v10209
      %v10280 = vadd.f32 %v9554, %v10214
      %v10281 = vadd.f32 %v9555, %v10217
      %v10282 = vadd.f32 %v9556, %v10222
      %v10283 = vadd.f32 %v9557, %v10225
      %v10284 = vadd.f32 %v9558, %v10230
      %v10285 = vadd.f32 %v9559, %v10233
      %v10286 = vadd.f32 %v9560, %v10238
      %v10287 = vadd.f32 %v9561, %v10241
      %v10288 = vadd.f32 %v9562, %v10246
      %v10289 = vadd.f32 %v9563, %v10249
      %v10290 = vadd.f32 %v9564, %v10254
      %v10291 = vadd.f32 %v9565, %v10257
      %v10292 = vld [vmem:[%s9207] sm:$0xe]
      %v10293 = vld [vmem:[%s9207 + $0xc] sm:$0xe]
      %v10294 = vld [vmem:[%s9207 + $0x18] sm:$0xe]
      %v10295 = vld [vmem:[%s9207 + $0x24] sm:$0xe]
      %v10296 = vld [vmem:[%s9207 + $0x30] sm:$0xe]
      %v10297 = vld [vmem:[%s9207 + $0x3c] sm:$0xe]
      %v10298 = vld [vmem:[%s9207 + $0x48] sm:$0xe]
      %v10299 = vld [vmem:[%s9207 + $0x54] sm:$0xe]
      %v10300 = vld [vmem:[%s9207 + $0x60] sm:$0xe]
      %v10301 = vld [vmem:[%s9207 + $0x6c] sm:$0xe]
      %v10302 = vld [vmem:[%s9207 + $0x78] sm:$0xe]
      %v10303 = vld [vmem:[%s9207 + $0x84] sm:$0xe]
      %v10304 = vld [vmem:[%s9207 + $0x90] sm:$0xe]
      %v10305 = vld [vmem:[%s9207 + $0x9c] sm:$0xe]
      %v10306 = vld [vmem:[%s9207 + $0xa8] sm:$0xe]
      %v10307 = vld [vmem:[%s9207 + $0xb4] sm:$0xe]
      %v10356 = vrot.slane %v10292, 5
      %v10357 = vrot.slane %v10356, 4
      %v10358 = vrot.slane %v9567, 5
      %v10359 = vsel %vm2023, %v10357, %v10358
      %v10360 = vrot.slane %v10358, 4
      %v10361 = vrot.slane %v9568, 5
      %v10362 = vsel %vm2023, %v10360, %v10361
      %v10363 = vrot.slane %v10293, 5
      %v10364 = vrot.slane %v10363, 4
      %v10365 = vrot.slane %v9570, 5
      %v10366 = vsel %vm2023, %v10364, %v10365
      %v10367 = vrot.slane %v10365, 4
      %v10368 = vrot.slane %v9571, 5
      %v10369 = vsel %vm2023, %v10367, %v10368
      %v10370 = vrot.slane %v10294, 5
      %v10371 = vrot.slane %v10370, 4
      %v10372 = vrot.slane %v9573, 5
      %v10373 = vsel %vm2023, %v10371, %v10372
      %v10374 = vrot.slane %v10372, 4
      %v10375 = vrot.slane %v9574, 5
      %v10376 = vsel %vm2023, %v10374, %v10375
      %v10377 = vrot.slane %v10295, 5
      %v10378 = vrot.slane %v10377, 4
      %v10379 = vrot.slane %v9576, 5
      %v10380 = vsel %vm2023, %v10378, %v10379
      %v10381 = vrot.slane %v10379, 4
      %v10382 = vrot.slane %v9577, 5
      %v10383 = vsel %vm2023, %v10381, %v10382
      %v10384 = vrot.slane %v10296, 5
      %v10385 = vrot.slane %v10384, 4
      %v10386 = vrot.slane %v9579, 5
      %v10387 = vsel %vm2023, %v10385, %v10386
      %v10388 = vrot.slane %v10386, 4
      %v10389 = vrot.slane %v9580, 5
      %v10390 = vsel %vm2023, %v10388, %v10389
      %v10391 = vrot.slane %v10297, 5
      %v10392 = vrot.slane %v10391, 4
      %v10393 = vrot.slane %v9582, 5
      %v10394 = vsel %vm2023, %v10392, %v10393
      %v10395 = vrot.slane %v10393, 4
      %v10396 = vrot.slane %v9583, 5
      %v10397 = vsel %vm2023, %v10395, %v10396
      %v10398 = vrot.slane %v10298, 5
      %v10399 = vrot.slane %v10398, 4
      %v10400 = vrot.slane %v9585, 5
      %v10401 = vsel %vm2023, %v10399, %v10400
      %v10402 = vrot.slane %v10400, 4
      %v10403 = vrot.slane %v9586, 5
      %v10404 = vsel %vm2023, %v10402, %v10403
      %v10405 = vrot.slane %v10299, 5
      %v10406 = vrot.slane %v10405, 4
      %v10407 = vrot.slane %v9588, 5
      %v10408 = vsel %vm2023, %v10406, %v10407
      %v10409 = vrot.slane %v10407, 4
      %v10410 = vrot.slane %v9589, 5
      %v10411 = vsel %vm2023, %v10409, %v10410
      %v10412 = vrot.slane %v10300, 5
      %v10413 = vrot.slane %v10412, 4
      %v10414 = vrot.slane %v9591, 5
      %v10415 = vsel %vm2023, %v10413, %v10414
      %v10416 = vrot.slane %v10414, 4
      %v10417 = vrot.slane %v9592, 5
      %v10418 = vsel %vm2023, %v10416, %v10417
      %v10419 = vrot.slane %v10301, 5
      %v10420 = vrot.slane %v10419, 4
      %v10421 = vrot.slane %v9594, 5
      %v10422 = vsel %vm2023, %v10420, %v10421
      %v10423 = vrot.slane %v10421, 4
      %v10424 = vrot.slane %v9595, 5
      %v10425 = vsel %vm2023, %v10423, %v10424
      %v10426 = vrot.slane %v10302, 5
      %v10427 = vrot.slane %v10426, 4
      %v10428 = vrot.slane %v9597, 5
      %v10429 = vsel %vm2023, %v10427, %v10428
      %v10430 = vrot.slane %v10428, 4
      %v10431 = vrot.slane %v9598, 5
      %v10432 = vsel %vm2023, %v10430, %v10431
      %v10433 = vrot.slane %v10303, 5
      %v10434 = vrot.slane %v10433, 4
      %v10435 = vrot.slane %v9600, 5
      %v10436 = vsel %vm2023, %v10434, %v10435
      %v10437 = vrot.slane %v10435, 4
      %v10438 = vrot.slane %v9601, 5
      %v10439 = vsel %vm2023, %v10437, %v10438
      %v10440 = vrot.slane %v10304, 5
      %v10441 = vrot.slane %v10440, 4
      %v10442 = vrot.slane %v9603, 5
      %v10443 = vsel %vm2023, %v10441, %v10442
      %v10444 = vrot.slane %v10442, 4
      %v10445 = vrot.slane %v9604, 5
      %v10446 = vsel %vm2023, %v10444, %v10445
      %v10447 = vrot.slane %v10305, 5
      %v10448 = vrot.slane %v10447, 4
      %v10449 = vrot.slane %v9606, 5
      %v10450 = vsel %vm2023, %v10448, %v10449
      %v10451 = vrot.slane %v10449, 4
      %v10452 = vrot.slane %v9607, 5
      %v10453 = vsel %vm2023, %v10451, %v10452
      %v10454 = vrot.slane %v10306, 5
      %v10455 = vrot.slane %v10454, 4
      %v10456 = vrot.slane %v9609, 5
      %v10457 = vsel %vm2023, %v10455, %v10456
      %v10458 = vrot.slane %v10456, 4
      %v10459 = vrot.slane %v9610, 5
      %v10460 = vsel %vm2023, %v10458, %v10459
      %v10461 = vrot.slane %v10307, 5
      %v10462 = vrot.slane %v10461, 4
      %v10463 = vrot.slane %v9612, 5
      %v10464 = vsel %vm2023, %v10462, %v10463
      %v10465 = vrot.slane %v10463, 4
      %v10466 = vrot.slane %v9613, 5
      %v10467 = vsel %vm2023, %v10465, %v10466
      %s10468 = scalar_lea.vmem %s2, 32
      %v10469 = vld [vmem:[%s10468] sm:$0xf]
      %v10470 = vunpack.c.l.b16 %v10359
      %v10471 = vunpack.c.l.b16 %v10362
      %v10472 = vunpack.c.l.b16 %v10366
      %v10473 = vunpack.c.l.b16 %v10369
      %v10474 = vunpack.c.l.b16 %v10373
      %v10475 = vunpack.c.l.b16 %v10376
      %v10476 = vunpack.c.l.b16 %v10380
      %v10477 = vunpack.c.l.b16 %v10383
      %v10478 = vunpack.c.l.b16 %v10387
      %v10479 = vunpack.c.l.b16 %v10390
      %v10480 = vunpack.c.l.b16 %v10394
      %v10481 = vunpack.c.l.b16 %v10397
      %v10482 = vunpack.c.l.b16 %v10401
      %v10483 = vunpack.c.l.b16 %v10404
      %v10484 = vunpack.c.l.b16 %v10408
      %v10485 = vunpack.c.l.b16 %v10411
      %v10486 = vunpack.c.l.b16 %v10415
      %v10487 = vunpack.c.l.b16 %v10418
      %v10488 = vunpack.c.l.b16 %v10422
      %v10489 = vunpack.c.l.b16 %v10425
      %v10490 = vunpack.c.l.b16 %v10429
      %v10491 = vunpack.c.l.b16 %v10432
      %v10492 = vunpack.c.l.b16 %v10436
      %v10493 = vunpack.c.l.b16 %v10439
      %v10494 = vunpack.c.l.b16 %v10443
      %v10495 = vunpack.c.l.b16 %v10446
      %v10496 = vunpack.c.l.b16 %v10450
      %v10497 = vunpack.c.l.b16 %v10453
      %v10498 = vunpack.c.l.b16 %v10457
      %v10499 = vunpack.c.l.b16 %v10460
      %v10500 = vunpack.c.l.b16 %v10464
      %v10501 = vunpack.c.l.b16 %v10467
      %v10502 = vpack.c.b16 %v10471, %v10470
      %v10503 = vpack.c.b16 %v10473, %v10472
      %v10504 = vpack.c.b16 %v10475, %v10474
      %v10505 = vpack.c.b16 %v10477, %v10476
      %v10506 = vpack.c.b16 %v10479, %v10478
      %v10507 = vpack.c.b16 %v10481, %v10480
      %v10508 = vpack.c.b16 %v10483, %v10482
      %v10509 = vpack.c.b16 %v10485, %v10484
      %v10510 = vpack.c.b16 %v10487, %v10486
      %v10511 = vpack.c.b16 %v10489, %v10488
      %v10512 = vpack.c.b16 %v10491, %v10490
      %v10513 = vpack.c.b16 %v10493, %v10492
      %v10514 = vpack.c.b16 %v10495, %v10494
      %v10515 = vpack.c.b16 %v10497, %v10496
      %v10516 = vpack.c.b16 %v10499, %v10498
      %v10517 = vpack.c.b16 %v10501, %v10500
      %v10519 = vsel %vm6693, %v10502, 0
      %v10522 = vsel %vm6693, %v10503, 0
      %v10525 = vsel %vm6693, %v10504, 0
      %v10528 = vsel %vm6693, %v10505, 0
      %v10531 = vsel %vm6693, %v10506, 0
      %v10534 = vsel %vm6693, %v10507, 0
      %v10537 = vsel %vm6693, %v10508, 0
      %v10540 = vsel %vm6693, %v10509, 0
      %v10543 = vsel %vm6693, %v10510, 0
      %v10546 = vsel %vm6693, %v10511, 0
      %v10549 = vsel %vm6693, %v10512, 0
      %v10552 = vsel %vm6693, %v10513, 0
      %v10555 = vsel %vm6693, %v10514, 0
      %v10558 = vsel %vm6693, %v10515, 0
      %v10561 = vsel %vm6693, %v10516, 0
      %v10564 = vsel %vm6693, %v10517, 0
      %v10567 = vsel %vm6742, %v10469, 0
      %10569 = vmatprep.subr.bf16.mxu0 0
      %10570 = vmatpush1.bf16.msra.mxu0 %v10567
      %10571 = vmatprep.subr.bf16.mxu0 0
      %10572 = vmatpush1.bf16.msra.mxu0 0
      %10573 = vmatprep.subr.bf16.mxu0 0
      %10574 = vmatpush1.bf16.msra.mxu0 0
      %10575 = vmatprep.subr.bf16.mxu0 0
      %10576 = vmatpush1.bf16.msra.mxu0 0
      %10577 = vmatprep.subr.bf16.mxu0 0
      %10578 = vmatpush1.bf16.msra.mxu0 0
      %10579 = vmatprep.subr.bf16.mxu0 0
      %10580 = vmatpush1.bf16.msra.mxu0 0
      %10581 = vmatprep.subr.bf16.mxu0 0
      %10582 = vmatpush1.bf16.msra.mxu0 0
      %10583 = vmatprep.subr.bf16.mxu0 0
      %10584 = vmatpush1.bf16.msra.mxu0 0
      %10585 = vmatprep.subr.bf16.mxu0 0
      %10586 = vmatpush1.bf16.msra.mxu0 0
      %10587 = vmatprep.subr.bf16.mxu0 0
      %10588 = vmatpush1.bf16.msra.mxu0 0
      %10589 = vmatprep.subr.bf16.mxu0 0
      %10590 = vmatpush1.bf16.msra.mxu0 0
      %10591 = vmatprep.subr.bf16.mxu0 0
      %10592 = vmatpush1.bf16.msra.mxu0 0
      %10593 = vmatprep.subr.bf16.mxu0 0
      %10594 = vmatpush1.bf16.msra.mxu0 0
      %10595 = vmatprep.subr.bf16.mxu0 0
      %10596 = vmatpush1.bf16.msra.mxu0 0
      %10597 = vmatprep.subr.bf16.mxu0 0
      %10598 = vmatpush1.bf16.msra.mxu0 0
      %10599 = vmatprep.subr.bf16.mxu0 0
      %10600 = vmatpush1.bf16.msra.mxu0 0
      %10601 = vmatprep.mubr.bf16.mxu0 0
      %10602 = vmatmul.mubr.bf16.gmra.mrb[0].mxu0 %v10519
      %v10603 = vpop.f32.mrb[0].mxu0
      %v10604 = vadd.f32 0.0, %v10603
      %v10605 = vpop.f32.mrb[0].mxu0
      %v10606 = vpop.f32.mrb[0].mxu0
      %v10607 = vadd.f32 0.0, %v10606
      %v10608 = vpop.f32.mrb[0].mxu0
      %10609 = vmatprep.mubr.bf16.mxu0 0
      %10610 = vmatmul.mubr.bf16.gmra.mrb[0].mxu0 %v10522
      %v10611 = vpop.f32.mrb[0].mxu0
      %v10612 = vadd.f32 0.0, %v10611
      %v10613 = vpop.f32.mrb[0].mxu0
      %v10614 = vpop.f32.mrb[0].mxu0
      %v10615 = vadd.f32 0.0, %v10614
      %v10616 = vpop.f32.mrb[0].mxu0
      %10617 = vmatprep.mubr.bf16.mxu0 0
      %10618 = vmatmul.mubr.bf16.gmra.mrb[0].mxu0 %v10525
      %v10619 = vpop.f32.mrb[0].mxu0
      %v10620 = vadd.f32 0.0, %v10619
      %v10621 = vpop.f32.mrb[0].mxu0
      %v10622 = vpop.f32.mrb[0].mxu0
      %v10623 = vadd.f32 0.0, %v10622
      %v10624 = vpop.f32.mrb[0].mxu0
      %10625 = vmatprep.mubr.bf16.mxu0 0
      %10626 = vmatmul.mubr.bf16.gmra.mrb[0].mxu0 %v10528
      %v10627 = vpop.f32.mrb[0].mxu0
      %v10628 = vadd.f32 0.0, %v10627
      %v10629 = vpop.f32.mrb[0].mxu0
      %v10630 = vpop.f32.mrb[0].mxu0
      %v10631 = vadd.f32 0.0, %v10630
      %v10632 = vpop.f32.mrb[0].mxu0
      %10633 = vmatprep.mubr.bf16.mxu0 0
      %10634 = vmatmul.mubr.bf16.gmra.mrb[0].mxu0 %v10531
      %v10635 = vpop.f32.mrb[0].mxu0
      %v10636 = vadd.f32 0.0, %v10635
      %v10637 = vpop.f32.mrb[0].mxu0
      %v10638 = vpop.f32.mrb[0].mxu0
      %v10639 = vadd.f32 0.0, %v10638
      %v10640 = vpop.f32.mrb[0].mxu0
      %10641 = vmatprep.mubr.bf16.mxu0 0
      %10642 = vmatmul.mubr.bf16.gmra.mrb[0].mxu0 %v10534
      %v10643 = vpop.f32.mrb[0].mxu0
      %v10644 = vadd.f32 0.0, %v10643
      %v10645 = vpop.f32.mrb[0].mxu0
      %v10646 = vpop.f32.mrb[0].mxu0
      %v10647 = vadd.f32 0.0, %v10646
      %v10648 = vpop.f32.mrb[0].mxu0
      %10649 = vmatprep.mubr.bf16.mxu0 0
      %10650 = vmatmul.mubr.bf16.gmra.mrb[0].mxu0 %v10537
      %v10651 = vpop.f32.mrb[0].mxu0
      %v10652 = vadd.f32 0.0, %v10651
      %v10653 = vpop.f32.mrb[0].mxu0
      %v10654 = vpop.f32.mrb[0].mxu0
      %v10655 = vadd.f32 0.0, %v10654
      %v10656 = vpop.f32.mrb[0].mxu0
      %10657 = vmatprep.mubr.bf16.mxu0 0
      %10658 = vmatmul.mubr.bf16.gmra.mrb[0].mxu0 %v10540
      %v10659 = vpop.f32.mrb[0].mxu0
      %v10660 = vadd.f32 0.0, %v10659
      %v10661 = vpop.f32.mrb[0].mxu0
      %v10662 = vpop.f32.mrb[0].mxu0
      %v10663 = vadd.f32 0.0, %v10662
      %v10664 = vpop.f32.mrb[0].mxu0
      %10665 = vmatprep.mubr.bf16.mxu0 0
      %10666 = vmatmul.mubr.bf16.gmra.mrb[0].mxu0 %v10543
      %v10667 = vpop.f32.mrb[0].mxu0
      %v10668 = vadd.f32 0.0, %v10667
      %v10669 = vpop.f32.mrb[0].mxu0
      %v10670 = vpop.f32.mrb[0].mxu0
      %v10671 = vadd.f32 0.0, %v10670
      %v10672 = vpop.f32.mrb[0].mxu0
      %10673 = vmatprep.mubr.bf16.mxu0 0
      %10674 = vmatmul.mubr.bf16.gmra.mrb[0].mxu0 %v10546
      %v10675 = vpop.f32.mrb[0].mxu0
      %v10676 = vadd.f32 0.0, %v10675
      %v10677 = vpop.f32.mrb[0].mxu0
      %v10678 = vpop.f32.mrb[0].mxu0
      %v10679 = vadd.f32 0.0, %v10678
      %v10680 = vpop.f32.mrb[0].mxu0
      %10681 = vmatprep.mubr.bf16.mxu0 0
      %10682 = vmatmul.mubr.bf16.gmra.mrb[0].mxu0 %v10549
      %v10683 = vpop.f32.mrb[0].mxu0
      %v10684 = vadd.f32 0.0, %v10683
      %v10685 = vpop.f32.mrb[0].mxu0
      %v10686 = vpop.f32.mrb[0].mxu0
      %v10687 = vadd.f32 0.0, %v10686
      %v10688 = vpop.f32.mrb[0].mxu0
      %10689 = vmatprep.mubr.bf16.mxu0 0
      %10690 = vmatmul.mubr.bf16.gmra.mrb[0].mxu0 %v10552
      %v10691 = vpop.f32.mrb[0].mxu0
      %v10692 = vadd.f32 0.0, %v10691
      %v10693 = vpop.f32.mrb[0].mxu0
      %v10694 = vpop.f32.mrb[0].mxu0
      %v10695 = vadd.f32 0.0, %v10694
      %v10696 = vpop.f32.mrb[0].mxu0
      %10697 = vmatprep.mubr.bf16.mxu0 0
      %10698 = vmatmul.mubr.bf16.gmra.mrb[0].mxu0 %v10555
      %v10699 = vpop.f32.mrb[0].mxu0
      %v10700 = vadd.f32 0.0, %v10699
      %v10701 = vpop.f32.mrb[0].mxu0
      %v10702 = vpop.f32.mrb[0].mxu0
      %v10703 = vadd.f32 0.0, %v10702
      %v10704 = vpop.f32.mrb[0].mxu0
      %10705 = vmatprep.mubr.bf16.mxu0 0
      %10706 = vmatmul.mubr.bf16.gmra.mrb[0].mxu0 %v10558
      %v10707 = vpop.f32.mrb[0].mxu0
      %v10708 = vadd.f32 0.0, %v10707
      %v10709 = vpop.f32.mrb[0].mxu0
      %v10710 = vpop.f32.mrb[0].mxu0
      %v10711 = vadd.f32 0.0, %v10710
      %v10712 = vpop.f32.mrb[0].mxu0
      %10713 = vmatprep.mubr.bf16.mxu0 0
      %10714 = vmatmul.mubr.bf16.gmra.mrb[0].mxu0 %v10561
      %v10715 = vpop.f32.mrb[0].mxu0
      %v10716 = vadd.f32 0.0, %v10715
      %v10717 = vpop.f32.mrb[0].mxu0
      %v10718 = vpop.f32.mrb[0].mxu0
      %v10719 = vadd.f32 0.0, %v10718
      %v10720 = vpop.f32.mrb[0].mxu0
      %10721 = vmatprep.mubr.bf16.mxu0 0
      %10722 = vmatmul.mubr.bf16.gmra.mrb[0].mxu0 %v10564
      %v10723 = vpop.f32.mrb[0].mxu0
      %v10724 = vadd.f32 0.0, %v10723
      %v10725 = vpop.f32.mrb[0].mxu0
      %v10726 = vpop.f32.mrb[0].mxu0
      %v10727 = vadd.f32 0.0, %v10726
      %v10728 = vpop.f32.mrb[0].mxu0
      %10729 = vdwg.mxu0
      %v10730 = vadd.f32 %v10260, %v10604
      %v10731 = vadd.f32 %v10261, %v10607
      %v10732 = vadd.f32 %v10262, %v10612
      %v10733 = vadd.f32 %v10263, %v10615
      %v10734 = vadd.f32 %v10264, %v10620
      %v10735 = vadd.f32 %v10265, %v10623
      %v10736 = vadd.f32 %v10266, %v10628
      %v10737 = vadd.f32 %v10267, %v10631
      %v10738 = vadd.f32 %v10268, %v10636
      %v10739 = vadd.f32 %v10269, %v10639
      %v10740 = vadd.f32 %v10270, %v10644
      %v10741 = vadd.f32 %v10271, %v10647
      %v10742 = vadd.f32 %v10272, %v10652
      %v10743 = vadd.f32 %v10273, %v10655
      %v10744 = vadd.f32 %v10274, %v10660
      %v10745 = vadd.f32 %v10275, %v10663
      %v10746 = vadd.f32 %v10276, %v10668
      %v10747 = vadd.f32 %v10277, %v10671
      %v10748 = vadd.f32 %v10278, %v10676
      %v10749 = vadd.f32 %v10279, %v10679
      %v10750 = vadd.f32 %v10280, %v10684
      %v10751 = vadd.f32 %v10281, %v10687
      %v10752 = vadd.f32 %v10282, %v10692
      %v10753 = vadd.f32 %v10283, %v10695
      %v10754 = vadd.f32 %v10284, %v10700
      %v10755 = vadd.f32 %v10285, %v10703
      %v10756 = vadd.f32 %v10286, %v10708
      %v10757 = vadd.f32 %v10287, %v10711
      %v10758 = vadd.f32 %v10288, %v10716
      %v10759 = vadd.f32 %v10289, %v10719
      %v10760 = vadd.f32 %v10290, %v10724
      %v10761 = vadd.f32 %v10291, %v10727
      %v10762 = vpack.c.bf16 %v10731, %v10730
      %v10763 = vpack.c.bf16 %v10733, %v10732
      %v10764 = vpack.c.bf16 %v10735, %v10734
      %v10765 = vpack.c.bf16 %v10737, %v10736
      %v10766 = vpack.c.bf16 %v10739, %v10738
      %v10767 = vpack.c.bf16 %v10741, %v10740
      %v10768 = vpack.c.bf16 %v10743, %v10742
      %v10769 = vpack.c.bf16 %v10745, %v10744
      %v10770 = vpack.c.bf16 %v10747, %v10746
      %v10771 = vpack.c.bf16 %v10749, %v10748
      %v10772 = vpack.c.bf16 %v10751, %v10750
      %v10773 = vpack.c.bf16 %v10753, %v10752
      %v10774 = vpack.c.bf16 %v10755, %v10754
      %v10775 = vpack.c.bf16 %v10757, %v10756
      %v10776 = vpack.c.bf16 %v10759, %v10758
      %v10777 = vpack.c.bf16 %v10761, %v10760
      %v10794 = vunpack.c.l.b16 %v10762
      %v10795 = vunpack.c.h.b16 %v10762
      %v10796 = vunpack.c.l.b16 %v10763
      %v10797 = vunpack.c.h.b16 %v10763
      %v10798 = vunpack.c.l.b16 %v10764
      %v10799 = vunpack.c.h.b16 %v10764
      %v10800 = vunpack.c.l.b16 %v10765
      %v10801 = vunpack.c.h.b16 %v10765
      %v10802 = vunpack.c.l.b16 %v10766
      %v10803 = vunpack.c.h.b16 %v10766
      %v10804 = vunpack.c.l.b16 %v10767
      %v10805 = vunpack.c.h.b16 %v10767
      %v10806 = vunpack.c.l.b16 %v10768
      %v10807 = vunpack.c.h.b16 %v10768
      %v10808 = vunpack.c.l.b16 %v10769
      %v10809 = vunpack.c.h.b16 %v10769
      %v10810 = vunpack.c.l.b16 %v10770
      %v10811 = vunpack.c.h.b16 %v10770
      %v10812 = vunpack.c.l.b16 %v10771
      %v10813 = vunpack.c.h.b16 %v10771
      %v10814 = vunpack.c.l.b16 %v10772
      %v10815 = vunpack.c.h.b16 %v10772
      %v10816 = vunpack.c.l.b16 %v10773
      %v10817 = vunpack.c.h.b16 %v10773
      %v10818 = vunpack.c.l.b16 %v10774
      %v10819 = vunpack.c.h.b16 %v10774
      %v10820 = vunpack.c.l.b16 %v10775
      %v10821 = vunpack.c.h.b16 %v10775
      %v10822 = vunpack.c.l.b16 %v10776
      %v10823 = vunpack.c.h.b16 %v10776
      %v10824 = vunpack.c.l.b16 %v10777
      %v10825 = vunpack.c.h.b16 %v10777
      %v10826 = vpack.c.b16 %v10794, %v10794
      %v10827 = vpack.c.b16 %v10795, %v10795
      %v10828 = vpack.c.b16 %v10796, %v10796
      %v10829 = vpack.c.b16 %v10797, %v10797
      %v10830 = vpack.c.b16 %v10798, %v10798
      %v10831 = vpack.c.b16 %v10799, %v10799
      %v10832 = vpack.c.b16 %v10800, %v10800
      %v10833 = vpack.c.b16 %v10801, %v10801
      %v10834 = vpack.c.b16 %v10802, %v10802
      %v10835 = vpack.c.b16 %v10803, %v10803
      %v10836 = vpack.c.b16 %v10804, %v10804
      %v10837 = vpack.c.b16 %v10805, %v10805
      %v10838 = vpack.c.b16 %v10806, %v10806
      %v10839 = vpack.c.b16 %v10807, %v10807
      %v10840 = vpack.c.b16 %v10808, %v10808
      %v10841 = vpack.c.b16 %v10809, %v10809
      %v10842 = vpack.c.b16 %v10810, %v10810
      %v10843 = vpack.c.b16 %v10811, %v10811
      %v10844 = vpack.c.b16 %v10812, %v10812
      %v10845 = vpack.c.b16 %v10813, %v10813
      %v10846 = vpack.c.b16 %v10814, %v10814
      %v10847 = vpack.c.b16 %v10815, %v10815
      %v10848 = vpack.c.b16 %v10816, %v10816
      %v10849 = vpack.c.b16 %v10817, %v10817
      %v10850 = vpack.c.b16 %v10818, %v10818
      %v10851 = vpack.c.b16 %v10819, %v10819
      %v10852 = vpack.c.b16 %v10820, %v10820
      %v10853 = vpack.c.b16 %v10821, %v10821
      %v10854 = vpack.c.b16 %v10822, %v10822
      %v10855 = vpack.c.b16 %v10823, %v10823
      %v10856 = vpack.c.b16 %v10824, %v10824
      %v10857 = vpack.c.b16 %v10825, %v10825
      %10890 = vst.msk [vmem:[%s204] sm:$0xf] %vm354, %v10826
      %10891 = vst.msk [vmem:[%s204 + $0x4] sm:$0xf] %vm354, %v10827
      %10892 = vst.msk [vmem:[%s204 + $0x8] sm:$0xf] %vm354, %v10828
      %10893 = vst.msk [vmem:[%s204 + $0xc] sm:$0xf] %vm354, %v10829
      %10894 = vst.msk [vmem:[%s204 + $0x10] sm:$0xf] %vm354, %v10830
      %10895 = vst.msk [vmem:[%s204 + $0x14] sm:$0xf] %vm354, %v10831
      %10896 = vst.msk [vmem:[%s204 + $0x18] sm:$0xf] %vm354, %v10832
      %10897 = vst.msk [vmem:[%s204 + $0x1c] sm:$0xf] %vm354, %v10833
      %10898 = vst.msk [vmem:[%s204 + $0x20] sm:$0xf] %vm354, %v10834
      %10899 = vst.msk [vmem:[%s204 + $0x24] sm:$0xf] %vm354, %v10835
      %10900 = vst.msk [vmem:[%s204 + $0x28] sm:$0xf] %vm354, %v10836
      %10901 = vst.msk [vmem:[%s204 + $0x2c] sm:$0xf] %vm354, %v10837
      %10902 = vst.msk [vmem:[%s204 + $0x30] sm:$0xf] %vm354, %v10838
      %10903 = vst.msk [vmem:[%s204 + $0x34] sm:$0xf] %vm354, %v10839
      %10904 = vst.msk [vmem:[%s204 + $0x38] sm:$0xf] %vm354, %v10840
      %10905 = vst.msk [vmem:[%s204 + $0x3c] sm:$0xf] %vm354, %v10841
      %10906 = vst.msk [vmem:[%s204 + $0x40] sm:$0xf] %vm354, %v10842
      %10907 = vst.msk [vmem:[%s204 + $0x44] sm:$0xf] %vm354, %v10843
      %10908 = vst.msk [vmem:[%s204 + $0x48] sm:$0xf] %vm354, %v10844
      %10909 = vst.msk [vmem:[%s204 + $0x4c] sm:$0xf] %vm354, %v10845
      %10910 = vst.msk [vmem:[%s204 + $0x50] sm:$0xf] %vm354, %v10846
      %10911 = vst.msk [vmem:[%s204 + $0x54] sm:$0xf] %vm354, %v10847
      %10912 = vst.msk [vmem:[%s204 + $0x58] sm:$0xf] %vm354, %v10848
      %10913 = vst.msk [vmem:[%s204 + $0x5c] sm:$0xf] %vm354, %v10849
      %10914 = vst.msk [vmem:[%s204 + $0x60] sm:$0xf] %vm354, %v10850
      %10915 = vst.msk [vmem:[%s204 + $0x64] sm:$0xf] %vm354, %v10851
      %10916 = vst.msk [vmem:[%s204 + $0x68] sm:$0xf] %vm354, %v10852
      %10917 = vst.msk [vmem:[%s204 + $0x6c] sm:$0xf] %vm354, %v10853
      %10918 = vst.msk [vmem:[%s204 + $0x70] sm:$0xf] %vm354, %v10854
      %10919 = vst.msk [vmem:[%s204 + $0x74] sm:$0xf] %vm354, %v10855
      %10920 = vst.msk [vmem:[%s204 + $0x78] sm:$0xf] %vm354, %v10856
      %10921 = vst.msk [vmem:[%s204 + $0x7c] sm:$0xf] %vm354, %v10857
      %v10922 = vsel %vm1467, %v10730, 0.0
      %v10923 = vsel %vm1467, %v10731, 0.0
      %v10924 = vadd.f32 %v10922, %v10923
      %v10925 = vsel %vm1467, %v10732, 0.0
      %v10926 = vadd.f32 %v10924, %v10925
      %v10927 = vsel %vm1467, %v10733, 0.0
      %v10928 = vadd.f32 %v10926, %v10927
      %v10929 = vsel %vm1467, %v10734, 0.0
      %v10930 = vadd.f32 %v10928, %v10929
      %v10931 = vsel %vm1467, %v10735, 0.0
      %v10932 = vadd.f32 %v10930, %v10931
      %v10933 = vsel %vm1467, %v10736, 0.0
      %v10934 = vadd.f32 %v10932, %v10933
      %v10935 = vsel %vm1467, %v10737, 0.0
      %v10936 = vadd.f32 %v10934, %v10935
      %v10937 = vsel %vm1467, %v10738, 0.0
      %v10938 = vadd.f32 %v10936, %v10937
      %v10939 = vsel %vm1467, %v10739, 0.0
      %v10940 = vadd.f32 %v10938, %v10939
      %v10941 = vsel %vm1467, %v10740, 0.0
      %v10942 = vadd.f32 %v10940, %v10941
      %v10943 = vsel %vm1467, %v10741, 0.0
      %v10944 = vadd.f32 %v10942, %v10943
      %v10945 = vsel %vm1467, %v10742, 0.0
      %v10946 = vadd.f32 %v10944, %v10945
      %v10947 = vsel %vm1467, %v10743, 0.0
      %v10948 = vadd.f32 %v10946, %v10947
      %v10949 = vsel %vm1467, %v10744, 0.0
      %v10950 = vadd.f32 %v10948, %v10949
      %v10951 = vsel %vm1467, %v10745, 0.0
      %v10952 = vadd.f32 %v10950, %v10951
      %v10953 = vsel %vm1467, %v10746, 0.0
      %v10954 = vadd.f32 %v10952, %v10953
      %v10955 = vsel %vm1467, %v10747, 0.0
      %v10956 = vadd.f32 %v10954, %v10955
      %v10957 = vsel %vm1467, %v10748, 0.0
      %v10958 = vadd.f32 %v10956, %v10957
      %v10959 = vsel %vm1467, %v10749, 0.0
      %v10960 = vadd.f32 %v10958, %v10959
      %v10961 = vsel %vm1467, %v10750, 0.0
      %v10962 = vadd.f32 %v10960, %v10961
      %v10963 = vsel %vm1467, %v10751, 0.0
      %v10964 = vadd.f32 %v10962, %v10963
      %v10965 = vsel %vm1467, %v10752, 0.0
      %v10966 = vadd.f32 %v10964, %v10965
      %v10967 = vsel %vm1467, %v10753, 0.0
      %v10968 = vadd.f32 %v10966, %v10967
      %v10969 = vsel %vm1467, %v10754, 0.0
      %v10970 = vadd.f32 %v10968, %v10969
      %v10971 = vsel %vm1467, %v10755, 0.0
      %v10972 = vadd.f32 %v10970, %v10971
      %v10973 = vsel %vm1467, %v10756, 0.0
      %v10974 = vadd.f32 %v10972, %v10973
      %v10975 = vsel %vm1467, %v10757, 0.0
      %v10976 = vadd.f32 %v10974, %v10975
      %v10977 = vsel %vm1467, %v10758, 0.0
      %v10978 = vadd.f32 %v10976, %v10977
      %v10979 = vsel %vm1467, %v10759, 0.0
      %v10980 = vadd.f32 %v10978, %v10979
      %v10981 = vsel %vm1467, %v10760, 0.0
      %v10982 = vadd.f32 %v10980, %v10981
      %v10983 = vsel %vm1467, %v10761, 0.0
      %v10984 = vadd.f32 %v10982, %v10983
      %v10985 = vrot.slane %v10984, 4
      %v10986 = vadd.f32 %v10984, %v10985
      %v10987 = vrot.slane %v10986, 2
      %v10988 = vadd.f32 %v10986, %v10987
      %v10989 = vrot.slane %v10988, 1
      %v10990 = vadd.f32 %v10988, %v10989
      %v10991 = vmul.f32 %v10990, 0.00390625
      %v10992 = vsub.f32 %v10730, %v10991
      %v10993 = vsub.f32 %v10731, %v10991
      %v10994 = vsub.f32 %v10732, %v10991
      %v10995 = vsub.f32 %v10733, %v10991
      %v10996 = vsub.f32 %v10734, %v10991
      %v10997 = vsub.f32 %v10735, %v10991
      %v10998 = vsub.f32 %v10736, %v10991
      %v10999 = vsub.f32 %v10737, %v10991
      %v11000 = vsub.f32 %v10738, %v10991
      %v11001 = vsub.f32 %v10739, %v10991
      %v11002 = vsub.f32 %v10740, %v10991
      %v11003 = vsub.f32 %v10741, %v10991
      %v11004 = vsub.f32 %v10742, %v10991
      %v11005 = vsub.f32 %v10743, %v10991
      %v11006 = vsub.f32 %v10744, %v10991
      %v11007 = vsub.f32 %v10745, %v10991
      %v11008 = vsub.f32 %v10746, %v10991
      %v11009 = vsub.f32 %v10747, %v10991
      %v11010 = vsub.f32 %v10748, %v10991
      %v11011 = vsub.f32 %v10749, %v10991
      %v11012 = vsub.f32 %v10750, %v10991
      %v11013 = vsub.f32 %v10751, %v10991
      %v11014 = vsub.f32 %v10752, %v10991
      %v11015 = vsub.f32 %v10753, %v10991
      %v11016 = vsub.f32 %v10754, %v10991
      %v11017 = vsub.f32 %v10755, %v10991
      %v11018 = vsub.f32 %v10756, %v10991
      %v11019 = vsub.f32 %v10757, %v10991
      %v11020 = vsub.f32 %v10758, %v10991
      %v11021 = vsub.f32 %v10759, %v10991
      %v11022 = vsub.f32 %v10760, %v10991
      %v11023 = vsub.f32 %v10761, %v10991
      %v11024 = vmul.f32 %v10992, %v10992
      %v11025 = vmul.f32 %v10993, %v10993
      %v11026 = vmul.f32 %v10994, %v10994
      %v11027 = vmul.f32 %v10995, %v10995
      %v11028 = vmul.f32 %v10996, %v10996
      %v11029 = vmul.f32 %v10997, %v10997
      %v11030 = vmul.f32 %v10998, %v10998
      %v11031 = vmul.f32 %v10999, %v10999
      %v11032 = vmul.f32 %v11000, %v11000
      %v11033 = vmul.f32 %v11001, %v11001
      %v11034 = vmul.f32 %v11002, %v11002
      %v11035 = vmul.f32 %v11003, %v11003
      %v11036 = vmul.f32 %v11004, %v11004
      %v11037 = vmul.f32 %v11005, %v11005
      %v11038 = vmul.f32 %v11006, %v11006
      %v11039 = vmul.f32 %v11007, %v11007
      %v11040 = vmul.f32 %v11008, %v11008
      %v11041 = vmul.f32 %v11009, %v11009
      %v11042 = vmul.f32 %v11010, %v11010
      %v11043 = vmul.f32 %v11011, %v11011
      %v11044 = vmul.f32 %v11012, %v11012
      %v11045 = vmul.f32 %v11013, %v11013
      %v11046 = vmul.f32 %v11014, %v11014
      %v11047 = vmul.f32 %v11015, %v11015
      %v11048 = vmul.f32 %v11016, %v11016
      %v11049 = vmul.f32 %v11017, %v11017
      %v11050 = vmul.f32 %v11018, %v11018
      %v11051 = vmul.f32 %v11019, %v11019
      %v11052 = vmul.f32 %v11020, %v11020
      %v11053 = vmul.f32 %v11021, %v11021
      %v11054 = vmul.f32 %v11022, %v11022
      %v11055 = vmul.f32 %v11023, %v11023
      %v11056 = vsel %vm1467, %v11024, 0.0
      %v11057 = vsel %vm1467, %v11025, 0.0
      %v11058 = vadd.f32 %v11056, %v11057
      %v11059 = vsel %vm1467, %v11026, 0.0
      %v11060 = vadd.f32 %v11058, %v11059
      %v11061 = vsel %vm1467, %v11027, 0.0
      %v11062 = vadd.f32 %v11060, %v11061
      %v11063 = vsel %vm1467, %v11028, 0.0
      %v11064 = vadd.f32 %v11062, %v11063
      %v11065 = vsel %vm1467, %v11029, 0.0
      %v11066 = vadd.f32 %v11064, %v11065
      %v11067 = vsel %vm1467, %v11030, 0.0
      %v11068 = vadd.f32 %v11066, %v11067
      %v11069 = vsel %vm1467, %v11031, 0.0
      %v11070 = vadd.f32 %v11068, %v11069
      %v11071 = vsel %vm1467, %v11032, 0.0
      %v11072 = vadd.f32 %v11070, %v11071
      %v11073 = vsel %vm1467, %v11033, 0.0
      %v11074 = vadd.f32 %v11072, %v11073
      %v11075 = vsel %vm1467, %v11034, 0.0
      %v11076 = vadd.f32 %v11074, %v11075
      %v11077 = vsel %vm1467, %v11035, 0.0
      %v11078 = vadd.f32 %v11076, %v11077
      %v11079 = vsel %vm1467, %v11036, 0.0
      %v11080 = vadd.f32 %v11078, %v11079
      %v11081 = vsel %vm1467, %v11037, 0.0
      %v11082 = vadd.f32 %v11080, %v11081
      %v11083 = vsel %vm1467, %v11038, 0.0
      %v11084 = vadd.f32 %v11082, %v11083
      %v11085 = vsel %vm1467, %v11039, 0.0
      %v11086 = vadd.f32 %v11084, %v11085
      %v11087 = vsel %vm1467, %v11040, 0.0
      %v11088 = vadd.f32 %v11086, %v11087
      %v11089 = vsel %vm1467, %v11041, 0.0
      %v11090 = vadd.f32 %v11088, %v11089
      %v11091 = vsel %vm1467, %v11042, 0.0
      %v11092 = vadd.f32 %v11090, %v11091
      %v11093 = vsel %vm1467, %v11043, 0.0
      %v11094 = vadd.f32 %v11092, %v11093
      %v11095 = vsel %vm1467, %v11044, 0.0
      %v11096 = vadd.f32 %v11094, %v11095
      %v11097 = vsel %vm1467, %v11045, 0.0
      %v11098 = vadd.f32 %v11096, %v11097
      %v11099 = vsel %vm1467, %v11046, 0.0
      %v11100 = vadd.f32 %v11098, %v11099
      %v11101 = vsel %vm1467, %v11047, 0.0
      %v11102 = vadd.f32 %v11100, %v11101
      %v11103 = vsel %vm1467, %v11048, 0.0
      %v11104 = vadd.f32 %v11102, %v11103
      %v11105 = vsel %vm1467, %v11049, 0.0
      %v11106 = vadd.f32 %v11104, %v11105
      %v11107 = vsel %vm1467, %v11050, 0.0
      %v11108 = vadd.f32 %v11106, %v11107
      %v11109 = vsel %vm1467, %v11051, 0.0
      %v11110 = vadd.f32 %v11108, %v11109
      %v11111 = vsel %vm1467, %v11052, 0.0
      %v11112 = vadd.f32 %v11110, %v11111
      %v11113 = vsel %vm1467, %v11053, 0.0
      %v11114 = vadd.f32 %v11112, %v11113
      %v11115 = vsel %vm1467, %v11054, 0.0
      %v11116 = vadd.f32 %v11114, %v11115
      %v11117 = vsel %vm1467, %v11055, 0.0
      %v11118 = vadd.f32 %v11116, %v11117
      %v11119 = vrot.slane %v11118, 4
      %v11120 = vadd.f32 %v11118, %v11119
      %v11121 = vrot.slane %v11120, 2
      %v11122 = vadd.f32 %v11120, %v11121
      %v11123 = vrot.slane %v11122, 1
      %v11124 = vadd.f32 %v11122, %v11123
      %vm11125 = vcmask 1040384
      %v11126 = vsel %vm11125, %v10990, %v11124
      %vm11127 = vcmask 25600
      %11128 = vst.msk [vmem:[%s208] sm:$0x3] %vm11127, %v11126
      %p11129 = scmp.lt.s32.totalorder %s16, 1
      %s11130 = scalar_select %p11129, %s16, 1
      %s11131 = smul.addr %s11130, 32
      %s11132 = smul.addr %s11131, 4
      %s11133 = scalar_lea.vmem %s3, %s11132
      %p11134 = scmp.lt.s32.totalorder %s16, 1
      %s11135 = scalar_select %p11134, %s16, 1
      %s11136 = smul.addr %s11135, 2
      %s11137 = scalar_lea.vmem %s4, %s11136
      // Predicated region
      $region33: #{skip_connection_block_innermost.2} parent=31 // pred_check
        %p11138 = pneg %p102
      $region34: #{skip_connection_block_innermost.2} parent=31 // pred_check_branch
        %11140 = sbr.rel (%p11138) target = $region36
      $region35: #{skip_connection_block_innermost.2} parent=31 // pred_region
        _
      $region36: #{skip_connection_block_innermost.2} parent=31 // pred_fallthru
        _
      // Predicated region
      $region37: #{skip_connection_block_innermost.2} parent=31 // pred_check
        %p11141 = pneg %p128
      $region38: #{skip_connection_block_innermost.2} parent=31 // pred_check_branch
        %11143 = sbr.rel (%p11141) target = $region40
      $region39: #{skip_connection_block_innermost.2} parent=31 // pred_region
        _
      $region40: #{skip_connection_block_innermost.2} parent=31 // pred_fallthru
        _
    $region32: #{skip_connection_block_innermost.2} parent=5 // pred_fallthru
      _
    %p11144 = scmp.le.s32.totalorder 2, %s11
    // Predicated region
    $region41: #{skip_connection_block_innermost.2} parent=5 // pred_check
      %p11145 = pneg %p11144
    $region42: #{skip_connection_block_innermost.2} parent=5 // pred_check_branch
      %11147 = sbr.rel (%p11145) target = $region44
    $region43: #{skip_connection_block_innermost.2} parent=5 // pred_region
      %s11148 = ssub.s32 %s11, 2
      // Predicated region
      $region45: #{skip_connection_block_innermost.2} parent=43 // pred_check
        %p11149 = pneg %p108
      $region46: #{skip_connection_block_innermost.2} parent=43 // pred_check_branch
        %11151 = sbr.rel (%p11149) target = $region48
      $region47: #{skip_connection_block_innermost.2} parent=43 // pred_region
        %p11152 = scmp.lt.s32.totalorder %s17, 1
        %s11153 = scalar_select %p11152, %s17, 1
        %s11154 = smul.addr %s11153, 32
        %s11155 = smul.addr %s11154, 4
        %s11156 = scalar_lea.vmem %s3, %s11155
      $region48: #{skip_connection_block_innermost.2} parent=43 // pred_fallthru
        _
      // Predicated region
      $region49: #{skip_connection_block_innermost.2} parent=43 // pred_check
        %p11157 = pneg %p134
      $region50: #{skip_connection_block_innermost.2} parent=43 // pred_check_branch
        %11159 = sbr.rel (%p11157) target = $region52
      $region51: #{skip_connection_block_innermost.2} parent=43 // pred_region
        %p11160 = scmp.lt.s32.totalorder %s17, 1
        %s11161 = scalar_select %p11160, %s17, 1
        %s11162 = smul.addr %s11161, 2
        %s11163 = scalar_lea.vmem %s4, %s11162
      $region52: #{skip_connection_block_innermost.2} parent=43 // pred_fallthru
        _
    $region44: #{skip_connection_block_innermost.2} parent=5 // pred_fallthru
      _
  $region6: #{skip_connection_block_innermost.2} parent=0 // loop_footer
    %s15 = sadd.s32 1, %s11
  $region7: #{skip_connection_block_innermost.2} parent=0 // loop_footer_branch
    %10 = sbr.rel target = $region3
  $region8: #{skip_connection_block_innermost.2} parent=0 // loop_exit
    _

</llo_original>
